<compile_context>
chip_gen: v7x
topology: tpu7x:2x2x1
jax: 0.10.0
libtpu: 0.0.40
codegen_flags: <defaults>
</compile_context>

<pallas_src>
import math
import numpy as np
import jax
import jax.numpy as jnp
from jax import lax
from jax.experimental import pallas as pl
from jax.experimental.pallas import tpu as pltpu

# ----------------------------- small config ---------------------------------
BATCH = 2
N_EVENTS = 8                       # fixed by the module
MODEL_DIM = 32                     # exp.model_dim (128 in original)
N_FRAMES = 16                      # exp.n_frames (128 in original)
N_SAMPLES = 256                    # exp.n_samples (2**15 in original)
STEP = N_SAMPLES // N_FRAMES
N_HARMONICS = 8                    # 64 in original
N_PITCHES = 16                     # len(musical_scale) (128 in original)
FILT_LEN = 32                      # noise-filter length (128 in original)
START_SIZE = 8                     # ConvUpsample start_size
NYQUIST = 11025.0                  # zounds.SR22050().nyquist
LEAKY_SLOPE = 0.01                 # PyTorch nn.LeakyReLU default
DS = MODEL_DIM * START_SIZE        # flattened ConvUpsample hidden width


# ----------------------------- fused Pallas kernel ---------------------------
def _make_kernel(G):
    """Kernel body processing G atoms (= n_events, or batch*n_events if folded)."""
    D, F, N, H, FL = MODEL_DIM, N_FRAMES, N_SAMPLES, N_HARMONICS, FILT_LEN
    HG = H * G
    PI = math.pi

    def leaky(v):
        return jnp.where(v > 0, v, LEAKY_SLOPE * v)

    def sigmoid(v):
        return 1.0 / (1.0 + jnp.exp(-v))

    def mm(a, b):
        return jnp.dot(a, b, preferred_element_type=jnp.float32)

    def hard_softmax(logits):
        # forward value of the straight-through hard softmax: one-hot at the
        # (first) argmax scaled by the max softmax probability.
        m = jnp.max(logits, axis=-1, keepdims=True)
        e = jnp.exp(logits - m)
        sm = e / jnp.sum(e, axis=-1, keepdims=True)
        mx = jnp.max(sm, axis=-1, keepdims=True)
        idx = lax.broadcasted_iota(jnp.int32, sm.shape, sm.ndim - 1).astype(jnp.float32)
        first = jnp.min(jnp.where(sm >= mx, idx, jnp.float32(1e9)),
                        axis=-1, keepdims=True)
        return jnp.where(idx == first, mx, 0.0)

    def kernel(x_ref, noise_ref,
               wfused_ref, bfused_ref,
               f0_wh_ref, f0_bh_ref, f0_wo_ref, f0_bo_ref,
               loc_cw_ref, loc_cb_ref, fv_cw_ref, fv_cb_ref,
               amp_cw_ref, amp_cb_ref,
               cf_ref, winterp_ref, wcum_ref,
               rep_h_ref, hamm_rep_ref, band_mask_ref,
               pos_rep_ref, pos_mask_ref,
               out_ref,
               sig_scr, amp_scr, nb_scr, bd_scr, nroll_scr, proll_scr):
        x = x_ref[...].reshape(G, D)

        # ---- four first-layer matmuls fused into one (G, 3*DS + D) matmul ----
        h1 = leaky(mm(x, wfused_ref[...]) + bfused_ref[...])
        h_loc = h1[:, 0:DS]
        h_fv = h1[:, DS:2 * DS]
        h_amp = h1[:, 2 * DS:3 * DS]
        h_f0 = h1[:, 3 * DS:3 * DS + D]

        # ---- f0 pitch head: remaining LinearOutputStack layers -> hard softmax @ cf
        h = h_f0
        for i in range(2):
            h = leaky(mm(h, f0_wh_ref[i]) + f0_bh_ref[i])
        f0_logits = mm(h, f0_wo_ref[...]) + f0_bo_ref[...]                 # (G, P)
        f0 = jnp.sum(hard_softmax(f0_logits) * cf_ref[...],
                     axis=-1, keepdims=True)                               # (G, 1)

        # ---- ConvUpsample heads (upsample+conv folded host-side to one matmul)
        loc = hard_softmax(sigmoid(mm(h_loc, loc_cw_ref[...]) + loc_cb_ref[...]))  # (G, F)
        f0_var = sigmoid(mm(h_fv, fv_cw_ref[...]) + fv_cb_ref[...]) * 2.0 - 1.0    # (G, F)
        amp = mm(h_amp, amp_cw_ref[...]) + amp_cb_ref[...]                          # (G, 2H*F)
        amp_sq = amp * amp

        # ---- amp envelopes: channel-major rows, ONE frame->sample interp matmul
        amp_cm = jnp.transpose(amp_sq.reshape(G, 2 * H, F), (1, 0, 2)).reshape(2 * HG, F)
        amp_scr[...] = mm(amp_cm, winterp_ref[...])                        # (2HG, N) -> VMEM

        # ---- harmonic oscillators: cumsum folded into the interpolation matrix
        # cumsum(rows @ winterp, axis=-1) == rows @ cumsum(winterp, axis=-1), so
        # the whole phase accumulation is a single MXU matmul against wcum.
        # TODO(synk): at production n_samples (2**15) the f32 phase needs a
        # mod-2*pi treatment (precision), same as the reference cumsum would.
        f0_frames = f0 + f0_var * (f0 * 0.01)                              # (G, F)
        raw = mm(rep_h_ref[...], f0_frames)                                # (HG, F), h-major rows
        hrows = jnp.where(raw > 1.0, 0.0, raw) * PI                        # zero super-Nyquist
        sig_scr[...] = jnp.sin(mm(hrows, wcum_ref[...]))                   # (HG, N) -> VMEM

        # ---- stage circularly rolled noise once (FIR right-hand side) ----
        noise = noise_ref[...].reshape(G, N)
        nroll_scr[0:G, :] = noise
        for k in range(1, FL):
            nroll_scr[k * G:(k + 1) * G, :] = pltpu.roll(noise, k, axis=1)

        # ---- noise bands: hamming-windowed FIR as one band-masked MXU matmul ----
        # (matches the reference's circular rfft-product convolution; the ortho
        #  1/sqrt(N) factor cancels under max_norm)
        bd_scr[...] = mm(sig_scr[:, 0:FL], hamm_rep_ref[...]) * band_mask_ref[...]
        nb = mm(bd_scr[...], nroll_scr[...])                               # (HG, N)
        # max_norm over time; TODO(synk): max_norm source missing (eps assumed 1e-8)
        nb_scr[...] = nb * pl.reciprocal(
            jnp.max(jnp.abs(nb), axis=-1, keepdims=True) + 1e-8, approx=True)

        # ---- per-atom mix: sum over harmonics, streaming small slices from VMEM ----
        mix = jnp.zeros((G, N), jnp.float32)
        for hh in range(H):
            r = hh * G
            mix = (mix
                   + sig_scr[r:r + G, :] * amp_scr[r:r + G, :]
                   + nb_scr[r:r + G, :] * amp_scr[HG + r:HG + r + G, :])
        # x = x * fade : fade is all ones -> no-op

        # ---- positioning: convolution with the loc impulse train, on the MXU ----
        # TODO(synk): fft_convolve source not provided; assumed zero-padded (linear)
        # convolution truncated to n_samples -> the wrapped head is masked to zero.
        # Drop the jnp.where() below for a plain circular convolution instead.
        lane = lax.broadcasted_iota(jnp.int32, (1, N), 1)
        proll_scr[0:G, :] = mix
        for j in range(1, F):
            sft = j * STEP
            proll_scr[j * G:(j + 1) * G, :] = jnp.where(
                lane >= sft, pltpu.roll(mix, sft, axis=1), 0.0)
        bd_pos = mm(loc, pos_rep_ref[...]) * pos_mask_ref[...]             # (G, F*G)
        audio = mm(bd_pos, proll_scr[...])                                 # (G, N)

        out_ref[...] = audio.reshape(out_ref.shape)                        # lane-dense store

    return kernel


# ----------------------------- parameter construction ------------------------
def _make_linear_interp_matrix(in_size, out_size):
    # matches F.interpolate(mode='linear', align_corners=False)
    w = np.zeros((in_size, out_size), dtype=np.float32)
    scale = in_size / out_size
    for t in range(out_size):
        src = max((t + 0.5) * scale - 0.5, 0.0)
        i0 = min(int(math.floor(src)), in_size - 1)
        i1 = min(i0 + 1, in_size - 1)
        frac = src - i0
        w[i0, t] += 1.0 - frac
        w[i1, t] += frac
    return w


def _fold_upsample_conv(w, b, t_in):
    """Fold (nearest x2 upsample -> Conv1d k=3 pad=1) into a dense matrix acting
    on the flattened (Cin, t_in) hidden state.
    Returns M: (Cin*t_in, Cout*t_out), bias: (1, Cout*t_out)."""
    w = np.asarray(w, np.float32)
    b = np.asarray(b, np.float32)
    cout, cin, _ = w.shape
    t_out = 2 * t_in
    M = np.zeros((cin * t_in, cout * t_out), np.float32)
    cidx = np.arange(cin) * t_in
    for o in range(cout):
        for s in range(t_out):
            for dk in range(3):
                u = s + dk - 1
                if 0 <= u < t_out:
                    M[cidx + (u // 2), o * t_out + s] += w[o, :, dk]
    bias = np.repeat(b, t_out)[None, :]
    return jnp.asarray(M), jnp.asarray(bias)


def init_params(key):
    ks = iter(jax.random.split(key, 64))

    def lin(fi, fo):
        w = jax.random.normal(next(ks), (fi, fo), jnp.float32) * (0.1 / math.sqrt(fi))
        return w, jnp.zeros((1, fo), jnp.float32)

    # TODO(synk): LinearOutputStack source not provided; modelled as
    # 3 x (Linear(d,d) + LeakyReLU) followed by Linear(d, out_ch).
    f0_h = [lin(MODEL_DIM, MODEL_DIM) for _ in range(3)]
    f0_wo, f0_bo = lin(MODEL_DIM, N_PITCHES)

    def upsample(out_ch):
        # TODO(synk): ConvUpsample source not provided; modelled as
        # Linear(d, d*start)+LeakyReLU then nearest x2 + Conv1d(k=3) per doubling;
        # mode='learned' (ConvTranspose, used for `loc`) approximated the same way.
        n_layers = int(math.log2(N_FRAMES // START_SIZE))
        assert n_layers == 1, "small config folds exactly one upsample+conv layer"
        lw, lb = lin(MODEL_DIM, MODEL_DIM * START_SIZE)
        cw = jax.random.normal(next(ks), (out_ch, MODEL_DIM, 3), jnp.float32) * (
            0.1 / math.sqrt(MODEL_DIM * 3))
        cb = jnp.zeros((out_ch,), jnp.float32)
        M, bias = _fold_upsample_conv(cw, cb, START_SIZE)
        return lw, lb, M, bias

    loc_lw, loc_lb, loc_cw, loc_cb = upsample(1)
    fv_lw, fv_lb, fv_cw, fv_cb = upsample(1)
    amp_lw, amp_lb, amp_cw, amp_cb = upsample(2 * N_HARMONICS)

    # fuse the four independent first-layer matmuls; 256-wide blocks first so
    # result slices land on 128-lane boundaries, narrow f0 slice last.
    wfused = jnp.concatenate([loc_lw, fv_lw, amp_lw, f0_h[0][0]], axis=1)   # (32, 800)
    bfused = jnp.concatenate([loc_lb, fv_lb, amp_lb, f0_h[0][1]], axis=1)   # (1, 800)
    f0_wh = jnp.stack([f0_h[1][0], f0_h[2][0]])                             # (2, 32, 32)
    f0_bh = jnp.stack([f0_h[1][1], f0_h[2][1]])                             # (2, 1, 32)

    # TODO(synk): MusicalScale source not provided; equal-tempered from A1=55 Hz.
    cf = (55.0 * 2.0 ** (jnp.arange(N_PITCHES, dtype=jnp.float32) / 12.0)
          / NYQUIST).reshape(1, N_PITCHES)

    winterp_np = _make_linear_interp_matrix(N_FRAMES, N_SAMPLES)
    winterp = jnp.asarray(winterp_np)                                        # (F, N)
    wcum = jnp.asarray(np.cumsum(winterp_np, axis=1))                        # cumsum-folded interp

    # order must match _make_kernel's weight-ref arguments
    return (wfused, bfused, f0_wh, f0_bh, f0_wo, f0_bo,
            loc_cw, loc_cb, fv_cw, fv_cb, amp_cw, amp_cb,
            cf, winterp, wcum)


def _structural_constants(G):
    """Static block-structure matrices for G atoms per grid step."""
    H, F, FL = N_HARMONICS, N_FRAMES, FILT_LEN
    HG, FLG, FG = H * G, FL * G, F * G

    # rep_h[h*G+g, g] = h+1 : replicates f0 frames per harmonic and scales by h+1
    rep_h = np.zeros((HG, G), np.float32)
    for h in range(H):
        rep_h[h * G:(h + 1) * G, :] = np.eye(G, dtype=np.float32) * float(h + 1)

    # hamm_rep[k, k*G:(k+1)*G] = hamming[k] (periodic window, matches torch default)
    n = np.arange(FL, dtype=np.float32)
    hamm = 0.54 - 0.46 * np.cos(2.0 * np.pi * n / FL)
    hamm_rep = np.zeros((FL, FLG), np.float32)
    for k in range(FL):
        hamm_rep[k, k * G:(k + 1) * G] = hamm[k]

    # band_mask[r, c] = 1 iff row r (atom r%G) reads its own atom's rolled noise
    band_mask = (np.arange(HG)[:, None] % G == np.arange(FLG)[None, :] % G
                 ).astype(np.float32)

    # pos_rep[j, j*G:(j+1)*G] = 1 ; pos_mask[g, c] = 1 iff c % G == g
    pos_rep = np.zeros((F, FG), np.float32)
    for j in range(F):
        pos_rep[j, j * G:(j + 1) * G] = 1.0
    pos_mask = (np.arange(G)[:, None] == np.arange(FG)[None, :] % G).astype(np.float32)

    return tuple(jnp.asarray(a) for a in (rep_h, hamm_rep, band_mask, pos_rep, pos_mask))


# ----------------------------- wrapper ---------------------------------------
def atoms_forward(x, noise, params, *, fold_batch=True):
    """x: (B, n_events, model_dim); noise: (B, n_events, n_samples) fresh per call
    (the original samples uniform(-1, 1) noise inside forward()).
    Returns (B, n_events, n_samples).

    fold_batch=True  : one grid step over all B*n_events atoms (best on single-
                       TensorCore v5e / v6e).
    fold_batch=False : grid=(B,) with 'parallel' semantics so v7x megacore can
                       shard batch steps across its two TensorCores."""
    B = x.shape[0]
    G = B * N_EVENTS if fold_batch else N_EVENTS
    struct = _structural_constants(G)
    inputs = (x, noise) + tuple(params) + struct

    if fold_batch:
        grid = (1,)

        def data_spec(last):
            return pl.BlockSpec((B, N_EVENTS, last), lambda b: (0, 0, 0))
        dims = ("arbitrary",)
    else:
        grid = (B,)

        def data_spec(last):
            return pl.BlockSpec((1, N_EVENTS, last), lambda b: (b, 0, 0))
        dims = ("parallel",)

    def rep_spec(a):
        nd = a.ndim
        return pl.BlockSpec(a.shape, lambda b, _nd=nd: (0,) * _nd)

    in_specs = ([data_spec(MODEL_DIM), data_spec(N_SAMPLES)]
                + [rep_spec(a) for a in tuple(params) + struct])

    HG = N_HARMONICS * G
    scratch_shapes = [
        pltpu.VMEM((HG, N_SAMPLES), jnp.float32),              # harmonic oscillators
        pltpu.VMEM((2 * HG, N_SAMPLES), jnp.float32),          # interpolated amp envelopes
        pltpu.VMEM((HG, N_SAMPLES), jnp.float32),              # normalized noise bands
        pltpu.VMEM((HG, FILT_LEN * G), jnp.float32),           # band-masked FIR matrix
        pltpu.VMEM((FILT_LEN * G, N_SAMPLES), jnp.float32),    # rolled noise (FIR RHS)
        pltpu.VMEM((N_FRAMES * G, N_SAMPLES), jnp.float32),    # rolled mix (positioning RHS)
    ]

    return pl.pallas_call(
        _make_kernel(G),
        out_shape=jax.ShapeDtypeStruct((B, N_EVENTS, N_SAMPLES), jnp.float32),
        grid=grid,
        in_specs=in_specs,
        out_specs=data_spec(N_SAMPLES),
        scratch_shapes=scratch_shapes,
        compiler_params=pltpu.CompilerParams(dimension_semantics=dims),
    )(*inputs)


if __name__ == "__main__":
    key = jax.random.PRNGKey(0)
    kx, kp, kn = jax.random.split(key, 3)
    params = init_params(kp)
    x = jax.random.normal(kx, (BATCH, N_EVENTS, MODEL_DIM), jnp.float32)
    noise = jax.random.uniform(kn, (BATCH, N_EVENTS, N_SAMPLES), jnp.float32,
                               -1.0, 1.0)
    out = jax.jit(atoms_forward)(x, noise, params)
    jax.block_until_ready(out)
    assert out.shape == (BATCH, N_EVENTS, N_SAMPLES)
    assert bool(jnp.all(jnp.isfinite(out)))
    print("KERNEL_OK")
</pallas_src>

<mosaic_0001>
module attributes {stable_mosaic.version = 11 : i64} {
  func.func @kernel(%arg0: i32, %arg1: memref<2x8x32xf32, #tpu.memory_space<vmem>>, %arg2: memref<2x8x256xf32, #tpu.memory_space<vmem>>, %arg3: memref<32x800xf32, #tpu.memory_space<vmem>>, %arg4: memref<1x800xf32, #tpu.memory_space<vmem>>, %arg5: memref<2x32x32xf32, #tpu.memory_space<vmem>>, %arg6: memref<2x1x32xf32, #tpu.memory_space<vmem>>, %arg7: memref<32x16xf32, #tpu.memory_space<vmem>>, %arg8: memref<1x16xf32, #tpu.memory_space<vmem>>, %arg9: memref<256x16xf32, #tpu.memory_space<vmem>>, %arg10: memref<1x16xf32, #tpu.memory_space<vmem>>, %arg11: memref<256x16xf32, #tpu.memory_space<vmem>>, %arg12: memref<1x16xf32, #tpu.memory_space<vmem>>, %arg13: memref<256x256xf32, #tpu.memory_space<vmem>>, %arg14: memref<1x256xf32, #tpu.memory_space<vmem>>, %arg15: memref<1x16xf32, #tpu.memory_space<vmem>>, %arg16: memref<16x256xf32, #tpu.memory_space<vmem>>, %arg17: memref<16x256xf32, #tpu.memory_space<vmem>>, %arg18: memref<128x16xf32, #tpu.memory_space<vmem>>, %arg19: memref<32x512xf32, #tpu.memory_space<vmem>>, %arg20: memref<128x512xf32, #tpu.memory_space<vmem>>, %arg21: memref<16x256xf32, #tpu.memory_space<vmem>>, %arg22: memref<16x256xf32, #tpu.memory_space<vmem>>, %arg23: memref<2x8x256xf32, #tpu.memory_space<vmem>>, %arg24: memref<128x256xf32, #tpu.memory_space<vmem>>, %arg25: memref<256x256xf32, #tpu.memory_space<vmem>>, %arg26: memref<128x256xf32, #tpu.memory_space<vmem>>, %arg27: memref<128x512xf32, #tpu.memory_space<vmem>>, %arg28: memref<512x256xf32, #tpu.memory_space<vmem>>, %arg29: memref<256x256xf32, #tpu.memory_space<vmem>>) attributes {dimension_semantics = [#tpu.dimension_semantics<arbitrary>], iteration_bounds = array<i64: 1>, scalar_prefetch = 0 : i64, scratch_operands = 6 : i64, tpu.core_type = #tpu.core_type<tc>, window_params = [{pipeline_mode = #tpu.pipeline_mode<synchronous>, transform_indices = @transform_0, window_bounds = array<i64: 2, 8, 32>}, {pipeline_mode = #tpu.pipeline_mode<synchronous>, transform_indices = @transform_1, window_bounds = array<i64: 2, 8, 256>}, {pipeline_mode = #tpu.pipeline_mode<synchronous>, transform_indices = @transform_2, window_bounds = array<i64: 32, 800>}, {pipeline_mode = #tpu.pipeline_mode<synchronous>, transform_indices = @transform_3, window_bounds = array<i64: 1, 800>}, {pipeline_mode = #tpu.pipeline_mode<synchronous>, transform_indices = @transform_4, window_bounds = array<i64: 2, 32, 32>}, {pipeline_mode = #tpu.pipeline_mode<synchronous>, transform_indices = @transform_5, window_bounds = array<i64: 2, 1, 32>}, {pipeline_mode = #tpu.pipeline_mode<synchronous>, transform_indices = @transform_6, window_bounds = array<i64: 32, 16>}, {pipeline_mode = #tpu.pipeline_mode<synchronous>, transform_indices = @transform_7, window_bounds = array<i64: 1, 16>}, {pipeline_mode = #tpu.pipeline_mode<synchronous>, transform_indices = @transform_8, window_bounds = array<i64: 256, 16>}, {pipeline_mode = #tpu.pipeline_mode<synchronous>, transform_indices = @transform_9, window_bounds = array<i64: 1, 16>}, {pipeline_mode = #tpu.pipeline_mode<synchronous>, transform_indices = @transform_10, window_bounds = array<i64: 256, 16>}, {pipeline_mode = #tpu.pipeline_mode<synchronous>, transform_indices = @transform_11, window_bounds = array<i64: 1, 16>}, {pipeline_mode = #tpu.pipeline_mode<synchronous>, transform_indices = @transform_12, window_bounds = array<i64: 256, 256>}, {pipeline_mode = #tpu.pipeline_mode<synchronous>, transform_indices = @transform_13, window_bounds = array<i64: 1, 256>}, {pipeline_mode = #tpu.pipeline_mode<synchronous>, transform_indices = @transform_14, window_bounds = array<i64: 1, 16>}, {pipeline_mode = #tpu.pipeline_mode<synchronous>, transform_indices = @transform_15, window_bounds = array<i64: 16, 256>}, {pipeline_mode = #tpu.pipeline_mode<synchronous>, transform_indices = @transform_16, window_bounds = array<i64: 16, 256>}, {pipeline_mode = #tpu.pipeline_mode<synchronous>, transform_indices = @transform_17, window_bounds = array<i64: 128, 16>}, {pipeline_mode = #tpu.pipeline_mode<synchronous>, transform_indices = @transform_18, window_bounds = array<i64: 32, 512>}, {pipeline_mode = #tpu.pipeline_mode<synchronous>, transform_indices = @transform_19, window_bounds = array<i64: 128, 512>}, {pipeline_mode = #tpu.pipeline_mode<synchronous>, transform_indices = @transform_20, window_bounds = array<i64: 16, 256>}, {pipeline_mode = #tpu.pipeline_mode<synchronous>, transform_indices = @transform_21, window_bounds = array<i64: 16, 256>}, {pipeline_mode = #tpu.pipeline_mode<synchronous>, transform_indices = @transform_22, window_bounds = array<i64: 2, 8, 256>}]} {
    %c0 = arith.constant 0 : index
    %c0_0 = arith.constant 0 : index
    %c0_1 = arith.constant 0 : index
    %0 = vector.load %arg1[%c0, %c0_0, %c0_1] : memref<2x8x32xf32, #tpu.memory_space<vmem>>, vector<2x8x32xf32>
    %1 = vector.shape_cast %0 : vector<2x8x32xf32> to vector<16x32xf32>
    %c0_2 = arith.constant 0 : index
    %c0_3 = arith.constant 0 : index
    %2 = vector.load %arg3[%c0_2, %c0_3] : memref<32x800xf32, #tpu.memory_space<vmem>>, vector<32x800xf32>
    %cst = arith.constant dense<0.000000e+00> : vector<16x800xf32>
    %3 = tpu.matmul %1, %2, %cst {dimension_numbers = #tpu.dot_dimension_numbers<[1], [0], [0], [1], [0, 0, 1, 1], [], []>} : vector<16x32xf32>, vector<32x800xf32>, vector<16x800xf32> -> vector<16x800xf32>
    %c0_4 = arith.constant 0 : index
    %c0_5 = arith.constant 0 : index
    %4 = vector.load %arg4[%c0_4, %c0_5] : memref<1x800xf32, #tpu.memory_space<vmem>>, vector<1x800xf32>
    %5 = vector.broadcast %4 : vector<1x800xf32> to vector<16x800xf32>
    %6 = arith.addf %3, %5 : vector<16x800xf32>
    %cst_6 = arith.constant 0.000000e+00 : f32
    %7 = vector.broadcast %cst_6 : f32 to vector<16x800xf32>
    %8 = arith.cmpf ogt, %6, %7 : vector<16x800xf32>
    %cst_7 = arith.constant 0.00999999977 : f32
    %9 = vector.broadcast %cst_7 : f32 to vector<16x800xf32>
    %10 = arith.mulf %9, %6 : vector<16x800xf32>
    %11 = arith.select %8, %6, %10 : vector<16x800xi1>, vector<16x800xf32>
    %12 = vector.extract_strided_slice %11 {offsets = [0, 0], sizes = [16, 256], strides = [1, 1]} : vector<16x800xf32> to vector<16x256xf32>
    %13 = vector.extract_strided_slice %11 {offsets = [0, 256], sizes = [16, 256], strides = [1, 1]} : vector<16x800xf32> to vector<16x256xf32>
    %14 = vector.extract_strided_slice %11 {offsets = [0, 512], sizes = [16, 256], strides = [1, 1]} : vector<16x800xf32> to vector<16x256xf32>
    %15 = vector.extract_strided_slice %11 {offsets = [0, 768], sizes = [16, 32], strides = [1, 1]} : vector<16x800xf32> to vector<16x32xf32>
    %c0_8 = arith.constant 0 : index
    %c0_9 = arith.constant 0 : index
    %c0_10 = arith.constant 0 : index
    %16 = vector.load %arg5[%c0_8, %c0_9, %c0_10] : memref<2x32x32xf32, #tpu.memory_space<vmem>>, vector<1x32x32xf32>
    %17 = vector.shape_cast %16 : vector<1x32x32xf32> to vector<32x32xf32>
    %cst_11 = arith.constant dense<0.000000e+00> : vector<16x32xf32>
    %18 = tpu.matmul %15, %17, %cst_11 {dimension_numbers = #tpu.dot_dimension_numbers<[1], [0], [0], [1], [0, 0, 1, 1], [], []>} : vector<16x32xf32>, vector<32x32xf32>, vector<16x32xf32> -> vector<16x32xf32>
    %c0_12 = arith.constant 0 : index
    %c0_13 = arith.constant 0 : index
    %c0_14 = arith.constant 0 : index
    %19 = vector.load %arg6[%c0_12, %c0_13, %c0_14] : memref<2x1x32xf32, #tpu.memory_space<vmem>>, vector<1x1x32xf32>
    %20 = vector.shape_cast %19 : vector<1x1x32xf32> to vector<1x32xf32>
    %21 = vector.broadcast %20 : vector<1x32xf32> to vector<16x32xf32>
    %22 = arith.addf %18, %21 : vector<16x32xf32>
    %cst_15 = arith.constant 0.000000e+00 : f32
    %23 = vector.broadcast %cst_15 : f32 to vector<16x32xf32>
    %24 = arith.cmpf ogt, %22, %23 : vector<16x32xf32>
    %cst_16 = arith.constant 0.00999999977 : f32
    %25 = vector.broadcast %cst_16 : f32 to vector<16x32xf32>
    %26 = arith.mulf %25, %22 : vector<16x32xf32>
    %27 = arith.select %24, %22, %26 : vector<16x32xi1>, vector<16x32xf32>
    %c1 = arith.constant 1 : index
    %c0_17 = arith.constant 0 : index
    %c0_18 = arith.constant 0 : index
    %28 = vector.load %arg5[%c1, %c0_17, %c0_18] : memref<2x32x32xf32, #tpu.memory_space<vmem>>, vector<1x32x32xf32>
    %29 = vector.shape_cast %28 : vector<1x32x32xf32> to vector<32x32xf32>
    %cst_19 = arith.constant dense<0.000000e+00> : vector<16x32xf32>
    %30 = tpu.matmul %27, %29, %cst_19 {dimension_numbers = #tpu.dot_dimension_numbers<[1], [0], [0], [1], [0, 0, 1, 1], [], []>} : vector<16x32xf32>, vector<32x32xf32>, vector<16x32xf32> -> vector<16x32xf32>
    %c1_20 = arith.constant 1 : index
    %c0_21 = arith.constant 0 : index
    %c0_22 = arith.constant 0 : index
    %31 = vector.load %arg6[%c1_20, %c0_21, %c0_22] : memref<2x1x32xf32, #tpu.memory_space<vmem>>, vector<1x1x32xf32>
    %32 = vector.shape_cast %31 : vector<1x1x32xf32> to vector<1x32xf32>
    %33 = vector.broadcast %32 : vector<1x32xf32> to vector<16x32xf32>
    %34 = arith.addf %30, %33 : vector<16x32xf32>
    %cst_23 = arith.constant 0.000000e+00 : f32
    %35 = vector.broadcast %cst_23 : f32 to vector<16x32xf32>
    %36 = arith.cmpf ogt, %34, %35 : vector<16x32xf32>
    %cst_24 = arith.constant 0.00999999977 : f32
    %37 = vector.broadcast %cst_24 : f32 to vector<16x32xf32>
    %38 = arith.mulf %37, %34 : vector<16x32xf32>
    %39 = arith.select %36, %34, %38 : vector<16x32xi1>, vector<16x32xf32>
    %c0_25 = arith.constant 0 : index
    %c0_26 = arith.constant 0 : index
    %40 = vector.load %arg7[%c0_25, %c0_26] : memref<32x16xf32, #tpu.memory_space<vmem>>, vector<32x16xf32>
    %cst_27 = arith.constant dense<0.000000e+00> : vector<16x16xf32>
    %41 = tpu.matmul %39, %40, %cst_27 {dimension_numbers = #tpu.dot_dimension_numbers<[1], [0], [0], [1], [0, 0, 1, 1], [], []>} : vector<16x32xf32>, vector<32x16xf32>, vector<16x16xf32> -> vector<16x16xf32>
    %c0_28 = arith.constant 0 : index
    %c0_29 = arith.constant 0 : index
    %42 = vector.load %arg8[%c0_28, %c0_29] : memref<1x16xf32, #tpu.memory_space<vmem>>, vector<1x16xf32>
    %43 = vector.broadcast %42 : vector<1x16xf32> to vector<16x16xf32>
    %44 = arith.addf %41, %43 : vector<16x16xf32>
    %cst_30 = arith.constant dense<0xFF800000> : vector<16xf32>
    %45 = vector.multi_reduction <maximumf>, %44, %cst_30 [1] : vector<16x16xf32> to vector<16xf32>
    %46 = vector.shape_cast %45 : vector<16xf32> to vector<16x1xf32>
    %47 = vector.broadcast %46 : vector<16x1xf32> to vector<16x16xf32>
    %48 = arith.subf %44, %47 : vector<16x16xf32>
    %49 = math.exp %48 : vector<16x16xf32>
    %cst_31 = arith.constant dense<0.000000e+00> : vector<16xf32>
    %50 = vector.multi_reduction <add>, %49, %cst_31 [1] : vector<16x16xf32> to vector<16xf32>
    %51 = vector.shape_cast %50 : vector<16xf32> to vector<16x1xf32>
    %52 = vector.broadcast %51 : vector<16x1xf32> to vector<16x16xf32>
    %53 = arith.divf %49, %52 : vector<16x16xf32>
    %cst_32 = arith.constant dense<0xFF800000> : vector<16xf32>
    %54 = vector.multi_reduction <maximumf>, %53, %cst_32 [1] : vector<16x16xf32> to vector<16xf32>
    %55 = vector.shape_cast %54 : vector<16xf32> to vector<16x1xf32>
    %56 = tpu.iota {dimensions = array<i32: 1>} : vector<16x16xi32>
    %57 = arith.sitofp %56 : vector<16x16xi32> to vector<16x16xf32>
    %58 = vector.broadcast %55 : vector<16x1xf32> to vector<16x16xf32>
    %59 = arith.cmpf oge, %53, %58 : vector<16x16xf32>
    %cst_33 = arith.constant 1.000000e+09 : f32
    %60 = vector.broadcast %cst_33 : f32 to vector<16x16xf32>
    %61 = arith.select %59, %57, %60 : vector<16x16xi1>, vector<16x16xf32>
    %cst_34 = arith.constant dense<0x7F800000> : vector<16xf32>
    %62 = vector.multi_reduction <minimumf>, %61, %cst_34 [1] : vector<16x16xf32> to vector<16xf32>
    %63 = vector.shape_cast %62 : vector<16xf32> to vector<16x1xf32>
    %64 = vector.broadcast %63 : vector<16x1xf32> to vector<16x16xf32>
    %65 = arith.cmpf oeq, %57, %64 : vector<16x16xf32>
    %cst_35 = arith.constant 0.000000e+00 : f32
    %66 = vector.shape_cast %55 : vector<16x1xf32> to vector<16x1xf32>
    %67 = vector.broadcast %66 : vector<16x1xf32> to vector<16x16xf32>
    %68 = vector.broadcast %cst_35 : f32 to vector<16x16xf32>
    %69 = arith.select %65, %67, %68 : vector<16x16xi1>, vector<16x16xf32>
    %c0_36 = arith.constant 0 : index
    %c0_37 = arith.constant 0 : index
    %70 = vector.load %arg15[%c0_36, %c0_37] : memref<1x16xf32, #tpu.memory_space<vmem>>, vector<1x16xf32>
    %71 = vector.broadcast %70 : vector<1x16xf32> to vector<16x16xf32>
    %72 = arith.mulf %69, %71 : vector<16x16xf32>
    %cst_38 = arith.constant dense<0.000000e+00> : vector<16xf32>
    %73 = vector.multi_reduction <add>, %72, %cst_38 [1] : vector<16x16xf32> to vector<16xf32>
    %74 = vector.shape_cast %73 : vector<16xf32> to vector<16x1xf32>
    %c0_39 = arith.constant 0 : index
    %c0_40 = arith.constant 0 : index
    %75 = vector.load %arg9[%c0_39, %c0_40] : memref<256x16xf32, #tpu.memory_space<vmem>>, vector<256x16xf32>
    %cst_41 = arith.constant dense<0.000000e+00> : vector<16x16xf32>
    %76 = tpu.matmul %12, %75, %cst_41 {dimension_numbers = #tpu.dot_dimension_numbers<[1], [0], [0], [1], [0, 0, 1, 1], [], []>} : vector<16x256xf32>, vector<256x16xf32>, vector<16x16xf32> -> vector<16x16xf32>
    %c0_42 = arith.constant 0 : index
    %c0_43 = arith.constant 0 : index
    %77 = vector.load %arg10[%c0_42, %c0_43] : memref<1x16xf32, #tpu.memory_space<vmem>>, vector<1x16xf32>
    %78 = vector.broadcast %77 : vector<1x16xf32> to vector<16x16xf32>
    %79 = arith.addf %76, %78 : vector<16x16xf32>
    %cst_44 = arith.constant 0.000000e+00 : f32
    %80 = vector.broadcast %cst_44 : f32 to vector<16x16xf32>
    %81 = arith.subf %80, %79 : vector<16x16xf32>
    %82 = math.exp %81 : vector<16x16xf32>
    %cst_45 = arith.constant 1.000000e+00 : f32
    %83 = vector.broadcast %cst_45 : f32 to vector<16x16xf32>
    %84 = arith.addf %83, %82 : vector<16x16xf32>
    %cst_46 = arith.constant 1.000000e+00 : f32
    %85 = vector.broadcast %cst_46 : f32 to vector<16x16xf32>
    %86 = arith.divf %85, %84 : vector<16x16xf32>
    %cst_47 = arith.constant dense<0xFF800000> : vector<16xf32>
    %87 = vector.multi_reduction <maximumf>, %86, %cst_47 [1] : vector<16x16xf32> to vector<16xf32>
    %88 = vector.shape_cast %87 : vector<16xf32> to vector<16x1xf32>
    %89 = vector.broadcast %88 : vector<16x1xf32> to vector<16x16xf32>
    %90 = arith.subf %86, %89 : vector<16x16xf32>
    %91 = math.exp %90 : vector<16x16xf32>
    %cst_48 = arith.constant dense<0.000000e+00> : vector<16xf32>
    %92 = vector.multi_reduction <add>, %91, %cst_48 [1] : vector<16x16xf32> to vector<16xf32>
    %93 = vector.shape_cast %92 : vector<16xf32> to vector<16x1xf32>
    %94 = vector.broadcast %93 : vector<16x1xf32> to vector<16x16xf32>
    %95 = arith.divf %91, %94 : vector<16x16xf32>
    %cst_49 = arith.constant dense<0xFF800000> : vector<16xf32>
    %96 = vector.multi_reduction <maximumf>, %95, %cst_49 [1] : vector<16x16xf32> to vector<16xf32>
    %97 = vector.shape_cast %96 : vector<16xf32> to vector<16x1xf32>
    %98 = tpu.iota {dimensions = array<i32: 1>} : vector<16x16xi32>
    %99 = arith.sitofp %98 : vector<16x16xi32> to vector<16x16xf32>
    %100 = vector.broadcast %97 : vector<16x1xf32> to vector<16x16xf32>
    %101 = arith.cmpf oge, %95, %100 : vector<16x16xf32>
    %cst_50 = arith.constant 1.000000e+09 : f32
    %102 = vector.broadcast %cst_50 : f32 to vector<16x16xf32>
    %103 = arith.select %101, %99, %102 : vector<16x16xi1>, vector<16x16xf32>
    %cst_51 = arith.constant dense<0x7F800000> : vector<16xf32>
    %104 = vector.multi_reduction <minimumf>, %103, %cst_51 [1] : vector<16x16xf32> to vector<16xf32>
    %105 = vector.shape_cast %104 : vector<16xf32> to vector<16x1xf32>
    %106 = vector.broadcast %105 : vector<16x1xf32> to vector<16x16xf32>
    %107 = arith.cmpf oeq, %99, %106 : vector<16x16xf32>
    %cst_52 = arith.constant 0.000000e+00 : f32
    %108 = vector.shape_cast %97 : vector<16x1xf32> to vector<16x1xf32>
    %109 = vector.broadcast %108 : vector<16x1xf32> to vector<16x16xf32>
    %110 = vector.broadcast %cst_52 : f32 to vector<16x16xf32>
    %111 = arith.select %107, %109, %110 : vector<16x16xi1>, vector<16x16xf32>
    %c0_53 = arith.constant 0 : index
    %c0_54 = arith.constant 0 : index
    %112 = vector.load %arg11[%c0_53, %c0_54] : memref<256x16xf32, #tpu.memory_space<vmem>>, vector<256x16xf32>
    %cst_55 = arith.constant dense<0.000000e+00> : vector<16x16xf32>
    %113 = tpu.matmul %13, %112, %cst_55 {dimension_numbers = #tpu.dot_dimension_numbers<[1], [0], [0], [1], [0, 0, 1, 1], [], []>} : vector<16x256xf32>, vector<256x16xf32>, vector<16x16xf32> -> vector<16x16xf32>
    %c0_56 = arith.constant 0 : index
    %c0_57 = arith.constant 0 : index
    %114 = vector.load %arg12[%c0_56, %c0_57] : memref<1x16xf32, #tpu.memory_space<vmem>>, vector<1x16xf32>
    %115 = vector.broadcast %114 : vector<1x16xf32> to vector<16x16xf32>
    %116 = arith.addf %113, %115 : vector<16x16xf32>
    %cst_58 = arith.constant 0.000000e+00 : f32
    %117 = vector.broadcast %cst_58 : f32 to vector<16x16xf32>
    %118 = arith.subf %117, %116 : vector<16x16xf32>
    %119 = math.exp %118 : vector<16x16xf32>
    %cst_59 = arith.constant 1.000000e+00 : f32
    %120 = vector.broadcast %cst_59 : f32 to vector<16x16xf32>
    %121 = arith.addf %120, %119 : vector<16x16xf32>
    %cst_60 = arith.constant 1.000000e+00 : f32
    %122 = vector.broadcast %cst_60 : f32 to vector<16x16xf32>
    %123 = arith.divf %122, %121 : vector<16x16xf32>
    %cst_61 = arith.constant 2.000000e+00 : f32
    %124 = vector.broadcast %cst_61 : f32 to vector<16x16xf32>
    %125 = arith.mulf %123, %124 : vector<16x16xf32>
    %cst_62 = arith.constant 1.000000e+00 : f32
    %126 = vector.broadcast %cst_62 : f32 to vector<16x16xf32>
    %127 = arith.subf %125, %126 : vector<16x16xf32>
    %c0_63 = arith.constant 0 : index
    %c0_64 = arith.constant 0 : index
    %128 = vector.load %arg13[%c0_63, %c0_64] : memref<256x256xf32, #tpu.memory_space<vmem>>, vector<256x256xf32>
    %cst_65 = arith.constant dense<0.000000e+00> : vector<16x256xf32>
    %129 = tpu.matmul %14, %128, %cst_65 {dimension_numbers = #tpu.dot_dimension_numbers<[1], [0], [0], [1], [0, 0, 1, 1], [], []>} : vector<16x256xf32>, vector<256x256xf32>, vector<16x256xf32> -> vector<16x256xf32>
    %c0_66 = arith.constant 0 : index
    %c0_67 = arith.constant 0 : index
    %130 = vector.load %arg14[%c0_66, %c0_67] : memref<1x256xf32, #tpu.memory_space<vmem>>, vector<1x256xf32>
    %131 = vector.broadcast %130 : vector<1x256xf32> to vector<16x256xf32>
    %132 = arith.addf %129, %131 : vector<16x256xf32>
    %133 = arith.mulf %132, %132 : vector<16x256xf32>
    %134 = vector.shape_cast %133 : vector<16x256xf32> to vector<16x16x16xf32>
    %135 = tpu.transpose %134, [1, 0, 2] : vector<16x16x16xf32> -> vector<16x16x16xf32>
    %136 = vector.shape_cast %135 : vector<16x16x16xf32> to vector<256x16xf32>
    %c0_68 = arith.constant 0 : index
    %c0_69 = arith.constant 0 : index
    %137 = vector.load %arg16[%c0_68, %c0_69] : memref<16x256xf32, #tpu.memory_space<vmem>>, vector<16x256xf32>
    %cst_70 = arith.constant dense<0.000000e+00> : vector<256x256xf32>
    %138 = tpu.matmul %136, %137, %cst_70 {dimension_numbers = #tpu.dot_dimension_numbers<[1], [0], [0], [1], [0, 0, 1, 1], [], []>} : vector<256x16xf32>, vector<16x256xf32>, vector<256x256xf32> -> vector<256x256xf32>
    %c0_71 = arith.constant 0 : index
    %c0_72 = arith.constant 0 : index
    %139 = vector.load %arg25[%c0_71, %c0_72] : memref<256x256xf32, #tpu.memory_space<vmem>>, vector<256x256xf32>
    tpu.vector_store %arg25[%c0_71, %c0_72], %138 {strides = array<i32>} : memref<256x256xf32, #tpu.memory_space<vmem>>, vector<256x256xf32>,
    %cst_73 = arith.constant 0.00999999977 : f32
    %140 = vector.broadcast %cst_73 : f32 to vector<16x1xf32>
    %141 = arith.mulf %74, %140 : vector<16x1xf32>
    %142 = vector.broadcast %141 : vector<16x1xf32> to vector<16x16xf32>
    %143 = arith.mulf %127, %142 : vector<16x16xf32>
    %144 = vector.broadcast %74 : vector<16x1xf32> to vector<16x16xf32>
    %145 = arith.addf %144, %143 : vector<16x16xf32>
    %c0_74 = arith.constant 0 : index
    %c0_75 = arith.constant 0 : index
    %146 = vector.load %arg18[%c0_74, %c0_75] : memref<128x16xf32, #tpu.memory_space<vmem>>, vector<128x16xf32>
    %cst_76 = arith.constant dense<0.000000e+00> : vector<128x16xf32>
    %147 = tpu.matmul %146, %145, %cst_76 {dimension_numbers = #tpu.dot_dimension_numbers<[1], [0], [0], [1], [0, 0, 1, 1], [], []>} : vector<128x16xf32>, vector<16x16xf32>, vector<128x16xf32> -> vector<128x16xf32>
    %cst_77 = arith.constant 1.000000e+00 : f32
    %148 = vector.broadcast %cst_77 : f32 to vector<128x16xf32>
    %149 = arith.cmpf ogt, %147, %148 : vector<128x16xf32>
    %cst_78 = arith.constant 0.000000e+00 : f32
    %150 = vector.broadcast %cst_78 : f32 to vector<128x16xf32>
    %151 = arith.select %149, %150, %147 : vector<128x16xi1>, vector<128x16xf32>
    %cst_79 = arith.constant 3.14159274 : f32
    %152 = vector.broadcast %cst_79 : f32 to vector<128x16xf32>
    %153 = arith.mulf %151, %152 : vector<128x16xf32>
    %c0_80 = arith.constant 0 : index
    %c0_81 = arith.constant 0 : index
    %154 = vector.load %arg17[%c0_80, %c0_81] : memref<16x256xf32, #tpu.memory_space<vmem>>, vector<16x256xf32>
    %cst_82 = arith.constant dense<0.000000e+00> : vector<128x256xf32>
    %155 = tpu.matmul %153, %154, %cst_82 {dimension_numbers = #tpu.dot_dimension_numbers<[1], [0], [0], [1], [0, 0, 1, 1], [], []>} : vector<128x16xf32>, vector<16x256xf32>, vector<128x256xf32> -> vector<128x256xf32>
    %156 = math.sin %155 : vector<128x256xf32>
    %c0_83 = arith.constant 0 : index
    %c0_84 = arith.constant 0 : index
    %157 = vector.load %arg24[%c0_83, %c0_84] : memref<128x256xf32, #tpu.memory_space<vmem>>, vector<128x256xf32>
    tpu.vector_store %arg24[%c0_83, %c0_84], %156 {strides = array<i32>} : memref<128x256xf32, #tpu.memory_space<vmem>>, vector<128x256xf32>,
    %c0_85 = arith.constant 0 : index
    %c0_86 = arith.constant 0 : index
    %c0_87 = arith.constant 0 : index
    %158 = vector.load %arg2[%c0_85, %c0_86, %c0_87] : memref<2x8x256xf32, #tpu.memory_space<vmem>>, vector<2x8x256xf32>
    %159 = vector.shape_cast %158 : vector<2x8x256xf32> to vector<16x256xf32>
    %c0_88 = arith.constant 0 : index
    %c0_89 = arith.constant 0 : index
    %160 = vector.load %arg28[%c0_88, %c0_89] : memref<512x256xf32, #tpu.memory_space<vmem>>, vector<16x256xf32>
    tpu.vector_store %arg28[%c0_88, %c0_89], %159 {strides = array<i32>} : memref<512x256xf32, #tpu.memory_space<vmem>>, vector<16x256xf32>,
    %c1_i32 = arith.constant 1 : i32
    %161 = tpu.dynamic_rotate %159 by %c1_i32 dim 1 : vector<16x256xf32>, i32 -> vector<16x256xf32>
    %c16 = arith.constant 16 : index
    %c0_90 = arith.constant 0 : index
    %162 = vector.load %arg28[%c16, %c0_90] : memref<512x256xf32, #tpu.memory_space<vmem>>, vector<16x256xf32>
    tpu.vector_store %arg28[%c16, %c0_90], %161 {strides = array<i32>} : memref<512x256xf32, #tpu.memory_space<vmem>>, vector<16x256xf32>,
    %c2_i32 = arith.constant 2 : i32
    %163 = tpu.dynamic_rotate %159 by %c2_i32 dim 1 : vector<16x256xf32>, i32 -> vector<16x256xf32>
    %c32 = arith.constant 32 : index
    %c0_91 = arith.constant 0 : index
    %164 = vector.load %arg28[%c32, %c0_91] : memref<512x256xf32, #tpu.memory_space<vmem>>, vector<16x256xf32>
    tpu.vector_store %arg28[%c32, %c0_91], %163 {strides = array<i32>} : memref<512x256xf32, #tpu.memory_space<vmem>>, vector<16x256xf32>,
    %c3_i32 = arith.constant 3 : i32
    %165 = tpu.dynamic_rotate %159 by %c3_i32 dim 1 : vector<16x256xf32>, i32 -> vector<16x256xf32>
    %c48 = arith.constant 48 : index
    %c0_92 = arith.constant 0 : index
    %166 = vector.load %arg28[%c48, %c0_92] : memref<512x256xf32, #tpu.memory_space<vmem>>, vector<16x256xf32>
    tpu.vector_store %arg28[%c48, %c0_92], %165 {strides = array<i32>} : memref<512x256xf32, #tpu.memory_space<vmem>>, vector<16x256xf32>,
    %c4_i32 = arith.constant 4 : i32
    %167 = tpu.dynamic_rotate %159 by %c4_i32 dim 1 : vector<16x256xf32>, i32 -> vector<16x256xf32>
    %c64 = arith.constant 64 : index
    %c0_93 = arith.constant 0 : index
    %168 = vector.load %arg28[%c64, %c0_93] : memref<512x256xf32, #tpu.memory_space<vmem>>, vector<16x256xf32>
    tpu.vector_store %arg28[%c64, %c0_93], %167 {strides = array<i32>} : memref<512x256xf32, #tpu.memory_space<vmem>>, vector<16x256xf32>,
    %c5_i32 = arith.constant 5 : i32
    %169 = tpu.dynamic_rotate %159 by %c5_i32 dim 1 : vector<16x256xf32>, i32 -> vector<16x256xf32>
    %c80 = arith.constant 80 : index
    %c0_94 = arith.constant 0 : index
    %170 = vector.load %arg28[%c80, %c0_94] : memref<512x256xf32, #tpu.memory_space<vmem>>, vector<16x256xf32>
    tpu.vector_store %arg28[%c80, %c0_94], %169 {strides = array<i32>} : memref<512x256xf32, #tpu.memory_space<vmem>>, vector<16x256xf32>,
    %c6_i32 = arith.constant 6 : i32
    %171 = tpu.dynamic_rotate %159 by %c6_i32 dim 1 : vector<16x256xf32>, i32 -> vector<16x256xf32>
    %c96 = arith.constant 96 : index
    %c0_95 = arith.constant 0 : index
    %172 = vector.load %arg28[%c96, %c0_95] : memref<512x256xf32, #tpu.memory_space<vmem>>, vector<16x256xf32>
    tpu.vector_store %arg28[%c96, %c0_95], %171 {strides = array<i32>} : memref<512x256xf32, #tpu.memory_space<vmem>>, vector<16x256xf32>,
    %c7_i32 = arith.constant 7 : i32
    %173 = tpu.dynamic_rotate %159 by %c7_i32 dim 1 : vector<16x256xf32>, i32 -> vector<16x256xf32>
    %c112 = arith.constant 112 : index
    %c0_96 = arith.constant 0 : index
    %174 = vector.load %arg28[%c112, %c0_96] : memref<512x256xf32, #tpu.memory_space<vmem>>, vector<16x256xf32>
    tpu.vector_store %arg28[%c112, %c0_96], %173 {strides = array<i32>} : memref<512x256xf32, #tpu.memory_space<vmem>>, vector<16x256xf32>,
    %c8_i32 = arith.constant 8 : i32
    %175 = tpu.dynamic_rotate %159 by %c8_i32 dim 1 : vector<16x256xf32>, i32 -> vector<16x256xf32>
    %c128 = arith.constant 128 : index
    %c0_97 = arith.constant 0 : index
    %176 = vector.load %arg28[%c128, %c0_97] : memref<512x256xf32, #tpu.memory_space<vmem>>, vector<16x256xf32>
    tpu.vector_store %arg28[%c128, %c0_97], %175 {strides = array<i32>} : memref<512x256xf32, #tpu.memory_space<vmem>>, vector<16x256xf32>,
    %c9_i32 = arith.constant 9 : i32
    %177 = tpu.dynamic_rotate %159 by %c9_i32 dim 1 : vector<16x256xf32>, i32 -> vector<16x256xf32>
    %c144 = arith.constant 144 : index
    %c0_98 = arith.constant 0 : index
    %178 = vector.load %arg28[%c144, %c0_98] : memref<512x256xf32, #tpu.memory_space<vmem>>, vector<16x256xf32>
    tpu.vector_store %arg28[%c144, %c0_98], %177 {strides = array<i32>} : memref<512x256xf32, #tpu.memory_space<vmem>>, vector<16x256xf32>,
    %c10_i32 = arith.constant 10 : i32
    %179 = tpu.dynamic_rotate %159 by %c10_i32 dim 1 : vector<16x256xf32>, i32 -> vector<16x256xf32>
    %c160 = arith.constant 160 : index
    %c0_99 = arith.constant 0 : index
    %180 = vector.load %arg28[%c160, %c0_99] : memref<512x256xf32, #tpu.memory_space<vmem>>, vector<16x256xf32>
    tpu.vector_store %arg28[%c160, %c0_99], %179 {strides = array<i32>} : memref<512x256xf32, #tpu.memory_space<vmem>>, vector<16x256xf32>,
    %c11_i32 = arith.constant 11 : i32
    %181 = tpu.dynamic_rotate %159 by %c11_i32 dim 1 : vector<16x256xf32>, i32 -> vector<16x256xf32>
    %c176 = arith.constant 176 : index
    %c0_100 = arith.constant 0 : index
    %182 = vector.load %arg28[%c176, %c0_100] : memref<512x256xf32, #tpu.memory_space<vmem>>, vector<16x256xf32>
    tpu.vector_store %arg28[%c176, %c0_100], %181 {strides = array<i32>} : memref<512x256xf32, #tpu.memory_space<vmem>>, vector<16x256xf32>,
    %c12_i32 = arith.constant 12 : i32
    %183 = tpu.dynamic_rotate %159 by %c12_i32 dim 1 : vector<16x256xf32>, i32 -> vector<16x256xf32>
    %c192 = arith.constant 192 : index
    %c0_101 = arith.constant 0 : index
    %184 = vector.load %arg28[%c192, %c0_101] : memref<512x256xf32, #tpu.memory_space<vmem>>, vector<16x256xf32>
    tpu.vector_store %arg28[%c192, %c0_101], %183 {strides = array<i32>} : memref<512x256xf32, #tpu.memory_space<vmem>>, vector<16x256xf32>,
    %c13_i32 = arith.constant 13 : i32
    %185 = tpu.dynamic_rotate %159 by %c13_i32 dim 1 : vector<16x256xf32>, i32 -> vector<16x256xf32>
    %c208 = arith.constant 208 : index
    %c0_102 = arith.constant 0 : index
    %186 = vector.load %arg28[%c208, %c0_102] : memref<512x256xf32, #tpu.memory_space<vmem>>, vector<16x256xf32>
    tpu.vector_store %arg28[%c208, %c0_102], %185 {strides = array<i32>} : memref<512x256xf32, #tpu.memory_space<vmem>>, vector<16x256xf32>,
    %c14_i32 = arith.constant 14 : i32
    %187 = tpu.dynamic_rotate %159 by %c14_i32 dim 1 : vector<16x256xf32>, i32 -> vector<16x256xf32>
    %c224 = arith.constant 224 : index
    %c0_103 = arith.constant 0 : index
    %188 = vector.load %arg28[%c224, %c0_103] : memref<512x256xf32, #tpu.memory_space<vmem>>, vector<16x256xf32>
    tpu.vector_store %arg28[%c224, %c0_103], %187 {strides = array<i32>} : memref<512x256xf32, #tpu.memory_space<vmem>>, vector<16x256xf32>,
    %c15_i32 = arith.constant 15 : i32
    %189 = tpu.dynamic_rotate %159 by %c15_i32 dim 1 : vector<16x256xf32>, i32 -> vector<16x256xf32>
    %c240 = arith.constant 240 : index
    %c0_104 = arith.constant 0 : index
    %190 = vector.load %arg28[%c240, %c0_104] : memref<512x256xf32, #tpu.memory_space<vmem>>, vector<16x256xf32>
    tpu.vector_store %arg28[%c240, %c0_104], %189 {strides = array<i32>} : memref<512x256xf32, #tpu.memory_space<vmem>>, vector<16x256xf32>,
    %c16_i32 = arith.constant 16 : i32
    %191 = tpu.dynamic_rotate %159 by %c16_i32 dim 1 : vector<16x256xf32>, i32 -> vector<16x256xf32>
    %c256 = arith.constant 256 : index
    %c0_105 = arith.constant 0 : index
    %192 = vector.load %arg28[%c256, %c0_105] : memref<512x256xf32, #tpu.memory_space<vmem>>, vector<16x256xf32>
    tpu.vector_store %arg28[%c256, %c0_105], %191 {strides = array<i32>} : memref<512x256xf32, #tpu.memory_space<vmem>>, vector<16x256xf32>,
    %c17_i32 = arith.constant 17 : i32
    %193 = tpu.dynamic_rotate %159 by %c17_i32 dim 1 : vector<16x256xf32>, i32 -> vector<16x256xf32>
    %c272 = arith.constant 272 : index
    %c0_106 = arith.constant 0 : index
    %194 = vector.load %arg28[%c272, %c0_106] : memref<512x256xf32, #tpu.memory_space<vmem>>, vector<16x256xf32>
    tpu.vector_store %arg28[%c272, %c0_106], %193 {strides = array<i32>} : memref<512x256xf32, #tpu.memory_space<vmem>>, vector<16x256xf32>,
    %c18_i32 = arith.constant 18 : i32
    %195 = tpu.dynamic_rotate %159 by %c18_i32 dim 1 : vector<16x256xf32>, i32 -> vector<16x256xf32>
    %c288 = arith.constant 288 : index
    %c0_107 = arith.constant 0 : index
    %196 = vector.load %arg28[%c288, %c0_107] : memref<512x256xf32, #tpu.memory_space<vmem>>, vector<16x256xf32>
    tpu.vector_store %arg28[%c288, %c0_107], %195 {strides = array<i32>} : memref<512x256xf32, #tpu.memory_space<vmem>>, vector<16x256xf32>,
    %c19_i32 = arith.constant 19 : i32
    %197 = tpu.dynamic_rotate %159 by %c19_i32 dim 1 : vector<16x256xf32>, i32 -> vector<16x256xf32>
    %c304 = arith.constant 304 : index
    %c0_108 = arith.constant 0 : index
    %198 = vector.load %arg28[%c304, %c0_108] : memref<512x256xf32, #tpu.memory_space<vmem>>, vector<16x256xf32>
    tpu.vector_store %arg28[%c304, %c0_108], %197 {strides = array<i32>} : memref<512x256xf32, #tpu.memory_space<vmem>>, vector<16x256xf32>,
    %c20_i32 = arith.constant 20 : i32
    %199 = tpu.dynamic_rotate %159 by %c20_i32 dim 1 : vector<16x256xf32>, i32 -> vector<16x256xf32>
    %c320 = arith.constant 320 : index
    %c0_109 = arith.constant 0 : index
    %200 = vector.load %arg28[%c320, %c0_109] : memref<512x256xf32, #tpu.memory_space<vmem>>, vector<16x256xf32>
    tpu.vector_store %arg28[%c320, %c0_109], %199 {strides = array<i32>} : memref<512x256xf32, #tpu.memory_space<vmem>>, vector<16x256xf32>,
    %c21_i32 = arith.constant 21 : i32
    %201 = tpu.dynamic_rotate %159 by %c21_i32 dim 1 : vector<16x256xf32>, i32 -> vector<16x256xf32>
    %c336 = arith.constant 336 : index
    %c0_110 = arith.constant 0 : index
    %202 = vector.load %arg28[%c336, %c0_110] : memref<512x256xf32, #tpu.memory_space<vmem>>, vector<16x256xf32>
    tpu.vector_store %arg28[%c336, %c0_110], %201 {strides = array<i32>} : memref<512x256xf32, #tpu.memory_space<vmem>>, vector<16x256xf32>,
    %c22_i32 = arith.constant 22 : i32
    %203 = tpu.dynamic_rotate %159 by %c22_i32 dim 1 : vector<16x256xf32>, i32 -> vector<16x256xf32>
    %c352 = arith.constant 352 : index
    %c0_111 = arith.constant 0 : index
    %204 = vector.load %arg28[%c352, %c0_111] : memref<512x256xf32, #tpu.memory_space<vmem>>, vector<16x256xf32>
    tpu.vector_store %arg28[%c352, %c0_111], %203 {strides = array<i32>} : memref<512x256xf32, #tpu.memory_space<vmem>>, vector<16x256xf32>,
    %c23_i32 = arith.constant 23 : i32
    %205 = tpu.dynamic_rotate %159 by %c23_i32 dim 1 : vector<16x256xf32>, i32 -> vector<16x256xf32>
    %c368 = arith.constant 368 : index
    %c0_112 = arith.constant 0 : index
    %206 = vector.load %arg28[%c368, %c0_112] : memref<512x256xf32, #tpu.memory_space<vmem>>, vector<16x256xf32>
    tpu.vector_store %arg28[%c368, %c0_112], %205 {strides = array<i32>} : memref<512x256xf32, #tpu.memory_space<vmem>>, vector<16x256xf32>,
    %c24_i32 = arith.constant 24 : i32
    %207 = tpu.dynamic_rotate %159 by %c24_i32 dim 1 : vector<16x256xf32>, i32 -> vector<16x256xf32>
    %c384 = arith.constant 384 : index
    %c0_113 = arith.constant 0 : index
    %208 = vector.load %arg28[%c384, %c0_113] : memref<512x256xf32, #tpu.memory_space<vmem>>, vector<16x256xf32>
    tpu.vector_store %arg28[%c384, %c0_113], %207 {strides = array<i32>} : memref<512x256xf32, #tpu.memory_space<vmem>>, vector<16x256xf32>,
    %c25_i32 = arith.constant 25 : i32
    %209 = tpu.dynamic_rotate %159 by %c25_i32 dim 1 : vector<16x256xf32>, i32 -> vector<16x256xf32>
    %c400 = arith.constant 400 : index
    %c0_114 = arith.constant 0 : index
    %210 = vector.load %arg28[%c400, %c0_114] : memref<512x256xf32, #tpu.memory_space<vmem>>, vector<16x256xf32>
    tpu.vector_store %arg28[%c400, %c0_114], %209 {strides = array<i32>} : memref<512x256xf32, #tpu.memory_space<vmem>>, vector<16x256xf32>,
    %c26_i32 = arith.constant 26 : i32
    %211 = tpu.dynamic_rotate %159 by %c26_i32 dim 1 : vector<16x256xf32>, i32 -> vector<16x256xf32>
    %c416 = arith.constant 416 : index
    %c0_115 = arith.constant 0 : index
    %212 = vector.load %arg28[%c416, %c0_115] : memref<512x256xf32, #tpu.memory_space<vmem>>, vector<16x256xf32>
    tpu.vector_store %arg28[%c416, %c0_115], %211 {strides = array<i32>} : memref<512x256xf32, #tpu.memory_space<vmem>>, vector<16x256xf32>,
    %c27_i32 = arith.constant 27 : i32
    %213 = tpu.dynamic_rotate %159 by %c27_i32 dim 1 : vector<16x256xf32>, i32 -> vector<16x256xf32>
    %c432 = arith.constant 432 : index
    %c0_116 = arith.constant 0 : index
    %214 = vector.load %arg28[%c432, %c0_116] : memref<512x256xf32, #tpu.memory_space<vmem>>, vector<16x256xf32>
    tpu.vector_store %arg28[%c432, %c0_116], %213 {strides = array<i32>} : memref<512x256xf32, #tpu.memory_space<vmem>>, vector<16x256xf32>,
    %c28_i32 = arith.constant 28 : i32
    %215 = tpu.dynamic_rotate %159 by %c28_i32 dim 1 : vector<16x256xf32>, i32 -> vector<16x256xf32>
    %c448 = arith.constant 448 : index
    %c0_117 = arith.constant 0 : index
    %216 = vector.load %arg28[%c448, %c0_117] : memref<512x256xf32, #tpu.memory_space<vmem>>, vector<16x256xf32>
    tpu.vector_store %arg28[%c448, %c0_117], %215 {strides = array<i32>} : memref<512x256xf32, #tpu.memory_space<vmem>>, vector<16x256xf32>,
    %c29_i32 = arith.constant 29 : i32
    %217 = tpu.dynamic_rotate %159 by %c29_i32 dim 1 : vector<16x256xf32>, i32 -> vector<16x256xf32>
    %c464 = arith.constant 464 : index
    %c0_118 = arith.constant 0 : index
    %218 = vector.load %arg28[%c464, %c0_118] : memref<512x256xf32, #tpu.memory_space<vmem>>, vector<16x256xf32>
    tpu.vector_store %arg28[%c464, %c0_118], %217 {strides = array<i32>} : memref<512x256xf32, #tpu.memory_space<vmem>>, vector<16x256xf32>,
    %c30_i32 = arith.constant 30 : i32
    %219 = tpu.dynamic_rotate %159 by %c30_i32 dim 1 : vector<16x256xf32>, i32 -> vector<16x256xf32>
    %c480 = arith.constant 480 : index
    %c0_119 = arith.constant 0 : index
    %220 = vector.load %arg28[%c480, %c0_119] : memref<512x256xf32, #tpu.memory_space<vmem>>, vector<16x256xf32>
    tpu.vector_store %arg28[%c480, %c0_119], %219 {strides = array<i32>} : memref<512x256xf32, #tpu.memory_space<vmem>>, vector<16x256xf32>,
    %c31_i32 = arith.constant 31 : i32
    %221 = tpu.dynamic_rotate %159 by %c31_i32 dim 1 : vector<16x256xf32>, i32 -> vector<16x256xf32>
    %c496 = arith.constant 496 : index
    %c0_120 = arith.constant 0 : index
    %222 = vector.load %arg28[%c496, %c0_120] : memref<512x256xf32, #tpu.memory_space<vmem>>, vector<16x256xf32>
    tpu.vector_store %arg28[%c496, %c0_120], %221 {strides = array<i32>} : memref<512x256xf32, #tpu.memory_space<vmem>>, vector<16x256xf32>,
    %c0_121 = arith.constant 0 : index
    %c0_122 = arith.constant 0 : index
    %223 = vector.load %arg24[%c0_121, %c0_122] : memref<128x256xf32, #tpu.memory_space<vmem>>, vector<128x32xf32>
    %c0_123 = arith.constant 0 : index
    %c0_124 = arith.constant 0 : index
    %224 = vector.load %arg19[%c0_123, %c0_124] : memref<32x512xf32, #tpu.memory_space<vmem>>, vector<32x512xf32>
    %cst_125 = arith.constant dense<0.000000e+00> : vector<128x512xf32>
    %225 = tpu.matmul %223, %224, %cst_125 {dimension_numbers = #tpu.dot_dimension_numbers<[1], [0], [0], [1], [0, 0, 1, 1], [], []>} : vector<128x32xf32>, vector<32x512xf32>, vector<128x512xf32> -> vector<128x512xf32>
    %c0_126 = arith.constant 0 : index
    %c0_127 = arith.constant 0 : index
    %226 = vector.load %arg20[%c0_126, %c0_127] : memref<128x512xf32, #tpu.memory_space<vmem>>, vector<128x512xf32>
    %227 = arith.mulf %225, %226 : vector<128x512xf32>
    %c0_128 = arith.constant 0 : index
    %c0_129 = arith.constant 0 : index
    %228 = vector.load %arg27[%c0_128, %c0_129] : memref<128x512xf32, #tpu.memory_space<vmem>>, vector<128x512xf32>
    tpu.vector_store %arg27[%c0_128, %c0_129], %227 {strides = array<i32>} : memref<128x512xf32, #tpu.memory_space<vmem>>, vector<128x512xf32>,
    %c0_130 = arith.constant 0 : index
    %c0_131 = arith.constant 0 : index
    %229 = vector.load %arg27[%c0_130, %c0_131] : memref<128x512xf32, #tpu.memory_space<vmem>>, vector<128x512xf32>
    %c0_132 = arith.constant 0 : index
    %c0_133 = arith.constant 0 : index
    %230 = vector.load %arg28[%c0_132, %c0_133] : memref<512x256xf32, #tpu.memory_space<vmem>>, vector<512x256xf32>
    %cst_134 = arith.constant dense<0.000000e+00> : vector<128x256xf32>
    %231 = tpu.matmul %229, %230, %cst_134 {dimension_numbers = #tpu.dot_dimension_numbers<[1], [0], [0], [1], [0, 0, 1, 1], [], []>} : vector<128x512xf32>, vector<512x256xf32>, vector<128x256xf32> -> vector<128x256xf32>
    %232 = math.absf %231 : vector<128x256xf32>
    %cst_135 = arith.constant dense<0xFF800000> : vector<128xf32>
    %233 = vector.multi_reduction <maximumf>, %232, %cst_135 [1] : vector<128x256xf32> to vector<128xf32>
    %234 = vector.shape_cast %233 : vector<128xf32> to vector<128x1xf32>
    %cst_136 = arith.constant 9.99999993E-9 : f32
    %235 = vector.broadcast %cst_136 : f32 to vector<128x1xf32>
    %236 = arith.addf %234, %235 : vector<128x1xf32>
    %237 = tpu.reciprocal %236 {approx = true} : vector<128x1xf32> -> vector<128x1xf32>
    %238 = vector.broadcast %237 : vector<128x1xf32> to vector<128x256xf32>
    %239 = arith.mulf %231, %238 : vector<128x256xf32>
    %c0_137 = arith.constant 0 : index
    %c0_138 = arith.constant 0 : index
    %240 = vector.load %arg26[%c0_137, %c0_138] : memref<128x256xf32, #tpu.memory_space<vmem>>, vector<128x256xf32>
    tpu.vector_store %arg26[%c0_137, %c0_138], %239 {strides = array<i32>} : memref<128x256xf32, #tpu.memory_space<vmem>>, vector<128x256xf32>,
    %cst_139 = arith.constant 0.000000e+00 : f32
    %241 = vector.broadcast %cst_139 : f32 to vector<16x256xf32>
    %c0_140 = arith.constant 0 : index
    %c0_141 = arith.constant 0 : index
    %242 = vector.load %arg24[%c0_140, %c0_141] : memref<128x256xf32, #tpu.memory_space<vmem>>, vector<16x256xf32>
    %c0_142 = arith.constant 0 : index
    %c0_143 = arith.constant 0 : index
    %243 = vector.load %arg25[%c0_142, %c0_143] : memref<256x256xf32, #tpu.memory_space<vmem>>, vector<16x256xf32>
    %244 = arith.mulf %242, %243 : vector<16x256xf32>
    %245 = arith.addf %241, %244 : vector<16x256xf32>
    %c0_144 = arith.constant 0 : index
    %c0_145 = arith.constant 0 : index
    %246 = vector.load %arg26[%c0_144, %c0_145] : memref<128x256xf32, #tpu.memory_space<vmem>>, vector<16x256xf32>
    %c128_146 = arith.constant 128 : index
    %c0_147 = arith.constant 0 : index
    %247 = vector.load %arg25[%c128_146, %c0_147] : memref<256x256xf32, #tpu.memory_space<vmem>>, vector<16x256xf32>
    %248 = arith.mulf %246, %247 : vector<16x256xf32>
    %249 = arith.addf %245, %248 : vector<16x256xf32>
    %c16_148 = arith.constant 16 : index
    %c0_149 = arith.constant 0 : index
    %250 = vector.load %arg24[%c16_148, %c0_149] : memref<128x256xf32, #tpu.memory_space<vmem>>, vector<16x256xf32>
    %c16_150 = arith.constant 16 : index
    %c0_151 = arith.constant 0 : index
    %251 = vector.load %arg25[%c16_150, %c0_151] : memref<256x256xf32, #tpu.memory_space<vmem>>, vector<16x256xf32>
    %252 = arith.mulf %250, %251 : vector<16x256xf32>
    %253 = arith.addf %249, %252 : vector<16x256xf32>
    %c16_152 = arith.constant 16 : index
    %c0_153 = arith.constant 0 : index
    %254 = vector.load %arg26[%c16_152, %c0_153] : memref<128x256xf32, #tpu.memory_space<vmem>>, vector<16x256xf32>
    %c144_154 = arith.constant 144 : index
    %c0_155 = arith.constant 0 : index
    %255 = vector.load %arg25[%c144_154, %c0_155] : memref<256x256xf32, #tpu.memory_space<vmem>>, vector<16x256xf32>
    %256 = arith.mulf %254, %255 : vector<16x256xf32>
    %257 = arith.addf %253, %256 : vector<16x256xf32>
    %c32_156 = arith.constant 32 : index
    %c0_157 = arith.constant 0 : index
    %258 = vector.load %arg24[%c32_156, %c0_157] : memref<128x256xf32, #tpu.memory_space<vmem>>, vector<16x256xf32>
    %c32_158 = arith.constant 32 : index
    %c0_159 = arith.constant 0 : index
    %259 = vector.load %arg25[%c32_158, %c0_159] : memref<256x256xf32, #tpu.memory_space<vmem>>, vector<16x256xf32>
    %260 = arith.mulf %258, %259 : vector<16x256xf32>
    %261 = arith.addf %257, %260 : vector<16x256xf32>
    %c32_160 = arith.constant 32 : index
    %c0_161 = arith.constant 0 : index
    %262 = vector.load %arg26[%c32_160, %c0_161] : memref<128x256xf32, #tpu.memory_space<vmem>>, vector<16x256xf32>
    %c160_162 = arith.constant 160 : index
    %c0_163 = arith.constant 0 : index
    %263 = vector.load %arg25[%c160_162, %c0_163] : memref<256x256xf32, #tpu.memory_space<vmem>>, vector<16x256xf32>
    %264 = arith.mulf %262, %263 : vector<16x256xf32>
    %265 = arith.addf %261, %264 : vector<16x256xf32>
    %c48_164 = arith.constant 48 : index
    %c0_165 = arith.constant 0 : index
    %266 = vector.load %arg24[%c48_164, %c0_165] : memref<128x256xf32, #tpu.memory_space<vmem>>, vector<16x256xf32>
    %c48_166 = arith.constant 48 : index
    %c0_167 = arith.constant 0 : index
    %267 = vector.load %arg25[%c48_166, %c0_167] : memref<256x256xf32, #tpu.memory_space<vmem>>, vector<16x256xf32>
    %268 = arith.mulf %266, %267 : vector<16x256xf32>
    %269 = arith.addf %265, %268 : vector<16x256xf32>
    %c48_168 = arith.constant 48 : index
    %c0_169 = arith.constant 0 : index
    %270 = vector.load %arg26[%c48_168, %c0_169] : memref<128x256xf32, #tpu.memory_space<vmem>>, vector<16x256xf32>
    %c176_170 = arith.constant 176 : index
    %c0_171 = arith.constant 0 : index
    %271 = vector.load %arg25[%c176_170, %c0_171] : memref<256x256xf32, #tpu.memory_space<vmem>>, vector<16x256xf32>
    %272 = arith.mulf %270, %271 : vector<16x256xf32>
    %273 = arith.addf %269, %272 : vector<16x256xf32>
    %c64_172 = arith.constant 64 : index
    %c0_173 = arith.constant 0 : index
    %274 = vector.load %arg24[%c64_172, %c0_173] : memref<128x256xf32, #tpu.memory_space<vmem>>, vector<16x256xf32>
    %c64_174 = arith.constant 64 : index
    %c0_175 = arith.constant 0 : index
    %275 = vector.load %arg25[%c64_174, %c0_175] : memref<256x256xf32, #tpu.memory_space<vmem>>, vector<16x256xf32>
    %276 = arith.mulf %274, %275 : vector<16x256xf32>
    %277 = arith.addf %273, %276 : vector<16x256xf32>
    %c64_176 = arith.constant 64 : index
    %c0_177 = arith.constant 0 : index
    %278 = vector.load %arg26[%c64_176, %c0_177] : memref<128x256xf32, #tpu.memory_space<vmem>>, vector<16x256xf32>
    %c192_178 = arith.constant 192 : index
    %c0_179 = arith.constant 0 : index
    %279 = vector.load %arg25[%c192_178, %c0_179] : memref<256x256xf32, #tpu.memory_space<vmem>>, vector<16x256xf32>
    %280 = arith.mulf %278, %279 : vector<16x256xf32>
    %281 = arith.addf %277, %280 : vector<16x256xf32>
    %c80_180 = arith.constant 80 : index
    %c0_181 = arith.constant 0 : index
    %282 = vector.load %arg24[%c80_180, %c0_181] : memref<128x256xf32, #tpu.memory_space<vmem>>, vector<16x256xf32>
    %c80_182 = arith.constant 80 : index
    %c0_183 = arith.constant 0 : index
    %283 = vector.load %arg25[%c80_182, %c0_183] : memref<256x256xf32, #tpu.memory_space<vmem>>, vector<16x256xf32>
    %284 = arith.mulf %282, %283 : vector<16x256xf32>
    %285 = arith.addf %281, %284 : vector<16x256xf32>
    %c80_184 = arith.constant 80 : index
    %c0_185 = arith.constant 0 : index
    %286 = vector.load %arg26[%c80_184, %c0_185] : memref<128x256xf32, #tpu.memory_space<vmem>>, vector<16x256xf32>
    %c208_186 = arith.constant 208 : index
    %c0_187 = arith.constant 0 : index
    %287 = vector.load %arg25[%c208_186, %c0_187] : memref<256x256xf32, #tpu.memory_space<vmem>>, vector<16x256xf32>
    %288 = arith.mulf %286, %287 : vector<16x256xf32>
    %289 = arith.addf %285, %288 : vector<16x256xf32>
    %c96_188 = arith.constant 96 : index
    %c0_189 = arith.constant 0 : index
    %290 = vector.load %arg24[%c96_188, %c0_189] : memref<128x256xf32, #tpu.memory_space<vmem>>, vector<16x256xf32>
    %c96_190 = arith.constant 96 : index
    %c0_191 = arith.constant 0 : index
    %291 = vector.load %arg25[%c96_190, %c0_191] : memref<256x256xf32, #tpu.memory_space<vmem>>, vector<16x256xf32>
    %292 = arith.mulf %290, %291 : vector<16x256xf32>
    %293 = arith.addf %289, %292 : vector<16x256xf32>
    %c96_192 = arith.constant 96 : index
    %c0_193 = arith.constant 0 : index
    %294 = vector.load %arg26[%c96_192, %c0_193] : memref<128x256xf32, #tpu.memory_space<vmem>>, vector<16x256xf32>
    %c224_194 = arith.constant 224 : index
    %c0_195 = arith.constant 0 : index
    %295 = vector.load %arg25[%c224_194, %c0_195] : memref<256x256xf32, #tpu.memory_space<vmem>>, vector<16x256xf32>
    %296 = arith.mulf %294, %295 : vector<16x256xf32>
    %297 = arith.addf %293, %296 : vector<16x256xf32>
    %c112_196 = arith.constant 112 : index
    %c0_197 = arith.constant 0 : index
    %298 = vector.load %arg24[%c112_196, %c0_197] : memref<128x256xf32, #tpu.memory_space<vmem>>, vector<16x256xf32>
    %c112_198 = arith.constant 112 : index
    %c0_199 = arith.constant 0 : index
    %299 = vector.load %arg25[%c112_198, %c0_199] : memref<256x256xf32, #tpu.memory_space<vmem>>, vector<16x256xf32>
    %300 = arith.mulf %298, %299 : vector<16x256xf32>
    %301 = arith.addf %297, %300 : vector<16x256xf32>
    %c112_200 = arith.constant 112 : index
    %c0_201 = arith.constant 0 : index
    %302 = vector.load %arg26[%c112_200, %c0_201] : memref<128x256xf32, #tpu.memory_space<vmem>>, vector<16x256xf32>
    %c240_202 = arith.constant 240 : index
    %c0_203 = arith.constant 0 : index
    %303 = vector.load %arg25[%c240_202, %c0_203] : memref<256x256xf32, #tpu.memory_space<vmem>>, vector<16x256xf32>
    %304 = arith.mulf %302, %303 : vector<16x256xf32>
    %305 = arith.addf %301, %304 : vector<16x256xf32>
    %306 = tpu.iota {dimensions = array<i32: 1>} : vector<1x256xi32>
    %c0_204 = arith.constant 0 : index
    %c0_205 = arith.constant 0 : index
    %307 = vector.load %arg29[%c0_204, %c0_205] : memref<256x256xf32, #tpu.memory_space<vmem>>, vector<16x256xf32>
    tpu.vector_store %arg29[%c0_204, %c0_205], %305 {strides = array<i32>} : memref<256x256xf32, #tpu.memory_space<vmem>>, vector<16x256xf32>,
    %c16_i32_206 = arith.constant 16 : i32
    %308 = vector.broadcast %c16_i32_206 : i32 to vector<1x256xi32>
    %309 = arith.cmpi sge, %306, %308 : vector<1x256xi32>
    %c16_i32_207 = arith.constant 16 : i32
    %310 = tpu.dynamic_rotate %305 by %c16_i32_207 dim 1 : vector<16x256xf32>, i32 -> vector<16x256xf32>
    %cst_208 = arith.constant 0.000000e+00 : f32
    %311 = vector.shape_cast %309 : vector<1x256xi1> to vector<1x256xi1>
    %312 = vector.broadcast %311 : vector<1x256xi1> to vector<16x256xi1>
    %313 = vector.broadcast %cst_208 : f32 to vector<16x256xf32>
    %314 = arith.select %312, %310, %313 : vector<16x256xi1>, vector<16x256xf32>
    %c16_209 = arith.constant 16 : index
    %c0_210 = arith.constant 0 : index
    %315 = vector.load %arg29[%c16_209, %c0_210] : memref<256x256xf32, #tpu.memory_space<vmem>>, vector<16x256xf32>
    tpu.vector_store %arg29[%c16_209, %c0_210], %314 {strides = array<i32>} : memref<256x256xf32, #tpu.memory_space<vmem>>, vector<16x256xf32>,
    %c32_i32 = arith.constant 32 : i32
    %316 = vector.broadcast %c32_i32 : i32 to vector<1x256xi32>
    %317 = arith.cmpi sge, %306, %316 : vector<1x256xi32>
    %c32_i32_211 = arith.constant 32 : i32
    %318 = tpu.dynamic_rotate %305 by %c32_i32_211 dim 1 : vector<16x256xf32>, i32 -> vector<16x256xf32>
    %cst_212 = arith.constant 0.000000e+00 : f32
    %319 = vector.shape_cast %317 : vector<1x256xi1> to vector<1x256xi1>
    %320 = vector.broadcast %319 : vector<1x256xi1> to vector<16x256xi1>
    %321 = vector.broadcast %cst_212 : f32 to vector<16x256xf32>
    %322 = arith.select %320, %318, %321 : vector<16x256xi1>, vector<16x256xf32>
    %c32_213 = arith.constant 32 : index
    %c0_214 = arith.constant 0 : index
    %323 = vector.load %arg29[%c32_213, %c0_214] : memref<256x256xf32, #tpu.memory_space<vmem>>, vector<16x256xf32>
    tpu.vector_store %arg29[%c32_213, %c0_214], %322 {strides = array<i32>} : memref<256x256xf32, #tpu.memory_space<vmem>>, vector<16x256xf32>,
    %c48_i32 = arith.constant 48 : i32
    %324 = vector.broadcast %c48_i32 : i32 to vector<1x256xi32>
    %325 = arith.cmpi sge, %306, %324 : vector<1x256xi32>
    %c48_i32_215 = arith.constant 48 : i32
    %326 = tpu.dynamic_rotate %305 by %c48_i32_215 dim 1 : vector<16x256xf32>, i32 -> vector<16x256xf32>
    %cst_216 = arith.constant 0.000000e+00 : f32
    %327 = vector.shape_cast %325 : vector<1x256xi1> to vector<1x256xi1>
    %328 = vector.broadcast %327 : vector<1x256xi1> to vector<16x256xi1>
    %329 = vector.broadcast %cst_216 : f32 to vector<16x256xf32>
    %330 = arith.select %328, %326, %329 : vector<16x256xi1>, vector<16x256xf32>
    %c48_217 = arith.constant 48 : index
    %c0_218 = arith.constant 0 : index
    %331 = vector.load %arg29[%c48_217, %c0_218] : memref<256x256xf32, #tpu.memory_space<vmem>>, vector<16x256xf32>
    tpu.vector_store %arg29[%c48_217, %c0_218], %330 {strides = array<i32>} : memref<256x256xf32, #tpu.memory_space<vmem>>, vector<16x256xf32>,
    %c64_i32 = arith.constant 64 : i32
    %332 = vector.broadcast %c64_i32 : i32 to vector<1x256xi32>
    %333 = arith.cmpi sge, %306, %332 : vector<1x256xi32>
    %c64_i32_219 = arith.constant 64 : i32
    %334 = tpu.dynamic_rotate %305 by %c64_i32_219 dim 1 : vector<16x256xf32>, i32 -> vector<16x256xf32>
    %cst_220 = arith.constant 0.000000e+00 : f32
    %335 = vector.shape_cast %333 : vector<1x256xi1> to vector<1x256xi1>
    %336 = vector.broadcast %335 : vector<1x256xi1> to vector<16x256xi1>
    %337 = vector.broadcast %cst_220 : f32 to vector<16x256xf32>
    %338 = arith.select %336, %334, %337 : vector<16x256xi1>, vector<16x256xf32>
    %c64_221 = arith.constant 64 : index
    %c0_222 = arith.constant 0 : index
    %339 = vector.load %arg29[%c64_221, %c0_222] : memref<256x256xf32, #tpu.memory_space<vmem>>, vector<16x256xf32>
    tpu.vector_store %arg29[%c64_221, %c0_222], %338 {strides = array<i32>} : memref<256x256xf32, #tpu.memory_space<vmem>>, vector<16x256xf32>,
    %c80_i32 = arith.constant 80 : i32
    %340 = vector.broadcast %c80_i32 : i32 to vector<1x256xi32>
    %341 = arith.cmpi sge, %306, %340 : vector<1x256xi32>
    %c80_i32_223 = arith.constant 80 : i32
    %342 = tpu.dynamic_rotate %305 by %c80_i32_223 dim 1 : vector<16x256xf32>, i32 -> vector<16x256xf32>
    %cst_224 = arith.constant 0.000000e+00 : f32
    %343 = vector.shape_cast %341 : vector<1x256xi1> to vector<1x256xi1>
    %344 = vector.broadcast %343 : vector<1x256xi1> to vector<16x256xi1>
    %345 = vector.broadcast %cst_224 : f32 to vector<16x256xf32>
    %346 = arith.select %344, %342, %345 : vector<16x256xi1>, vector<16x256xf32>
    %c80_225 = arith.constant 80 : index
    %c0_226 = arith.constant 0 : index
    %347 = vector.load %arg29[%c80_225, %c0_226] : memref<256x256xf32, #tpu.memory_space<vmem>>, vector<16x256xf32>
    tpu.vector_store %arg29[%c80_225, %c0_226], %346 {strides = array<i32>} : memref<256x256xf32, #tpu.memory_space<vmem>>, vector<16x256xf32>,
    %c96_i32 = arith.constant 96 : i32
    %348 = vector.broadcast %c96_i32 : i32 to vector<1x256xi32>
    %349 = arith.cmpi sge, %306, %348 : vector<1x256xi32>
    %c96_i32_227 = arith.constant 96 : i32
    %350 = tpu.dynamic_rotate %305 by %c96_i32_227 dim 1 : vector<16x256xf32>, i32 -> vector<16x256xf32>
    %cst_228 = arith.constant 0.000000e+00 : f32
    %351 = vector.shape_cast %349 : vector<1x256xi1> to vector<1x256xi1>
    %352 = vector.broadcast %351 : vector<1x256xi1> to vector<16x256xi1>
    %353 = vector.broadcast %cst_228 : f32 to vector<16x256xf32>
    %354 = arith.select %352, %350, %353 : vector<16x256xi1>, vector<16x256xf32>
    %c96_229 = arith.constant 96 : index
    %c0_230 = arith.constant 0 : index
    %355 = vector.load %arg29[%c96_229, %c0_230] : memref<256x256xf32, #tpu.memory_space<vmem>>, vector<16x256xf32>
    tpu.vector_store %arg29[%c96_229, %c0_230], %354 {strides = array<i32>} : memref<256x256xf32, #tpu.memory_space<vmem>>, vector<16x256xf32>,
    %c112_i32 = arith.constant 112 : i32
    %356 = vector.broadcast %c112_i32 : i32 to vector<1x256xi32>
    %357 = arith.cmpi sge, %306, %356 : vector<1x256xi32>
    %c112_i32_231 = arith.constant 112 : i32
    %358 = tpu.dynamic_rotate %305 by %c112_i32_231 dim 1 : vector<16x256xf32>, i32 -> vector<16x256xf32>
    %cst_232 = arith.constant 0.000000e+00 : f32
    %359 = vector.shape_cast %357 : vector<1x256xi1> to vector<1x256xi1>
    %360 = vector.broadcast %359 : vector<1x256xi1> to vector<16x256xi1>
    %361 = vector.broadcast %cst_232 : f32 to vector<16x256xf32>
    %362 = arith.select %360, %358, %361 : vector<16x256xi1>, vector<16x256xf32>
    %c112_233 = arith.constant 112 : index
    %c0_234 = arith.constant 0 : index
    %363 = vector.load %arg29[%c112_233, %c0_234] : memref<256x256xf32, #tpu.memory_space<vmem>>, vector<16x256xf32>
    tpu.vector_store %arg29[%c112_233, %c0_234], %362 {strides = array<i32>} : memref<256x256xf32, #tpu.memory_space<vmem>>, vector<16x256xf32>,
    %c128_i32 = arith.constant 128 : i32
    %364 = vector.broadcast %c128_i32 : i32 to vector<1x256xi32>
    %365 = arith.cmpi sge, %306, %364 : vector<1x256xi32>
    %c128_i32_235 = arith.constant 128 : i32
    %366 = tpu.dynamic_rotate %305 by %c128_i32_235 dim 1 : vector<16x256xf32>, i32 -> vector<16x256xf32>
    %cst_236 = arith.constant 0.000000e+00 : f32
    %367 = vector.shape_cast %365 : vector<1x256xi1> to vector<1x256xi1>
    %368 = vector.broadcast %367 : vector<1x256xi1> to vector<16x256xi1>
    %369 = vector.broadcast %cst_236 : f32 to vector<16x256xf32>
    %370 = arith.select %368, %366, %369 : vector<16x256xi1>, vector<16x256xf32>
    %c128_237 = arith.constant 128 : index
    %c0_238 = arith.constant 0 : index
    %371 = vector.load %arg29[%c128_237, %c0_238] : memref<256x256xf32, #tpu.memory_space<vmem>>, vector<16x256xf32>
    tpu.vector_store %arg29[%c128_237, %c0_238], %370 {strides = array<i32>} : memref<256x256xf32, #tpu.memory_space<vmem>>, vector<16x256xf32>,
    %c144_i32 = arith.constant 144 : i32
    %372 = vector.broadcast %c144_i32 : i32 to vector<1x256xi32>
    %373 = arith.cmpi sge, %306, %372 : vector<1x256xi32>
    %c144_i32_239 = arith.constant 144 : i32
    %374 = tpu.dynamic_rotate %305 by %c144_i32_239 dim 1 : vector<16x256xf32>, i32 -> vector<16x256xf32>
    %cst_240 = arith.constant 0.000000e+00 : f32
    %375 = vector.shape_cast %373 : vector<1x256xi1> to vector<1x256xi1>
    %376 = vector.broadcast %375 : vector<1x256xi1> to vector<16x256xi1>
    %377 = vector.broadcast %cst_240 : f32 to vector<16x256xf32>
    %378 = arith.select %376, %374, %377 : vector<16x256xi1>, vector<16x256xf32>
    %c144_241 = arith.constant 144 : index
    %c0_242 = arith.constant 0 : index
    %379 = vector.load %arg29[%c144_241, %c0_242] : memref<256x256xf32, #tpu.memory_space<vmem>>, vector<16x256xf32>
    tpu.vector_store %arg29[%c144_241, %c0_242], %378 {strides = array<i32>} : memref<256x256xf32, #tpu.memory_space<vmem>>, vector<16x256xf32>,
    %c160_i32 = arith.constant 160 : i32
    %380 = vector.broadcast %c160_i32 : i32 to vector<1x256xi32>
    %381 = arith.cmpi sge, %306, %380 : vector<1x256xi32>
    %c160_i32_243 = arith.constant 160 : i32
    %382 = tpu.dynamic_rotate %305 by %c160_i32_243 dim 1 : vector<16x256xf32>, i32 -> vector<16x256xf32>
    %cst_244 = arith.constant 0.000000e+00 : f32
    %383 = vector.shape_cast %381 : vector<1x256xi1> to vector<1x256xi1>
    %384 = vector.broadcast %383 : vector<1x256xi1> to vector<16x256xi1>
    %385 = vector.broadcast %cst_244 : f32 to vector<16x256xf32>
    %386 = arith.select %384, %382, %385 : vector<16x256xi1>, vector<16x256xf32>
    %c160_245 = arith.constant 160 : index
    %c0_246 = arith.constant 0 : index
    %387 = vector.load %arg29[%c160_245, %c0_246] : memref<256x256xf32, #tpu.memory_space<vmem>>, vector<16x256xf32>
    tpu.vector_store %arg29[%c160_245, %c0_246], %386 {strides = array<i32>} : memref<256x256xf32, #tpu.memory_space<vmem>>, vector<16x256xf32>,
    %c176_i32 = arith.constant 176 : i32
    %388 = vector.broadcast %c176_i32 : i32 to vector<1x256xi32>
    %389 = arith.cmpi sge, %306, %388 : vector<1x256xi32>
    %c176_i32_247 = arith.constant 176 : i32
    %390 = tpu.dynamic_rotate %305 by %c176_i32_247 dim 1 : vector<16x256xf32>, i32 -> vector<16x256xf32>
    %cst_248 = arith.constant 0.000000e+00 : f32
    %391 = vector.shape_cast %389 : vector<1x256xi1> to vector<1x256xi1>
    %392 = vector.broadcast %391 : vector<1x256xi1> to vector<16x256xi1>
    %393 = vector.broadcast %cst_248 : f32 to vector<16x256xf32>
    %394 = arith.select %392, %390, %393 : vector<16x256xi1>, vector<16x256xf32>
    %c176_249 = arith.constant 176 : index
    %c0_250 = arith.constant 0 : index
    %395 = vector.load %arg29[%c176_249, %c0_250] : memref<256x256xf32, #tpu.memory_space<vmem>>, vector<16x256xf32>
    tpu.vector_store %arg29[%c176_249, %c0_250], %394 {strides = array<i32>} : memref<256x256xf32, #tpu.memory_space<vmem>>, vector<16x256xf32>,
    %c192_i32 = arith.constant 192 : i32
    %396 = vector.broadcast %c192_i32 : i32 to vector<1x256xi32>
    %397 = arith.cmpi sge, %306, %396 : vector<1x256xi32>
    %c192_i32_251 = arith.constant 192 : i32
    %398 = tpu.dynamic_rotate %305 by %c192_i32_251 dim 1 : vector<16x256xf32>, i32 -> vector<16x256xf32>
    %cst_252 = arith.constant 0.000000e+00 : f32
    %399 = vector.shape_cast %397 : vector<1x256xi1> to vector<1x256xi1>
    %400 = vector.broadcast %399 : vector<1x256xi1> to vector<16x256xi1>
    %401 = vector.broadcast %cst_252 : f32 to vector<16x256xf32>
    %402 = arith.select %400, %398, %401 : vector<16x256xi1>, vector<16x256xf32>
    %c192_253 = arith.constant 192 : index
    %c0_254 = arith.constant 0 : index
    %403 = vector.load %arg29[%c192_253, %c0_254] : memref<256x256xf32, #tpu.memory_space<vmem>>, vector<16x256xf32>
    tpu.vector_store %arg29[%c192_253, %c0_254], %402 {strides = array<i32>} : memref<256x256xf32, #tpu.memory_space<vmem>>, vector<16x256xf32>,
    %c208_i32 = arith.constant 208 : i32
    %404 = vector.broadcast %c208_i32 : i32 to vector<1x256xi32>
    %405 = arith.cmpi sge, %306, %404 : vector<1x256xi32>
    %c208_i32_255 = arith.constant 208 : i32
    %406 = tpu.dynamic_rotate %305 by %c208_i32_255 dim 1 : vector<16x256xf32>, i32 -> vector<16x256xf32>
    %cst_256 = arith.constant 0.000000e+00 : f32
    %407 = vector.shape_cast %405 : vector<1x256xi1> to vector<1x256xi1>
    %408 = vector.broadcast %407 : vector<1x256xi1> to vector<16x256xi1>
    %409 = vector.broadcast %cst_256 : f32 to vector<16x256xf32>
    %410 = arith.select %408, %406, %409 : vector<16x256xi1>, vector<16x256xf32>
    %c208_257 = arith.constant 208 : index
    %c0_258 = arith.constant 0 : index
    %411 = vector.load %arg29[%c208_257, %c0_258] : memref<256x256xf32, #tpu.memory_space<vmem>>, vector<16x256xf32>
    tpu.vector_store %arg29[%c208_257, %c0_258], %410 {strides = array<i32>} : memref<256x256xf32, #tpu.memory_space<vmem>>, vector<16x256xf32>,
    %c224_i32 = arith.constant 224 : i32
    %412 = vector.broadcast %c224_i32 : i32 to vector<1x256xi32>
    %413 = arith.cmpi sge, %306, %412 : vector<1x256xi32>
    %c224_i32_259 = arith.constant 224 : i32
    %414 = tpu.dynamic_rotate %305 by %c224_i32_259 dim 1 : vector<16x256xf32>, i32 -> vector<16x256xf32>
    %cst_260 = arith.constant 0.000000e+00 : f32
    %415 = vector.shape_cast %413 : vector<1x256xi1> to vector<1x256xi1>
    %416 = vector.broadcast %415 : vector<1x256xi1> to vector<16x256xi1>
    %417 = vector.broadcast %cst_260 : f32 to vector<16x256xf32>
    %418 = arith.select %416, %414, %417 : vector<16x256xi1>, vector<16x256xf32>
    %c224_261 = arith.constant 224 : index
    %c0_262 = arith.constant 0 : index
    %419 = vector.load %arg29[%c224_261, %c0_262] : memref<256x256xf32, #tpu.memory_space<vmem>>, vector<16x256xf32>
    tpu.vector_store %arg29[%c224_261, %c0_262], %418 {strides = array<i32>} : memref<256x256xf32, #tpu.memory_space<vmem>>, vector<16x256xf32>,
    %c240_i32 = arith.constant 240 : i32
    %420 = vector.broadcast %c240_i32 : i32 to vector<1x256xi32>
    %421 = arith.cmpi sge, %306, %420 : vector<1x256xi32>
    %c240_i32_263 = arith.constant 240 : i32
    %422 = tpu.dynamic_rotate %305 by %c240_i32_263 dim 1 : vector<16x256xf32>, i32 -> vector<16x256xf32>
    %cst_264 = arith.constant 0.000000e+00 : f32
    %423 = vector.shape_cast %421 : vector<1x256xi1> to vector<1x256xi1>
    %424 = vector.broadcast %423 : vector<1x256xi1> to vector<16x256xi1>
    %425 = vector.broadcast %cst_264 : f32 to vector<16x256xf32>
    %426 = arith.select %424, %422, %425 : vector<16x256xi1>, vector<16x256xf32>
    %c240_265 = arith.constant 240 : index
    %c0_266 = arith.constant 0 : index
    %427 = vector.load %arg29[%c240_265, %c0_266] : memref<256x256xf32, #tpu.memory_space<vmem>>, vector<16x256xf32>
    tpu.vector_store %arg29[%c240_265, %c0_266], %426 {strides = array<i32>} : memref<256x256xf32, #tpu.memory_space<vmem>>, vector<16x256xf32>,
    %c0_267 = arith.constant 0 : index
    %c0_268 = arith.constant 0 : index
    %428 = vector.load %arg21[%c0_267, %c0_268] : memref<16x256xf32, #tpu.memory_space<vmem>>, vector<16x256xf32>
    %cst_269 = arith.constant dense<0.000000e+00> : vector<16x256xf32>
    %429 = tpu.matmul %111, %428, %cst_269 {dimension_numbers = #tpu.dot_dimension_numbers<[1], [0], [0], [1], [0, 0, 1, 1], [], []>} : vector<16x16xf32>, vector<16x256xf32>, vector<16x256xf32> -> vector<16x256xf32>
    %c0_270 = arith.constant 0 : index
    %c0_271 = arith.constant 0 : index
    %430 = vector.load %arg22[%c0_270, %c0_271] : memref<16x256xf32, #tpu.memory_space<vmem>>, vector<16x256xf32>
    %431 = arith.mulf %429, %430 : vector<16x256xf32>
    %c0_272 = arith.constant 0 : index
    %c0_273 = arith.constant 0 : index
    %432 = vector.load %arg29[%c0_272, %c0_273] : memref<256x256xf32, #tpu.memory_space<vmem>>, vector<256x256xf32>
    %cst_274 = arith.constant dense<0.000000e+00> : vector<16x256xf32>
    %433 = tpu.matmul %431, %432, %cst_274 {dimension_numbers = #tpu.dot_dimension_numbers<[1], [0], [0], [1], [0, 0, 1, 1], [], []>} : vector<16x256xf32>, vector<256x256xf32>, vector<16x256xf32> -> vector<16x256xf32>
    %434 = vector.shape_cast %433 : vector<16x256xf32> to vector<2x8x256xf32>
    %c0_275 = arith.constant 0 : index
    %c0_276 = arith.constant 0 : index
    %c0_277 = arith.constant 0 : index
    %435 = vector.load %arg23[%c0_275, %c0_276, %c0_277] : memref<2x8x256xf32, #tpu.memory_space<vmem>>, vector<2x8x256xf32>
    tpu.vector_store %arg23[%c0_275, %c0_276, %c0_277], %434 {strides = array<i32>} : memref<2x8x256xf32, #tpu.memory_space<vmem>>, vector<2x8x256xf32>,
    return
  }
  func.func @transform_0(%arg0: i32) -> (i32, i32, i32) {
    %c0_i32 = arith.constant 0 : i32
    %c0_i32_0 = arith.constant 0 : i32
    %c0_i32_1 = arith.constant 0 : i32
    %c0_i32_2 = arith.constant 0 : i32
    return %c0_i32, %c0_i32_0, %c0_i32_1 : i32, i32, i32
  }
  func.func @transform_1(%arg0: i32) -> (i32, i32, i32) {
    %c0_i32 = arith.constant 0 : i32
    %c0_i32_0 = arith.constant 0 : i32
    %c0_i32_1 = arith.constant 0 : i32
    %c0_i32_2 = arith.constant 0 : i32
    return %c0_i32, %c0_i32_0, %c0_i32_1 : i32, i32, i32
  }
  func.func @transform_2(%arg0: i32) -> (i32, i32) {
    %c0_i32 = arith.constant 0 : i32
    %c0_i32_0 = arith.constant 0 : i32
    %c0_i32_1 = arith.constant 0 : i32
    return %c0_i32, %c0_i32_0 : i32, i32
  }
  func.func @transform_3(%arg0: i32) -> (i32, i32) {
    %c0_i32 = arith.constant 0 : i32
    %c0_i32_0 = arith.constant 0 : i32
    %c0_i32_1 = arith.constant 0 : i32
    return %c0_i32, %c0_i32_0 : i32, i32
  }
  func.func @transform_4(%arg0: i32) -> (i32, i32, i32) {
    %c0_i32 = arith.constant 0 : i32
    %c0_i32_0 = arith.constant 0 : i32
    %c0_i32_1 = arith.constant 0 : i32
    %c0_i32_2 = arith.constant 0 : i32
    return %c0_i32, %c0_i32_0, %c0_i32_1 : i32, i32, i32
  }
  func.func @transform_5(%arg0: i32) -> (i32, i32, i32) {
    %c0_i32 = arith.constant 0 : i32
    %c0_i32_0 = arith.constant 0 : i32
    %c0_i32_1 = arith.constant 0 : i32
    %c0_i32_2 = arith.constant 0 : i32
    return %c0_i32, %c0_i32_0, %c0_i32_1 : i32, i32, i32
  }
  func.func @transform_6(%arg0: i32) -> (i32, i32) {
    %c0_i32 = arith.constant 0 : i32
    %c0_i32_0 = arith.constant 0 : i32
    %c0_i32_1 = arith.constant 0 : i32
    return %c0_i32, %c0_i32_0 : i32, i32
  }
  func.func @transform_7(%arg0: i32) -> (i32, i32) {
    %c0_i32 = arith.constant 0 : i32
    %c0_i32_0 = arith.constant 0 : i32
    %c0_i32_1 = arith.constant 0 : i32
    return %c0_i32, %c0_i32_0 : i32, i32
  }
  func.func @transform_8(%arg0: i32) -> (i32, i32) {
    %c0_i32 = arith.constant 0 : i32
    %c0_i32_0 = arith.constant 0 : i32
    %c0_i32_1 = arith.constant 0 : i32
    return %c0_i32, %c0_i32_0 : i32, i32
  }
  func.func @transform_9(%arg0: i32) -> (i32, i32) {
    %c0_i32 = arith.constant 0 : i32
    %c0_i32_0 = arith.constant 0 : i32
    %c0_i32_1 = arith.constant 0 : i32
    return %c0_i32, %c0_i32_0 : i32, i32
  }
  func.func @transform_10(%arg0: i32) -> (i32, i32) {
    %c0_i32 = arith.constant 0 : i32
    %c0_i32_0 = arith.constant 0 : i32
    %c0_i32_1 = arith.constant 0 : i32
    return %c0_i32, %c0_i32_0 : i32, i32
  }
  func.func @transform_11(%arg0: i32) -> (i32, i32) {
    %c0_i32 = arith.constant 0 : i32
    %c0_i32_0 = arith.constant 0 : i32
    %c0_i32_1 = arith.constant 0 : i32
    return %c0_i32, %c0_i32_0 : i32, i32
  }
  func.func @transform_12(%arg0: i32) -> (i32, i32) {
    %c0_i32 = arith.constant 0 : i32
    %c0_i32_0 = arith.constant 0 : i32
    %c0_i32_1 = arith.constant 0 : i32
    return %c0_i32, %c0_i32_0 : i32, i32
  }
  func.func @transform_13(%arg0: i32) -> (i32, i32) {
    %c0_i32 = arith.constant 0 : i32
    %c0_i32_0 = arith.constant 0 : i32
    %c0_i32_1 = arith.constant 0 : i32
    return %c0_i32, %c0_i32_0 : i32, i32
  }
  func.func @transform_14(%arg0: i32) -> (i32, i32) {
    %c0_i32 = arith.constant 0 : i32
    %c0_i32_0 = arith.constant 0 : i32
    %c0_i32_1 = arith.constant 0 : i32
    return %c0_i32, %c0_i32_0 : i32, i32
  }
  func.func @transform_15(%arg0: i32) -> (i32, i32) {
    %c0_i32 = arith.constant 0 : i32
    %c0_i32_0 = arith.constant 0 : i32
    %c0_i32_1 = arith.constant 0 : i32
    return %c0_i32, %c0_i32_0 : i32, i32
  }
  func.func @transform_16(%arg0: i32) -> (i32, i32) {
    %c0_i32 = arith.constant 0 : i32
    %c0_i32_0 = arith.constant 0 : i32
    %c0_i32_1 = arith.constant 0 : i32
    return %c0_i32, %c0_i32_0 : i32, i32
  }
  func.func @transform_17(%arg0: i32) -> (i32, i32) {
    %c0_i32 = arith.constant 0 : i32
    %c0_i32_0 = arith.constant 0 : i32
    %c0_i32_1 = arith.constant 0 : i32
    return %c0_i32, %c0_i32_0 : i32, i32
  }
  func.func @transform_18(%arg0: i32) -> (i32, i32) {
    %c0_i32 = arith.constant 0 : i32
    %c0_i32_0 = arith.constant 0 : i32
    %c0_i32_1 = arith.constant 0 : i32
    return %c0_i32, %c0_i32_0 : i32, i32
  }
  func.func @transform_19(%arg0: i32) -> (i32, i32) {
    %c0_i32 = arith.constant 0 : i32
    %c0_i32_0 = arith.constant 0 : i32
    %c0_i32_1 = arith.constant 0 : i32
    return %c0_i32, %c0_i32_0 : i32, i32
  }
  func.func @transform_20(%arg0: i32) -> (i32, i32) {
    %c0_i32 = arith.constant 0 : i32
    %c0_i32_0 = arith.constant 0 : i32
    %c0_i32_1 = arith.constant 0 : i32
    return %c0_i32, %c0_i32_0 : i32, i32
  }
  func.func @transform_21(%arg0: i32) -> (i32, i32) {
    %c0_i32 = arith.constant 0 : i32
    %c0_i32_0 = arith.constant 0 : i32
    %c0_i32_1 = arith.constant 0 : i32
    return %c0_i32, %c0_i32_0 : i32, i32
  }
  func.func @transform_22(%arg0: i32) -> (i32, i32, i32) {
    %c0_i32 = arith.constant 0 : i32
    %c0_i32_0 = arith.constant 0 : i32
    %c0_i32_1 = arith.constant 0 : i32
    %c0_i32_2 = arith.constant 0 : i32
    return %c0_i32, %c0_i32_0, %c0_i32_1 : i32, i32, i32
  }
}

</mosaic_0001>

<llo_original>
// kernel: atoms_forward.1
$region0: #{atoms_forward.1}
  #allocation0 [shape = 'u32[]', space=smem, size = 0x4, offset = 0x4, fixed_abs, tag = 'smem constant byte address 0x4 - core index']
  #allocation1 [shape = 'u32[144,128]{1,0:T(1,128)}', space=vmem, size = 0x12000, scoped, tag = 'internal scratch']
  #allocation2 [shape = 'f32[128,256]{1,0:T(8,128)}', space=vmem, size = 0x20000, scoped, tag = 'scratch operand']
  #allocation3 [shape = 'f32[256,256]{1,0:T(8,128)}', space=vmem, size = 0x40000, scoped, tag = 'scratch operand']
  #allocation4 [shape = 'f32[128,256]{1,0:T(8,128)}', space=vmem, size = 0x20000, scoped, tag = 'scratch operand']
  #allocation5 [shape = 'f32[128,512]{1,0:T(8,128)}', space=vmem, size = 0x40000, scoped, tag = 'scratch operand']
  #allocation6 [shape = 'f32[512,256]{1,0:T(8,128)}', space=vmem, size = 0x80000, scoped, tag = 'scratch operand']
  #allocation7 [shape = 'f32[256,256]{1,0:T(8,128)}', space=vmem, size = 0x40000, scoped, tag = 'scratch operand']
  %s0 = inlined_call_operand.hbm [shape: f32[2,8,32], index: 0, kind: input, shape index: {}]
  %s1 = inlined_call_operand.hbm [shape: f32[2,8,256], index: 1, kind: input, shape index: {}]
  %s2 = inlined_call_operand.hbm [shape: f32[32,800], index: 2, kind: input, shape index: {}]
  %s3 = inlined_call_operand.hbm [shape: f32[1,800], index: 3, kind: input, shape index: {}]
  %s4 = inlined_call_operand.hbm [shape: f32[2,32,32], index: 4, kind: input, shape index: {}]
  %s5 = inlined_call_operand.vmem [shape: f32[2,1,32], index: 5, kind: input, shape index: {}]
  %s6 = inlined_call_operand.vmem [shape: f32[32,16], index: 6, kind: input, shape index: {}]
  %s7 = inlined_call_operand.vmem [shape: f32[1,16], index: 7, kind: input, shape index: {}]
  %s8 = inlined_call_operand.vmem [shape: f32[256,16], index: 8, kind: input, shape index: {}]
  %s9 = inlined_call_operand.hbm [shape: f32[1,16], index: 9, kind: input, shape index: {}]
  %s10 = inlined_call_operand.vmem [shape: f32[256,16], index: 10, kind: input, shape index: {}]
  %s11 = inlined_call_operand.hbm [shape: f32[1,16], index: 11, kind: input, shape index: {}]
  %s12 = inlined_call_operand.vmem [shape: f32[256,256], index: 12, kind: input, shape index: {}]
  %s13 = inlined_call_operand.vmem [shape: f32[1,256], index: 13, kind: input, shape index: {}]
  %s14 = inlined_call_operand.hbm [shape: f32[1,16], index: 14, kind: input, shape index: {}]
  %s15 = inlined_call_operand.vmem [shape: f32[16,256], index: 15, kind: input, shape index: {}]
  %s16 = inlined_call_operand.hbm [shape: f32[16,256], index: 16, kind: input, shape index: {}]
  %s17 = inlined_call_operand.hbm [shape: f32[128,16], index: 17, kind: input, shape index: {}]
  %s18 = inlined_call_operand.vmem [shape: f32[32,512], index: 18, kind: input, shape index: {}]
  %s19 = inlined_call_operand.hbm [shape: f32[128,512], index: 19, kind: input, shape index: {}]
  %s20 = inlined_call_operand.hbm [shape: f32[16,256], index: 20, kind: input, shape index: {}]
  %s21 = inlined_call_operand.hbm [shape: f32[16,256], index: 21, kind: input, shape index: {}]
  %s22 = inlined_call_operand.hbm [shape: f32[2,8,256], index: 22, kind: output, shape index: {}]
  %s23 = sld [smem:[#allocation0]]
  $region150: #{atoms_forward.1} parent=0
    _
  %s25 = ssub.s32 1, %s23
  %s26 = scalar_select 0, %s25, %s23
  $region1: #{atoms_forward.1} parent=0
    #allocation8 [shape = 'u8[8192]{0}', space=vmem, size = 0x2000, scoped, tag = 'input window, operand 0, single buffered']
    #allocation9 [shape = 's32[1]{0}', space=sflag, size = 0x4, scoped, tag = 'scoped memory for atoms_forward.1']
    #allocation10 [shape = 's32[1]{0}', space=sflag, size = 0x4, scoped, tag = 'scoped memory for atoms_forward.1']
    #allocation11 [shape = 'u8[16384]{0}', space=vmem, size = 0x4000, scoped, tag = 'input window, operand 1, single buffered']
    #allocation12 [shape = 's32[1]{0}', space=sflag, size = 0x4, scoped, tag = 'scoped memory for atoms_forward.1']
    #allocation13 [shape = 'u8[114688]{0}', space=vmem, size = 0x1c000, scoped, tag = 'input window, operand 2, single buffered']
    #allocation14 [shape = 'u8[3584]{0}', space=vmem, size = 0x1000, scoped, tag = 'input window, operand 3, single buffered']
    #allocation15 [shape = 's32[1]{0}', space=sflag, size = 0x4, scoped, tag = 'scoped memory for atoms_forward.1']
    #allocation16 [shape = 'u8[32768]{0}', space=vmem, size = 0x8000, scoped, tag = 'input window, operand 4, single buffered']
    #allocation17 [shape = 'u8[512]{0}', space=vmem, size = 0x400, scoped, tag = 'input window, operand 9, single buffered']
    #allocation18 [shape = 's32[1]{0}', space=sflag, size = 0x4, scoped, tag = 'scoped memory for atoms_forward.1']
    #allocation19 [shape = 'u8[512]{0}', space=vmem, size = 0x400, scoped, tag = 'input window, operand 11, single buffered']
    #allocation20 [shape = 'u8[512]{0}', space=vmem, size = 0x400, scoped, tag = 'input window, operand 14, single buffered']
    #allocation21 [shape = 's32[1]{0}', space=sflag, size = 0x4, scoped, tag = 'scoped memory for atoms_forward.1']
    #allocation22 [shape = 'u8[16384]{0}', space=vmem, size = 0x4000, scoped, tag = 'input window, operand 16, single buffered']
    #allocation23 [shape = 'u8[65536]{0}', space=vmem, size = 0x10000, scoped, tag = 'input window, operand 17, single buffered']
    #allocation24 [shape = 's32[1]{0}', space=sflag, size = 0x4, scoped, tag = 'scoped memory for atoms_forward.1']
    #allocation25 [shape = 'u8[262144]{0}', space=vmem, size = 0x40000, scoped, tag = 'input window, operand 19, single buffered']
    #allocation26 [shape = 'u8[16384]{0}', space=vmem, size = 0x4000, scoped, tag = 'input window, operand 20, single buffered']
    #allocation27 [shape = 's32[1]{0}', space=sflag, size = 0x4, scoped, tag = 'scoped memory for atoms_forward.1']
    #allocation28 [shape = 'u8[16384]{0}', space=vmem, size = 0x4000, scoped, tag = 'input window, operand 21, single buffered']
    #allocation29 [shape = 'u8[16384]{0}', space=vmem, size = 0x4000, scoped, tag = 'output window, operand 0, single buffered']
    %27 = vsyncpa [#allocation9], 0
    %28 = vsyncpa [#allocation12], 0
    %29 = vsyncpa [#allocation15], 0
    %30 = vsyncpa [#allocation18], 0
    %31 = vsyncpa [#allocation21], 0
    %32 = vsyncpa [#allocation24], 0
    %33 = vsyncpa [#allocation27], 0
    %34 = vsyncpa [#allocation10], 0
    // Predicated region
    $region2: #{atoms_forward.1} parent=1 // pred_check
      _
    $region3: #{atoms_forward.1} parent=1 // pred_check_branch
      %36 = sbr.rel (0) target = $region5
    $region4: #{atoms_forward.1} parent=1 // pred_region
      %s38 = ssub.s32 256, 256
      %39 = vsyncadd [#allocation9], %s38
      %s40 = sshll.u32 [#allocation8], 4
      %s41 = int_to_ptr.vmem [resolvable:$true] %s40
      %46 = dma.hbm_to_vmem [thread:$0]  %s0, 256, %s41, [#allocation9], 128, 128, 8
    $region5: #{atoms_forward.1} parent=1 // pred_fallthru
      _
    // Predicated region
    $region6: #{atoms_forward.1} parent=1 // pred_check
      _
    $region7: #{atoms_forward.1} parent=1 // pred_check_branch
      %48 = sbr.rel (0) target = $region9
    $region8: #{atoms_forward.1} parent=1 // pred_region
      %s50 = ssub.s32 512, 512
      %51 = vsyncadd [#allocation12], %s50
      %s52 = sshll.u32 [#allocation11], 4
      %s53 = int_to_ptr.vmem [resolvable:$true] %s52
      %58 = dma.hbm_to_vmem [thread:$0]  %s1, 512, %s53, [#allocation12], 256, 256, 16
    $region9: #{atoms_forward.1} parent=1 // pred_fallthru
      _
    // Predicated region
    $region10: #{atoms_forward.1} parent=1 // pred_check
      _
    $region11: #{atoms_forward.1} parent=1 // pred_check_branch
      %60 = sbr.rel (0) target = $region13
    $region12: #{atoms_forward.1} parent=1 // pred_region
      %s62 = ssub.s32 3584, 3584
      %63 = vsyncadd [#allocation12], %s62
      %s64 = sshll.u32 [#allocation13], 4
      %s65 = int_to_ptr.vmem [resolvable:$true] %s64
      %70 = dma.hbm_to_vmem [thread:$0]  %s2, 3584, %s65, [#allocation12], 896, 896, 56
    $region13: #{atoms_forward.1} parent=1 // pred_fallthru
      _
    // Predicated region
    $region14: #{atoms_forward.1} parent=1 // pred_check
      _
    $region15: #{atoms_forward.1} parent=1 // pred_check_branch
      %72 = sbr.rel (0) target = $region17
    $region16: #{atoms_forward.1} parent=1 // pred_region
      %s74 = ssub.s32 112, 112
      %75 = vsyncadd [#allocation15], %s74
      %s77 = sshll.u32 [#allocation14], 4
      %s78 = int_to_ptr.vmem [resolvable:$true] %s77
      %80 = dma.hbm_to_vmem [thread:$0]  %s3, 112, %s78, [#allocation15]
    $region17: #{atoms_forward.1} parent=1 // pred_fallthru
      _
    // Predicated region
    $region18: #{atoms_forward.1} parent=1 // pred_check
      _
    $region19: #{atoms_forward.1} parent=1 // pred_check_branch
      %82 = sbr.rel (0) target = $region21
    $region20: #{atoms_forward.1} parent=1 // pred_region
      %s84 = ssub.s32 1024, 1024
      %85 = vsyncadd [#allocation15], %s84
      %s86 = sshll.u32 [#allocation16], 4
      %s87 = int_to_ptr.vmem [resolvable:$true] %s86
      %92 = dma.hbm_to_vmem [thread:$0]  %s4, 1024, %s87, [#allocation15], 128, 128, 8
    $region21: #{atoms_forward.1} parent=1 // pred_fallthru
      _
    // Predicated region
    $region22: #{atoms_forward.1} parent=1 // pred_check
      _
    $region23: #{atoms_forward.1} parent=1 // pred_check_branch
      %94 = sbr.rel (0) target = $region25
    $region24: #{atoms_forward.1} parent=1 // pred_region
      _
    $region25: #{atoms_forward.1} parent=1 // pred_fallthru
      _
    // Predicated region
    $region26: #{atoms_forward.1} parent=1 // pred_check
      _
    $region27: #{atoms_forward.1} parent=1 // pred_check_branch
      %96 = sbr.rel (0) target = $region29
    $region28: #{atoms_forward.1} parent=1 // pred_region
      _
    $region29: #{atoms_forward.1} parent=1 // pred_fallthru
      _
    // Predicated region
    $region30: #{atoms_forward.1} parent=1 // pred_check
      _
    $region31: #{atoms_forward.1} parent=1 // pred_check_branch
      %98 = sbr.rel (0) target = $region33
    $region32: #{atoms_forward.1} parent=1 // pred_region
      _
    $region33: #{atoms_forward.1} parent=1 // pred_fallthru
      _
    // Predicated region
    $region34: #{atoms_forward.1} parent=1 // pred_check
      _
    $region35: #{atoms_forward.1} parent=1 // pred_check_branch
      %100 = sbr.rel (0) target = $region37
    $region36: #{atoms_forward.1} parent=1 // pred_region
      _
    $region37: #{atoms_forward.1} parent=1 // pred_fallthru
      _
    // Predicated region
    $region38: #{atoms_forward.1} parent=1 // pred_check
      _
    $region39: #{atoms_forward.1} parent=1 // pred_check_branch
      %102 = sbr.rel (0) target = $region41
    $region40: #{atoms_forward.1} parent=1 // pred_region
      %s104 = ssub.s32 16, 16
      %105 = vsyncadd [#allocation18], %s104
      %s107 = sshll.u32 [#allocation17], 4
      %s108 = int_to_ptr.vmem [resolvable:$true] %s107
      %110 = dma.hbm_to_vmem [thread:$0]  %s9, 16, %s108, [#allocation18]
    $region41: #{atoms_forward.1} parent=1 // pred_fallthru
      _
    // Predicated region
    $region42: #{atoms_forward.1} parent=1 // pred_check
      _
    $region43: #{atoms_forward.1} parent=1 // pred_check_branch
      %112 = sbr.rel (0) target = $region45
    $region44: #{atoms_forward.1} parent=1 // pred_region
      _
    $region45: #{atoms_forward.1} parent=1 // pred_fallthru
      _
    // Predicated region
    $region46: #{atoms_forward.1} parent=1 // pred_check
      _
    $region47: #{atoms_forward.1} parent=1 // pred_check_branch
      %114 = sbr.rel (0) target = $region49
    $region48: #{atoms_forward.1} parent=1 // pred_region
      %s116 = ssub.s32 16, 16
      %117 = vsyncadd [#allocation18], %s116
      %s119 = sshll.u32 [#allocation19], 4
      %s120 = int_to_ptr.vmem [resolvable:$true] %s119
      %122 = dma.hbm_to_vmem [thread:$0]  %s11, 16, %s120, [#allocation18]
    $region49: #{atoms_forward.1} parent=1 // pred_fallthru
      _
    // Predicated region
    $region50: #{atoms_forward.1} parent=1 // pred_check
      _
    $region51: #{atoms_forward.1} parent=1 // pred_check_branch
      %124 = sbr.rel (0) target = $region53
    $region52: #{atoms_forward.1} parent=1 // pred_region
      _
    $region53: #{atoms_forward.1} parent=1 // pred_fallthru
      _
    // Predicated region
    $region54: #{atoms_forward.1} parent=1 // pred_check
      _
    $region55: #{atoms_forward.1} parent=1 // pred_check_branch
      %126 = sbr.rel (0) target = $region57
    $region56: #{atoms_forward.1} parent=1 // pred_region
      _
    $region57: #{atoms_forward.1} parent=1 // pred_fallthru
      _
    // Predicated region
    $region58: #{atoms_forward.1} parent=1 // pred_check
      _
    $region59: #{atoms_forward.1} parent=1 // pred_check_branch
      %128 = sbr.rel (0) target = $region61
    $region60: #{atoms_forward.1} parent=1 // pred_region
      %s130 = ssub.s32 16, 16
      %131 = vsyncadd [#allocation21], %s130
      %s133 = sshll.u32 [#allocation20], 4
      %s134 = int_to_ptr.vmem [resolvable:$true] %s133
      %136 = dma.hbm_to_vmem [thread:$0]  %s14, 16, %s134, [#allocation21]
    $region61: #{atoms_forward.1} parent=1 // pred_fallthru
      _
    // Predicated region
    $region62: #{atoms_forward.1} parent=1 // pred_check
      _
    $region63: #{atoms_forward.1} parent=1 // pred_check_branch
      %138 = sbr.rel (0) target = $region65
    $region64: #{atoms_forward.1} parent=1 // pred_region
      _
    $region65: #{atoms_forward.1} parent=1 // pred_fallthru
      _
    // Predicated region
    $region66: #{atoms_forward.1} parent=1 // pred_check
      _
    $region67: #{atoms_forward.1} parent=1 // pred_check_branch
      %140 = sbr.rel (0) target = $region69
    $region68: #{atoms_forward.1} parent=1 // pred_region
      %s142 = ssub.s32 512, 512
      %143 = vsyncadd [#allocation21], %s142
      %s144 = sshll.u32 [#allocation22], 4
      %s145 = int_to_ptr.vmem [resolvable:$true] %s144
      %150 = dma.hbm_to_vmem [thread:$0]  %s16, 512, %s145, [#allocation21], 256, 256, 16
    $region69: #{atoms_forward.1} parent=1 // pred_fallthru
      _
    // Predicated region
    $region70: #{atoms_forward.1} parent=1 // pred_check
      _
    $region71: #{atoms_forward.1} parent=1 // pred_check_branch
      %152 = sbr.rel (0) target = $region73
    $region72: #{atoms_forward.1} parent=1 // pred_region
      %s154 = ssub.s32 2048, 2048
      %155 = vsyncadd [#allocation24], %s154
      %s156 = sshll.u32 [#allocation23], 4
      %s157 = int_to_ptr.vmem [resolvable:$true] %s156
      %162 = dma.hbm_to_vmem [thread:$0]  %s17, 2048, %s157, [#allocation24], 128, 128, 8
    $region73: #{atoms_forward.1} parent=1 // pred_fallthru
      _
    // Predicated region
    $region74: #{atoms_forward.1} parent=1 // pred_check
      _
    $region75: #{atoms_forward.1} parent=1 // pred_check_branch
      %164 = sbr.rel (0) target = $region77
    $region76: #{atoms_forward.1} parent=1 // pred_region
      _
    $region77: #{atoms_forward.1} parent=1 // pred_fallthru
      _
    // Predicated region
    $region78: #{atoms_forward.1} parent=1 // pred_check
      _
    $region79: #{atoms_forward.1} parent=1 // pred_check_branch
      %166 = sbr.rel (0) target = $region81
    $region80: #{atoms_forward.1} parent=1 // pred_region
      %s168 = ssub.s32 8192, 8192
      %169 = vsyncadd [#allocation24], %s168
      %s170 = sshll.u32 [#allocation25], 4
      %s171 = int_to_ptr.vmem [resolvable:$true] %s170
      %176 = dma.hbm_to_vmem [thread:$0]  %s19, 8192, %s171, [#allocation24], 512, 512, 32
    $region81: #{atoms_forward.1} parent=1 // pred_fallthru
      _
    // Predicated region
    $region82: #{atoms_forward.1} parent=1 // pred_check
      _
    $region83: #{atoms_forward.1} parent=1 // pred_check_branch
      %178 = sbr.rel (0) target = $region85
    $region84: #{atoms_forward.1} parent=1 // pred_region
      %s180 = ssub.s32 512, 512
      %181 = vsyncadd [#allocation27], %s180
      %s182 = sshll.u32 [#allocation26], 4
      %s183 = int_to_ptr.vmem [resolvable:$true] %s182
      %188 = dma.hbm_to_vmem [thread:$0]  %s20, 512, %s183, [#allocation27], 256, 256, 16
    $region85: #{atoms_forward.1} parent=1 // pred_fallthru
      _
    // Predicated region
    $region86: #{atoms_forward.1} parent=1 // pred_check
      _
    $region87: #{atoms_forward.1} parent=1 // pred_check_branch
      %190 = sbr.rel (0) target = $region89
    $region88: #{atoms_forward.1} parent=1 // pred_region
      %s192 = ssub.s32 512, 512
      %193 = vsyncadd [#allocation27], %s192
      %s194 = sshll.u32 [#allocation28], 4
      %s195 = int_to_ptr.vmem [resolvable:$true] %s194
      %200 = dma.hbm_to_vmem [thread:$0]  %s21, 512, %s195, [#allocation27], 256, 256, 16
    $region89: #{atoms_forward.1} parent=1 // pred_fallthru
      _
    // Predicated region
    $region90: #{atoms_forward.1} parent=1 // pred_check
      _
    $region91: #{atoms_forward.1} parent=1 // pred_check_branch
      %202 = sbr.rel (0) target = $region93
    $region92: #{atoms_forward.1} parent=1 // pred_region
      %203 = dma.done [#allocation9], 256
    $region93: #{atoms_forward.1} parent=1 // pred_fallthru
      _
    // Predicated region
    $region94: #{atoms_forward.1} parent=1 // pred_check
      _
    $region95: #{atoms_forward.1} parent=1 // pred_check_branch
      %205 = sbr.rel (0) target = $region97
    $region96: #{atoms_forward.1} parent=1 // pred_region
      %206 = dma.done [#allocation12], 512
    $region97: #{atoms_forward.1} parent=1 // pred_fallthru
      _
    // Predicated region
    $region98: #{atoms_forward.1} parent=1 // pred_check
      _
    $region99: #{atoms_forward.1} parent=1 // pred_check_branch
      %208 = sbr.rel (0) target = $region101
    $region100: #{atoms_forward.1} parent=1 // pred_region
      %209 = dma.done [#allocation12], 3584
    $region101: #{atoms_forward.1} parent=1 // pred_fallthru
      _
    // Predicated region
    $region102: #{atoms_forward.1} parent=1 // pred_check
      _
    $region103: #{atoms_forward.1} parent=1 // pred_check_branch
      %211 = sbr.rel (0) target = $region105
    $region104: #{atoms_forward.1} parent=1 // pred_region
      %212 = dma.done [#allocation15], 112
    $region105: #{atoms_forward.1} parent=1 // pred_fallthru
      _
    // Predicated region
    $region106: #{atoms_forward.1} parent=1 // pred_check
      _
    $region107: #{atoms_forward.1} parent=1 // pred_check_branch
      %214 = sbr.rel (0) target = $region109
    $region108: #{atoms_forward.1} parent=1 // pred_region
      %215 = dma.done [#allocation15], 1024
    $region109: #{atoms_forward.1} parent=1 // pred_fallthru
      _
    // Predicated region
    $region110: #{atoms_forward.1} parent=1 // pred_check
      _
    $region111: #{atoms_forward.1} parent=1 // pred_check_branch
      %217 = sbr.rel (0) target = $region113
    $region112: #{atoms_forward.1} parent=1 // pred_region
      %218 = dma.done [#allocation18], 16
    $region113: #{atoms_forward.1} parent=1 // pred_fallthru
      _
    // Predicated region
    $region114: #{atoms_forward.1} parent=1 // pred_check
      _
    $region115: #{atoms_forward.1} parent=1 // pred_check_branch
      %220 = sbr.rel (0) target = $region117
    $region116: #{atoms_forward.1} parent=1 // pred_region
      %221 = dma.done [#allocation18], 16
    $region117: #{atoms_forward.1} parent=1 // pred_fallthru
      _
    // Predicated region
    $region118: #{atoms_forward.1} parent=1 // pred_check
      _
    $region119: #{atoms_forward.1} parent=1 // pred_check_branch
      %223 = sbr.rel (0) target = $region121
    $region120: #{atoms_forward.1} parent=1 // pred_region
      %224 = dma.done [#allocation21], 16
    $region121: #{atoms_forward.1} parent=1 // pred_fallthru
      _
    // Predicated region
    $region122: #{atoms_forward.1} parent=1 // pred_check
      _
    $region123: #{atoms_forward.1} parent=1 // pred_check_branch
      %226 = sbr.rel (0) target = $region125
    $region124: #{atoms_forward.1} parent=1 // pred_region
      %227 = dma.done [#allocation21], 512
    $region125: #{atoms_forward.1} parent=1 // pred_fallthru
      _
    // Predicated region
    $region126: #{atoms_forward.1} parent=1 // pred_check
      _
    $region127: #{atoms_forward.1} parent=1 // pred_check_branch
      %229 = sbr.rel (0) target = $region129
    $region128: #{atoms_forward.1} parent=1 // pred_region
      %230 = dma.done [#allocation24], 2048
    $region129: #{atoms_forward.1} parent=1 // pred_fallthru
      _
    // Predicated region
    $region130: #{atoms_forward.1} parent=1 // pred_check
      _
    $region131: #{atoms_forward.1} parent=1 // pred_check_branch
      %232 = sbr.rel (0) target = $region133
    $region132: #{atoms_forward.1} parent=1 // pred_region
      %233 = dma.done [#allocation24], 8192
    $region133: #{atoms_forward.1} parent=1 // pred_fallthru
      _
    // Predicated region
    $region134: #{atoms_forward.1} parent=1 // pred_check
      _
    $region135: #{atoms_forward.1} parent=1 // pred_check_branch
      %235 = sbr.rel (0) target = $region137
    $region136: #{atoms_forward.1} parent=1 // pred_region
      %236 = dma.done [#allocation27], 512
    $region137: #{atoms_forward.1} parent=1 // pred_fallthru
      _
    // Predicated region
    $region138: #{atoms_forward.1} parent=1 // pred_check
      _
    $region139: #{atoms_forward.1} parent=1 // pred_check_branch
      %238 = sbr.rel (0) target = $region141
    $region140: #{atoms_forward.1} parent=1 // pred_region
      %239 = dma.done [#allocation27], 512
    $region141: #{atoms_forward.1} parent=1 // pred_fallthru
      _
    %v240 = vld [vmem:[#allocation8] sm:$0xff]
    %v241 = vld [vmem:[#allocation8 + $0x8] sm:$0xff]
    %v242 = vld [vmem:[#allocation13] sm:$0xff]
    %v243 = vld [vmem:[#allocation13 + $0x8] sm:$0xff]
    %v244 = vld [vmem:[#allocation13 + $0x10] sm:$0xff]
    %v245 = vld [vmem:[#allocation13 + $0x18] sm:$0xff]
    %v246 = vld [vmem:[#allocation13 + $0x20] sm:$0xff]
    %v247 = vld [vmem:[#allocation13 + $0x28] sm:$0xff]
    %v248 = vld [vmem:[#allocation13 + $0x30] sm:$0xff]
    %v249 = vld [vmem:[#allocation13 + $0x38] sm:$0xff]
    %v250 = vld [vmem:[#allocation13 + $0x40] sm:$0xff]
    %v251 = vld [vmem:[#allocation13 + $0x48] sm:$0xff]
    %v252 = vld [vmem:[#allocation13 + $0x50] sm:$0xff]
    %v253 = vld [vmem:[#allocation13 + $0x58] sm:$0xff]
    %v254 = vld [vmem:[#allocation13 + $0x60] sm:$0xff]
    %v255 = vld [vmem:[#allocation13 + $0x68] sm:$0xff]
    %v256 = vld [vmem:[#allocation13 + $0x70] sm:$0xff]
    %v257 = vld [vmem:[#allocation13 + $0x78] sm:$0xff]
    %v258 = vld [vmem:[#allocation13 + $0x80] sm:$0xff]
    %v259 = vld [vmem:[#allocation13 + $0x88] sm:$0xff]
    %v260 = vld [vmem:[#allocation13 + $0x90] sm:$0xff]
    %v261 = vld [vmem:[#allocation13 + $0x98] sm:$0xff]
    %v262 = vld [vmem:[#allocation13 + $0xa0] sm:$0xff]
    %v263 = vld [vmem:[#allocation13 + $0xa8] sm:$0xff]
    %v264 = vld [vmem:[#allocation13 + $0xb0] sm:$0xff]
    %v265 = vld [vmem:[#allocation13 + $0xb8] sm:$0xff]
    %v266 = vld [vmem:[#allocation13 + $0xc0] sm:$0xff]
    %v267 = vld [vmem:[#allocation13 + $0xc8] sm:$0xff]
    %v268 = vld [vmem:[#allocation13 + $0xd0] sm:$0xff]
    %v269 = vld [vmem:[#allocation13 + $0xd8] sm:$0xff]
    %v270 = vld [vmem:[#allocation14] sm:$0x7f]
    %v272 = vlaneseq
    %v273 = vshrl.u32 %v272, 7
    %v274 = vsub.s32 0, %v273
    %v275 = vrot.slane %v270, %v274
    %v276 = vlaneseq
    %v277 = vshrl.u32 %v276, 7
    %v278 = vsub.s32 1, %v277
    %v279 = vrot.slane %v270, %v278
    %v280 = vlaneseq
    %v281 = vshrl.u32 %v280, 7
    %v282 = vsub.s32 2, %v281
    %v283 = vrot.slane %v270, %v282
    %v284 = vlaneseq
    %v285 = vshrl.u32 %v284, 7
    %v286 = vsub.s32 3, %v285
    %v287 = vrot.slane %v270, %v286
    %v288 = vlaneseq
    %v289 = vshrl.u32 %v288, 7
    %v290 = vsub.s32 4, %v289
    %v291 = vrot.slane %v270, %v290
    %v292 = vlaneseq
    %v293 = vshrl.u32 %v292, 7
    %v294 = vsub.s32 5, %v293
    %v295 = vrot.slane %v270, %v294
    %v296 = vlaneseq
    %v297 = vshrl.u32 %v296, 7
    %v298 = vsub.s32 6, %v297
    %v299 = vrot.slane %v270, %v298
    %vm307 = vcmask 261120
    %v309 = vsel %vm307, %v240, 0
    %v312 = vsel %vm307, %v241, 0
    %314 = vmatprep.subr.mxu0 %v243
    %315 = vmatpush1.msra.mxu0 %v242
    %316 = vmatprep.subr.mxu0 %v250
    %317 = vmatpush1.msra.mxu0 %v249
    %318 = vmatprep.subr.mxu0 %v257
    %319 = vmatpush1.msra.mxu0 %v256
    %320 = vmatprep.subr.mxu0 %v264
    %321 = vmatpush1.msra.mxu0 %v263
    %322 = vmatprep.subr.mxu0 0.0
    %323 = vmatpush1.msra.mxu0 0.0
    %324 = vmatprep.subr.mxu0 0.0
    %325 = vmatpush1.msra.mxu0 0.0
    %326 = vmatprep.subr.mxu0 0.0
    %327 = vmatpush1.msra.mxu0 0.0
    %328 = vmatprep.subr.mxu0 0.0
    %329 = vmatpush1.msra.mxu0 0.0
    %330 = vmatprep.subr.mxu0 0.0
    %331 = vmatpush1.msra.mxu0 0.0
    %332 = vmatprep.subr.mxu0 0.0
    %333 = vmatpush1.msra.mxu0 0.0
    %334 = vmatprep.subr.mxu0 0.0
    %335 = vmatpush1.msra.mxu0 0.0
    %336 = vmatprep.subr.mxu0 0.0
    %337 = vmatpush1.msra.mxu0 0.0
    %338 = vmatprep.subr.mxu0 0.0
    %339 = vmatpush1.msra.mxu0 0.0
    %340 = vmatprep.subr.mxu0 0.0
    %341 = vmatpush1.msra.mxu0 0.0
    %342 = vmatprep.subr.mxu0 0.0
    %343 = vmatpush1.msra.mxu0 0.0
    %344 = vmatprep.subr.mxu0 0.0
    %345 = vmatpush1.msra.mxu0 0.0
    %346 = vmatprep.subr.mxu0 0.0
    %347 = vmatpush1.msra.mxu0 0.0
    %348 = vmatprep.subr.mxu0 0.0
    %349 = vmatpush1.msra.mxu0 0.0
    %350 = vmatprep.subr.mxu0 0.0
    %351 = vmatpush1.msra.mxu0 0.0
    %352 = vmatprep.subr.mxu0 0.0
    %353 = vmatpush1.msra.mxu0 0.0
    %354 = vmatprep.subr.mxu0 0.0
    %355 = vmatpush1.msra.mxu0 0.0
    %356 = vmatprep.subr.mxu0 0.0
    %357 = vmatpush1.msra.mxu0 0.0
    %358 = vmatprep.subr.mxu0 0.0
    %359 = vmatpush1.msra.mxu0 0.0
    %360 = vmatprep.subr.mxu0 0.0
    %361 = vmatpush1.msra.mxu0 0.0
    %362 = vmatprep.subr.mxu0 0.0
    %363 = vmatpush1.msra.mxu0 0.0
    %364 = vmatprep.subr.mxu0 0.0
    %365 = vmatpush1.msra.mxu0 0.0
    %366 = vmatprep.subr.mxu0 0.0
    %367 = vmatpush1.msra.mxu0 0.0
    %368 = vmatprep.subr.mxu0 0.0
    %369 = vmatpush1.msra.mxu0 0.0
    %370 = vmatprep.subr.mxu0 0.0
    %371 = vmatpush1.msra.mxu0 0.0
    %372 = vmatprep.subr.mxu0 0.0
    %373 = vmatpush1.msra.mxu0 0.0
    %374 = vmatprep.subr.mxu0 0.0
    %375 = vmatpush1.msra.mxu0 0.0
    %376 = vmatprep.subr.mxu0 0.0
    %377 = vmatpush1.msra.mxu0 0.0
    %378 = vmatprep.mubr.f32.mxu0 0.0
    %379 = vmatmul.mubr.f32.gmra.mrb[0].mxu0 %v309
    %v380 = vpop.f32.mrb[0].mxu0
    %v381 = vadd.f32 %v275, %v380
    %v382 = vpop.f32.mrb[0].mxu0
    %v383 = vadd.f32 %v279, %v382
    %384 = vmatprep.mubr.f32.mxu0 0.0
    %385 = vmatmul.mubr.f32.gmra.mrb[0].mxu0 %v312
    %v386 = vpop.f32.mrb[0].mxu0
    %v387 = vadd.f32 %v275, %v386
    %v388 = vpop.f32.mrb[0].mxu0
    %v389 = vadd.f32 %v279, %v388
    %390 = vdwg.mxu0
    %391 = vmatprep.subr.mxu0 %v245
    %392 = vmatpush1.msra.mxu0 %v244
    %393 = vmatprep.subr.mxu0 %v252
    %394 = vmatpush1.msra.mxu0 %v251
    %395 = vmatprep.subr.mxu0 %v259
    %396 = vmatpush1.msra.mxu0 %v258
    %397 = vmatprep.subr.mxu0 %v266
    %398 = vmatpush1.msra.mxu0 %v265
    %399 = vmatprep.subr.mxu0 0.0
    %400 = vmatpush1.msra.mxu0 0.0
    %401 = vmatprep.subr.mxu0 0.0
    %402 = vmatpush1.msra.mxu0 0.0
    %403 = vmatprep.subr.mxu0 0.0
    %404 = vmatpush1.msra.mxu0 0.0
    %405 = vmatprep.subr.mxu0 0.0
    %406 = vmatpush1.msra.mxu0 0.0
    %407 = vmatprep.subr.mxu0 0.0
    %408 = vmatpush1.msra.mxu0 0.0
    %409 = vmatprep.subr.mxu0 0.0
    %410 = vmatpush1.msra.mxu0 0.0
    %411 = vmatprep.subr.mxu0 0.0
    %412 = vmatpush1.msra.mxu0 0.0
    %413 = vmatprep.subr.mxu0 0.0
    %414 = vmatpush1.msra.mxu0 0.0
    %415 = vmatprep.subr.mxu0 0.0
    %416 = vmatpush1.msra.mxu0 0.0
    %417 = vmatprep.subr.mxu0 0.0
    %418 = vmatpush1.msra.mxu0 0.0
    %419 = vmatprep.subr.mxu0 0.0
    %420 = vmatpush1.msra.mxu0 0.0
    %421 = vmatprep.subr.mxu0 0.0
    %422 = vmatpush1.msra.mxu0 0.0
    %423 = vmatprep.subr.mxu0 0.0
    %424 = vmatpush1.msra.mxu0 0.0
    %425 = vmatprep.subr.mxu0 0.0
    %426 = vmatpush1.msra.mxu0 0.0
    %427 = vmatprep.subr.mxu0 0.0
    %428 = vmatpush1.msra.mxu0 0.0
    %429 = vmatprep.subr.mxu0 0.0
    %430 = vmatpush1.msra.mxu0 0.0
    %431 = vmatprep.subr.mxu0 0.0
    %432 = vmatpush1.msra.mxu0 0.0
    %433 = vmatprep.subr.mxu0 0.0
    %434 = vmatpush1.msra.mxu0 0.0
    %435 = vmatprep.subr.mxu0 0.0
    %436 = vmatpush1.msra.mxu0 0.0
    %437 = vmatprep.subr.mxu0 0.0
    %438 = vmatpush1.msra.mxu0 0.0
    %439 = vmatprep.subr.mxu0 0.0
    %440 = vmatpush1.msra.mxu0 0.0
    %441 = vmatprep.subr.mxu0 0.0
    %442 = vmatpush1.msra.mxu0 0.0
    %443 = vmatprep.subr.mxu0 0.0
    %444 = vmatpush1.msra.mxu0 0.0
    %445 = vmatprep.subr.mxu0 0.0
    %446 = vmatpush1.msra.mxu0 0.0
    %447 = vmatprep.subr.mxu0 0.0
    %448 = vmatpush1.msra.mxu0 0.0
    %449 = vmatprep.subr.mxu0 0.0
    %450 = vmatpush1.msra.mxu0 0.0
    %451 = vmatprep.subr.mxu0 0.0
    %452 = vmatpush1.msra.mxu0 0.0
    %453 = vmatprep.subr.mxu0 0.0
    %454 = vmatpush1.msra.mxu0 0.0
    %455 = vmatprep.mubr.f32.mxu0 0.0
    %456 = vmatmul.mubr.f32.gmra.mrb[0].mxu0 %v309
    %v457 = vpop.f32.mrb[0].mxu0
    %v458 = vadd.f32 %v283, %v457
    %v459 = vpop.f32.mrb[0].mxu0
    %v460 = vadd.f32 %v287, %v459
    %461 = vmatprep.mubr.f32.mxu0 0.0
    %462 = vmatmul.mubr.f32.gmra.mrb[0].mxu0 %v312
    %v463 = vpop.f32.mrb[0].mxu0
    %v464 = vadd.f32 %v283, %v463
    %v465 = vpop.f32.mrb[0].mxu0
    %v466 = vadd.f32 %v287, %v465
    %467 = vdwg.mxu0
    %468 = vmatprep.subr.mxu0 %v247
    %469 = vmatpush1.msra.mxu0 %v246
    %470 = vmatprep.subr.mxu0 %v254
    %471 = vmatpush1.msra.mxu0 %v253
    %472 = vmatprep.subr.mxu0 %v261
    %473 = vmatpush1.msra.mxu0 %v260
    %474 = vmatprep.subr.mxu0 %v268
    %475 = vmatpush1.msra.mxu0 %v267
    %476 = vmatprep.subr.mxu0 0.0
    %477 = vmatpush1.msra.mxu0 0.0
    %478 = vmatprep.subr.mxu0 0.0
    %479 = vmatpush1.msra.mxu0 0.0
    %480 = vmatprep.subr.mxu0 0.0
    %481 = vmatpush1.msra.mxu0 0.0
    %482 = vmatprep.subr.mxu0 0.0
    %483 = vmatpush1.msra.mxu0 0.0
    %484 = vmatprep.subr.mxu0 0.0
    %485 = vmatpush1.msra.mxu0 0.0
    %486 = vmatprep.subr.mxu0 0.0
    %487 = vmatpush1.msra.mxu0 0.0
    %488 = vmatprep.subr.mxu0 0.0
    %489 = vmatpush1.msra.mxu0 0.0
    %490 = vmatprep.subr.mxu0 0.0
    %491 = vmatpush1.msra.mxu0 0.0
    %492 = vmatprep.subr.mxu0 0.0
    %493 = vmatpush1.msra.mxu0 0.0
    %494 = vmatprep.subr.mxu0 0.0
    %495 = vmatpush1.msra.mxu0 0.0
    %496 = vmatprep.subr.mxu0 0.0
    %497 = vmatpush1.msra.mxu0 0.0
    %498 = vmatprep.subr.mxu0 0.0
    %499 = vmatpush1.msra.mxu0 0.0
    %500 = vmatprep.subr.mxu0 0.0
    %501 = vmatpush1.msra.mxu0 0.0
    %502 = vmatprep.subr.mxu0 0.0
    %503 = vmatpush1.msra.mxu0 0.0
    %504 = vmatprep.subr.mxu0 0.0
    %505 = vmatpush1.msra.mxu0 0.0
    %506 = vmatprep.subr.mxu0 0.0
    %507 = vmatpush1.msra.mxu0 0.0
    %508 = vmatprep.subr.mxu0 0.0
    %509 = vmatpush1.msra.mxu0 0.0
    %510 = vmatprep.subr.mxu0 0.0
    %511 = vmatpush1.msra.mxu0 0.0
    %512 = vmatprep.subr.mxu0 0.0
    %513 = vmatpush1.msra.mxu0 0.0
    %514 = vmatprep.subr.mxu0 0.0
    %515 = vmatpush1.msra.mxu0 0.0
    %516 = vmatprep.subr.mxu0 0.0
    %517 = vmatpush1.msra.mxu0 0.0
    %518 = vmatprep.subr.mxu0 0.0
    %519 = vmatpush1.msra.mxu0 0.0
    %520 = vmatprep.subr.mxu0 0.0
    %521 = vmatpush1.msra.mxu0 0.0
    %522 = vmatprep.subr.mxu0 0.0
    %523 = vmatpush1.msra.mxu0 0.0
    %524 = vmatprep.subr.mxu0 0.0
    %525 = vmatpush1.msra.mxu0 0.0
    %526 = vmatprep.subr.mxu0 0.0
    %527 = vmatpush1.msra.mxu0 0.0
    %528 = vmatprep.subr.mxu0 0.0
    %529 = vmatpush1.msra.mxu0 0.0
    %530 = vmatprep.subr.mxu0 0.0
    %531 = vmatpush1.msra.mxu0 0.0
    %532 = vmatprep.mubr.f32.mxu0 0.0
    %533 = vmatmul.mubr.f32.gmra.mrb[0].mxu0 %v309
    %v534 = vpop.f32.mrb[0].mxu0
    %v535 = vadd.f32 %v291, %v534
    %v536 = vpop.f32.mrb[0].mxu0
    %v537 = vadd.f32 %v295, %v536
    %538 = vmatprep.mubr.f32.mxu0 0.0
    %539 = vmatmul.mubr.f32.gmra.mrb[0].mxu0 %v312
    %v540 = vpop.f32.mrb[0].mxu0
    %v541 = vadd.f32 %v291, %v540
    %v542 = vpop.f32.mrb[0].mxu0
    %v543 = vadd.f32 %v295, %v542
    %544 = vdwg.mxu0
    %545 = vmatprep.subr.mxu0 0.0
    %546 = vmatpush1.msra.mxu0 %v248
    %547 = vmatprep.subr.mxu0 0.0
    %548 = vmatpush1.msra.mxu0 %v255
    %549 = vmatprep.subr.mxu0 0.0
    %550 = vmatpush1.msra.mxu0 %v262
    %551 = vmatprep.subr.mxu0 0.0
    %552 = vmatpush1.msra.mxu0 %v269
    %553 = vmatprep.subr.mxu0 0.0
    %554 = vmatpush1.msra.mxu0 0.0
    %555 = vmatprep.subr.mxu0 0.0
    %556 = vmatpush1.msra.mxu0 0.0
    %557 = vmatprep.subr.mxu0 0.0
    %558 = vmatpush1.msra.mxu0 0.0
    %559 = vmatprep.subr.mxu0 0.0
    %560 = vmatpush1.msra.mxu0 0.0
    %561 = vmatprep.subr.mxu0 0.0
    %562 = vmatpush1.msra.mxu0 0.0
    %563 = vmatprep.subr.mxu0 0.0
    %564 = vmatpush1.msra.mxu0 0.0
    %565 = vmatprep.subr.mxu0 0.0
    %566 = vmatpush1.msra.mxu0 0.0
    %567 = vmatprep.subr.mxu0 0.0
    %568 = vmatpush1.msra.mxu0 0.0
    %569 = vmatprep.subr.mxu0 0.0
    %570 = vmatpush1.msra.mxu0 0.0
    %571 = vmatprep.subr.mxu0 0.0
    %572 = vmatpush1.msra.mxu0 0.0
    %573 = vmatprep.subr.mxu0 0.0
    %574 = vmatpush1.msra.mxu0 0.0
    %575 = vmatprep.subr.mxu0 0.0
    %576 = vmatpush1.msra.mxu0 0.0
    %577 = vmatprep.subr.mxu0 0.0
    %578 = vmatpush1.msra.mxu0 0.0
    %579 = vmatprep.subr.mxu0 0.0
    %580 = vmatpush1.msra.mxu0 0.0
    %581 = vmatprep.subr.mxu0 0.0
    %582 = vmatpush1.msra.mxu0 0.0
    %583 = vmatprep.subr.mxu0 0.0
    %584 = vmatpush1.msra.mxu0 0.0
    %585 = vmatprep.subr.mxu0 0.0
    %586 = vmatpush1.msra.mxu0 0.0
    %587 = vmatprep.subr.mxu0 0.0
    %588 = vmatpush1.msra.mxu0 0.0
    %589 = vmatprep.subr.mxu0 0.0
    %590 = vmatpush1.msra.mxu0 0.0
    %591 = vmatprep.subr.mxu0 0.0
    %592 = vmatpush1.msra.mxu0 0.0
    %593 = vmatprep.subr.mxu0 0.0
    %594 = vmatpush1.msra.mxu0 0.0
    %595 = vmatprep.subr.mxu0 0.0
    %596 = vmatpush1.msra.mxu0 0.0
    %597 = vmatprep.subr.mxu0 0.0
    %598 = vmatpush1.msra.mxu0 0.0
    %599 = vmatprep.subr.mxu0 0.0
    %600 = vmatpush1.msra.mxu0 0.0
    %601 = vmatprep.subr.mxu0 0.0
    %602 = vmatpush1.msra.mxu0 0.0
    %603 = vmatprep.subr.mxu0 0.0
    %604 = vmatpush1.msra.mxu0 0.0
    %605 = vmatprep.subr.mxu0 0.0
    %606 = vmatpush1.msra.mxu0 0.0
    %607 = vmatprep.subr.mxu0 0.0
    %608 = vmatpush1.msra.mxu0 0.0
    %609 = vmatprep.mubr.f32.mxu0 0.0
    %610 = vmatmul.mubr.f32.gmra.mrb[0].mxu0 %v309
    %v611 = vpop.f32.mrb[0].mxu0
    %v612 = vadd.f32 %v299, %v611
    %v613 = vpop.f32.mrb[0].mxu0
    %614 = vmatprep.mubr.f32.mxu0 0.0
    %615 = vmatmul.mubr.f32.gmra.mrb[0].mxu0 %v312
    %v616 = vpop.f32.mrb[0].mxu0
    %v617 = vadd.f32 %v299, %v616
    %v618 = vpop.f32.mrb[0].mxu0
    %619 = vdwg.mxu0
    %vm620 = vcmp.gt.f32.partialorder %v381, 0.0
    %vm621 = vcmp.gt.f32.partialorder %v383, 0.0
    %vm622 = vcmp.gt.f32.partialorder %v458, 0.0
    %vm623 = vcmp.gt.f32.partialorder %v460, 0.0
    %vm624 = vcmp.gt.f32.partialorder %v535, 0.0
    %vm625 = vcmp.gt.f32.partialorder %v537, 0.0
    %vm626 = vcmp.gt.f32.partialorder %v612, 0.0
    %vm627 = vcmp.gt.f32.partialorder %v387, 0.0
    %vm628 = vcmp.gt.f32.partialorder %v389, 0.0
    %vm629 = vcmp.gt.f32.partialorder %v464, 0.0
    %vm630 = vcmp.gt.f32.partialorder %v466, 0.0
    %vm631 = vcmp.gt.f32.partialorder %v541, 0.0
    %vm632 = vcmp.gt.f32.partialorder %v543, 0.0
    %vm633 = vcmp.gt.f32.partialorder %v617, 0.0
    %v634 = vmul.f32 %v381, 0.01
    %v635 = vmul.f32 %v383, 0.01
    %v636 = vmul.f32 %v458, 0.01
    %v637 = vmul.f32 %v460, 0.01
    %v638 = vmul.f32 %v535, 0.01
    %v639 = vmul.f32 %v537, 0.01
    %v640 = vmul.f32 %v612, 0.01
    %v641 = vmul.f32 %v387, 0.01
    %v642 = vmul.f32 %v389, 0.01
    %v643 = vmul.f32 %v464, 0.01
    %v644 = vmul.f32 %v466, 0.01
    %v645 = vmul.f32 %v541, 0.01
    %v646 = vmul.f32 %v543, 0.01
    %v647 = vmul.f32 %v617, 0.01
    %v648 = vsel %vm620, %v381, %v634
    %v649 = vsel %vm621, %v383, %v635
    %v650 = vsel %vm622, %v458, %v636
    %v651 = vsel %vm623, %v460, %v637
    %v652 = vsel %vm624, %v535, %v638
    %v653 = vsel %vm625, %v537, %v639
    %v654 = vsel %vm626, %v612, %v640
    %v655 = vsel %vm627, %v387, %v641
    %v656 = vsel %vm628, %v389, %v642
    %v657 = vsel %vm629, %v464, %v643
    %v658 = vsel %vm630, %v466, %v644
    %v659 = vsel %vm631, %v541, %v645
    %v660 = vsel %vm632, %v543, %v646
    %v661 = vsel %vm633, %v617, %v647
    %v662 = vld [vmem:[#allocation16] sm:$0xff]
    %v663 = vld [vmem:[#allocation16 + $0x8] sm:$0xff]
    %v664 = vld [vmem:[#allocation16 + $0x10] sm:$0xff]
    %v665 = vld [vmem:[#allocation16 + $0x18] sm:$0xff]
    %v666 = vld [vmem:[%s5] sm:$0x1]
    %v668 = vlaneseq
    %v669 = vshrl.u32 %v668, 7
    %v670 = vsub.s32 0, %v669
    %v671 = vrot.slane %v666, %v670
    %v674 = vsel %vm307, %v654, 0
    %v677 = vsel %vm307, %v661, 0
    %679 = vmatprep.subr.mxu0 0.0
    %680 = vmatpush1.msra.mxu0 %v662
    %681 = vmatprep.subr.mxu0 0.0
    %682 = vmatpush1.msra.mxu0 %v663
    %683 = vmatprep.subr.mxu0 0.0
    %684 = vmatpush1.msra.mxu0 %v664
    %685 = vmatprep.subr.mxu0 0.0
    %686 = vmatpush1.msra.mxu0 %v665
    %687 = vmatprep.subr.mxu0 0.0
    %688 = vmatpush1.msra.mxu0 0.0
    %689 = vmatprep.subr.mxu0 0.0
    %690 = vmatpush1.msra.mxu0 0.0
    %691 = vmatprep.subr.mxu0 0.0
    %692 = vmatpush1.msra.mxu0 0.0
    %693 = vmatprep.subr.mxu0 0.0
    %694 = vmatpush1.msra.mxu0 0.0
    %695 = vmatprep.subr.mxu0 0.0
    %696 = vmatpush1.msra.mxu0 0.0
    %697 = vmatprep.subr.mxu0 0.0
    %698 = vmatpush1.msra.mxu0 0.0
    %699 = vmatprep.subr.mxu0 0.0
    %700 = vmatpush1.msra.mxu0 0.0
    %701 = vmatprep.subr.mxu0 0.0
    %702 = vmatpush1.msra.mxu0 0.0
    %703 = vmatprep.subr.mxu0 0.0
    %704 = vmatpush1.msra.mxu0 0.0
    %705 = vmatprep.subr.mxu0 0.0
    %706 = vmatpush1.msra.mxu0 0.0
    %707 = vmatprep.subr.mxu0 0.0
    %708 = vmatpush1.msra.mxu0 0.0
    %709 = vmatprep.subr.mxu0 0.0
    %710 = vmatpush1.msra.mxu0 0.0
    %711 = vmatprep.subr.mxu0 0.0
    %712 = vmatpush1.msra.mxu0 0.0
    %713 = vmatprep.subr.mxu0 0.0
    %714 = vmatpush1.msra.mxu0 0.0
    %715 = vmatprep.subr.mxu0 0.0
    %716 = vmatpush1.msra.mxu0 0.0
    %717 = vmatprep.subr.mxu0 0.0
    %718 = vmatpush1.msra.mxu0 0.0
    %719 = vmatprep.subr.mxu0 0.0
    %720 = vmatpush1.msra.mxu0 0.0
    %721 = vmatprep.subr.mxu0 0.0
    %722 = vmatpush1.msra.mxu0 0.0
    %723 = vmatprep.subr.mxu0 0.0
    %724 = vmatpush1.msra.mxu0 0.0
    %725 = vmatprep.subr.mxu0 0.0
    %726 = vmatpush1.msra.mxu0 0.0
    %727 = vmatprep.subr.mxu0 0.0
    %728 = vmatpush1.msra.mxu0 0.0
    %729 = vmatprep.subr.mxu0 0.0
    %730 = vmatpush1.msra.mxu0 0.0
    %731 = vmatprep.subr.mxu0 0.0
    %732 = vmatpush1.msra.mxu0 0.0
    %733 = vmatprep.subr.mxu0 0.0
    %734 = vmatpush1.msra.mxu0 0.0
    %735 = vmatprep.subr.mxu0 0.0
    %736 = vmatpush1.msra.mxu0 0.0
    %737 = vmatprep.subr.mxu0 0.0
    %738 = vmatpush1.msra.mxu0 0.0
    %739 = vmatprep.subr.mxu0 0.0
    %740 = vmatpush1.msra.mxu0 0.0
    %741 = vmatprep.subr.mxu0 0.0
    %742 = vmatpush1.msra.mxu0 0.0
    %743 = vmatprep.mubr.f32.mxu0 0.0
    %744 = vmatmul.mubr.f32.gmra.mrb[0].mxu0 %v674
    %v745 = vpop.f32.mrb[0].mxu0
    %v746 = vadd.f32 %v671, %v745
    %v747 = vpop.f32.mrb[0].mxu0
    %748 = vmatprep.mubr.f32.mxu0 0.0
    %749 = vmatmul.mubr.f32.gmra.mrb[0].mxu0 %v677
    %v750 = vpop.f32.mrb[0].mxu0
    %v751 = vadd.f32 %v671, %v750
    %v752 = vpop.f32.mrb[0].mxu0
    %753 = vdwg.mxu0
    %vm754 = vcmp.gt.f32.partialorder %v746, 0.0
    %vm755 = vcmp.gt.f32.partialorder %v751, 0.0
    %v756 = vmul.f32 %v746, 0.01
    %v757 = vmul.f32 %v751, 0.01
    %v758 = vsel %vm754, %v746, %v756
    %v759 = vsel %vm755, %v751, %v757
    %s760 = scalar_lea.vmem [#allocation16], 32
    %v761 = vld [vmem:[%s760] sm:$0xff]
    %v762 = vld [vmem:[%s760 + $0x8] sm:$0xff]
    %v763 = vld [vmem:[%s760 + $0x10] sm:$0xff]
    %v764 = vld [vmem:[%s760 + $0x18] sm:$0xff]
    %s765 = scalar_lea.vmem %s5, 1
    %v766 = vld [vmem:[%s765] sm:$0x1]
    %v768 = vlaneseq
    %v769 = vshrl.u32 %v768, 7
    %v770 = vsub.s32 0, %v769
    %v771 = vrot.slane %v766, %v770
    %v774 = vsel %vm307, %v758, 0
    %v777 = vsel %vm307, %v759, 0
    %779 = vmatprep.subr.mxu0 0.0
    %780 = vmatpush1.msra.mxu0 %v761
    %781 = vmatprep.subr.mxu0 0.0
    %782 = vmatpush1.msra.mxu0 %v762
    %783 = vmatprep.subr.mxu0 0.0
    %784 = vmatpush1.msra.mxu0 %v763
    %785 = vmatprep.subr.mxu0 0.0
    %786 = vmatpush1.msra.mxu0 %v764
    %787 = vmatprep.subr.mxu0 0.0
    %788 = vmatpush1.msra.mxu0 0.0
    %789 = vmatprep.subr.mxu0 0.0
    %790 = vmatpush1.msra.mxu0 0.0
    %791 = vmatprep.subr.mxu0 0.0
    %792 = vmatpush1.msra.mxu0 0.0
    %793 = vmatprep.subr.mxu0 0.0
    %794 = vmatpush1.msra.mxu0 0.0
    %795 = vmatprep.subr.mxu0 0.0
    %796 = vmatpush1.msra.mxu0 0.0
    %797 = vmatprep.subr.mxu0 0.0
    %798 = vmatpush1.msra.mxu0 0.0
    %799 = vmatprep.subr.mxu0 0.0
    %800 = vmatpush1.msra.mxu0 0.0
    %801 = vmatprep.subr.mxu0 0.0
    %802 = vmatpush1.msra.mxu0 0.0
    %803 = vmatprep.subr.mxu0 0.0
    %804 = vmatpush1.msra.mxu0 0.0
    %805 = vmatprep.subr.mxu0 0.0
    %806 = vmatpush1.msra.mxu0 0.0
    %807 = vmatprep.subr.mxu0 0.0
    %808 = vmatpush1.msra.mxu0 0.0
    %809 = vmatprep.subr.mxu0 0.0
    %810 = vmatpush1.msra.mxu0 0.0
    %811 = vmatprep.subr.mxu0 0.0
    %812 = vmatpush1.msra.mxu0 0.0
    %813 = vmatprep.subr.mxu0 0.0
    %814 = vmatpush1.msra.mxu0 0.0
    %815 = vmatprep.subr.mxu0 0.0
    %816 = vmatpush1.msra.mxu0 0.0
    %817 = vmatprep.subr.mxu0 0.0
    %818 = vmatpush1.msra.mxu0 0.0
    %819 = vmatprep.subr.mxu0 0.0
    %820 = vmatpush1.msra.mxu0 0.0
    %821 = vmatprep.subr.mxu0 0.0
    %822 = vmatpush1.msra.mxu0 0.0
    %823 = vmatprep.subr.mxu0 0.0
    %824 = vmatpush1.msra.mxu0 0.0
    %825 = vmatprep.subr.mxu0 0.0
    %826 = vmatpush1.msra.mxu0 0.0
    %827 = vmatprep.subr.mxu0 0.0
    %828 = vmatpush1.msra.mxu0 0.0
    %829 = vmatprep.subr.mxu0 0.0
    %830 = vmatpush1.msra.mxu0 0.0
    %831 = vmatprep.subr.mxu0 0.0
    %832 = vmatpush1.msra.mxu0 0.0
    %833 = vmatprep.subr.mxu0 0.0
    %834 = vmatpush1.msra.mxu0 0.0
    %835 = vmatprep.subr.mxu0 0.0
    %836 = vmatpush1.msra.mxu0 0.0
    %837 = vmatprep.subr.mxu0 0.0
    %838 = vmatpush1.msra.mxu0 0.0
    %839 = vmatprep.subr.mxu0 0.0
    %840 = vmatpush1.msra.mxu0 0.0
    %841 = vmatprep.subr.mxu0 0.0
    %842 = vmatpush1.msra.mxu0 0.0
    %843 = vmatprep.mubr.f32.mxu0 0.0
    %844 = vmatmul.mubr.f32.gmra.mrb[0].mxu0 %v774
    %v845 = vpop.f32.mrb[0].mxu0
    %v846 = vadd.f32 %v771, %v845
    %v847 = vpop.f32.mrb[0].mxu0
    %848 = vmatprep.mubr.f32.mxu0 0.0
    %849 = vmatmul.mubr.f32.gmra.mrb[0].mxu0 %v777
    %v850 = vpop.f32.mrb[0].mxu0
    %v851 = vadd.f32 %v771, %v850
    %v852 = vpop.f32.mrb[0].mxu0
    %853 = vdwg.mxu0
    %vm854 = vcmp.gt.f32.partialorder %v846, 0.0
    %vm855 = vcmp.gt.f32.partialorder %v851, 0.0
    %v856 = vmul.f32 %v846, 0.01
    %v857 = vmul.f32 %v851, 0.01
    %v858 = vsel %vm854, %v846, %v856
    %v859 = vsel %vm855, %v851, %v857
    %v860 = vld [vmem:[%s6] sm:$0xff]
    %v861 = vld [vmem:[%s6 + $0x8] sm:$0xff]
    %v862 = vld [vmem:[%s6 + $0x10] sm:$0xff]
    %v863 = vld [vmem:[%s6 + $0x18] sm:$0xff]
    %v864 = vld [vmem:[%s7] sm:$0x1]
    %v866 = vlaneseq
    %v867 = vshrl.u32 %v866, 7
    %v868 = vsub.s32 0, %v867
    %v869 = vrot.slane %v864, %v868
    %v872 = vsel %vm307, %v858, 0
    %v875 = vsel %vm307, %v859, 0
    %877 = vmatprep.subr.mxu0 0.0
    %878 = vmatpush1.msra.mxu0 %v860
    %879 = vmatprep.subr.mxu0 0.0
    %880 = vmatpush1.msra.mxu0 %v861
    %881 = vmatprep.subr.mxu0 0.0
    %882 = vmatpush1.msra.mxu0 %v862
    %883 = vmatprep.subr.mxu0 0.0
    %884 = vmatpush1.msra.mxu0 %v863
    %885 = vmatprep.subr.mxu0 0.0
    %886 = vmatpush1.msra.mxu0 0.0
    %887 = vmatprep.subr.mxu0 0.0
    %888 = vmatpush1.msra.mxu0 0.0
    %889 = vmatprep.subr.mxu0 0.0
    %890 = vmatpush1.msra.mxu0 0.0
    %891 = vmatprep.subr.mxu0 0.0
    %892 = vmatpush1.msra.mxu0 0.0
    %893 = vmatprep.subr.mxu0 0.0
    %894 = vmatpush1.msra.mxu0 0.0
    %895 = vmatprep.subr.mxu0 0.0
    %896 = vmatpush1.msra.mxu0 0.0
    %897 = vmatprep.subr.mxu0 0.0
    %898 = vmatpush1.msra.mxu0 0.0
    %899 = vmatprep.subr.mxu0 0.0
    %900 = vmatpush1.msra.mxu0 0.0
    %901 = vmatprep.subr.mxu0 0.0
    %902 = vmatpush1.msra.mxu0 0.0
    %903 = vmatprep.subr.mxu0 0.0
    %904 = vmatpush1.msra.mxu0 0.0
    %905 = vmatprep.subr.mxu0 0.0
    %906 = vmatpush1.msra.mxu0 0.0
    %907 = vmatprep.subr.mxu0 0.0
    %908 = vmatpush1.msra.mxu0 0.0
    %909 = vmatprep.subr.mxu0 0.0
    %910 = vmatpush1.msra.mxu0 0.0
    %911 = vmatprep.subr.mxu0 0.0
    %912 = vmatpush1.msra.mxu0 0.0
    %913 = vmatprep.subr.mxu0 0.0
    %914 = vmatpush1.msra.mxu0 0.0
    %915 = vmatprep.subr.mxu0 0.0
    %916 = vmatpush1.msra.mxu0 0.0
    %917 = vmatprep.subr.mxu0 0.0
    %918 = vmatpush1.msra.mxu0 0.0
    %919 = vmatprep.subr.mxu0 0.0
    %920 = vmatpush1.msra.mxu0 0.0
    %921 = vmatprep.subr.mxu0 0.0
    %922 = vmatpush1.msra.mxu0 0.0
    %923 = vmatprep.subr.mxu0 0.0
    %924 = vmatpush1.msra.mxu0 0.0
    %925 = vmatprep.subr.mxu0 0.0
    %926 = vmatpush1.msra.mxu0 0.0
    %927 = vmatprep.subr.mxu0 0.0
    %928 = vmatpush1.msra.mxu0 0.0
    %929 = vmatprep.subr.mxu0 0.0
    %930 = vmatpush1.msra.mxu0 0.0
    %931 = vmatprep.subr.mxu0 0.0
    %932 = vmatpush1.msra.mxu0 0.0
    %933 = vmatprep.subr.mxu0 0.0
    %934 = vmatpush1.msra.mxu0 0.0
    %935 = vmatprep.subr.mxu0 0.0
    %936 = vmatpush1.msra.mxu0 0.0
    %937 = vmatprep.subr.mxu0 0.0
    %938 = vmatpush1.msra.mxu0 0.0
    %939 = vmatprep.subr.mxu0 0.0
    %940 = vmatpush1.msra.mxu0 0.0
    %941 = vmatprep.mubr.f32.mxu0 0.0
    %942 = vmatmul.mubr.f32.gmra.mrb[0].mxu0 %v872
    %v943 = vpop.f32.mrb[0].mxu0
    %v944 = vadd.f32 %v869, %v943
    %v945 = vpop.f32.mrb[0].mxu0
    %946 = vmatprep.mubr.f32.mxu0 0.0
    %947 = vmatmul.mubr.f32.gmra.mrb[0].mxu0 %v875
    %v948 = vpop.f32.mrb[0].mxu0
    %v949 = vadd.f32 %v869, %v948
    %v950 = vpop.f32.mrb[0].mxu0
    %951 = vdwg.mxu0
    %vm952 = vcmask 130048
    %v953 = vsel %vm952, %v944, -inf
    %954 = vmax.xlane.f32.xlu0 %v953
    %v955 = vpop.xlane.xlu0 %954
    %v956 = vsel %vm952, %v949, -inf
    %957 = vmax.xlane.f32.xlu0 %v956
    %v958 = vpop.xlane.xlu0 %957
    %v959 = vsub.f32 %v944, %v955
    %v960 = vsub.f32 %v949, %v958
    %v961 = vmul.f32 %v959, 1.442695
    %v962 = vpow.pop %v961
    %v963 = vmul.f32 %v960, 1.442695
    %v964 = vpow.pop %v963
    %v965 = vsel %vm952, %v962, 0.0
    %966 = vadd.xlane.f32.xlu0 %v965
    %v967 = vpop.xlane.xlu0 %966
    %v968 = vsel %vm952, %v964, 0.0
    %969 = vadd.xlane.f32.xlu0 %v968
    %v970 = vpop.xlane.xlu0 %969
    %v971 = vrcp.pop %v967
    %v972 = vmul.f32 %v962, %v971
    %v973 = vrcp.pop %v970
    %v974 = vmul.f32 %v964, %v973
    %v975 = vsel %vm952, %v972, -inf
    %976 = vmax.xlane.f32.xlu0 %v975
    %v977 = vpop.xlane.xlu0 %976
    %v978 = vsel %vm952, %v974, -inf
    %979 = vmax.xlane.f32.xlu0 %v978
    %v980 = vpop.xlane.xlu0 %979
    %v981 = vlaneseq
    %v982 = vand.u32 %v981, 127
    %v983 = vcvt.s32.f32 %v982
    %vm984 = vcmp.ge.f32.partialorder %v972, %v977
    %vm985 = vcmp.ge.f32.partialorder %v974, %v980
    %v986 = vsel %vm984, %v983, 1e+09
    %v987 = vsel %vm985, %v983, 1e+09
    %v988 = vsel %vm952, %v986, inf
    %989 = vmin.xlane.f32.xlu0 %v988
    %v990 = vpop.xlane.xlu0 %989
    %v991 = vsel %vm952, %v987, inf
    %992 = vmin.xlane.f32.xlu0 %v991
    %v993 = vpop.xlane.xlu0 %992
    %vm994 = vcmp.eq.f32.partialorder %v983, %v990
    %vm995 = vcmp.eq.f32.partialorder %v983, %v993
    %v996 = vsel %vm994, %v977, 0.0
    %v997 = vsel %vm995, %v980, 0.0
    %v998 = vld [vmem:[#allocation20] sm:$0x1]
    %v1000 = vlaneseq
    %v1001 = vshrl.u32 %v1000, 7
    %v1002 = vsub.s32 0, %v1001
    %v1003 = vrot.slane %v998, %v1002
    %v1005 = vmul.f32 %v996, %v1003
    %v1006 = vmul.f32 %v997, %v1003
    %v1007 = vsel %vm952, %v1005, 0.0
    %1008 = vadd.xlane.f32.xlu0 %v1007
    %v1009 = vpop.xlane.xlu0 %1008
    %v1010 = vsel %vm952, %v1006, 0.0
    %1011 = vadd.xlane.f32.xlu0 %v1010
    %v1012 = vpop.xlane.xlu0 %1011
    %v1013 = vld [vmem:[%s8] sm:$0xff]
    %v1014 = vld [vmem:[%s8 + $0x8] sm:$0xff]
    %v1015 = vld [vmem:[%s8 + $0x10] sm:$0xff]
    %v1016 = vld [vmem:[%s8 + $0x18] sm:$0xff]
    %v1017 = vld [vmem:[%s8 + $0x20] sm:$0xff]
    %v1018 = vld [vmem:[%s8 + $0x28] sm:$0xff]
    %v1019 = vld [vmem:[%s8 + $0x30] sm:$0xff]
    %v1020 = vld [vmem:[%s8 + $0x38] sm:$0xff]
    %v1021 = vld [vmem:[%s8 + $0x40] sm:$0xff]
    %v1022 = vld [vmem:[%s8 + $0x48] sm:$0xff]
    %v1023 = vld [vmem:[%s8 + $0x50] sm:$0xff]
    %v1024 = vld [vmem:[%s8 + $0x58] sm:$0xff]
    %v1025 = vld [vmem:[%s8 + $0x60] sm:$0xff]
    %v1026 = vld [vmem:[%s8 + $0x68] sm:$0xff]
    %v1027 = vld [vmem:[%s8 + $0x70] sm:$0xff]
    %v1028 = vld [vmem:[%s8 + $0x78] sm:$0xff]
    %v1029 = vld [vmem:[%s8 + $0x80] sm:$0xff]
    %v1030 = vld [vmem:[%s8 + $0x88] sm:$0xff]
    %v1031 = vld [vmem:[%s8 + $0x90] sm:$0xff]
    %v1032 = vld [vmem:[%s8 + $0x98] sm:$0xff]
    %v1033 = vld [vmem:[%s8 + $0xa0] sm:$0xff]
    %v1034 = vld [vmem:[%s8 + $0xa8] sm:$0xff]
    %v1035 = vld [vmem:[%s8 + $0xb0] sm:$0xff]
    %v1036 = vld [vmem:[%s8 + $0xb8] sm:$0xff]
    %v1037 = vld [vmem:[%s8 + $0xc0] sm:$0xff]
    %v1038 = vld [vmem:[%s8 + $0xc8] sm:$0xff]
    %v1039 = vld [vmem:[%s8 + $0xd0] sm:$0xff]
    %v1040 = vld [vmem:[%s8 + $0xd8] sm:$0xff]
    %v1041 = vld [vmem:[%s8 + $0xe0] sm:$0xff]
    %v1042 = vld [vmem:[%s8 + $0xe8] sm:$0xff]
    %v1043 = vld [vmem:[%s8 + $0xf0] sm:$0xff]
    %v1044 = vld [vmem:[%s8 + $0xf8] sm:$0xff]
    %v1045 = vld [vmem:[#allocation17] sm:$0x1]
    %v1047 = vlaneseq
    %v1048 = vshrl.u32 %v1047, 7
    %v1049 = vsub.s32 0, %v1048
    %v1050 = vrot.slane %v1045, %v1049
    %1052 = vmatprep.subr.mxu0 0.0
    %1053 = vmatpush1.msra.mxu0 %v1013
    %1054 = vmatprep.subr.mxu0 0.0
    %1055 = vmatpush1.msra.mxu0 %v1014
    %1056 = vmatprep.subr.mxu0 0.0
    %1057 = vmatpush1.msra.mxu0 %v1015
    %1058 = vmatprep.subr.mxu0 0.0
    %1059 = vmatpush1.msra.mxu0 %v1016
    %1060 = vmatprep.subr.mxu0 0.0
    %1061 = vmatpush1.msra.mxu0 %v1017
    %1062 = vmatprep.subr.mxu0 0.0
    %1063 = vmatpush1.msra.mxu0 %v1018
    %1064 = vmatprep.subr.mxu0 0.0
    %1065 = vmatpush1.msra.mxu0 %v1019
    %1066 = vmatprep.subr.mxu0 0.0
    %1067 = vmatpush1.msra.mxu0 %v1020
    %1068 = vmatprep.subr.mxu0 0.0
    %1069 = vmatpush1.msra.mxu0 %v1021
    %1070 = vmatprep.subr.mxu0 0.0
    %1071 = vmatpush1.msra.mxu0 %v1022
    %1072 = vmatprep.subr.mxu0 0.0
    %1073 = vmatpush1.msra.mxu0 %v1023
    %1074 = vmatprep.subr.mxu0 0.0
    %1075 = vmatpush1.msra.mxu0 %v1024
    %1076 = vmatprep.subr.mxu0 0.0
    %1077 = vmatpush1.msra.mxu0 %v1025
    %1078 = vmatprep.subr.mxu0 0.0
    %1079 = vmatpush1.msra.mxu0 %v1026
    %1080 = vmatprep.subr.mxu0 0.0
    %1081 = vmatpush1.msra.mxu0 %v1027
    %1082 = vmatprep.subr.mxu0 0.0
    %1083 = vmatpush1.msra.mxu0 %v1028
    %1084 = vmatprep.subr.mxu0 0.0
    %1085 = vmatpush1.msra.mxu0 %v1029
    %1086 = vmatprep.subr.mxu0 0.0
    %1087 = vmatpush1.msra.mxu0 %v1030
    %1088 = vmatprep.subr.mxu0 0.0
    %1089 = vmatpush1.msra.mxu0 %v1031
    %1090 = vmatprep.subr.mxu0 0.0
    %1091 = vmatpush1.msra.mxu0 %v1032
    %1092 = vmatprep.subr.mxu0 0.0
    %1093 = vmatpush1.msra.mxu0 %v1033
    %1094 = vmatprep.subr.mxu0 0.0
    %1095 = vmatpush1.msra.mxu0 %v1034
    %1096 = vmatprep.subr.mxu0 0.0
    %1097 = vmatpush1.msra.mxu0 %v1035
    %1098 = vmatprep.subr.mxu0 0.0
    %1099 = vmatpush1.msra.mxu0 %v1036
    %1100 = vmatprep.subr.mxu0 0.0
    %1101 = vmatpush1.msra.mxu0 %v1037
    %1102 = vmatprep.subr.mxu0 0.0
    %1103 = vmatpush1.msra.mxu0 %v1038
    %1104 = vmatprep.subr.mxu0 0.0
    %1105 = vmatpush1.msra.mxu0 %v1039
    %1106 = vmatprep.subr.mxu0 0.0
    %1107 = vmatpush1.msra.mxu0 %v1040
    %1108 = vmatprep.subr.mxu0 0.0
    %1109 = vmatpush1.msra.mxu0 %v1041
    %1110 = vmatprep.subr.mxu0 0.0
    %1111 = vmatpush1.msra.mxu0 %v1042
    %1112 = vmatprep.subr.mxu0 0.0
    %1113 = vmatpush1.msra.mxu0 %v1043
    %1114 = vmatprep.subr.mxu0 0.0
    %1115 = vmatpush1.msra.mxu0 %v1044
    %1116 = vmatprep.mubr.f32.mxu0 %v649
    %1117 = vmatmul.mubr.f32.gmra.mrb[0].mxu0 %v648
    %v1118 = vpop.f32.mrb[0].mxu0
    %v1119 = vadd.f32 %v1050, %v1118
    %v1120 = vpop.f32.mrb[0].mxu0
    %1121 = vmatprep.mubr.f32.mxu0 %v656
    %1122 = vmatmul.mubr.f32.gmra.mrb[0].mxu0 %v655
    %v1123 = vpop.f32.mrb[0].mxu0
    %v1124 = vadd.f32 %v1050, %v1123
    %v1125 = vpop.f32.mrb[0].mxu0
    %1126 = vdwg.mxu0
    %v1127 = vsub.f32 0.0, %v1119
    %v1128 = vsub.f32 0.0, %v1124
    %v1129 = vmul.f32 %v1127, 1.442695
    %v1130 = vpow.pop %v1129
    %v1131 = vmul.f32 %v1128, 1.442695
    %v1132 = vpow.pop %v1131
    %v1133 = vadd.f32 %v1130, 1.0
    %v1134 = vadd.f32 %v1132, 1.0
    %v1135 = vrcp.pop %v1133
    %v1136 = vmul.f32 1.0, %v1135
    %v1137 = vrcp.pop %v1134
    %v1138 = vmul.f32 1.0, %v1137
    %v1139 = vsel %vm952, %v1136, -inf
    %1140 = vmax.xlane.f32.xlu0 %v1139
    %v1141 = vpop.xlane.xlu0 %1140
    %v1142 = vsel %vm952, %v1138, -inf
    %1143 = vmax.xlane.f32.xlu0 %v1142
    %v1144 = vpop.xlane.xlu0 %1143
    %v1145 = vsub.f32 %v1136, %v1141
    %v1146 = vsub.f32 %v1138, %v1144
    %v1147 = vmul.f32 %v1145, 1.442695
    %v1148 = vpow.pop %v1147
    %v1149 = vmul.f32 %v1146, 1.442695
    %v1150 = vpow.pop %v1149
    %v1151 = vsel %vm952, %v1148, 0.0
    %1152 = vadd.xlane.f32.xlu0 %v1151
    %v1153 = vpop.xlane.xlu0 %1152
    %v1154 = vsel %vm952, %v1150, 0.0
    %1155 = vadd.xlane.f32.xlu0 %v1154
    %v1156 = vpop.xlane.xlu0 %1155
    %v1157 = vrcp.pop %v1153
    %v1158 = vmul.f32 %v1148, %v1157
    %v1159 = vrcp.pop %v1156
    %v1160 = vmul.f32 %v1150, %v1159
    %v1161 = vsel %vm952, %v1158, -inf
    %1162 = vmax.xlane.f32.xlu0 %v1161
    %v1163 = vpop.xlane.xlu0 %1162
    %v1164 = vsel %vm952, %v1160, -inf
    %1165 = vmax.xlane.f32.xlu0 %v1164
    %v1166 = vpop.xlane.xlu0 %1165
    %vm1167 = vcmp.ge.f32.partialorder %v1158, %v1163
    %vm1168 = vcmp.ge.f32.partialorder %v1160, %v1166
    %v1169 = vsel %vm1167, %v983, 1e+09
    %v1170 = vsel %vm1168, %v983, 1e+09
    %v1171 = vsel %vm952, %v1169, inf
    %1172 = vmin.xlane.f32.xlu0 %v1171
    %v1173 = vpop.xlane.xlu0 %1172
    %v1174 = vsel %vm952, %v1170, inf
    %1175 = vmin.xlane.f32.xlu0 %v1174
    %v1176 = vpop.xlane.xlu0 %1175
    %vm1177 = vcmp.eq.f32.partialorder %v983, %v1173
    %vm1178 = vcmp.eq.f32.partialorder %v983, %v1176
    %v1179 = vsel %vm1177, %v1163, 0.0
    %v1180 = vsel %vm1178, %v1166, 0.0
    %v1181 = vld [vmem:[%s10] sm:$0xff]
    %v1182 = vld [vmem:[%s10 + $0x8] sm:$0xff]
    %v1183 = vld [vmem:[%s10 + $0x10] sm:$0xff]
    %v1184 = vld [vmem:[%s10 + $0x18] sm:$0xff]
    %v1185 = vld [vmem:[%s10 + $0x20] sm:$0xff]
    %v1186 = vld [vmem:[%s10 + $0x28] sm:$0xff]
    %v1187 = vld [vmem:[%s10 + $0x30] sm:$0xff]
    %v1188 = vld [vmem:[%s10 + $0x38] sm:$0xff]
    %v1189 = vld [vmem:[%s10 + $0x40] sm:$0xff]
    %v1190 = vld [vmem:[%s10 + $0x48] sm:$0xff]
    %v1191 = vld [vmem:[%s10 + $0x50] sm:$0xff]
    %v1192 = vld [vmem:[%s10 + $0x58] sm:$0xff]
    %v1193 = vld [vmem:[%s10 + $0x60] sm:$0xff]
    %v1194 = vld [vmem:[%s10 + $0x68] sm:$0xff]
    %v1195 = vld [vmem:[%s10 + $0x70] sm:$0xff]
    %v1196 = vld [vmem:[%s10 + $0x78] sm:$0xff]
    %v1197 = vld [vmem:[%s10 + $0x80] sm:$0xff]
    %v1198 = vld [vmem:[%s10 + $0x88] sm:$0xff]
    %v1199 = vld [vmem:[%s10 + $0x90] sm:$0xff]
    %v1200 = vld [vmem:[%s10 + $0x98] sm:$0xff]
    %v1201 = vld [vmem:[%s10 + $0xa0] sm:$0xff]
    %v1202 = vld [vmem:[%s10 + $0xa8] sm:$0xff]
    %v1203 = vld [vmem:[%s10 + $0xb0] sm:$0xff]
    %v1204 = vld [vmem:[%s10 + $0xb8] sm:$0xff]
    %v1205 = vld [vmem:[%s10 + $0xc0] sm:$0xff]
    %v1206 = vld [vmem:[%s10 + $0xc8] sm:$0xff]
    %v1207 = vld [vmem:[%s10 + $0xd0] sm:$0xff]
    %v1208 = vld [vmem:[%s10 + $0xd8] sm:$0xff]
    %v1209 = vld [vmem:[%s10 + $0xe0] sm:$0xff]
    %v1210 = vld [vmem:[%s10 + $0xe8] sm:$0xff]
    %v1211 = vld [vmem:[%s10 + $0xf0] sm:$0xff]
    %v1212 = vld [vmem:[%s10 + $0xf8] sm:$0xff]
    %v1213 = vld [vmem:[#allocation19] sm:$0x1]
    %v1215 = vlaneseq
    %v1216 = vshrl.u32 %v1215, 7
    %v1217 = vsub.s32 0, %v1216
    %v1218 = vrot.slane %v1213, %v1217
    %1220 = vmatprep.subr.mxu0 0.0
    %1221 = vmatpush1.msra.mxu0 %v1181
    %1222 = vmatprep.subr.mxu0 0.0
    %1223 = vmatpush1.msra.mxu0 %v1182
    %1224 = vmatprep.subr.mxu0 0.0
    %1225 = vmatpush1.msra.mxu0 %v1183
    %1226 = vmatprep.subr.mxu0 0.0
    %1227 = vmatpush1.msra.mxu0 %v1184
    %1228 = vmatprep.subr.mxu0 0.0
    %1229 = vmatpush1.msra.mxu0 %v1185
    %1230 = vmatprep.subr.mxu0 0.0
    %1231 = vmatpush1.msra.mxu0 %v1186
    %1232 = vmatprep.subr.mxu0 0.0
    %1233 = vmatpush1.msra.mxu0 %v1187
    %1234 = vmatprep.subr.mxu0 0.0
    %1235 = vmatpush1.msra.mxu0 %v1188
    %1236 = vmatprep.subr.mxu0 0.0
    %1237 = vmatpush1.msra.mxu0 %v1189
    %1238 = vmatprep.subr.mxu0 0.0
    %1239 = vmatpush1.msra.mxu0 %v1190
    %1240 = vmatprep.subr.mxu0 0.0
    %1241 = vmatpush1.msra.mxu0 %v1191
    %1242 = vmatprep.subr.mxu0 0.0
    %1243 = vmatpush1.msra.mxu0 %v1192
    %1244 = vmatprep.subr.mxu0 0.0
    %1245 = vmatpush1.msra.mxu0 %v1193
    %1246 = vmatprep.subr.mxu0 0.0
    %1247 = vmatpush1.msra.mxu0 %v1194
    %1248 = vmatprep.subr.mxu0 0.0
    %1249 = vmatpush1.msra.mxu0 %v1195
    %1250 = vmatprep.subr.mxu0 0.0
    %1251 = vmatpush1.msra.mxu0 %v1196
    %1252 = vmatprep.subr.mxu0 0.0
    %1253 = vmatpush1.msra.mxu0 %v1197
    %1254 = vmatprep.subr.mxu0 0.0
    %1255 = vmatpush1.msra.mxu0 %v1198
    %1256 = vmatprep.subr.mxu0 0.0
    %1257 = vmatpush1.msra.mxu0 %v1199
    %1258 = vmatprep.subr.mxu0 0.0
    %1259 = vmatpush1.msra.mxu0 %v1200
    %1260 = vmatprep.subr.mxu0 0.0
    %1261 = vmatpush1.msra.mxu0 %v1201
    %1262 = vmatprep.subr.mxu0 0.0
    %1263 = vmatpush1.msra.mxu0 %v1202
    %1264 = vmatprep.subr.mxu0 0.0
    %1265 = vmatpush1.msra.mxu0 %v1203
    %1266 = vmatprep.subr.mxu0 0.0
    %1267 = vmatpush1.msra.mxu0 %v1204
    %1268 = vmatprep.subr.mxu0 0.0
    %1269 = vmatpush1.msra.mxu0 %v1205
    %1270 = vmatprep.subr.mxu0 0.0
    %1271 = vmatpush1.msra.mxu0 %v1206
    %1272 = vmatprep.subr.mxu0 0.0
    %1273 = vmatpush1.msra.mxu0 %v1207
    %1274 = vmatprep.subr.mxu0 0.0
    %1275 = vmatpush1.msra.mxu0 %v1208
    %1276 = vmatprep.subr.mxu0 0.0
    %1277 = vmatpush1.msra.mxu0 %v1209
    %1278 = vmatprep.subr.mxu0 0.0
    %1279 = vmatpush1.msra.mxu0 %v1210
    %1280 = vmatprep.subr.mxu0 0.0
    %1281 = vmatpush1.msra.mxu0 %v1211
    %1282 = vmatprep.subr.mxu0 0.0
    %1283 = vmatpush1.msra.mxu0 %v1212
    %1284 = vmatprep.mubr.f32.mxu0 %v651
    %1285 = vmatmul.mubr.f32.gmra.mrb[0].mxu0 %v650
    %v1286 = vpop.f32.mrb[0].mxu0
    %v1287 = vadd.f32 %v1218, %v1286
    %v1288 = vpop.f32.mrb[0].mxu0
    %1289 = vmatprep.mubr.f32.mxu0 %v658
    %1290 = vmatmul.mubr.f32.gmra.mrb[0].mxu0 %v657
    %v1291 = vpop.f32.mrb[0].mxu0
    %v1292 = vadd.f32 %v1218, %v1291
    %v1293 = vpop.f32.mrb[0].mxu0
    %1294 = vdwg.mxu0
    %v1295 = vsub.f32 0.0, %v1287
    %v1296 = vsub.f32 0.0, %v1292
    %v1297 = vmul.f32 %v1295, 1.442695
    %v1298 = vpow.pop %v1297
    %v1299 = vmul.f32 %v1296, 1.442695
    %v1300 = vpow.pop %v1299
    %v1301 = vadd.f32 %v1298, 1.0
    %v1302 = vadd.f32 %v1300, 1.0
    %v1303 = vrcp.pop %v1301
    %v1304 = vmul.f32 1.0, %v1303
    %v1305 = vrcp.pop %v1302
    %v1306 = vmul.f32 1.0, %v1305
    %v1307 = vmul.f32 %v1304, 2.0
    %v1308 = vmul.f32 %v1306, 2.0
    %v1309 = vsub.f32 %v1307, 1.0
    %v1310 = vsub.f32 %v1308, 1.0
    %v1311 = vld [vmem:[%s12] sm:$0xff]
    %v1312 = vld [vmem:[%s12 + $0x8] sm:$0xff]
    %v1313 = vld [vmem:[%s12 + $0x10] sm:$0xff]
    %v1314 = vld [vmem:[%s12 + $0x18] sm:$0xff]
    %v1315 = vld [vmem:[%s12 + $0x20] sm:$0xff]
    %v1316 = vld [vmem:[%s12 + $0x28] sm:$0xff]
    %v1317 = vld [vmem:[%s12 + $0x30] sm:$0xff]
    %v1318 = vld [vmem:[%s12 + $0x38] sm:$0xff]
    %v1319 = vld [vmem:[%s12 + $0x40] sm:$0xff]
    %v1320 = vld [vmem:[%s12 + $0x48] sm:$0xff]
    %v1321 = vld [vmem:[%s12 + $0x50] sm:$0xff]
    %v1322 = vld [vmem:[%s12 + $0x58] sm:$0xff]
    %v1323 = vld [vmem:[%s12 + $0x60] sm:$0xff]
    %v1324 = vld [vmem:[%s12 + $0x68] sm:$0xff]
    %v1325 = vld [vmem:[%s12 + $0x70] sm:$0xff]
    %v1326 = vld [vmem:[%s12 + $0x78] sm:$0xff]
    %v1327 = vld [vmem:[%s12 + $0x80] sm:$0xff]
    %v1328 = vld [vmem:[%s12 + $0x88] sm:$0xff]
    %v1329 = vld [vmem:[%s12 + $0x90] sm:$0xff]
    %v1330 = vld [vmem:[%s12 + $0x98] sm:$0xff]
    %v1331 = vld [vmem:[%s12 + $0xa0] sm:$0xff]
    %v1332 = vld [vmem:[%s12 + $0xa8] sm:$0xff]
    %v1333 = vld [vmem:[%s12 + $0xb0] sm:$0xff]
    %v1334 = vld [vmem:[%s12 + $0xb8] sm:$0xff]
    %v1335 = vld [vmem:[%s12 + $0xc0] sm:$0xff]
    %v1336 = vld [vmem:[%s12 + $0xc8] sm:$0xff]
    %v1337 = vld [vmem:[%s12 + $0xd0] sm:$0xff]
    %v1338 = vld [vmem:[%s12 + $0xd8] sm:$0xff]
    %v1339 = vld [vmem:[%s12 + $0xe0] sm:$0xff]
    %v1340 = vld [vmem:[%s12 + $0xe8] sm:$0xff]
    %v1341 = vld [vmem:[%s12 + $0xf0] sm:$0xff]
    %v1342 = vld [vmem:[%s12 + $0xf8] sm:$0xff]
    %v1343 = vld [vmem:[%s12 + $0x100] sm:$0xff]
    %v1344 = vld [vmem:[%s12 + $0x108] sm:$0xff]
    %v1345 = vld [vmem:[%s12 + $0x110] sm:$0xff]
    %v1346 = vld [vmem:[%s12 + $0x118] sm:$0xff]
    %v1347 = vld [vmem:[%s12 + $0x120] sm:$0xff]
    %v1348 = vld [vmem:[%s12 + $0x128] sm:$0xff]
    %v1349 = vld [vmem:[%s12 + $0x130] sm:$0xff]
    %v1350 = vld [vmem:[%s12 + $0x138] sm:$0xff]
    %v1351 = vld [vmem:[%s12 + $0x140] sm:$0xff]
    %v1352 = vld [vmem:[%s12 + $0x148] sm:$0xff]
    %v1353 = vld [vmem:[%s12 + $0x150] sm:$0xff]
    %v1354 = vld [vmem:[%s12 + $0x158] sm:$0xff]
    %v1355 = vld [vmem:[%s12 + $0x160] sm:$0xff]
    %v1356 = vld [vmem:[%s12 + $0x168] sm:$0xff]
    %v1357 = vld [vmem:[%s12 + $0x170] sm:$0xff]
    %v1358 = vld [vmem:[%s12 + $0x178] sm:$0xff]
    %v1359 = vld [vmem:[%s12 + $0x180] sm:$0xff]
    %v1360 = vld [vmem:[%s12 + $0x188] sm:$0xff]
    %v1361 = vld [vmem:[%s12 + $0x190] sm:$0xff]
    %v1362 = vld [vmem:[%s12 + $0x198] sm:$0xff]
    %v1363 = vld [vmem:[%s12 + $0x1a0] sm:$0xff]
    %v1364 = vld [vmem:[%s12 + $0x1a8] sm:$0xff]
    %v1365 = vld [vmem:[%s12 + $0x1b0] sm:$0xff]
    %v1366 = vld [vmem:[%s12 + $0x1b8] sm:$0xff]
    %v1367 = vld [vmem:[%s12 + $0x1c0] sm:$0xff]
    %v1368 = vld [vmem:[%s12 + $0x1c8] sm:$0xff]
    %v1369 = vld [vmem:[%s12 + $0x1d0] sm:$0xff]
    %v1370 = vld [vmem:[%s12 + $0x1d8] sm:$0xff]
    %v1371 = vld [vmem:[%s12 + $0x1e0] sm:$0xff]
    %v1372 = vld [vmem:[%s12 + $0x1e8] sm:$0xff]
    %v1373 = vld [vmem:[%s12 + $0x1f0] sm:$0xff]
    %v1374 = vld [vmem:[%s12 + $0x1f8] sm:$0xff]
    %v1375 = vld [vmem:[%s13] sm:$0x3]
    %v1377 = vlaneseq
    %v1378 = vshrl.u32 %v1377, 7
    %v1379 = vsub.s32 0, %v1378
    %v1380 = vrot.slane %v1375, %v1379
    %v1381 = vlaneseq
    %v1382 = vshrl.u32 %v1381, 7
    %v1383 = vsub.s32 1, %v1382
    %v1384 = vrot.slane %v1375, %v1383
    %1387 = vmatprep.subr.mxu0 %v1312
    %1388 = vmatpush1.msra.mxu0 %v1311
    %1389 = vmatprep.subr.mxu0 %v1314
    %1390 = vmatpush1.msra.mxu0 %v1313
    %1391 = vmatprep.subr.mxu0 %v1316
    %1392 = vmatpush1.msra.mxu0 %v1315
    %1393 = vmatprep.subr.mxu0 %v1318
    %1394 = vmatpush1.msra.mxu0 %v1317
    %1395 = vmatprep.subr.mxu0 %v1320
    %1396 = vmatpush1.msra.mxu0 %v1319
    %1397 = vmatprep.subr.mxu0 %v1322
    %1398 = vmatpush1.msra.mxu0 %v1321
    %1399 = vmatprep.subr.mxu0 %v1324
    %1400 = vmatpush1.msra.mxu0 %v1323
    %1401 = vmatprep.subr.mxu0 %v1326
    %1402 = vmatpush1.msra.mxu0 %v1325
    %1403 = vmatprep.subr.mxu0 %v1328
    %1404 = vmatpush1.msra.mxu0 %v1327
    %1405 = vmatprep.subr.mxu0 %v1330
    %1406 = vmatpush1.msra.mxu0 %v1329
    %1407 = vmatprep.subr.mxu0 %v1332
    %1408 = vmatpush1.msra.mxu0 %v1331
    %1409 = vmatprep.subr.mxu0 %v1334
    %1410 = vmatpush1.msra.mxu0 %v1333
    %1411 = vmatprep.subr.mxu0 %v1336
    %1412 = vmatpush1.msra.mxu0 %v1335
    %1413 = vmatprep.subr.mxu0 %v1338
    %1414 = vmatpush1.msra.mxu0 %v1337
    %1415 = vmatprep.subr.mxu0 %v1340
    %1416 = vmatpush1.msra.mxu0 %v1339
    %1417 = vmatprep.subr.mxu0 %v1342
    %1418 = vmatpush1.msra.mxu0 %v1341
    %1419 = vmatprep.subr.mxu0 %v1344
    %1420 = vmatpush1.msra.mxu0 %v1343
    %1421 = vmatprep.subr.mxu0 %v1346
    %1422 = vmatpush1.msra.mxu0 %v1345
    %1423 = vmatprep.subr.mxu0 %v1348
    %1424 = vmatpush1.msra.mxu0 %v1347
    %1425 = vmatprep.subr.mxu0 %v1350
    %1426 = vmatpush1.msra.mxu0 %v1349
    %1427 = vmatprep.subr.mxu0 %v1352
    %1428 = vmatpush1.msra.mxu0 %v1351
    %1429 = vmatprep.subr.mxu0 %v1354
    %1430 = vmatpush1.msra.mxu0 %v1353
    %1431 = vmatprep.subr.mxu0 %v1356
    %1432 = vmatpush1.msra.mxu0 %v1355
    %1433 = vmatprep.subr.mxu0 %v1358
    %1434 = vmatpush1.msra.mxu0 %v1357
    %1435 = vmatprep.subr.mxu0 %v1360
    %1436 = vmatpush1.msra.mxu0 %v1359
    %1437 = vmatprep.subr.mxu0 %v1362
    %1438 = vmatpush1.msra.mxu0 %v1361
    %1439 = vmatprep.subr.mxu0 %v1364
    %1440 = vmatpush1.msra.mxu0 %v1363
    %1441 = vmatprep.subr.mxu0 %v1366
    %1442 = vmatpush1.msra.mxu0 %v1365
    %1443 = vmatprep.subr.mxu0 %v1368
    %1444 = vmatpush1.msra.mxu0 %v1367
    %1445 = vmatprep.subr.mxu0 %v1370
    %1446 = vmatpush1.msra.mxu0 %v1369
    %1447 = vmatprep.subr.mxu0 %v1372
    %1448 = vmatpush1.msra.mxu0 %v1371
    %1449 = vmatprep.subr.mxu0 %v1374
    %1450 = vmatpush1.msra.mxu0 %v1373
    %1451 = vmatprep.mubr.f32.mxu0 %v653
    %1452 = vmatmul.mubr.f32.gmra.mrb[0].mxu0 %v652
    %v1453 = vpop.f32.mrb[0].mxu0
    %v1454 = vadd.f32 %v1380, %v1453
    %v1455 = vpop.f32.mrb[0].mxu0
    %v1456 = vadd.f32 %v1384, %v1455
    %1457 = vmatprep.mubr.f32.mxu0 %v660
    %1458 = vmatmul.mubr.f32.gmra.mrb[0].mxu0 %v659
    %v1459 = vpop.f32.mrb[0].mxu0
    %v1460 = vadd.f32 %v1380, %v1459
    %v1461 = vpop.f32.mrb[0].mxu0
    %v1462 = vadd.f32 %v1384, %v1461
    %1463 = vdwg.mxu0
    %v1464 = vmul.f32 %v1454, %v1454
    %v1465 = vmul.f32 %v1456, %v1456
    %v1466 = vmul.f32 %v1460, %v1460
    %v1467 = vmul.f32 %v1462, %v1462
    %1470 = vrot.lane.b32.xlu0 %v1464, 112
    %v1471 = vpop.permute.xlu0 %1470
    %1472 = vrot.lane.b32.xlu0 %v1466, 112
    %v1473 = vpop.permute.xlu0 %1472
    %1476 = vrot.lane.b32.xlu0 %v1464, 96
    %v1477 = vpop.permute.xlu0 %1476
    %1478 = vrot.lane.b32.xlu0 %v1466, 96
    %v1479 = vpop.permute.xlu0 %1478
    %1482 = vrot.lane.b32.xlu0 %v1464, 80
    %v1483 = vpop.permute.xlu0 %1482
    %1484 = vrot.lane.b32.xlu0 %v1466, 80
    %v1485 = vpop.permute.xlu0 %1484
    %1488 = vrot.lane.b32.xlu0 %v1464, 64
    %v1489 = vpop.permute.xlu0 %1488
    %1490 = vrot.lane.b32.xlu0 %v1466, 64
    %v1491 = vpop.permute.xlu0 %1490
    %1494 = vrot.lane.b32.xlu0 %v1464, 48
    %v1495 = vpop.permute.xlu0 %1494
    %1496 = vrot.lane.b32.xlu0 %v1466, 48
    %v1497 = vpop.permute.xlu0 %1496
    %1500 = vrot.lane.b32.xlu0 %v1464, 32
    %v1501 = vpop.permute.xlu0 %1500
    %1502 = vrot.lane.b32.xlu0 %v1466, 32
    %v1503 = vpop.permute.xlu0 %1502
    %1506 = vrot.lane.b32.xlu0 %v1464, 16
    %v1507 = vpop.permute.xlu0 %1506
    %1508 = vrot.lane.b32.xlu0 %v1466, 16
    %v1509 = vpop.permute.xlu0 %1508
    %1514 = vrot.lane.b32.xlu0 %v1465, 112
    %v1515 = vpop.permute.xlu0 %1514
    %1516 = vrot.lane.b32.xlu0 %v1467, 112
    %v1517 = vpop.permute.xlu0 %1516
    %1520 = vrot.lane.b32.xlu0 %v1465, 96
    %v1521 = vpop.permute.xlu0 %1520
    %1522 = vrot.lane.b32.xlu0 %v1467, 96
    %v1523 = vpop.permute.xlu0 %1522
    %1526 = vrot.lane.b32.xlu0 %v1465, 80
    %v1527 = vpop.permute.xlu0 %1526
    %1528 = vrot.lane.b32.xlu0 %v1467, 80
    %v1529 = vpop.permute.xlu0 %1528
    %1532 = vrot.lane.b32.xlu0 %v1465, 64
    %v1533 = vpop.permute.xlu0 %1532
    %1534 = vrot.lane.b32.xlu0 %v1467, 64
    %v1535 = vpop.permute.xlu0 %1534
    %1538 = vrot.lane.b32.xlu0 %v1465, 48
    %v1539 = vpop.permute.xlu0 %1538
    %1540 = vrot.lane.b32.xlu0 %v1467, 48
    %v1541 = vpop.permute.xlu0 %1540
    %1544 = vrot.lane.b32.xlu0 %v1465, 32
    %v1545 = vpop.permute.xlu0 %1544
    %1546 = vrot.lane.b32.xlu0 %v1467, 32
    %v1547 = vpop.permute.xlu0 %1546
    %1550 = vrot.lane.b32.xlu0 %v1465, 16
    %v1551 = vpop.permute.xlu0 %1550
    %1552 = vrot.lane.b32.xlu0 %v1467, 16
    %v1553 = vpop.permute.xlu0 %1552
    %v1556 = vcombine.low %v1464, %v1477
    %v1557 = vcombine.high %v1464, %v1477
    %v1559 = vunpack.c.l.s4 1983009808
    %v1560 = vunpack.c.0.s8 %v1559
    %v1561 = vlaneseq
    %v1562 = vshrl.u32 %v1561, 7
    %v1563 = vsub.s32 %v1560, %v1562
    %v1564 = vrot.slane %v1556, %v1563
    %v1566 = vunpack.c.l.s4 1983009808
    %v1567 = vunpack.c.0.s8 %v1566
    %v1568 = vlaneseq
    %v1569 = vshrl.u32 %v1568, 7
    %v1570 = vsub.s32 %v1567, %v1569
    %v1571 = vrot.slane %v1557, %v1570
    %v1572 = vcombine.low %v1471, %v1483
    %v1573 = vcombine.high %v1471, %v1483
    %v1575 = vunpack.c.l.s4 1983009808
    %v1576 = vunpack.c.0.s8 %v1575
    %v1577 = vlaneseq
    %v1578 = vshrl.u32 %v1577, 7
    %v1579 = vsub.s32 %v1576, %v1578
    %v1580 = vrot.slane %v1572, %v1579
    %v1582 = vunpack.c.l.s4 1983009808
    %v1583 = vunpack.c.0.s8 %v1582
    %v1584 = vlaneseq
    %v1585 = vshrl.u32 %v1584, 7
    %v1586 = vsub.s32 %v1583, %v1585
    %v1587 = vrot.slane %v1573, %v1586
    %v1588 = vcombine.low %v1489, %v1501
    %v1589 = vcombine.high %v1489, %v1501
    %v1591 = vunpack.c.l.s4 1983009808
    %v1592 = vunpack.c.0.s8 %v1591
    %v1593 = vlaneseq
    %v1594 = vshrl.u32 %v1593, 7
    %v1595 = vsub.s32 %v1592, %v1594
    %v1596 = vrot.slane %v1588, %v1595
    %v1598 = vunpack.c.l.s4 1983009808
    %v1599 = vunpack.c.0.s8 %v1598
    %v1600 = vlaneseq
    %v1601 = vshrl.u32 %v1600, 7
    %v1602 = vsub.s32 %v1599, %v1601
    %v1603 = vrot.slane %v1589, %v1602
    %v1604 = vcombine.low %v1495, %v1507
    %v1605 = vcombine.high %v1495, %v1507
    %v1607 = vunpack.c.l.s4 1983009808
    %v1608 = vunpack.c.0.s8 %v1607
    %v1609 = vlaneseq
    %v1610 = vshrl.u32 %v1609, 7
    %v1611 = vsub.s32 %v1608, %v1610
    %v1612 = vrot.slane %v1604, %v1611
    %v1614 = vunpack.c.l.s4 1983009808
    %v1615 = vunpack.c.0.s8 %v1614
    %v1616 = vlaneseq
    %v1617 = vshrl.u32 %v1616, 7
    %v1618 = vsub.s32 %v1615, %v1617
    %v1619 = vrot.slane %v1605, %v1618
    %v1620 = vcombine.low %v1564, %v1580
    %v1621 = vcombine.high %v1564, %v1580
    %v1623 = vunpack.c.l.s4 1934713408
    %v1624 = vunpack.c.0.s8 %v1623
    %v1625 = vlaneseq
    %v1626 = vshrl.u32 %v1625, 7
    %v1627 = vsub.s32 %v1624, %v1626
    %v1628 = vrot.slane %v1620, %v1627
    %v1630 = vunpack.c.l.s4 1934713408
    %v1631 = vunpack.c.0.s8 %v1630
    %v1632 = vlaneseq
    %v1633 = vshrl.u32 %v1632, 7
    %v1634 = vsub.s32 %v1631, %v1633
    %v1635 = vrot.slane %v1621, %v1634
    %v1636 = vcombine.low %v1571, %v1587
    %v1637 = vcombine.high %v1571, %v1587
    %v1639 = vunpack.c.l.s4 1934713408
    %v1640 = vunpack.c.0.s8 %v1639
    %v1641 = vlaneseq
    %v1642 = vshrl.u32 %v1641, 7
    %v1643 = vsub.s32 %v1640, %v1642
    %v1644 = vrot.slane %v1636, %v1643
    %v1646 = vunpack.c.l.s4 1934713408
    %v1647 = vunpack.c.0.s8 %v1646
    %v1648 = vlaneseq
    %v1649 = vshrl.u32 %v1648, 7
    %v1650 = vsub.s32 %v1647, %v1649
    %v1651 = vrot.slane %v1637, %v1650
    %v1652 = vcombine.low %v1596, %v1612
    %v1653 = vcombine.high %v1596, %v1612
    %v1655 = vunpack.c.l.s4 1934713408
    %v1656 = vunpack.c.0.s8 %v1655
    %v1657 = vlaneseq
    %v1658 = vshrl.u32 %v1657, 7
    %v1659 = vsub.s32 %v1656, %v1658
    %v1660 = vrot.slane %v1652, %v1659
    %v1662 = vunpack.c.l.s4 1934713408
    %v1663 = vunpack.c.0.s8 %v1662
    %v1664 = vlaneseq
    %v1665 = vshrl.u32 %v1664, 7
    %v1666 = vsub.s32 %v1663, %v1665
    %v1667 = vrot.slane %v1653, %v1666
    %v1668 = vcombine.low %v1603, %v1619
    %v1669 = vcombine.high %v1603, %v1619
    %v1671 = vunpack.c.l.s4 1934713408
    %v1672 = vunpack.c.0.s8 %v1671
    %v1673 = vlaneseq
    %v1674 = vshrl.u32 %v1673, 7
    %v1675 = vsub.s32 %v1672, %v1674
    %v1676 = vrot.slane %v1668, %v1675
    %v1678 = vunpack.c.l.s4 1934713408
    %v1679 = vunpack.c.0.s8 %v1678
    %v1680 = vlaneseq
    %v1681 = vshrl.u32 %v1680, 7
    %v1682 = vsub.s32 %v1679, %v1681
    %v1683 = vrot.slane %v1669, %v1682
    %v1684 = vcombine.low %v1628, %v1660
    %v1685 = vcombine.high %v1628, %v1660
    %v1686 = vcombine.low %v1635, %v1667
    %v1687 = vcombine.high %v1635, %v1667
    %v1688 = vcombine.low %v1644, %v1676
    %v1689 = vcombine.high %v1644, %v1676
    %v1690 = vcombine.low %v1651, %v1683
    %v1691 = vcombine.high %v1651, %v1683
    %v1692 = vcombine.low %v1465, %v1521
    %v1693 = vcombine.high %v1465, %v1521
    %v1695 = vunpack.c.l.s4 1983009808
    %v1696 = vunpack.c.0.s8 %v1695
    %v1697 = vlaneseq
    %v1698 = vshrl.u32 %v1697, 7
    %v1699 = vsub.s32 %v1696, %v1698
    %v1700 = vrot.slane %v1692, %v1699
    %v1702 = vunpack.c.l.s4 1983009808
    %v1703 = vunpack.c.0.s8 %v1702
    %v1704 = vlaneseq
    %v1705 = vshrl.u32 %v1704, 7
    %v1706 = vsub.s32 %v1703, %v1705
    %v1707 = vrot.slane %v1693, %v1706
    %v1708 = vcombine.low %v1515, %v1527
    %v1709 = vcombine.high %v1515, %v1527
    %v1711 = vunpack.c.l.s4 1983009808
    %v1712 = vunpack.c.0.s8 %v1711
    %v1713 = vlaneseq
    %v1714 = vshrl.u32 %v1713, 7
    %v1715 = vsub.s32 %v1712, %v1714
    %v1716 = vrot.slane %v1708, %v1715
    %v1718 = vunpack.c.l.s4 1983009808
    %v1719 = vunpack.c.0.s8 %v1718
    %v1720 = vlaneseq
    %v1721 = vshrl.u32 %v1720, 7
    %v1722 = vsub.s32 %v1719, %v1721
    %v1723 = vrot.slane %v1709, %v1722
    %v1724 = vcombine.low %v1533, %v1545
    %v1725 = vcombine.high %v1533, %v1545
    %v1727 = vunpack.c.l.s4 1983009808
    %v1728 = vunpack.c.0.s8 %v1727
    %v1729 = vlaneseq
    %v1730 = vshrl.u32 %v1729, 7
    %v1731 = vsub.s32 %v1728, %v1730
    %v1732 = vrot.slane %v1724, %v1731
    %v1734 = vunpack.c.l.s4 1983009808
    %v1735 = vunpack.c.0.s8 %v1734
    %v1736 = vlaneseq
    %v1737 = vshrl.u32 %v1736, 7
    %v1738 = vsub.s32 %v1735, %v1737
    %v1739 = vrot.slane %v1725, %v1738
    %v1740 = vcombine.low %v1539, %v1551
    %v1741 = vcombine.high %v1539, %v1551
    %v1743 = vunpack.c.l.s4 1983009808
    %v1744 = vunpack.c.0.s8 %v1743
    %v1745 = vlaneseq
    %v1746 = vshrl.u32 %v1745, 7
    %v1747 = vsub.s32 %v1744, %v1746
    %v1748 = vrot.slane %v1740, %v1747
    %v1750 = vunpack.c.l.s4 1983009808
    %v1751 = vunpack.c.0.s8 %v1750
    %v1752 = vlaneseq
    %v1753 = vshrl.u32 %v1752, 7
    %v1754 = vsub.s32 %v1751, %v1753
    %v1755 = vrot.slane %v1741, %v1754
    %v1756 = vcombine.low %v1700, %v1716
    %v1757 = vcombine.high %v1700, %v1716
    %v1759 = vunpack.c.l.s4 1934713408
    %v1760 = vunpack.c.0.s8 %v1759
    %v1761 = vlaneseq
    %v1762 = vshrl.u32 %v1761, 7
    %v1763 = vsub.s32 %v1760, %v1762
    %v1764 = vrot.slane %v1756, %v1763
    %v1766 = vunpack.c.l.s4 1934713408
    %v1767 = vunpack.c.0.s8 %v1766
    %v1768 = vlaneseq
    %v1769 = vshrl.u32 %v1768, 7
    %v1770 = vsub.s32 %v1767, %v1769
    %v1771 = vrot.slane %v1757, %v1770
    %v1772 = vcombine.low %v1707, %v1723
    %v1773 = vcombine.high %v1707, %v1723
    %v1775 = vunpack.c.l.s4 1934713408
    %v1776 = vunpack.c.0.s8 %v1775
    %v1777 = vlaneseq
    %v1778 = vshrl.u32 %v1777, 7
    %v1779 = vsub.s32 %v1776, %v1778
    %v1780 = vrot.slane %v1772, %v1779
    %v1782 = vunpack.c.l.s4 1934713408
    %v1783 = vunpack.c.0.s8 %v1782
    %v1784 = vlaneseq
    %v1785 = vshrl.u32 %v1784, 7
    %v1786 = vsub.s32 %v1783, %v1785
    %v1787 = vrot.slane %v1773, %v1786
    %v1788 = vcombine.low %v1732, %v1748
    %v1789 = vcombine.high %v1732, %v1748
    %v1791 = vunpack.c.l.s4 1934713408
    %v1792 = vunpack.c.0.s8 %v1791
    %v1793 = vlaneseq
    %v1794 = vshrl.u32 %v1793, 7
    %v1795 = vsub.s32 %v1792, %v1794
    %v1796 = vrot.slane %v1788, %v1795
    %v1798 = vunpack.c.l.s4 1934713408
    %v1799 = vunpack.c.0.s8 %v1798
    %v1800 = vlaneseq
    %v1801 = vshrl.u32 %v1800, 7
    %v1802 = vsub.s32 %v1799, %v1801
    %v1803 = vrot.slane %v1789, %v1802
    %v1804 = vcombine.low %v1739, %v1755
    %v1805 = vcombine.high %v1739, %v1755
    %v1807 = vunpack.c.l.s4 1934713408
    %v1808 = vunpack.c.0.s8 %v1807
    %v1809 = vlaneseq
    %v1810 = vshrl.u32 %v1809, 7
    %v1811 = vsub.s32 %v1808, %v1810
    %v1812 = vrot.slane %v1804, %v1811
    %v1814 = vunpack.c.l.s4 1934713408
    %v1815 = vunpack.c.0.s8 %v1814
    %v1816 = vlaneseq
    %v1817 = vshrl.u32 %v1816, 7
    %v1818 = vsub.s32 %v1815, %v1817
    %v1819 = vrot.slane %v1805, %v1818
    %v1820 = vcombine.low %v1764, %v1796
    %v1821 = vcombine.high %v1764, %v1796
    %v1822 = vcombine.low %v1771, %v1803
    %v1823 = vcombine.high %v1771, %v1803
    %v1824 = vcombine.low %v1780, %v1812
    %v1825 = vcombine.high %v1780, %v1812
    %v1826 = vcombine.low %v1787, %v1819
    %v1827 = vcombine.high %v1787, %v1819
    %v1828 = vcombine.low %v1466, %v1479
    %v1829 = vcombine.high %v1466, %v1479
    %v1831 = vunpack.c.l.s4 1983009808
    %v1832 = vunpack.c.0.s8 %v1831
    %v1833 = vlaneseq
    %v1834 = vshrl.u32 %v1833, 7
    %v1835 = vsub.s32 %v1832, %v1834
    %v1836 = vrot.slane %v1828, %v1835
    %v1838 = vunpack.c.l.s4 1983009808
    %v1839 = vunpack.c.0.s8 %v1838
    %v1840 = vlaneseq
    %v1841 = vshrl.u32 %v1840, 7
    %v1842 = vsub.s32 %v1839, %v1841
    %v1843 = vrot.slane %v1829, %v1842
    %v1844 = vcombine.low %v1473, %v1485
    %v1845 = vcombine.high %v1473, %v1485
    %v1847 = vunpack.c.l.s4 1983009808
    %v1848 = vunpack.c.0.s8 %v1847
    %v1849 = vlaneseq
    %v1850 = vshrl.u32 %v1849, 7
    %v1851 = vsub.s32 %v1848, %v1850
    %v1852 = vrot.slane %v1844, %v1851
    %v1854 = vunpack.c.l.s4 1983009808
    %v1855 = vunpack.c.0.s8 %v1854
    %v1856 = vlaneseq
    %v1857 = vshrl.u32 %v1856, 7
    %v1858 = vsub.s32 %v1855, %v1857
    %v1859 = vrot.slane %v1845, %v1858
    %v1860 = vcombine.low %v1491, %v1503
    %v1861 = vcombine.high %v1491, %v1503
    %v1863 = vunpack.c.l.s4 1983009808
    %v1864 = vunpack.c.0.s8 %v1863
    %v1865 = vlaneseq
    %v1866 = vshrl.u32 %v1865, 7
    %v1867 = vsub.s32 %v1864, %v1866
    %v1868 = vrot.slane %v1860, %v1867
    %v1870 = vunpack.c.l.s4 1983009808
    %v1871 = vunpack.c.0.s8 %v1870
    %v1872 = vlaneseq
    %v1873 = vshrl.u32 %v1872, 7
    %v1874 = vsub.s32 %v1871, %v1873
    %v1875 = vrot.slane %v1861, %v1874
    %v1876 = vcombine.low %v1497, %v1509
    %v1877 = vcombine.high %v1497, %v1509
    %v1879 = vunpack.c.l.s4 1983009808
    %v1880 = vunpack.c.0.s8 %v1879
    %v1881 = vlaneseq
    %v1882 = vshrl.u32 %v1881, 7
    %v1883 = vsub.s32 %v1880, %v1882
    %v1884 = vrot.slane %v1876, %v1883
    %v1886 = vunpack.c.l.s4 1983009808
    %v1887 = vunpack.c.0.s8 %v1886
    %v1888 = vlaneseq
    %v1889 = vshrl.u32 %v1888, 7
    %v1890 = vsub.s32 %v1887, %v1889
    %v1891 = vrot.slane %v1877, %v1890
    %v1892 = vcombine.low %v1836, %v1852
    %v1893 = vcombine.high %v1836, %v1852
    %v1895 = vunpack.c.l.s4 1934713408
    %v1896 = vunpack.c.0.s8 %v1895
    %v1897 = vlaneseq
    %v1898 = vshrl.u32 %v1897, 7
    %v1899 = vsub.s32 %v1896, %v1898
    %v1900 = vrot.slane %v1892, %v1899
    %v1902 = vunpack.c.l.s4 1934713408
    %v1903 = vunpack.c.0.s8 %v1902
    %v1904 = vlaneseq
    %v1905 = vshrl.u32 %v1904, 7
    %v1906 = vsub.s32 %v1903, %v1905
    %v1907 = vrot.slane %v1893, %v1906
    %v1908 = vcombine.low %v1843, %v1859
    %v1909 = vcombine.high %v1843, %v1859
    %v1911 = vunpack.c.l.s4 1934713408
    %v1912 = vunpack.c.0.s8 %v1911
    %v1913 = vlaneseq
    %v1914 = vshrl.u32 %v1913, 7
    %v1915 = vsub.s32 %v1912, %v1914
    %v1916 = vrot.slane %v1908, %v1915
    %v1918 = vunpack.c.l.s4 1934713408
    %v1919 = vunpack.c.0.s8 %v1918
    %v1920 = vlaneseq
    %v1921 = vshrl.u32 %v1920, 7
    %v1922 = vsub.s32 %v1919, %v1921
    %v1923 = vrot.slane %v1909, %v1922
    %v1924 = vcombine.low %v1868, %v1884
    %v1925 = vcombine.high %v1868, %v1884
    %v1927 = vunpack.c.l.s4 1934713408
    %v1928 = vunpack.c.0.s8 %v1927
    %v1929 = vlaneseq
    %v1930 = vshrl.u32 %v1929, 7
    %v1931 = vsub.s32 %v1928, %v1930
    %v1932 = vrot.slane %v1924, %v1931
    %v1934 = vunpack.c.l.s4 1934713408
    %v1935 = vunpack.c.0.s8 %v1934
    %v1936 = vlaneseq
    %v1937 = vshrl.u32 %v1936, 7
    %v1938 = vsub.s32 %v1935, %v1937
    %v1939 = vrot.slane %v1925, %v1938
    %v1940 = vcombine.low %v1875, %v1891
    %v1941 = vcombine.high %v1875, %v1891
    %v1943 = vunpack.c.l.s4 1934713408
    %v1944 = vunpack.c.0.s8 %v1943
    %v1945 = vlaneseq
    %v1946 = vshrl.u32 %v1945, 7
    %v1947 = vsub.s32 %v1944, %v1946
    %v1948 = vrot.slane %v1940, %v1947
    %v1950 = vunpack.c.l.s4 1934713408
    %v1951 = vunpack.c.0.s8 %v1950
    %v1952 = vlaneseq
    %v1953 = vshrl.u32 %v1952, 7
    %v1954 = vsub.s32 %v1951, %v1953
    %v1955 = vrot.slane %v1941, %v1954
    %v1956 = vcombine.low %v1900, %v1932
    %v1957 = vcombine.high %v1900, %v1932
    %v1958 = vcombine.low %v1907, %v1939
    %v1959 = vcombine.high %v1907, %v1939
    %v1960 = vcombine.low %v1916, %v1948
    %v1961 = vcombine.high %v1916, %v1948
    %v1962 = vcombine.low %v1923, %v1955
    %v1963 = vcombine.high %v1923, %v1955
    %v1964 = vcombine.low %v1467, %v1523
    %v1965 = vcombine.high %v1467, %v1523
    %v1967 = vunpack.c.l.s4 1983009808
    %v1968 = vunpack.c.0.s8 %v1967
    %v1969 = vlaneseq
    %v1970 = vshrl.u32 %v1969, 7
    %v1971 = vsub.s32 %v1968, %v1970
    %v1972 = vrot.slane %v1964, %v1971
    %v1974 = vunpack.c.l.s4 1983009808
    %v1975 = vunpack.c.0.s8 %v1974
    %v1976 = vlaneseq
    %v1977 = vshrl.u32 %v1976, 7
    %v1978 = vsub.s32 %v1975, %v1977
    %v1979 = vrot.slane %v1965, %v1978
    %v1980 = vcombine.low %v1517, %v1529
    %v1981 = vcombine.high %v1517, %v1529
    %v1983 = vunpack.c.l.s4 1983009808
    %v1984 = vunpack.c.0.s8 %v1983
    %v1985 = vlaneseq
    %v1986 = vshrl.u32 %v1985, 7
    %v1987 = vsub.s32 %v1984, %v1986
    %v1988 = vrot.slane %v1980, %v1987
    %v1990 = vunpack.c.l.s4 1983009808
    %v1991 = vunpack.c.0.s8 %v1990
    %v1992 = vlaneseq
    %v1993 = vshrl.u32 %v1992, 7
    %v1994 = vsub.s32 %v1991, %v1993
    %v1995 = vrot.slane %v1981, %v1994
    %v1996 = vcombine.low %v1535, %v1547
    %v1997 = vcombine.high %v1535, %v1547
    %v1999 = vunpack.c.l.s4 1983009808
    %v2000 = vunpack.c.0.s8 %v1999
    %v2001 = vlaneseq
    %v2002 = vshrl.u32 %v2001, 7
    %v2003 = vsub.s32 %v2000, %v2002
    %v2004 = vrot.slane %v1996, %v2003
    %v2006 = vunpack.c.l.s4 1983009808
    %v2007 = vunpack.c.0.s8 %v2006
    %v2008 = vlaneseq
    %v2009 = vshrl.u32 %v2008, 7
    %v2010 = vsub.s32 %v2007, %v2009
    %v2011 = vrot.slane %v1997, %v2010
    %v2012 = vcombine.low %v1541, %v1553
    %v2013 = vcombine.high %v1541, %v1553
    %v2015 = vunpack.c.l.s4 1983009808
    %v2016 = vunpack.c.0.s8 %v2015
    %v2017 = vlaneseq
    %v2018 = vshrl.u32 %v2017, 7
    %v2019 = vsub.s32 %v2016, %v2018
    %v2020 = vrot.slane %v2012, %v2019
    %v2022 = vunpack.c.l.s4 1983009808
    %v2023 = vunpack.c.0.s8 %v2022
    %v2024 = vlaneseq
    %v2025 = vshrl.u32 %v2024, 7
    %v2026 = vsub.s32 %v2023, %v2025
    %v2027 = vrot.slane %v2013, %v2026
    %v2028 = vcombine.low %v1972, %v1988
    %v2029 = vcombine.high %v1972, %v1988
    %v2031 = vunpack.c.l.s4 1934713408
    %v2032 = vunpack.c.0.s8 %v2031
    %v2033 = vlaneseq
    %v2034 = vshrl.u32 %v2033, 7
    %v2035 = vsub.s32 %v2032, %v2034
    %v2036 = vrot.slane %v2028, %v2035
    %v2038 = vunpack.c.l.s4 1934713408
    %v2039 = vunpack.c.0.s8 %v2038
    %v2040 = vlaneseq
    %v2041 = vshrl.u32 %v2040, 7
    %v2042 = vsub.s32 %v2039, %v2041
    %v2043 = vrot.slane %v2029, %v2042
    %v2044 = vcombine.low %v1979, %v1995
    %v2045 = vcombine.high %v1979, %v1995
    %v2047 = vunpack.c.l.s4 1934713408
    %v2048 = vunpack.c.0.s8 %v2047
    %v2049 = vlaneseq
    %v2050 = vshrl.u32 %v2049, 7
    %v2051 = vsub.s32 %v2048, %v2050
    %v2052 = vrot.slane %v2044, %v2051
    %v2054 = vunpack.c.l.s4 1934713408
    %v2055 = vunpack.c.0.s8 %v2054
    %v2056 = vlaneseq
    %v2057 = vshrl.u32 %v2056, 7
    %v2058 = vsub.s32 %v2055, %v2057
    %v2059 = vrot.slane %v2045, %v2058
    %v2060 = vcombine.low %v2004, %v2020
    %v2061 = vcombine.high %v2004, %v2020
    %v2063 = vunpack.c.l.s4 1934713408
    %v2064 = vunpack.c.0.s8 %v2063
    %v2065 = vlaneseq
    %v2066 = vshrl.u32 %v2065, 7
    %v2067 = vsub.s32 %v2064, %v2066
    %v2068 = vrot.slane %v2060, %v2067
    %v2070 = vunpack.c.l.s4 1934713408
    %v2071 = vunpack.c.0.s8 %v2070
    %v2072 = vlaneseq
    %v2073 = vshrl.u32 %v2072, 7
    %v2074 = vsub.s32 %v2071, %v2073
    %v2075 = vrot.slane %v2061, %v2074
    %v2076 = vcombine.low %v2011, %v2027
    %v2077 = vcombine.high %v2011, %v2027
    %v2079 = vunpack.c.l.s4 1934713408
    %v2080 = vunpack.c.0.s8 %v2079
    %v2081 = vlaneseq
    %v2082 = vshrl.u32 %v2081, 7
    %v2083 = vsub.s32 %v2080, %v2082
    %v2084 = vrot.slane %v2076, %v2083
    %v2086 = vunpack.c.l.s4 1934713408
    %v2087 = vunpack.c.0.s8 %v2086
    %v2088 = vlaneseq
    %v2089 = vshrl.u32 %v2088, 7
    %v2090 = vsub.s32 %v2087, %v2089
    %v2091 = vrot.slane %v2077, %v2090
    %v2092 = vcombine.low %v2036, %v2068
    %v2093 = vcombine.high %v2036, %v2068
    %v2094 = vcombine.low %v2043, %v2075
    %v2095 = vcombine.high %v2043, %v2075
    %v2096 = vcombine.low %v2052, %v2084
    %v2097 = vcombine.high %v2052, %v2084
    %v2098 = vcombine.low %v2059, %v2091
    %v2099 = vcombine.high %v2059, %v2091
    %v2100 = vcombine.low %v1684, %v1686
    %v2101 = vcombine.high %v1684, %v1686
    %v2103 = vunpack.c.l.s4 1983009808
    %v2104 = vunpack.c.0.s8 %v2103
    %v2105 = vlaneseq
    %v2106 = vshrl.u32 %v2105, 7
    %v2107 = vsub.s32 %v2104, %v2106
    %v2108 = vrot.slane %v2100, %v2107
    %v2110 = vunpack.c.l.s4 1983009808
    %v2111 = vunpack.c.0.s8 %v2110
    %v2112 = vlaneseq
    %v2113 = vshrl.u32 %v2112, 7
    %v2114 = vsub.s32 %v2111, %v2113
    %v2115 = vrot.slane %v2101, %v2114
    %v2116 = vcombine.low %v1685, %v1687
    %v2117 = vcombine.high %v1685, %v1687
    %v2119 = vunpack.c.l.s4 1983009808
    %v2120 = vunpack.c.0.s8 %v2119
    %v2121 = vlaneseq
    %v2122 = vshrl.u32 %v2121, 7
    %v2123 = vsub.s32 %v2120, %v2122
    %v2124 = vrot.slane %v2116, %v2123
    %v2126 = vunpack.c.l.s4 1983009808
    %v2127 = vunpack.c.0.s8 %v2126
    %v2128 = vlaneseq
    %v2129 = vshrl.u32 %v2128, 7
    %v2130 = vsub.s32 %v2127, %v2129
    %v2131 = vrot.slane %v2117, %v2130
    %v2132 = vcombine.low %v1688, %v1690
    %v2133 = vcombine.high %v1688, %v1690
    %v2135 = vunpack.c.l.s4 1983009808
    %v2136 = vunpack.c.0.s8 %v2135
    %v2137 = vlaneseq
    %v2138 = vshrl.u32 %v2137, 7
    %v2139 = vsub.s32 %v2136, %v2138
    %v2140 = vrot.slane %v2132, %v2139
    %v2142 = vunpack.c.l.s4 1983009808
    %v2143 = vunpack.c.0.s8 %v2142
    %v2144 = vlaneseq
    %v2145 = vshrl.u32 %v2144, 7
    %v2146 = vsub.s32 %v2143, %v2145
    %v2147 = vrot.slane %v2133, %v2146
    %v2148 = vcombine.low %v1689, %v1691
    %v2149 = vcombine.high %v1689, %v1691
    %v2151 = vunpack.c.l.s4 1983009808
    %v2152 = vunpack.c.0.s8 %v2151
    %v2153 = vlaneseq
    %v2154 = vshrl.u32 %v2153, 7
    %v2155 = vsub.s32 %v2152, %v2154
    %v2156 = vrot.slane %v2148, %v2155
    %v2158 = vunpack.c.l.s4 1983009808
    %v2159 = vunpack.c.0.s8 %v2158
    %v2160 = vlaneseq
    %v2161 = vshrl.u32 %v2160, 7
    %v2162 = vsub.s32 %v2159, %v2161
    %v2163 = vrot.slane %v2149, %v2162
    %v2164 = vcombine.low %v2108, %v2124
    %v2165 = vcombine.high %v2108, %v2124
    %v2167 = vunpack.c.l.s4 1934713408
    %v2168 = vunpack.c.0.s8 %v2167
    %v2169 = vlaneseq
    %v2170 = vshrl.u32 %v2169, 7
    %v2171 = vsub.s32 %v2168, %v2170
    %v2172 = vrot.slane %v2164, %v2171
    %v2174 = vunpack.c.l.s4 1934713408
    %v2175 = vunpack.c.0.s8 %v2174
    %v2176 = vlaneseq
    %v2177 = vshrl.u32 %v2176, 7
    %v2178 = vsub.s32 %v2175, %v2177
    %v2179 = vrot.slane %v2165, %v2178
    %v2180 = vcombine.low %v2115, %v2131
    %v2181 = vcombine.high %v2115, %v2131
    %v2183 = vunpack.c.l.s4 1934713408
    %v2184 = vunpack.c.0.s8 %v2183
    %v2185 = vlaneseq
    %v2186 = vshrl.u32 %v2185, 7
    %v2187 = vsub.s32 %v2184, %v2186
    %v2188 = vrot.slane %v2180, %v2187
    %v2190 = vunpack.c.l.s4 1934713408
    %v2191 = vunpack.c.0.s8 %v2190
    %v2192 = vlaneseq
    %v2193 = vshrl.u32 %v2192, 7
    %v2194 = vsub.s32 %v2191, %v2193
    %v2195 = vrot.slane %v2181, %v2194
    %v2196 = vcombine.low %v2140, %v2156
    %v2197 = vcombine.high %v2140, %v2156
    %v2199 = vunpack.c.l.s4 1934713408
    %v2200 = vunpack.c.0.s8 %v2199
    %v2201 = vlaneseq
    %v2202 = vshrl.u32 %v2201, 7
    %v2203 = vsub.s32 %v2200, %v2202
    %v2204 = vrot.slane %v2196, %v2203
    %v2206 = vunpack.c.l.s4 1934713408
    %v2207 = vunpack.c.0.s8 %v2206
    %v2208 = vlaneseq
    %v2209 = vshrl.u32 %v2208, 7
    %v2210 = vsub.s32 %v2207, %v2209
    %v2211 = vrot.slane %v2197, %v2210
    %v2212 = vcombine.low %v2147, %v2163
    %v2213 = vcombine.high %v2147, %v2163
    %v2215 = vunpack.c.l.s4 1934713408
    %v2216 = vunpack.c.0.s8 %v2215
    %v2217 = vlaneseq
    %v2218 = vshrl.u32 %v2217, 7
    %v2219 = vsub.s32 %v2216, %v2218
    %v2220 = vrot.slane %v2212, %v2219
    %v2222 = vunpack.c.l.s4 1934713408
    %v2223 = vunpack.c.0.s8 %v2222
    %v2224 = vlaneseq
    %v2225 = vshrl.u32 %v2224, 7
    %v2226 = vsub.s32 %v2223, %v2225
    %v2227 = vrot.slane %v2213, %v2226
    %v2228 = vcombine.low %v2172, %v2204
    %v2229 = vcombine.high %v2172, %v2204
    %v2230 = vcombine.low %v2179, %v2211
    %v2231 = vcombine.high %v2179, %v2211
    %v2232 = vcombine.low %v2188, %v2220
    %v2233 = vcombine.high %v2188, %v2220
    %v2234 = vcombine.low %v2195, %v2227
    %v2235 = vcombine.high %v2195, %v2227
    %v2236 = vcombine.low %v1956, %v1958
    %v2237 = vcombine.high %v1956, %v1958
    %v2239 = vunpack.c.l.s4 1983009808
    %v2240 = vunpack.c.0.s8 %v2239
    %v2241 = vlaneseq
    %v2242 = vshrl.u32 %v2241, 7
    %v2243 = vsub.s32 %v2240, %v2242
    %v2244 = vrot.slane %v2236, %v2243
    %v2246 = vunpack.c.l.s4 1983009808
    %v2247 = vunpack.c.0.s8 %v2246
    %v2248 = vlaneseq
    %v2249 = vshrl.u32 %v2248, 7
    %v2250 = vsub.s32 %v2247, %v2249
    %v2251 = vrot.slane %v2237, %v2250
    %v2252 = vcombine.low %v1957, %v1959
    %v2253 = vcombine.high %v1957, %v1959
    %v2255 = vunpack.c.l.s4 1983009808
    %v2256 = vunpack.c.0.s8 %v2255
    %v2257 = vlaneseq
    %v2258 = vshrl.u32 %v2257, 7
    %v2259 = vsub.s32 %v2256, %v2258
    %v2260 = vrot.slane %v2252, %v2259
    %v2262 = vunpack.c.l.s4 1983009808
    %v2263 = vunpack.c.0.s8 %v2262
    %v2264 = vlaneseq
    %v2265 = vshrl.u32 %v2264, 7
    %v2266 = vsub.s32 %v2263, %v2265
    %v2267 = vrot.slane %v2253, %v2266
    %v2268 = vcombine.low %v1960, %v1962
    %v2269 = vcombine.high %v1960, %v1962
    %v2271 = vunpack.c.l.s4 1983009808
    %v2272 = vunpack.c.0.s8 %v2271
    %v2273 = vlaneseq
    %v2274 = vshrl.u32 %v2273, 7
    %v2275 = vsub.s32 %v2272, %v2274
    %v2276 = vrot.slane %v2268, %v2275
    %v2278 = vunpack.c.l.s4 1983009808
    %v2279 = vunpack.c.0.s8 %v2278
    %v2280 = vlaneseq
    %v2281 = vshrl.u32 %v2280, 7
    %v2282 = vsub.s32 %v2279, %v2281
    %v2283 = vrot.slane %v2269, %v2282
    %v2284 = vcombine.low %v1961, %v1963
    %v2285 = vcombine.high %v1961, %v1963
    %v2287 = vunpack.c.l.s4 1983009808
    %v2288 = vunpack.c.0.s8 %v2287
    %v2289 = vlaneseq
    %v2290 = vshrl.u32 %v2289, 7
    %v2291 = vsub.s32 %v2288, %v2290
    %v2292 = vrot.slane %v2284, %v2291
    %v2294 = vunpack.c.l.s4 1983009808
    %v2295 = vunpack.c.0.s8 %v2294
    %v2296 = vlaneseq
    %v2297 = vshrl.u32 %v2296, 7
    %v2298 = vsub.s32 %v2295, %v2297
    %v2299 = vrot.slane %v2285, %v2298
    %v2300 = vcombine.low %v2244, %v2260
    %v2301 = vcombine.high %v2244, %v2260
    %v2303 = vunpack.c.l.s4 1934713408
    %v2304 = vunpack.c.0.s8 %v2303
    %v2305 = vlaneseq
    %v2306 = vshrl.u32 %v2305, 7
    %v2307 = vsub.s32 %v2304, %v2306
    %v2308 = vrot.slane %v2300, %v2307
    %v2310 = vunpack.c.l.s4 1934713408
    %v2311 = vunpack.c.0.s8 %v2310
    %v2312 = vlaneseq
    %v2313 = vshrl.u32 %v2312, 7
    %v2314 = vsub.s32 %v2311, %v2313
    %v2315 = vrot.slane %v2301, %v2314
    %v2316 = vcombine.low %v2251, %v2267
    %v2317 = vcombine.high %v2251, %v2267
    %v2319 = vunpack.c.l.s4 1934713408
    %v2320 = vunpack.c.0.s8 %v2319
    %v2321 = vlaneseq
    %v2322 = vshrl.u32 %v2321, 7
    %v2323 = vsub.s32 %v2320, %v2322
    %v2324 = vrot.slane %v2316, %v2323
    %v2326 = vunpack.c.l.s4 1934713408
    %v2327 = vunpack.c.0.s8 %v2326
    %v2328 = vlaneseq
    %v2329 = vshrl.u32 %v2328, 7
    %v2330 = vsub.s32 %v2327, %v2329
    %v2331 = vrot.slane %v2317, %v2330
    %v2332 = vcombine.low %v2276, %v2292
    %v2333 = vcombine.high %v2276, %v2292
    %v2335 = vunpack.c.l.s4 1934713408
    %v2336 = vunpack.c.0.s8 %v2335
    %v2337 = vlaneseq
    %v2338 = vshrl.u32 %v2337, 7
    %v2339 = vsub.s32 %v2336, %v2338
    %v2340 = vrot.slane %v2332, %v2339
    %v2342 = vunpack.c.l.s4 1934713408
    %v2343 = vunpack.c.0.s8 %v2342
    %v2344 = vlaneseq
    %v2345 = vshrl.u32 %v2344, 7
    %v2346 = vsub.s32 %v2343, %v2345
    %v2347 = vrot.slane %v2333, %v2346
    %v2348 = vcombine.low %v2283, %v2299
    %v2349 = vcombine.high %v2283, %v2299
    %v2351 = vunpack.c.l.s4 1934713408
    %v2352 = vunpack.c.0.s8 %v2351
    %v2353 = vlaneseq
    %v2354 = vshrl.u32 %v2353, 7
    %v2355 = vsub.s32 %v2352, %v2354
    %v2356 = vrot.slane %v2348, %v2355
    %v2358 = vunpack.c.l.s4 1934713408
    %v2359 = vunpack.c.0.s8 %v2358
    %v2360 = vlaneseq
    %v2361 = vshrl.u32 %v2360, 7
    %v2362 = vsub.s32 %v2359, %v2361
    %v2363 = vrot.slane %v2349, %v2362
    %v2364 = vcombine.low %v2308, %v2340
    %v2365 = vcombine.high %v2308, %v2340
    %v2366 = vcombine.low %v2315, %v2347
    %v2367 = vcombine.high %v2315, %v2347
    %v2368 = vcombine.low %v2324, %v2356
    %v2369 = vcombine.high %v2324, %v2356
    %v2370 = vcombine.low %v2331, %v2363
    %v2371 = vcombine.high %v2331, %v2363
    %v2372 = vcombine.low %v1820, %v1822
    %v2373 = vcombine.high %v1820, %v1822
    %v2375 = vunpack.c.l.s4 1983009808
    %v2376 = vunpack.c.0.s8 %v2375
    %v2377 = vlaneseq
    %v2378 = vshrl.u32 %v2377, 7
    %v2379 = vsub.s32 %v2376, %v2378
    %v2380 = vrot.slane %v2372, %v2379
    %v2382 = vunpack.c.l.s4 1983009808
    %v2383 = vunpack.c.0.s8 %v2382
    %v2384 = vlaneseq
    %v2385 = vshrl.u32 %v2384, 7
    %v2386 = vsub.s32 %v2383, %v2385
    %v2387 = vrot.slane %v2373, %v2386
    %v2388 = vcombine.low %v1821, %v1823
    %v2389 = vcombine.high %v1821, %v1823
    %v2391 = vunpack.c.l.s4 1983009808
    %v2392 = vunpack.c.0.s8 %v2391
    %v2393 = vlaneseq
    %v2394 = vshrl.u32 %v2393, 7
    %v2395 = vsub.s32 %v2392, %v2394
    %v2396 = vrot.slane %v2388, %v2395
    %v2398 = vunpack.c.l.s4 1983009808
    %v2399 = vunpack.c.0.s8 %v2398
    %v2400 = vlaneseq
    %v2401 = vshrl.u32 %v2400, 7
    %v2402 = vsub.s32 %v2399, %v2401
    %v2403 = vrot.slane %v2389, %v2402
    %v2404 = vcombine.low %v1824, %v1826
    %v2405 = vcombine.high %v1824, %v1826
    %v2407 = vunpack.c.l.s4 1983009808
    %v2408 = vunpack.c.0.s8 %v2407
    %v2409 = vlaneseq
    %v2410 = vshrl.u32 %v2409, 7
    %v2411 = vsub.s32 %v2408, %v2410
    %v2412 = vrot.slane %v2404, %v2411
    %v2414 = vunpack.c.l.s4 1983009808
    %v2415 = vunpack.c.0.s8 %v2414
    %v2416 = vlaneseq
    %v2417 = vshrl.u32 %v2416, 7
    %v2418 = vsub.s32 %v2415, %v2417
    %v2419 = vrot.slane %v2405, %v2418
    %v2420 = vcombine.low %v1825, %v1827
    %v2421 = vcombine.high %v1825, %v1827
    %v2423 = vunpack.c.l.s4 1983009808
    %v2424 = vunpack.c.0.s8 %v2423
    %v2425 = vlaneseq
    %v2426 = vshrl.u32 %v2425, 7
    %v2427 = vsub.s32 %v2424, %v2426
    %v2428 = vrot.slane %v2420, %v2427
    %v2430 = vunpack.c.l.s4 1983009808
    %v2431 = vunpack.c.0.s8 %v2430
    %v2432 = vlaneseq
    %v2433 = vshrl.u32 %v2432, 7
    %v2434 = vsub.s32 %v2431, %v2433
    %v2435 = vrot.slane %v2421, %v2434
    %v2436 = vcombine.low %v2380, %v2396
    %v2437 = vcombine.high %v2380, %v2396
    %v2439 = vunpack.c.l.s4 1934713408
    %v2440 = vunpack.c.0.s8 %v2439
    %v2441 = vlaneseq
    %v2442 = vshrl.u32 %v2441, 7
    %v2443 = vsub.s32 %v2440, %v2442
    %v2444 = vrot.slane %v2436, %v2443
    %v2446 = vunpack.c.l.s4 1934713408
    %v2447 = vunpack.c.0.s8 %v2446
    %v2448 = vlaneseq
    %v2449 = vshrl.u32 %v2448, 7
    %v2450 = vsub.s32 %v2447, %v2449
    %v2451 = vrot.slane %v2437, %v2450
    %v2452 = vcombine.low %v2387, %v2403
    %v2453 = vcombine.high %v2387, %v2403
    %v2455 = vunpack.c.l.s4 1934713408
    %v2456 = vunpack.c.0.s8 %v2455
    %v2457 = vlaneseq
    %v2458 = vshrl.u32 %v2457, 7
    %v2459 = vsub.s32 %v2456, %v2458
    %v2460 = vrot.slane %v2452, %v2459
    %v2462 = vunpack.c.l.s4 1934713408
    %v2463 = vunpack.c.0.s8 %v2462
    %v2464 = vlaneseq
    %v2465 = vshrl.u32 %v2464, 7
    %v2466 = vsub.s32 %v2463, %v2465
    %v2467 = vrot.slane %v2453, %v2466
    %v2468 = vcombine.low %v2412, %v2428
    %v2469 = vcombine.high %v2412, %v2428
    %v2471 = vunpack.c.l.s4 1934713408
    %v2472 = vunpack.c.0.s8 %v2471
    %v2473 = vlaneseq
    %v2474 = vshrl.u32 %v2473, 7
    %v2475 = vsub.s32 %v2472, %v2474
    %v2476 = vrot.slane %v2468, %v2475
    %v2478 = vunpack.c.l.s4 1934713408
    %v2479 = vunpack.c.0.s8 %v2478
    %v2480 = vlaneseq
    %v2481 = vshrl.u32 %v2480, 7
    %v2482 = vsub.s32 %v2479, %v2481
    %v2483 = vrot.slane %v2469, %v2482
    %v2484 = vcombine.low %v2419, %v2435
    %v2485 = vcombine.high %v2419, %v2435
    %v2487 = vunpack.c.l.s4 1934713408
    %v2488 = vunpack.c.0.s8 %v2487
    %v2489 = vlaneseq
    %v2490 = vshrl.u32 %v2489, 7
    %v2491 = vsub.s32 %v2488, %v2490
    %v2492 = vrot.slane %v2484, %v2491
    %v2494 = vunpack.c.l.s4 1934713408
    %v2495 = vunpack.c.0.s8 %v2494
    %v2496 = vlaneseq
    %v2497 = vshrl.u32 %v2496, 7
    %v2498 = vsub.s32 %v2495, %v2497
    %v2499 = vrot.slane %v2485, %v2498
    %v2500 = vcombine.low %v2444, %v2476
    %v2501 = vcombine.high %v2444, %v2476
    %v2502 = vcombine.low %v2451, %v2483
    %v2503 = vcombine.high %v2451, %v2483
    %v2504 = vcombine.low %v2460, %v2492
    %v2505 = vcombine.high %v2460, %v2492
    %v2506 = vcombine.low %v2467, %v2499
    %v2507 = vcombine.high %v2467, %v2499
    %v2508 = vcombine.low %v2092, %v2094
    %v2509 = vcombine.high %v2092, %v2094
    %v2511 = vunpack.c.l.s4 1983009808
    %v2512 = vunpack.c.0.s8 %v2511
    %v2513 = vlaneseq
    %v2514 = vshrl.u32 %v2513, 7
    %v2515 = vsub.s32 %v2512, %v2514
    %v2516 = vrot.slane %v2508, %v2515
    %v2518 = vunpack.c.l.s4 1983009808
    %v2519 = vunpack.c.0.s8 %v2518
    %v2520 = vlaneseq
    %v2521 = vshrl.u32 %v2520, 7
    %v2522 = vsub.s32 %v2519, %v2521
    %v2523 = vrot.slane %v2509, %v2522
    %v2524 = vcombine.low %v2093, %v2095
    %v2525 = vcombine.high %v2093, %v2095
    %v2527 = vunpack.c.l.s4 1983009808
    %v2528 = vunpack.c.0.s8 %v2527
    %v2529 = vlaneseq
    %v2530 = vshrl.u32 %v2529, 7
    %v2531 = vsub.s32 %v2528, %v2530
    %v2532 = vrot.slane %v2524, %v2531
    %v2534 = vunpack.c.l.s4 1983009808
    %v2535 = vunpack.c.0.s8 %v2534
    %v2536 = vlaneseq
    %v2537 = vshrl.u32 %v2536, 7
    %v2538 = vsub.s32 %v2535, %v2537
    %v2539 = vrot.slane %v2525, %v2538
    %v2540 = vcombine.low %v2096, %v2098
    %v2541 = vcombine.high %v2096, %v2098
    %v2543 = vunpack.c.l.s4 1983009808
    %v2544 = vunpack.c.0.s8 %v2543
    %v2545 = vlaneseq
    %v2546 = vshrl.u32 %v2545, 7
    %v2547 = vsub.s32 %v2544, %v2546
    %v2548 = vrot.slane %v2540, %v2547
    %v2550 = vunpack.c.l.s4 1983009808
    %v2551 = vunpack.c.0.s8 %v2550
    %v2552 = vlaneseq
    %v2553 = vshrl.u32 %v2552, 7
    %v2554 = vsub.s32 %v2551, %v2553
    %v2555 = vrot.slane %v2541, %v2554
    %v2556 = vcombine.low %v2097, %v2099
    %v2557 = vcombine.high %v2097, %v2099
    %v2559 = vunpack.c.l.s4 1983009808
    %v2560 = vunpack.c.0.s8 %v2559
    %v2561 = vlaneseq
    %v2562 = vshrl.u32 %v2561, 7
    %v2563 = vsub.s32 %v2560, %v2562
    %v2564 = vrot.slane %v2556, %v2563
    %v2566 = vunpack.c.l.s4 1983009808
    %v2567 = vunpack.c.0.s8 %v2566
    %v2568 = vlaneseq
    %v2569 = vshrl.u32 %v2568, 7
    %v2570 = vsub.s32 %v2567, %v2569
    %v2571 = vrot.slane %v2557, %v2570
    %v2572 = vcombine.low %v2516, %v2532
    %v2573 = vcombine.high %v2516, %v2532
    %v2575 = vunpack.c.l.s4 1934713408
    %v2576 = vunpack.c.0.s8 %v2575
    %v2577 = vlaneseq
    %v2578 = vshrl.u32 %v2577, 7
    %v2579 = vsub.s32 %v2576, %v2578
    %v2580 = vrot.slane %v2572, %v2579
    %v2582 = vunpack.c.l.s4 1934713408
    %v2583 = vunpack.c.0.s8 %v2582
    %v2584 = vlaneseq
    %v2585 = vshrl.u32 %v2584, 7
    %v2586 = vsub.s32 %v2583, %v2585
    %v2587 = vrot.slane %v2573, %v2586
    %v2588 = vcombine.low %v2523, %v2539
    %v2589 = vcombine.high %v2523, %v2539
    %v2591 = vunpack.c.l.s4 1934713408
    %v2592 = vunpack.c.0.s8 %v2591
    %v2593 = vlaneseq
    %v2594 = vshrl.u32 %v2593, 7
    %v2595 = vsub.s32 %v2592, %v2594
    %v2596 = vrot.slane %v2588, %v2595
    %v2598 = vunpack.c.l.s4 1934713408
    %v2599 = vunpack.c.0.s8 %v2598
    %v2600 = vlaneseq
    %v2601 = vshrl.u32 %v2600, 7
    %v2602 = vsub.s32 %v2599, %v2601
    %v2603 = vrot.slane %v2589, %v2602
    %v2604 = vcombine.low %v2548, %v2564
    %v2605 = vcombine.high %v2548, %v2564
    %v2607 = vunpack.c.l.s4 1934713408
    %v2608 = vunpack.c.0.s8 %v2607
    %v2609 = vlaneseq
    %v2610 = vshrl.u32 %v2609, 7
    %v2611 = vsub.s32 %v2608, %v2610
    %v2612 = vrot.slane %v2604, %v2611
    %v2614 = vunpack.c.l.s4 1934713408
    %v2615 = vunpack.c.0.s8 %v2614
    %v2616 = vlaneseq
    %v2617 = vshrl.u32 %v2616, 7
    %v2618 = vsub.s32 %v2615, %v2617
    %v2619 = vrot.slane %v2605, %v2618
    %v2620 = vcombine.low %v2555, %v2571
    %v2621 = vcombine.high %v2555, %v2571
    %v2623 = vunpack.c.l.s4 1934713408
    %v2624 = vunpack.c.0.s8 %v2623
    %v2625 = vlaneseq
    %v2626 = vshrl.u32 %v2625, 7
    %v2627 = vsub.s32 %v2624, %v2626
    %v2628 = vrot.slane %v2620, %v2627
    %v2630 = vunpack.c.l.s4 1934713408
    %v2631 = vunpack.c.0.s8 %v2630
    %v2632 = vlaneseq
    %v2633 = vshrl.u32 %v2632, 7
    %v2634 = vsub.s32 %v2631, %v2633
    %v2635 = vrot.slane %v2621, %v2634
    %v2636 = vcombine.low %v2580, %v2612
    %v2637 = vcombine.high %v2580, %v2612
    %v2638 = vcombine.low %v2587, %v2619
    %v2639 = vcombine.high %v2587, %v2619
    %v2640 = vcombine.low %v2596, %v2628
    %v2641 = vcombine.high %v2596, %v2628
    %v2642 = vcombine.low %v2603, %v2635
    %v2643 = vcombine.high %v2603, %v2635
    %v2644 = vld [vmem:[%s15] sm:$0xff]
    %v2645 = vld [vmem:[%s15 + $0x8] sm:$0xff]
    %v2646 = vld [vmem:[%s15 + $0x10] sm:$0xff]
    %v2647 = vld [vmem:[%s15 + $0x18] sm:$0xff]
    %v2649 = vsel %vm952, %v2228, 0
    %v2652 = vsel %vm952, %v2364, 0
    %v2655 = vsel %vm952, %v2229, 0
    %v2658 = vsel %vm952, %v2365, 0
    %v2661 = vsel %vm952, %v2230, 0
    %v2664 = vsel %vm952, %v2366, 0
    %v2667 = vsel %vm952, %v2231, 0
    %v2670 = vsel %vm952, %v2367, 0
    %v2673 = vsel %vm952, %v2232, 0
    %v2676 = vsel %vm952, %v2368, 0
    %v2679 = vsel %vm952, %v2233, 0
    %v2682 = vsel %vm952, %v2369, 0
    %v2685 = vsel %vm952, %v2234, 0
    %v2688 = vsel %vm952, %v2370, 0
    %v2691 = vsel %vm952, %v2235, 0
    %v2694 = vsel %vm952, %v2371, 0
    %v2697 = vsel %vm952, %v2500, 0
    %v2700 = vsel %vm952, %v2636, 0
    %v2703 = vsel %vm952, %v2501, 0
    %v2706 = vsel %vm952, %v2637, 0
    %v2709 = vsel %vm952, %v2502, 0
    %v2712 = vsel %vm952, %v2638, 0
    %v2715 = vsel %vm952, %v2503, 0
    %v2718 = vsel %vm952, %v2639, 0
    %v2721 = vsel %vm952, %v2504, 0
    %v2724 = vsel %vm952, %v2640, 0
    %v2727 = vsel %vm952, %v2505, 0
    %v2730 = vsel %vm952, %v2641, 0
    %v2733 = vsel %vm952, %v2506, 0
    %v2736 = vsel %vm952, %v2642, 0
    %v2739 = vsel %vm952, %v2507, 0
    %v2742 = vsel %vm952, %v2643, 0
    %2744 = vmatprep.subr.mxu0 %v2645
    %2745 = vmatpush1.msra.mxu0 %v2644
    %2746 = vmatprep.subr.mxu0 %v2647
    %2747 = vmatpush1.msra.mxu0 %v2646
    %2748 = vmatprep.subr.mxu0 0.0
    %2749 = vmatpush1.msra.mxu0 0.0
    %2750 = vmatprep.subr.mxu0 0.0
    %2751 = vmatpush1.msra.mxu0 0.0
    %2752 = vmatprep.subr.mxu0 0.0
    %2753 = vmatpush1.msra.mxu0 0.0
    %2754 = vmatprep.subr.mxu0 0.0
    %2755 = vmatpush1.msra.mxu0 0.0
    %2756 = vmatprep.subr.mxu0 0.0
    %2757 = vmatpush1.msra.mxu0 0.0
    %2758 = vmatprep.subr.mxu0 0.0
    %2759 = vmatpush1.msra.mxu0 0.0
    %2760 = vmatprep.subr.mxu0 0.0
    %2761 = vmatpush1.msra.mxu0 0.0
    %2762 = vmatprep.subr.mxu0 0.0
    %2763 = vmatpush1.msra.mxu0 0.0
    %2764 = vmatprep.subr.mxu0 0.0
    %2765 = vmatpush1.msra.mxu0 0.0
    %2766 = vmatprep.subr.mxu0 0.0
    %2767 = vmatpush1.msra.mxu0 0.0
    %2768 = vmatprep.subr.mxu0 0.0
    %2769 = vmatpush1.msra.mxu0 0.0
    %2770 = vmatprep.subr.mxu0 0.0
    %2771 = vmatpush1.msra.mxu0 0.0
    %2772 = vmatprep.subr.mxu0 0.0
    %2773 = vmatpush1.msra.mxu0 0.0
    %2774 = vmatprep.subr.mxu0 0.0
    %2775 = vmatpush1.msra.mxu0 0.0
    %2776 = vmatprep.subr.mxu0 0.0
    %2777 = vmatpush1.msra.mxu0 0.0
    %2778 = vmatprep.subr.mxu0 0.0
    %2779 = vmatpush1.msra.mxu0 0.0
    %2780 = vmatprep.subr.mxu0 0.0
    %2781 = vmatpush1.msra.mxu0 0.0
    %2782 = vmatprep.subr.mxu0 0.0
    %2783 = vmatpush1.msra.mxu0 0.0
    %2784 = vmatprep.subr.mxu0 0.0
    %2785 = vmatpush1.msra.mxu0 0.0
    %2786 = vmatprep.subr.mxu0 0.0
    %2787 = vmatpush1.msra.mxu0 0.0
    %2788 = vmatprep.subr.mxu0 0.0
    %2789 = vmatpush1.msra.mxu0 0.0
    %2790 = vmatprep.subr.mxu0 0.0
    %2791 = vmatpush1.msra.mxu0 0.0
    %2792 = vmatprep.subr.mxu0 0.0
    %2793 = vmatpush1.msra.mxu0 0.0
    %2794 = vmatprep.subr.mxu0 0.0
    %2795 = vmatpush1.msra.mxu0 0.0
    %2796 = vmatprep.subr.mxu0 0.0
    %2797 = vmatpush1.msra.mxu0 0.0
    %2798 = vmatprep.subr.mxu0 0.0
    %2799 = vmatpush1.msra.mxu0 0.0
    %2800 = vmatprep.subr.mxu0 0.0
    %2801 = vmatpush1.msra.mxu0 0.0
    %2802 = vmatprep.subr.mxu0 0.0
    %2803 = vmatpush1.msra.mxu0 0.0
    %2804 = vmatprep.subr.mxu0 0.0
    %2805 = vmatpush1.msra.mxu0 0.0
    %2806 = vmatprep.subr.mxu0 0.0
    %2807 = vmatpush1.msra.mxu0 0.0
    %2808 = vmatprep.mubr.f32.mxu0 0.0
    %2809 = vmatmul.mubr.f32.gmra.mrb[0].mxu0 %v2649
    %v2810 = vpop.f32.mrb[0].mxu0
    %v2811 = vadd.f32 0.0, %v2810
    %v2812 = vpop.f32.mrb[0].mxu0
    %v2813 = vadd.f32 0.0, %v2812
    %2814 = vmatprep.mubr.f32.mxu0 0.0
    %2815 = vmatmul.mubr.f32.gmra.mrb[0].mxu0 %v2652
    %v2816 = vpop.f32.mrb[0].mxu0
    %v2817 = vadd.f32 0.0, %v2816
    %v2818 = vpop.f32.mrb[0].mxu0
    %v2819 = vadd.f32 0.0, %v2818
    %2820 = vmatprep.mubr.f32.mxu0 0.0
    %2821 = vmatmul.mubr.f32.gmra.mrb[0].mxu0 %v2655
    %v2822 = vpop.f32.mrb[0].mxu0
    %v2823 = vadd.f32 0.0, %v2822
    %v2824 = vpop.f32.mrb[0].mxu0
    %v2825 = vadd.f32 0.0, %v2824
    %2826 = vmatprep.mubr.f32.mxu0 0.0
    %2827 = vmatmul.mubr.f32.gmra.mrb[0].mxu0 %v2658
    %v2828 = vpop.f32.mrb[0].mxu0
    %v2829 = vadd.f32 0.0, %v2828
    %v2830 = vpop.f32.mrb[0].mxu0
    %v2831 = vadd.f32 0.0, %v2830
    %2832 = vmatprep.mubr.f32.mxu0 0.0
    %2833 = vmatmul.mubr.f32.gmra.mrb[0].mxu0 %v2661
    %v2834 = vpop.f32.mrb[0].mxu0
    %v2835 = vadd.f32 0.0, %v2834
    %v2836 = vpop.f32.mrb[0].mxu0
    %v2837 = vadd.f32 0.0, %v2836
    %2838 = vmatprep.mubr.f32.mxu0 0.0
    %2839 = vmatmul.mubr.f32.gmra.mrb[0].mxu0 %v2664
    %v2840 = vpop.f32.mrb[0].mxu0
    %v2841 = vadd.f32 0.0, %v2840
    %v2842 = vpop.f32.mrb[0].mxu0
    %v2843 = vadd.f32 0.0, %v2842
    %2844 = vmatprep.mubr.f32.mxu0 0.0
    %2845 = vmatmul.mubr.f32.gmra.mrb[0].mxu0 %v2667
    %v2846 = vpop.f32.mrb[0].mxu0
    %v2847 = vadd.f32 0.0, %v2846
    %v2848 = vpop.f32.mrb[0].mxu0
    %v2849 = vadd.f32 0.0, %v2848
    %2850 = vmatprep.mubr.f32.mxu0 0.0
    %2851 = vmatmul.mubr.f32.gmra.mrb[0].mxu0 %v2670
    %v2852 = vpop.f32.mrb[0].mxu0
    %v2853 = vadd.f32 0.0, %v2852
    %v2854 = vpop.f32.mrb[0].mxu0
    %v2855 = vadd.f32 0.0, %v2854
    %2856 = vmatprep.mubr.f32.mxu0 0.0
    %2857 = vmatmul.mubr.f32.gmra.mrb[0].mxu0 %v2673
    %v2858 = vpop.f32.mrb[0].mxu0
    %v2859 = vadd.f32 0.0, %v2858
    %v2860 = vpop.f32.mrb[0].mxu0
    %v2861 = vadd.f32 0.0, %v2860
    %2862 = vmatprep.mubr.f32.mxu0 0.0
    %2863 = vmatmul.mubr.f32.gmra.mrb[0].mxu0 %v2676
    %v2864 = vpop.f32.mrb[0].mxu0
    %v2865 = vadd.f32 0.0, %v2864
    %v2866 = vpop.f32.mrb[0].mxu0
    %v2867 = vadd.f32 0.0, %v2866
    %2868 = vmatprep.mubr.f32.mxu0 0.0
    %2869 = vmatmul.mubr.f32.gmra.mrb[0].mxu0 %v2679
    %v2870 = vpop.f32.mrb[0].mxu0
    %v2871 = vadd.f32 0.0, %v2870
    %v2872 = vpop.f32.mrb[0].mxu0
    %v2873 = vadd.f32 0.0, %v2872
    %2874 = vmatprep.mubr.f32.mxu0 0.0
    %2875 = vmatmul.mubr.f32.gmra.mrb[0].mxu0 %v2682
    %v2876 = vpop.f32.mrb[0].mxu0
    %v2877 = vadd.f32 0.0, %v2876
    %v2878 = vpop.f32.mrb[0].mxu0
    %v2879 = vadd.f32 0.0, %v2878
    %2880 = vmatprep.mubr.f32.mxu0 0.0
    %2881 = vmatmul.mubr.f32.gmra.mrb[0].mxu0 %v2685
    %v2882 = vpop.f32.mrb[0].mxu0
    %v2883 = vadd.f32 0.0, %v2882
    %v2884 = vpop.f32.mrb[0].mxu0
    %v2885 = vadd.f32 0.0, %v2884
    %2886 = vmatprep.mubr.f32.mxu0 0.0
    %2887 = vmatmul.mubr.f32.gmra.mrb[0].mxu0 %v2688
    %v2888 = vpop.f32.mrb[0].mxu0
    %v2889 = vadd.f32 0.0, %v2888
    %v2890 = vpop.f32.mrb[0].mxu0
    %v2891 = vadd.f32 0.0, %v2890
    %2892 = vmatprep.mubr.f32.mxu0 0.0
    %2893 = vmatmul.mubr.f32.gmra.mrb[0].mxu0 %v2691
    %v2894 = vpop.f32.mrb[0].mxu0
    %v2895 = vadd.f32 0.0, %v2894
    %v2896 = vpop.f32.mrb[0].mxu0
    %v2897 = vadd.f32 0.0, %v2896
    %2898 = vmatprep.mubr.f32.mxu0 0.0
    %2899 = vmatmul.mubr.f32.gmra.mrb[0].mxu0 %v2694
    %v2900 = vpop.f32.mrb[0].mxu0
    %v2901 = vadd.f32 0.0, %v2900
    %v2902 = vpop.f32.mrb[0].mxu0
    %v2903 = vadd.f32 0.0, %v2902
    %2904 = vmatprep.mubr.f32.mxu0 0.0
    %2905 = vmatmul.mubr.f32.gmra.mrb[0].mxu0 %v2697
    %v2906 = vpop.f32.mrb[0].mxu0
    %v2907 = vadd.f32 0.0, %v2906
    %v2908 = vpop.f32.mrb[0].mxu0
    %v2909 = vadd.f32 0.0, %v2908
    %2910 = vmatprep.mubr.f32.mxu0 0.0
    %2911 = vmatmul.mubr.f32.gmra.mrb[0].mxu0 %v2700
    %v2912 = vpop.f32.mrb[0].mxu0
    %v2913 = vadd.f32 0.0, %v2912
    %v2914 = vpop.f32.mrb[0].mxu0
    %v2915 = vadd.f32 0.0, %v2914
    %2916 = vmatprep.mubr.f32.mxu0 0.0
    %2917 = vmatmul.mubr.f32.gmra.mrb[0].mxu0 %v2703
    %v2918 = vpop.f32.mrb[0].mxu0
    %v2919 = vadd.f32 0.0, %v2918
    %v2920 = vpop.f32.mrb[0].mxu0
    %v2921 = vadd.f32 0.0, %v2920
    %2922 = vmatprep.mubr.f32.mxu0 0.0
    %2923 = vmatmul.mubr.f32.gmra.mrb[0].mxu0 %v2706
    %v2924 = vpop.f32.mrb[0].mxu0
    %v2925 = vadd.f32 0.0, %v2924
    %v2926 = vpop.f32.mrb[0].mxu0
    %v2927 = vadd.f32 0.0, %v2926
    %2928 = vmatprep.mubr.f32.mxu0 0.0
    %2929 = vmatmul.mubr.f32.gmra.mrb[0].mxu0 %v2709
    %v2930 = vpop.f32.mrb[0].mxu0
    %v2931 = vadd.f32 0.0, %v2930
    %v2932 = vpop.f32.mrb[0].mxu0
    %v2933 = vadd.f32 0.0, %v2932
    %2934 = vmatprep.mubr.f32.mxu0 0.0
    %2935 = vmatmul.mubr.f32.gmra.mrb[0].mxu0 %v2712
    %v2936 = vpop.f32.mrb[0].mxu0
    %v2937 = vadd.f32 0.0, %v2936
    %v2938 = vpop.f32.mrb[0].mxu0
    %v2939 = vadd.f32 0.0, %v2938
    %2940 = vmatprep.mubr.f32.mxu0 0.0
    %2941 = vmatmul.mubr.f32.gmra.mrb[0].mxu0 %v2715
    %v2942 = vpop.f32.mrb[0].mxu0
    %v2943 = vadd.f32 0.0, %v2942
    %v2944 = vpop.f32.mrb[0].mxu0
    %v2945 = vadd.f32 0.0, %v2944
    %2946 = vmatprep.mubr.f32.mxu0 0.0
    %2947 = vmatmul.mubr.f32.gmra.mrb[0].mxu0 %v2718
    %v2948 = vpop.f32.mrb[0].mxu0
    %v2949 = vadd.f32 0.0, %v2948
    %v2950 = vpop.f32.mrb[0].mxu0
    %v2951 = vadd.f32 0.0, %v2950
    %2952 = vmatprep.mubr.f32.mxu0 0.0
    %2953 = vmatmul.mubr.f32.gmra.mrb[0].mxu0 %v2721
    %v2954 = vpop.f32.mrb[0].mxu0
    %v2955 = vadd.f32 0.0, %v2954
    %v2956 = vpop.f32.mrb[0].mxu0
    %v2957 = vadd.f32 0.0, %v2956
    %2958 = vmatprep.mubr.f32.mxu0 0.0
    %2959 = vmatmul.mubr.f32.gmra.mrb[0].mxu0 %v2724
    %v2960 = vpop.f32.mrb[0].mxu0
    %v2961 = vadd.f32 0.0, %v2960
    %v2962 = vpop.f32.mrb[0].mxu0
    %v2963 = vadd.f32 0.0, %v2962
    %2964 = vmatprep.mubr.f32.mxu0 0.0
    %2965 = vmatmul.mubr.f32.gmra.mrb[0].mxu0 %v2727
    %v2966 = vpop.f32.mrb[0].mxu0
    %v2967 = vadd.f32 0.0, %v2966
    %v2968 = vpop.f32.mrb[0].mxu0
    %v2969 = vadd.f32 0.0, %v2968
    %2970 = vmatprep.mubr.f32.mxu0 0.0
    %2971 = vmatmul.mubr.f32.gmra.mrb[0].mxu0 %v2730
    %v2972 = vpop.f32.mrb[0].mxu0
    %v2973 = vadd.f32 0.0, %v2972
    %v2974 = vpop.f32.mrb[0].mxu0
    %v2975 = vadd.f32 0.0, %v2974
    %2976 = vmatprep.mubr.f32.mxu0 0.0
    %2977 = vmatmul.mubr.f32.gmra.mrb[0].mxu0 %v2733
    %v2978 = vpop.f32.mrb[0].mxu0
    %v2979 = vadd.f32 0.0, %v2978
    %v2980 = vpop.f32.mrb[0].mxu0
    %v2981 = vadd.f32 0.0, %v2980
    %2982 = vmatprep.mubr.f32.mxu0 0.0
    %2983 = vmatmul.mubr.f32.gmra.mrb[0].mxu0 %v2736
    %v2984 = vpop.f32.mrb[0].mxu0
    %v2985 = vadd.f32 0.0, %v2984
    %v2986 = vpop.f32.mrb[0].mxu0
    %v2987 = vadd.f32 0.0, %v2986
    %2988 = vmatprep.mubr.f32.mxu0 0.0
    %2989 = vmatmul.mubr.f32.gmra.mrb[0].mxu0 %v2739
    %v2990 = vpop.f32.mrb[0].mxu0
    %v2991 = vadd.f32 0.0, %v2990
    %v2992 = vpop.f32.mrb[0].mxu0
    %v2993 = vadd.f32 0.0, %v2992
    %2994 = vmatprep.mubr.f32.mxu0 0.0
    %2995 = vmatmul.mubr.f32.gmra.mrb[0].mxu0 %v2742
    %v2996 = vpop.f32.mrb[0].mxu0
    %v2997 = vadd.f32 0.0, %v2996
    %v2998 = vpop.f32.mrb[0].mxu0
    %v2999 = vadd.f32 0.0, %v2998
    %3000 = vdwg.mxu0
    %3001 = vst [vmem:[#allocation3] sm:$0xff] %v2811
    %3002 = vst [vmem:[#allocation3 + $0x8] sm:$0xff] %v2813
    %3003 = vst [vmem:[#allocation3 + $0x10] sm:$0xff] %v2817
    %3004 = vst [vmem:[#allocation3 + $0x18] sm:$0xff] %v2819
    %3005 = vst [vmem:[#allocation3 + $0x20] sm:$0xff] %v2823
    %3006 = vst [vmem:[#allocation3 + $0x28] sm:$0xff] %v2825
    %3007 = vst [vmem:[#allocation3 + $0x30] sm:$0xff] %v2829
    %3008 = vst [vmem:[#allocation3 + $0x38] sm:$0xff] %v2831
    %3009 = vst [vmem:[#allocation3 + $0x40] sm:$0xff] %v2835
    %3010 = vst [vmem:[#allocation3 + $0x48] sm:$0xff] %v2837
    %3011 = vst [vmem:[#allocation3 + $0x50] sm:$0xff] %v2841
    %3012 = vst [vmem:[#allocation3 + $0x58] sm:$0xff] %v2843
    %3013 = vst [vmem:[#allocation3 + $0x60] sm:$0xff] %v2847
    %3014 = vst [vmem:[#allocation3 + $0x68] sm:$0xff] %v2849
    %3015 = vst [vmem:[#allocation3 + $0x70] sm:$0xff] %v2853
    %3016 = vst [vmem:[#allocation3 + $0x78] sm:$0xff] %v2855
    %3017 = vst [vmem:[#allocation3 + $0x80] sm:$0xff] %v2859
    %3018 = vst [vmem:[#allocation3 + $0x88] sm:$0xff] %v2861
    %3019 = vst [vmem:[#allocation3 + $0x90] sm:$0xff] %v2865
    %3020 = vst [vmem:[#allocation3 + $0x98] sm:$0xff] %v2867
    %3021 = vst [vmem:[#allocation3 + $0xa0] sm:$0xff] %v2871
    %3022 = vst [vmem:[#allocation3 + $0xa8] sm:$0xff] %v2873
    %3023 = vst [vmem:[#allocation3 + $0xb0] sm:$0xff] %v2877
    %3024 = vst [vmem:[#allocation3 + $0xb8] sm:$0xff] %v2879
    %3025 = vst [vmem:[#allocation3 + $0xc0] sm:$0xff] %v2883
    %3026 = vst [vmem:[#allocation3 + $0xc8] sm:$0xff] %v2885
    %3027 = vst [vmem:[#allocation3 + $0xd0] sm:$0xff] %v2889
    %3028 = vst [vmem:[#allocation3 + $0xd8] sm:$0xff] %v2891
    %3029 = vst [vmem:[#allocation3 + $0xe0] sm:$0xff] %v2895
    %3030 = vst [vmem:[#allocation3 + $0xe8] sm:$0xff] %v2897
    %3031 = vst [vmem:[#allocation3 + $0xf0] sm:$0xff] %v2901
    %3032 = vst [vmem:[#allocation3 + $0xf8] sm:$0xff] %v2903
    %3033 = vst [vmem:[#allocation3 + $0x100] sm:$0xff] %v2907
    %3034 = vst [vmem:[#allocation3 + $0x108] sm:$0xff] %v2909
    %3035 = vst [vmem:[#allocation3 + $0x110] sm:$0xff] %v2913
    %3036 = vst [vmem:[#allocation3 + $0x118] sm:$0xff] %v2915
    %3037 = vst [vmem:[#allocation3 + $0x120] sm:$0xff] %v2919
    %3038 = vst [vmem:[#allocation3 + $0x128] sm:$0xff] %v2921
    %3039 = vst [vmem:[#allocation3 + $0x130] sm:$0xff] %v2925
    %3040 = vst [vmem:[#allocation3 + $0x138] sm:$0xff] %v2927
    %3041 = vst [vmem:[#allocation3 + $0x140] sm:$0xff] %v2931
    %3042 = vst [vmem:[#allocation3 + $0x148] sm:$0xff] %v2933
    %3043 = vst [vmem:[#allocation3 + $0x150] sm:$0xff] %v2937
    %3044 = vst [vmem:[#allocation3 + $0x158] sm:$0xff] %v2939
    %3045 = vst [vmem:[#allocation3 + $0x160] sm:$0xff] %v2943
    %3046 = vst [vmem:[#allocation3 + $0x168] sm:$0xff] %v2945
    %3047 = vst [vmem:[#allocation3 + $0x170] sm:$0xff] %v2949
    %3048 = vst [vmem:[#allocation3 + $0x178] sm:$0xff] %v2951
    %3049 = vst [vmem:[#allocation3 + $0x180] sm:$0xff] %v2955
    %3050 = vst [vmem:[#allocation3 + $0x188] sm:$0xff] %v2957
    %3051 = vst [vmem:[#allocation3 + $0x190] sm:$0xff] %v2961
    %3052 = vst [vmem:[#allocation3 + $0x198] sm:$0xff] %v2963
    %3053 = vst [vmem:[#allocation3 + $0x1a0] sm:$0xff] %v2967
    %3054 = vst [vmem:[#allocation3 + $0x1a8] sm:$0xff] %v2969
    %3055 = vst [vmem:[#allocation3 + $0x1b0] sm:$0xff] %v2973
    %3056 = vst [vmem:[#allocation3 + $0x1b8] sm:$0xff] %v2975
    %3057 = vst [vmem:[#allocation3 + $0x1c0] sm:$0xff] %v2979
    %3058 = vst [vmem:[#allocation3 + $0x1c8] sm:$0xff] %v2981
    %3059 = vst [vmem:[#allocation3 + $0x1d0] sm:$0xff] %v2985
    %3060 = vst [vmem:[#allocation3 + $0x1d8] sm:$0xff] %v2987
    %3061 = vst [vmem:[#allocation3 + $0x1e0] sm:$0xff] %v2991
    %3062 = vst [vmem:[#allocation3 + $0x1e8] sm:$0xff] %v2993
    %3063 = vst [vmem:[#allocation3 + $0x1f0] sm:$0xff] %v2997
    %3064 = vst [vmem:[#allocation3 + $0x1f8] sm:$0xff] %v2999
    %v3065 = vmul.f32 %v1009, 0.01
    %v3066 = vmul.f32 %v1012, 0.01
    %v3067 = vmul.f32 %v1309, %v3065
    %v3068 = vmul.f32 %v1310, %v3066
    %v3069 = vadd.f32 %v1009, %v3067
    %v3070 = vadd.f32 %v1012, %v3068
    %v3071 = vld [vmem:[#allocation23] sm:$0xff]
    %v3072 = vld [vmem:[#allocation23 + $0x8] sm:$0xff]
    %v3073 = vld [vmem:[#allocation23 + $0x10] sm:$0xff]
    %v3074 = vld [vmem:[#allocation23 + $0x18] sm:$0xff]
    %v3075 = vld [vmem:[#allocation23 + $0x20] sm:$0xff]
    %v3076 = vld [vmem:[#allocation23 + $0x28] sm:$0xff]
    %v3077 = vld [vmem:[#allocation23 + $0x30] sm:$0xff]
    %v3078 = vld [vmem:[#allocation23 + $0x38] sm:$0xff]
    %v3079 = vld [vmem:[#allocation23 + $0x40] sm:$0xff]
    %v3080 = vld [vmem:[#allocation23 + $0x48] sm:$0xff]
    %v3081 = vld [vmem:[#allocation23 + $0x50] sm:$0xff]
    %v3082 = vld [vmem:[#allocation23 + $0x58] sm:$0xff]
    %v3083 = vld [vmem:[#allocation23 + $0x60] sm:$0xff]
    %v3084 = vld [vmem:[#allocation23 + $0x68] sm:$0xff]
    %v3085 = vld [vmem:[#allocation23 + $0x70] sm:$0xff]
    %v3086 = vld [vmem:[#allocation23 + $0x78] sm:$0xff]
    %v3088 = vsel %vm952, %v3071, 0
    %v3091 = vsel %vm952, %v3072, 0
    %v3094 = vsel %vm952, %v3073, 0
    %v3097 = vsel %vm952, %v3074, 0
    %v3100 = vsel %vm952, %v3075, 0
    %v3103 = vsel %vm952, %v3076, 0
    %v3106 = vsel %vm952, %v3077, 0
    %v3109 = vsel %vm952, %v3078, 0
    %v3112 = vsel %vm952, %v3079, 0
    %v3115 = vsel %vm952, %v3080, 0
    %v3118 = vsel %vm952, %v3081, 0
    %v3121 = vsel %vm952, %v3082, 0
    %v3124 = vsel %vm952, %v3083, 0
    %v3127 = vsel %vm952, %v3084, 0
    %v3130 = vsel %vm952, %v3085, 0
    %v3133 = vsel %vm952, %v3086, 0
    %3135 = vmatprep.subr.mxu0 0.0
    %3136 = vmatpush1.msra.mxu0 %v3069
    %3137 = vmatprep.subr.mxu0 0.0
    %3138 = vmatpush1.msra.mxu0 %v3070
    %3139 = vmatprep.subr.mxu0 0.0
    %3140 = vmatpush1.msra.mxu0 0.0
    %3141 = vmatprep.subr.mxu0 0.0
    %3142 = vmatpush1.msra.mxu0 0.0
    %3143 = vmatprep.subr.mxu0 0.0
    %3144 = vmatpush1.msra.mxu0 0.0
    %3145 = vmatprep.subr.mxu0 0.0
    %3146 = vmatpush1.msra.mxu0 0.0
    %3147 = vmatprep.subr.mxu0 0.0
    %3148 = vmatpush1.msra.mxu0 0.0
    %3149 = vmatprep.subr.mxu0 0.0
    %3150 = vmatpush1.msra.mxu0 0.0
    %3151 = vmatprep.subr.mxu0 0.0
    %3152 = vmatpush1.msra.mxu0 0.0
    %3153 = vmatprep.subr.mxu0 0.0
    %3154 = vmatpush1.msra.mxu0 0.0
    %3155 = vmatprep.subr.mxu0 0.0
    %3156 = vmatpush1.msra.mxu0 0.0
    %3157 = vmatprep.subr.mxu0 0.0
    %3158 = vmatpush1.msra.mxu0 0.0
    %3159 = vmatprep.subr.mxu0 0.0
    %3160 = vmatpush1.msra.mxu0 0.0
    %3161 = vmatprep.subr.mxu0 0.0
    %3162 = vmatpush1.msra.mxu0 0.0
    %3163 = vmatprep.subr.mxu0 0.0
    %3164 = vmatpush1.msra.mxu0 0.0
    %3165 = vmatprep.subr.mxu0 0.0
    %3166 = vmatpush1.msra.mxu0 0.0
    %3167 = vmatprep.subr.mxu0 0.0
    %3168 = vmatpush1.msra.mxu0 0.0
    %3169 = vmatprep.subr.mxu0 0.0
    %3170 = vmatpush1.msra.mxu0 0.0
    %3171 = vmatprep.subr.mxu0 0.0
    %3172 = vmatpush1.msra.mxu0 0.0
    %3173 = vmatprep.subr.mxu0 0.0
    %3174 = vmatpush1.msra.mxu0 0.0
    %3175 = vmatprep.subr.mxu0 0.0
    %3176 = vmatpush1.msra.mxu0 0.0
    %3177 = vmatprep.subr.mxu0 0.0
    %3178 = vmatpush1.msra.mxu0 0.0
    %3179 = vmatprep.subr.mxu0 0.0
    %3180 = vmatpush1.msra.mxu0 0.0
    %3181 = vmatprep.subr.mxu0 0.0
    %3182 = vmatpush1.msra.mxu0 0.0
    %3183 = vmatprep.subr.mxu0 0.0
    %3184 = vmatpush1.msra.mxu0 0.0
    %3185 = vmatprep.subr.mxu0 0.0
    %3186 = vmatpush1.msra.mxu0 0.0
    %3187 = vmatprep.subr.mxu0 0.0
    %3188 = vmatpush1.msra.mxu0 0.0
    %3189 = vmatprep.subr.mxu0 0.0
    %3190 = vmatpush1.msra.mxu0 0.0
    %3191 = vmatprep.subr.mxu0 0.0
    %3192 = vmatpush1.msra.mxu0 0.0
    %3193 = vmatprep.subr.mxu0 0.0
    %3194 = vmatpush1.msra.mxu0 0.0
    %3195 = vmatprep.subr.mxu0 0.0
    %3196 = vmatpush1.msra.mxu0 0.0
    %3197 = vmatprep.subr.mxu0 0.0
    %3198 = vmatpush1.msra.mxu0 0.0
    %3199 = vmatprep.mubr.f32.mxu0 0.0
    %3200 = vmatmul.mubr.f32.gmra.mrb[0].mxu0 %v3088
    %v3201 = vpop.f32.mrb[0].mxu0
    %v3202 = vadd.f32 0.0, %v3201
    %v3203 = vpop.f32.mrb[0].mxu0
    %3204 = vmatprep.mubr.f32.mxu0 0.0
    %3205 = vmatmul.mubr.f32.gmra.mrb[0].mxu0 %v3091
    %v3206 = vpop.f32.mrb[0].mxu0
    %v3207 = vadd.f32 0.0, %v3206
    %v3208 = vpop.f32.mrb[0].mxu0
    %3209 = vmatprep.mubr.f32.mxu0 0.0
    %3210 = vmatmul.mubr.f32.gmra.mrb[0].mxu0 %v3094
    %v3211 = vpop.f32.mrb[0].mxu0
    %v3212 = vadd.f32 0.0, %v3211
    %v3213 = vpop.f32.mrb[0].mxu0
    %3214 = vmatprep.mubr.f32.mxu0 0.0
    %3215 = vmatmul.mubr.f32.gmra.mrb[0].mxu0 %v3097
    %v3216 = vpop.f32.mrb[0].mxu0
    %v3217 = vadd.f32 0.0, %v3216
    %v3218 = vpop.f32.mrb[0].mxu0
    %3219 = vmatprep.mubr.f32.mxu0 0.0
    %3220 = vmatmul.mubr.f32.gmra.mrb[0].mxu0 %v3100
    %v3221 = vpop.f32.mrb[0].mxu0
    %v3222 = vadd.f32 0.0, %v3221
    %v3223 = vpop.f32.mrb[0].mxu0
    %3224 = vmatprep.mubr.f32.mxu0 0.0
    %3225 = vmatmul.mubr.f32.gmra.mrb[0].mxu0 %v3103
    %v3226 = vpop.f32.mrb[0].mxu0
    %v3227 = vadd.f32 0.0, %v3226
    %v3228 = vpop.f32.mrb[0].mxu0
    %3229 = vmatprep.mubr.f32.mxu0 0.0
    %3230 = vmatmul.mubr.f32.gmra.mrb[0].mxu0 %v3106
    %v3231 = vpop.f32.mrb[0].mxu0
    %v3232 = vadd.f32 0.0, %v3231
    %v3233 = vpop.f32.mrb[0].mxu0
    %3234 = vmatprep.mubr.f32.mxu0 0.0
    %3235 = vmatmul.mubr.f32.gmra.mrb[0].mxu0 %v3109
    %v3236 = vpop.f32.mrb[0].mxu0
    %v3237 = vadd.f32 0.0, %v3236
    %v3238 = vpop.f32.mrb[0].mxu0
    %3239 = vmatprep.mubr.f32.mxu0 0.0
    %3240 = vmatmul.mubr.f32.gmra.mrb[0].mxu0 %v3112
    %v3241 = vpop.f32.mrb[0].mxu0
    %v3242 = vadd.f32 0.0, %v3241
    %v3243 = vpop.f32.mrb[0].mxu0
    %3244 = vmatprep.mubr.f32.mxu0 0.0
    %3245 = vmatmul.mubr.f32.gmra.mrb[0].mxu0 %v3115
    %v3246 = vpop.f32.mrb[0].mxu0
    %v3247 = vadd.f32 0.0, %v3246
    %v3248 = vpop.f32.mrb[0].mxu0
    %3249 = vmatprep.mubr.f32.mxu0 0.0
    %3250 = vmatmul.mubr.f32.gmra.mrb[0].mxu0 %v3118
    %v3251 = vpop.f32.mrb[0].mxu0
    %v3252 = vadd.f32 0.0, %v3251
    %v3253 = vpop.f32.mrb[0].mxu0
    %3254 = vmatprep.mubr.f32.mxu0 0.0
    %3255 = vmatmul.mubr.f32.gmra.mrb[0].mxu0 %v3121
    %v3256 = vpop.f32.mrb[0].mxu0
    %v3257 = vadd.f32 0.0, %v3256
    %v3258 = vpop.f32.mrb[0].mxu0
    %3259 = vmatprep.mubr.f32.mxu0 0.0
    %3260 = vmatmul.mubr.f32.gmra.mrb[0].mxu0 %v3124
    %v3261 = vpop.f32.mrb[0].mxu0
    %v3262 = vadd.f32 0.0, %v3261
    %v3263 = vpop.f32.mrb[0].mxu0
    %3264 = vmatprep.mubr.f32.mxu0 0.0
    %3265 = vmatmul.mubr.f32.gmra.mrb[0].mxu0 %v3127
    %v3266 = vpop.f32.mrb[0].mxu0
    %v3267 = vadd.f32 0.0, %v3266
    %v3268 = vpop.f32.mrb[0].mxu0
    %3269 = vmatprep.mubr.f32.mxu0 0.0
    %3270 = vmatmul.mubr.f32.gmra.mrb[0].mxu0 %v3130
    %v3271 = vpop.f32.mrb[0].mxu0
    %v3272 = vadd.f32 0.0, %v3271
    %v3273 = vpop.f32.mrb[0].mxu0
    %3274 = vmatprep.mubr.f32.mxu0 0.0
    %3275 = vmatmul.mubr.f32.gmra.mrb[0].mxu0 %v3133
    %v3276 = vpop.f32.mrb[0].mxu0
    %v3277 = vadd.f32 0.0, %v3276
    %v3278 = vpop.f32.mrb[0].mxu0
    %3279 = vdwg.mxu0
    %vm3280 = vcmp.gt.f32.partialorder %v3202, 1.0
    %vm3281 = vcmp.gt.f32.partialorder %v3207, 1.0
    %vm3282 = vcmp.gt.f32.partialorder %v3212, 1.0
    %vm3283 = vcmp.gt.f32.partialorder %v3217, 1.0
    %vm3284 = vcmp.gt.f32.partialorder %v3222, 1.0
    %vm3285 = vcmp.gt.f32.partialorder %v3227, 1.0
    %vm3286 = vcmp.gt.f32.partialorder %v3232, 1.0
    %vm3287 = vcmp.gt.f32.partialorder %v3237, 1.0
    %vm3288 = vcmp.gt.f32.partialorder %v3242, 1.0
    %vm3289 = vcmp.gt.f32.partialorder %v3247, 1.0
    %vm3290 = vcmp.gt.f32.partialorder %v3252, 1.0
    %vm3291 = vcmp.gt.f32.partialorder %v3257, 1.0
    %vm3292 = vcmp.gt.f32.partialorder %v3262, 1.0
    %vm3293 = vcmp.gt.f32.partialorder %v3267, 1.0
    %vm3294 = vcmp.gt.f32.partialorder %v3272, 1.0
    %vm3295 = vcmp.gt.f32.partialorder %v3277, 1.0
    %v3296 = vsel %vm3280, 0.0, %v3202
    %v3297 = vsel %vm3281, 0.0, %v3207
    %v3298 = vsel %vm3282, 0.0, %v3212
    %v3299 = vsel %vm3283, 0.0, %v3217
    %v3300 = vsel %vm3284, 0.0, %v3222
    %v3301 = vsel %vm3285, 0.0, %v3227
    %v3302 = vsel %vm3286, 0.0, %v3232
    %v3303 = vsel %vm3287, 0.0, %v3237
    %v3304 = vsel %vm3288, 0.0, %v3242
    %v3305 = vsel %vm3289, 0.0, %v3247
    %v3306 = vsel %vm3290, 0.0, %v3252
    %v3307 = vsel %vm3291, 0.0, %v3257
    %v3308 = vsel %vm3292, 0.0, %v3262
    %v3309 = vsel %vm3293, 0.0, %v3267
    %v3310 = vsel %vm3294, 0.0, %v3272
    %v3311 = vsel %vm3295, 0.0, %v3277
    %v3312 = vmul.f32 %v3296, 3.1415927
    %v3313 = vmul.f32 %v3297, 3.1415927
    %v3314 = vmul.f32 %v3298, 3.1415927
    %v3315 = vmul.f32 %v3299, 3.1415927
    %v3316 = vmul.f32 %v3300, 3.1415927
    %v3317 = vmul.f32 %v3301, 3.1415927
    %v3318 = vmul.f32 %v3302, 3.1415927
    %v3319 = vmul.f32 %v3303, 3.1415927
    %v3320 = vmul.f32 %v3304, 3.1415927
    %v3321 = vmul.f32 %v3305, 3.1415927
    %v3322 = vmul.f32 %v3306, 3.1415927
    %v3323 = vmul.f32 %v3307, 3.1415927
    %v3324 = vmul.f32 %v3308, 3.1415927
    %v3325 = vmul.f32 %v3309, 3.1415927
    %v3326 = vmul.f32 %v3310, 3.1415927
    %v3327 = vmul.f32 %v3311, 3.1415927
    %v3328 = vld [vmem:[#allocation22] sm:$0xff]
    %v3329 = vld [vmem:[#allocation22 + $0x8] sm:$0xff]
    %v3330 = vld [vmem:[#allocation22 + $0x10] sm:$0xff]
    %v3331 = vld [vmem:[#allocation22 + $0x18] sm:$0xff]
    %v3333 = vsel %vm952, %v3312, 0
    %v3336 = vsel %vm952, %v3313, 0
    %v3339 = vsel %vm952, %v3314, 0
    %v3342 = vsel %vm952, %v3315, 0
    %v3345 = vsel %vm952, %v3316, 0
    %v3348 = vsel %vm952, %v3317, 0
    %v3351 = vsel %vm952, %v3318, 0
    %v3354 = vsel %vm952, %v3319, 0
    %v3357 = vsel %vm952, %v3320, 0
    %v3360 = vsel %vm952, %v3321, 0
    %v3363 = vsel %vm952, %v3322, 0
    %v3366 = vsel %vm952, %v3323, 0
    %v3369 = vsel %vm952, %v3324, 0
    %v3372 = vsel %vm952, %v3325, 0
    %v3375 = vsel %vm952, %v3326, 0
    %v3378 = vsel %vm952, %v3327, 0
    %3380 = vmatprep.subr.mxu0 %v3329
    %3381 = vmatpush1.msra.mxu0 %v3328
    %3382 = vmatprep.subr.mxu0 %v3331
    %3383 = vmatpush1.msra.mxu0 %v3330
    %3384 = vmatprep.subr.mxu0 0.0
    %3385 = vmatpush1.msra.mxu0 0.0
    %3386 = vmatprep.subr.mxu0 0.0
    %3387 = vmatpush1.msra.mxu0 0.0
    %3388 = vmatprep.subr.mxu0 0.0
    %3389 = vmatpush1.msra.mxu0 0.0
    %3390 = vmatprep.subr.mxu0 0.0
    %3391 = vmatpush1.msra.mxu0 0.0
    %3392 = vmatprep.subr.mxu0 0.0
    %3393 = vmatpush1.msra.mxu0 0.0
    %3394 = vmatprep.subr.mxu0 0.0
    %3395 = vmatpush1.msra.mxu0 0.0
    %3396 = vmatprep.subr.mxu0 0.0
    %3397 = vmatpush1.msra.mxu0 0.0
    %3398 = vmatprep.subr.mxu0 0.0
    %3399 = vmatpush1.msra.mxu0 0.0
    %3400 = vmatprep.subr.mxu0 0.0
    %3401 = vmatpush1.msra.mxu0 0.0
    %3402 = vmatprep.subr.mxu0 0.0
    %3403 = vmatpush1.msra.mxu0 0.0
    %3404 = vmatprep.subr.mxu0 0.0
    %3405 = vmatpush1.msra.mxu0 0.0
    %3406 = vmatprep.subr.mxu0 0.0
    %3407 = vmatpush1.msra.mxu0 0.0
    %3408 = vmatprep.subr.mxu0 0.0
    %3409 = vmatpush1.msra.mxu0 0.0
    %3410 = vmatprep.subr.mxu0 0.0
    %3411 = vmatpush1.msra.mxu0 0.0
    %3412 = vmatprep.subr.mxu0 0.0
    %3413 = vmatpush1.msra.mxu0 0.0
    %3414 = vmatprep.subr.mxu0 0.0
    %3415 = vmatpush1.msra.mxu0 0.0
    %3416 = vmatprep.subr.mxu0 0.0
    %3417 = vmatpush1.msra.mxu0 0.0
    %3418 = vmatprep.subr.mxu0 0.0
    %3419 = vmatpush1.msra.mxu0 0.0
    %3420 = vmatprep.subr.mxu0 0.0
    %3421 = vmatpush1.msra.mxu0 0.0
    %3422 = vmatprep.subr.mxu0 0.0
    %3423 = vmatpush1.msra.mxu0 0.0
    %3424 = vmatprep.subr.mxu0 0.0
    %3425 = vmatpush1.msra.mxu0 0.0
    %3426 = vmatprep.subr.mxu0 0.0
    %3427 = vmatpush1.msra.mxu0 0.0
    %3428 = vmatprep.subr.mxu0 0.0
    %3429 = vmatpush1.msra.mxu0 0.0
    %3430 = vmatprep.subr.mxu0 0.0
    %3431 = vmatpush1.msra.mxu0 0.0
    %3432 = vmatprep.subr.mxu0 0.0
    %3433 = vmatpush1.msra.mxu0 0.0
    %3434 = vmatprep.subr.mxu0 0.0
    %3435 = vmatpush1.msra.mxu0 0.0
    %3436 = vmatprep.subr.mxu0 0.0
    %3437 = vmatpush1.msra.mxu0 0.0
    %3438 = vmatprep.subr.mxu0 0.0
    %3439 = vmatpush1.msra.mxu0 0.0
    %3440 = vmatprep.subr.mxu0 0.0
    %3441 = vmatpush1.msra.mxu0 0.0
    %3442 = vmatprep.subr.mxu0 0.0
    %3443 = vmatpush1.msra.mxu0 0.0
    %3444 = vmatprep.mubr.f32.mxu0 0.0
    %3445 = vmatmul.mubr.f32.gmra.mrb[0].mxu0 %v3333
    %v3446 = vpop.f32.mrb[0].mxu0
    %v3447 = vadd.f32 0.0, %v3446
    %v3448 = vpop.f32.mrb[0].mxu0
    %v3449 = vadd.f32 0.0, %v3448
    %3450 = vmatprep.mubr.f32.mxu0 0.0
    %3451 = vmatmul.mubr.f32.gmra.mrb[0].mxu0 %v3336
    %v3452 = vpop.f32.mrb[0].mxu0
    %v3453 = vadd.f32 0.0, %v3452
    %v3454 = vpop.f32.mrb[0].mxu0
    %v3455 = vadd.f32 0.0, %v3454
    %3456 = vmatprep.mubr.f32.mxu0 0.0
    %3457 = vmatmul.mubr.f32.gmra.mrb[0].mxu0 %v3339
    %v3458 = vpop.f32.mrb[0].mxu0
    %v3459 = vadd.f32 0.0, %v3458
    %v3460 = vpop.f32.mrb[0].mxu0
    %v3461 = vadd.f32 0.0, %v3460
    %3462 = vmatprep.mubr.f32.mxu0 0.0
    %3463 = vmatmul.mubr.f32.gmra.mrb[0].mxu0 %v3342
    %v3464 = vpop.f32.mrb[0].mxu0
    %v3465 = vadd.f32 0.0, %v3464
    %v3466 = vpop.f32.mrb[0].mxu0
    %v3467 = vadd.f32 0.0, %v3466
    %3468 = vmatprep.mubr.f32.mxu0 0.0
    %3469 = vmatmul.mubr.f32.gmra.mrb[0].mxu0 %v3345
    %v3470 = vpop.f32.mrb[0].mxu0
    %v3471 = vadd.f32 0.0, %v3470
    %v3472 = vpop.f32.mrb[0].mxu0
    %v3473 = vadd.f32 0.0, %v3472
    %3474 = vmatprep.mubr.f32.mxu0 0.0
    %3475 = vmatmul.mubr.f32.gmra.mrb[0].mxu0 %v3348
    %v3476 = vpop.f32.mrb[0].mxu0
    %v3477 = vadd.f32 0.0, %v3476
    %v3478 = vpop.f32.mrb[0].mxu0
    %v3479 = vadd.f32 0.0, %v3478
    %3480 = vmatprep.mubr.f32.mxu0 0.0
    %3481 = vmatmul.mubr.f32.gmra.mrb[0].mxu0 %v3351
    %v3482 = vpop.f32.mrb[0].mxu0
    %v3483 = vadd.f32 0.0, %v3482
    %v3484 = vpop.f32.mrb[0].mxu0
    %v3485 = vadd.f32 0.0, %v3484
    %3486 = vmatprep.mubr.f32.mxu0 0.0
    %3487 = vmatmul.mubr.f32.gmra.mrb[0].mxu0 %v3354
    %v3488 = vpop.f32.mrb[0].mxu0
    %v3489 = vadd.f32 0.0, %v3488
    %v3490 = vpop.f32.mrb[0].mxu0
    %v3491 = vadd.f32 0.0, %v3490
    %3492 = vmatprep.mubr.f32.mxu0 0.0
    %3493 = vmatmul.mubr.f32.gmra.mrb[0].mxu0 %v3357
    %v3494 = vpop.f32.mrb[0].mxu0
    %v3495 = vadd.f32 0.0, %v3494
    %v3496 = vpop.f32.mrb[0].mxu0
    %v3497 = vadd.f32 0.0, %v3496
    %3498 = vmatprep.mubr.f32.mxu0 0.0
    %3499 = vmatmul.mubr.f32.gmra.mrb[0].mxu0 %v3360
    %v3500 = vpop.f32.mrb[0].mxu0
    %v3501 = vadd.f32 0.0, %v3500
    %v3502 = vpop.f32.mrb[0].mxu0
    %v3503 = vadd.f32 0.0, %v3502
    %3504 = vmatprep.mubr.f32.mxu0 0.0
    %3505 = vmatmul.mubr.f32.gmra.mrb[0].mxu0 %v3363
    %v3506 = vpop.f32.mrb[0].mxu0
    %v3507 = vadd.f32 0.0, %v3506
    %v3508 = vpop.f32.mrb[0].mxu0
    %v3509 = vadd.f32 0.0, %v3508
    %3510 = vmatprep.mubr.f32.mxu0 0.0
    %3511 = vmatmul.mubr.f32.gmra.mrb[0].mxu0 %v3366
    %v3512 = vpop.f32.mrb[0].mxu0
    %v3513 = vadd.f32 0.0, %v3512
    %v3514 = vpop.f32.mrb[0].mxu0
    %v3515 = vadd.f32 0.0, %v3514
    %3516 = vmatprep.mubr.f32.mxu0 0.0
    %3517 = vmatmul.mubr.f32.gmra.mrb[0].mxu0 %v3369
    %v3518 = vpop.f32.mrb[0].mxu0
    %v3519 = vadd.f32 0.0, %v3518
    %v3520 = vpop.f32.mrb[0].mxu0
    %v3521 = vadd.f32 0.0, %v3520
    %3522 = vmatprep.mubr.f32.mxu0 0.0
    %3523 = vmatmul.mubr.f32.gmra.mrb[0].mxu0 %v3372
    %v3524 = vpop.f32.mrb[0].mxu0
    %v3525 = vadd.f32 0.0, %v3524
    %v3526 = vpop.f32.mrb[0].mxu0
    %v3527 = vadd.f32 0.0, %v3526
    %3528 = vmatprep.mubr.f32.mxu0 0.0
    %3529 = vmatmul.mubr.f32.gmra.mrb[0].mxu0 %v3375
    %v3530 = vpop.f32.mrb[0].mxu0
    %v3531 = vadd.f32 0.0, %v3530
    %v3532 = vpop.f32.mrb[0].mxu0
    %v3533 = vadd.f32 0.0, %v3532
    %3534 = vmatprep.mubr.f32.mxu0 0.0
    %3535 = vmatmul.mubr.f32.gmra.mrb[0].mxu0 %v3378
    %v3536 = vpop.f32.mrb[0].mxu0
    %v3537 = vadd.f32 0.0, %v3536
    %v3538 = vpop.f32.mrb[0].mxu0
    %v3539 = vadd.f32 0.0, %v3538
    %3540 = vdwg.mxu0
    %v3541 = vand.u32 2147483647, %v3447
    %vm3542 = vcmp.le.f32.partialorder %v3541, 0.7853982
    %vm3543 = vcmp.lt.s32.totalorder %v3447, 0
    %v3544 = vand.u32 %v3447, 2139095040
    %v3545 = vshrl.u32 %v3544, 23
    %v3546 = vsub.s32 %v3545, 127
    %v3547 = vand.u32 2147483647, %v3447
    %v3548 = vand.u32 %v3547, 8388607
    %v3549 = vor.u32 %v3548, 8388608
    %v3550 = vsub.s32 0, %v3549
    %v3551 = vadd.s32 %v3546, 1
    %vm3552 = vcmp.gt.s32.totalorder %v3551, 0
    %v3553 = vsel %vm3552, %v3551, 0
    %v3554 = vshrl.u32 %v3553, 5
    %v3555 = vand.u32 %v3553, 31
    %v3556 = vsub.s32 32, %v3555
    %v3557 = vshrl.u32 683565275, %v3556
    %v3558 = vshll.u32 683565275, %v3555
    %v3559 = vshrl.u32 2475754826, %v3556
    %v3560 = vor.u32 %v3558, %v3559
    %v3561 = vshll.u32 2475754826, %v3555
    %v3562 = vshrl.u32 2131351028, %v3556
    %v3563 = vor.u32 %v3561, %v3562
    %v3564 = vshll.u32 2131351028, %v3555
    %v3565 = vshrl.u32 2102212464, %v3556
    %v3566 = vor.u32 %v3564, %v3565
    %v3567 = vshll.u32 2102212464, %v3555
    %v3568 = vshrl.u32 920167782, %v3556
    %v3569 = vor.u32 %v3567, %v3568
    %v3570 = vshll.u32 920167782, %v3555
    %v3571 = vshrl.u32 1326507024, %v3556
    %v3572 = vor.u32 %v3570, %v3571
    %vm3573 = vcmp.lt.s32.totalorder %v3554, 1
    %vm3574 = vcmp.lt.s32.totalorder %v3554, 2
    %vm3575 = vcmp.lt.s32.totalorder %v3554, 3
    %vm3576 = vcmp.lt.s32.totalorder %v3554, 4
    %v3577 = vsel %vm3573, %v3557, %v3560
    %v3578 = vsel %vm3576, %v3566, 2102212464
    %v3579 = vsel %vm3575, %v3563, %v3578
    %v3580 = vsel %vm3574, %v3577, %v3579
    %v3581 = vsel %vm3573, %v3560, %v3563
    %v3582 = vsel %vm3576, %v3569, 920167782
    %v3583 = vsel %vm3575, %v3566, %v3582
    %v3584 = vsel %vm3574, %v3581, %v3583
    %v3585 = vsel %vm3573, %v3563, %v3566
    %v3586 = vsel %vm3576, %v3572, 1326507024
    %v3587 = vsel %vm3575, %v3569, %v3586
    %v3588 = vsel %vm3574, %v3585, %v3587
    %v3589 = vshll.u32 %v3549, 8
    %v3590 = vmul.u32.u64.compose %v3589, %v3588
    %v3591 = vextract.low.u32 %v3590
    %v3592 = vextract.high.u32 %v3590
    %v3593 = vmul.u32.u64.compose %v3589, %v3584
    %v3594 = vextract.low.u32 %v3593
    %v3595 = vextract.high.u32 %v3593
    %v3596 = vmul.u32 %v3589, %v3580
    %v3597 = vadd.s32 %v3592, %v3594
    %vm3598 = vc.u32 %v3592, %v3594
    %v3599 = vadd.s32 %v3595, 1
    %v3600 = vsel %vm3598, %v3599, %v3595
    %v3601 = vadd.s32 %v3596, %v3600
    %v3602 = vadd.s32 %v3601, 536870912
    %v3603 = vshrl.u32 %v3602, 30
    %v3604 = vshll.u32 %v3603, 30
    %v3605 = vsub.s32 %v3601, %v3604
    %vm3606 = vcmp.lt.s32.totalorder %v3605, 0
    %v3607 = vsub.s32 0, %v3605
    %v3608 = vsel %vm3606, %v3607, %v3605
    %v3609 = vclz %v3608
    %v3610 = vsub.s32 %v3609, 2
    %vm3611 = vcmp.gt.s32.totalorder 0, %v3610
    %v3612 = vsel %vm3611, 0, %v3610
    %v3613 = vsub.s32 32, %v3612
    %v3614 = vshll.u32 %v3605, %v3612
    %v3615 = vshrl.u32 %v3597, %v3613
    %v3616 = vor.u32 %v3614, %v3615
    %v3617 = vsub.s32 4294967266, %v3612
    %v3618 = vadd.s32 %v3617, 127
    %v3619 = vshll.u32 %v3618, 23
    %v3620 = vor.u32 4788187, %v3619
    %v3621 = vand.u32 2147483647, %v3620
    %v3623 = vcvt.s32.f32 %v3616
    %v3624 = vmul.f32 %v3623, %v3621
    %v3625 = vxor.u32 %v3624, 2147483648
    %v3626 = vsel %vm3543, %v3625, %v3624
    %v3627 = vsub.s32 4, %v3603
    %v3628 = vsel %vm3543, %v3627, %v3603
    %v3629 = vsel %vm3542, %v3447, %v3626
    %v3630 = vsel %vm3542, 0, %v3628
    %v3631 = vcosq.f32.pop %v3629
    %v3632 = vsinq.f32.pop %v3629
    %vm3633 = vweird.f32 %v3447
    %v3634 = vadd.s32 %v3630, 3
    %v3635 = vand.u32 %v3634, 3
    %vm3636 = vcmp.lt.s32.totalorder %v3635, 2
    %vm3637 = vcmp.eq.s32.totalorder %v3635, 0
    %v3638 = vxor.u32 %v3632, 2147483648
    %v3639 = vsel %vm3637, %v3631, %v3638
    %vm3640 = vcmp.eq.s32.totalorder %v3635, 2
    %v3641 = vxor.u32 %v3631, 2147483648
    %v3642 = vsel %vm3640, %v3641, %v3632
    %v3643 = vsel %vm3636, %v3639, %v3642
    %v3644 = vsel %vm3633, nan, %v3643
    %v3645 = vand.u32 2147483647, %v3449
    %vm3646 = vcmp.le.f32.partialorder %v3645, 0.7853982
    %vm3647 = vcmp.lt.s32.totalorder %v3449, 0
    %v3648 = vand.u32 %v3449, 2139095040
    %v3649 = vshrl.u32 %v3648, 23
    %v3650 = vsub.s32 %v3649, 127
    %v3651 = vand.u32 2147483647, %v3449
    %v3652 = vand.u32 %v3651, 8388607
    %v3653 = vor.u32 %v3652, 8388608
    %v3654 = vsub.s32 0, %v3653
    %v3655 = vadd.s32 %v3650, 1
    %vm3656 = vcmp.gt.s32.totalorder %v3655, 0
    %v3657 = vsel %vm3656, %v3655, 0
    %v3658 = vshrl.u32 %v3657, 5
    %v3659 = vand.u32 %v3657, 31
    %v3660 = vsub.s32 32, %v3659
    %v3661 = vshrl.u32 683565275, %v3660
    %v3662 = vshll.u32 683565275, %v3659
    %v3663 = vshrl.u32 2475754826, %v3660
    %v3664 = vor.u32 %v3662, %v3663
    %v3665 = vshll.u32 2475754826, %v3659
    %v3666 = vshrl.u32 2131351028, %v3660
    %v3667 = vor.u32 %v3665, %v3666
    %v3668 = vshll.u32 2131351028, %v3659
    %v3669 = vshrl.u32 2102212464, %v3660
    %v3670 = vor.u32 %v3668, %v3669
    %v3671 = vshll.u32 2102212464, %v3659
    %v3672 = vshrl.u32 920167782, %v3660
    %v3673 = vor.u32 %v3671, %v3672
    %v3674 = vshll.u32 920167782, %v3659
    %v3675 = vshrl.u32 1326507024, %v3660
    %v3676 = vor.u32 %v3674, %v3675
    %vm3677 = vcmp.lt.s32.totalorder %v3658, 1
    %vm3678 = vcmp.lt.s32.totalorder %v3658, 2
    %vm3679 = vcmp.lt.s32.totalorder %v3658, 3
    %vm3680 = vcmp.lt.s32.totalorder %v3658, 4
    %v3681 = vsel %vm3677, %v3661, %v3664
    %v3682 = vsel %vm3680, %v3670, 2102212464
    %v3683 = vsel %vm3679, %v3667, %v3682
    %v3684 = vsel %vm3678, %v3681, %v3683
    %v3685 = vsel %vm3677, %v3664, %v3667
    %v3686 = vsel %vm3680, %v3673, 920167782
    %v3687 = vsel %vm3679, %v3670, %v3686
    %v3688 = vsel %vm3678, %v3685, %v3687
    %v3689 = vsel %vm3677, %v3667, %v3670
    %v3690 = vsel %vm3680, %v3676, 1326507024
    %v3691 = vsel %vm3679, %v3673, %v3690
    %v3692 = vsel %vm3678, %v3689, %v3691
    %v3693 = vshll.u32 %v3653, 8
    %v3694 = vmul.u32.u64.compose %v3693, %v3692
    %v3695 = vextract.low.u32 %v3694
    %v3696 = vextract.high.u32 %v3694
    %v3697 = vmul.u32.u64.compose %v3693, %v3688
    %v3698 = vextract.low.u32 %v3697
    %v3699 = vextract.high.u32 %v3697
    %v3700 = vmul.u32 %v3693, %v3684
    %v3701 = vadd.s32 %v3696, %v3698
    %vm3702 = vc.u32 %v3696, %v3698
    %v3703 = vadd.s32 %v3699, 1
    %v3704 = vsel %vm3702, %v3703, %v3699
    %v3705 = vadd.s32 %v3700, %v3704
    %v3706 = vadd.s32 %v3705, 536870912
    %v3707 = vshrl.u32 %v3706, 30
    %v3708 = vshll.u32 %v3707, 30
    %v3709 = vsub.s32 %v3705, %v3708
    %vm3710 = vcmp.lt.s32.totalorder %v3709, 0
    %v3711 = vsub.s32 0, %v3709
    %v3712 = vsel %vm3710, %v3711, %v3709
    %v3713 = vclz %v3712
    %v3714 = vsub.s32 %v3713, 2
    %vm3715 = vcmp.gt.s32.totalorder 0, %v3714
    %v3716 = vsel %vm3715, 0, %v3714
    %v3717 = vsub.s32 32, %v3716
    %v3718 = vshll.u32 %v3709, %v3716
    %v3719 = vshrl.u32 %v3701, %v3717
    %v3720 = vor.u32 %v3718, %v3719
    %v3721 = vsub.s32 4294967266, %v3716
    %v3722 = vadd.s32 %v3721, 127
    %v3723 = vshll.u32 %v3722, 23
    %v3724 = vor.u32 4788187, %v3723
    %v3725 = vand.u32 2147483647, %v3724
    %v3727 = vcvt.s32.f32 %v3720
    %v3728 = vmul.f32 %v3727, %v3725
    %v3729 = vxor.u32 %v3728, 2147483648
    %v3730 = vsel %vm3647, %v3729, %v3728
    %v3731 = vsub.s32 4, %v3707
    %v3732 = vsel %vm3647, %v3731, %v3707
    %v3733 = vsel %vm3646, %v3449, %v3730
    %v3734 = vsel %vm3646, 0, %v3732
    %v3735 = vcosq.f32.pop %v3733
    %v3736 = vsinq.f32.pop %v3733
    %vm3737 = vweird.f32 %v3449
    %v3738 = vadd.s32 %v3734, 3
    %v3739 = vand.u32 %v3738, 3
    %vm3740 = vcmp.lt.s32.totalorder %v3739, 2
    %vm3741 = vcmp.eq.s32.totalorder %v3739, 0
    %v3742 = vxor.u32 %v3736, 2147483648
    %v3743 = vsel %vm3741, %v3735, %v3742
    %vm3744 = vcmp.eq.s32.totalorder %v3739, 2
    %v3745 = vxor.u32 %v3735, 2147483648
    %v3746 = vsel %vm3744, %v3745, %v3736
    %v3747 = vsel %vm3740, %v3743, %v3746
    %v3748 = vsel %vm3737, nan, %v3747
    %v3749 = vand.u32 2147483647, %v3453
    %vm3750 = vcmp.le.f32.partialorder %v3749, 0.7853982
    %vm3751 = vcmp.lt.s32.totalorder %v3453, 0
    %v3752 = vand.u32 %v3453, 2139095040
    %v3753 = vshrl.u32 %v3752, 23
    %v3754 = vsub.s32 %v3753, 127
    %v3755 = vand.u32 2147483647, %v3453
    %v3756 = vand.u32 %v3755, 8388607
    %v3757 = vor.u32 %v3756, 8388608
    %v3758 = vsub.s32 0, %v3757
    %v3759 = vadd.s32 %v3754, 1
    %vm3760 = vcmp.gt.s32.totalorder %v3759, 0
    %v3761 = vsel %vm3760, %v3759, 0
    %v3762 = vshrl.u32 %v3761, 5
    %v3763 = vand.u32 %v3761, 31
    %v3764 = vsub.s32 32, %v3763
    %v3765 = vshrl.u32 683565275, %v3764
    %v3766 = vshll.u32 683565275, %v3763
    %v3767 = vshrl.u32 2475754826, %v3764
    %v3768 = vor.u32 %v3766, %v3767
    %v3769 = vshll.u32 2475754826, %v3763
    %v3770 = vshrl.u32 2131351028, %v3764
    %v3771 = vor.u32 %v3769, %v3770
    %v3772 = vshll.u32 2131351028, %v3763
    %v3773 = vshrl.u32 2102212464, %v3764
    %v3774 = vor.u32 %v3772, %v3773
    %v3775 = vshll.u32 2102212464, %v3763
    %v3776 = vshrl.u32 920167782, %v3764
    %v3777 = vor.u32 %v3775, %v3776
    %v3778 = vshll.u32 920167782, %v3763
    %v3779 = vshrl.u32 1326507024, %v3764
    %v3780 = vor.u32 %v3778, %v3779
    %vm3781 = vcmp.lt.s32.totalorder %v3762, 1
    %vm3782 = vcmp.lt.s32.totalorder %v3762, 2
    %vm3783 = vcmp.lt.s32.totalorder %v3762, 3
    %vm3784 = vcmp.lt.s32.totalorder %v3762, 4
    %v3785 = vsel %vm3781, %v3765, %v3768
    %v3786 = vsel %vm3784, %v3774, 2102212464
    %v3787 = vsel %vm3783, %v3771, %v3786
    %v3788 = vsel %vm3782, %v3785, %v3787
    %v3789 = vsel %vm3781, %v3768, %v3771
    %v3790 = vsel %vm3784, %v3777, 920167782
    %v3791 = vsel %vm3783, %v3774, %v3790
    %v3792 = vsel %vm3782, %v3789, %v3791
    %v3793 = vsel %vm3781, %v3771, %v3774
    %v3794 = vsel %vm3784, %v3780, 1326507024
    %v3795 = vsel %vm3783, %v3777, %v3794
    %v3796 = vsel %vm3782, %v3793, %v3795
    %v3797 = vshll.u32 %v3757, 8
    %v3798 = vmul.u32.u64.compose %v3797, %v3796
    %v3799 = vextract.low.u32 %v3798
    %v3800 = vextract.high.u32 %v3798
    %v3801 = vmul.u32.u64.compose %v3797, %v3792
    %v3802 = vextract.low.u32 %v3801
    %v3803 = vextract.high.u32 %v3801
    %v3804 = vmul.u32 %v3797, %v3788
    %v3805 = vadd.s32 %v3800, %v3802
    %vm3806 = vc.u32 %v3800, %v3802
    %v3807 = vadd.s32 %v3803, 1
    %v3808 = vsel %vm3806, %v3807, %v3803
    %v3809 = vadd.s32 %v3804, %v3808
    %v3810 = vadd.s32 %v3809, 536870912
    %v3811 = vshrl.u32 %v3810, 30
    %v3812 = vshll.u32 %v3811, 30
    %v3813 = vsub.s32 %v3809, %v3812
    %vm3814 = vcmp.lt.s32.totalorder %v3813, 0
    %v3815 = vsub.s32 0, %v3813
    %v3816 = vsel %vm3814, %v3815, %v3813
    %v3817 = vclz %v3816
    %v3818 = vsub.s32 %v3817, 2
    %vm3819 = vcmp.gt.s32.totalorder 0, %v3818
    %v3820 = vsel %vm3819, 0, %v3818
    %v3821 = vsub.s32 32, %v3820
    %v3822 = vshll.u32 %v3813, %v3820
    %v3823 = vshrl.u32 %v3805, %v3821
    %v3824 = vor.u32 %v3822, %v3823
    %v3825 = vsub.s32 4294967266, %v3820
    %v3826 = vadd.s32 %v3825, 127
    %v3827 = vshll.u32 %v3826, 23
    %v3828 = vor.u32 4788187, %v3827
    %v3829 = vand.u32 2147483647, %v3828
    %v3831 = vcvt.s32.f32 %v3824
    %v3832 = vmul.f32 %v3831, %v3829
    %v3833 = vxor.u32 %v3832, 2147483648
    %v3834 = vsel %vm3751, %v3833, %v3832
    %v3835 = vsub.s32 4, %v3811
    %v3836 = vsel %vm3751, %v3835, %v3811
    %v3837 = vsel %vm3750, %v3453, %v3834
    %v3838 = vsel %vm3750, 0, %v3836
    %v3839 = vcosq.f32.pop %v3837
    %v3840 = vsinq.f32.pop %v3837
    %vm3841 = vweird.f32 %v3453
    %v3842 = vadd.s32 %v3838, 3
    %v3843 = vand.u32 %v3842, 3
    %vm3844 = vcmp.lt.s32.totalorder %v3843, 2
    %vm3845 = vcmp.eq.s32.totalorder %v3843, 0
    %v3846 = vxor.u32 %v3840, 2147483648
    %v3847 = vsel %vm3845, %v3839, %v3846
    %vm3848 = vcmp.eq.s32.totalorder %v3843, 2
    %v3849 = vxor.u32 %v3839, 2147483648
    %v3850 = vsel %vm3848, %v3849, %v3840
    %v3851 = vsel %vm3844, %v3847, %v3850
    %v3852 = vsel %vm3841, nan, %v3851
    %v3853 = vand.u32 2147483647, %v3455
    %vm3854 = vcmp.le.f32.partialorder %v3853, 0.7853982
    %vm3855 = vcmp.lt.s32.totalorder %v3455, 0
    %v3856 = vand.u32 %v3455, 2139095040
    %v3857 = vshrl.u32 %v3856, 23
    %v3858 = vsub.s32 %v3857, 127
    %v3859 = vand.u32 2147483647, %v3455
    %v3860 = vand.u32 %v3859, 8388607
    %v3861 = vor.u32 %v3860, 8388608
    %v3862 = vsub.s32 0, %v3861
    %v3863 = vadd.s32 %v3858, 1
    %vm3864 = vcmp.gt.s32.totalorder %v3863, 0
    %v3865 = vsel %vm3864, %v3863, 0
    %v3866 = vshrl.u32 %v3865, 5
    %v3867 = vand.u32 %v3865, 31
    %v3868 = vsub.s32 32, %v3867
    %v3869 = vshrl.u32 683565275, %v3868
    %v3870 = vshll.u32 683565275, %v3867
    %v3871 = vshrl.u32 2475754826, %v3868
    %v3872 = vor.u32 %v3870, %v3871
    %v3873 = vshll.u32 2475754826, %v3867
    %v3874 = vshrl.u32 2131351028, %v3868
    %v3875 = vor.u32 %v3873, %v3874
    %v3876 = vshll.u32 2131351028, %v3867
    %v3877 = vshrl.u32 2102212464, %v3868
    %v3878 = vor.u32 %v3876, %v3877
    %v3879 = vshll.u32 2102212464, %v3867
    %v3880 = vshrl.u32 920167782, %v3868
    %v3881 = vor.u32 %v3879, %v3880
    %v3882 = vshll.u32 920167782, %v3867
    %v3883 = vshrl.u32 1326507024, %v3868
    %v3884 = vor.u32 %v3882, %v3883
    %vm3885 = vcmp.lt.s32.totalorder %v3866, 1
    %vm3886 = vcmp.lt.s32.totalorder %v3866, 2
    %vm3887 = vcmp.lt.s32.totalorder %v3866, 3
    %vm3888 = vcmp.lt.s32.totalorder %v3866, 4
    %v3889 = vsel %vm3885, %v3869, %v3872
    %v3890 = vsel %vm3888, %v3878, 2102212464
    %v3891 = vsel %vm3887, %v3875, %v3890
    %v3892 = vsel %vm3886, %v3889, %v3891
    %v3893 = vsel %vm3885, %v3872, %v3875
    %v3894 = vsel %vm3888, %v3881, 920167782
    %v3895 = vsel %vm3887, %v3878, %v3894
    %v3896 = vsel %vm3886, %v3893, %v3895
    %v3897 = vsel %vm3885, %v3875, %v3878
    %v3898 = vsel %vm3888, %v3884, 1326507024
    %v3899 = vsel %vm3887, %v3881, %v3898
    %v3900 = vsel %vm3886, %v3897, %v3899
    %v3901 = vshll.u32 %v3861, 8
    %v3902 = vmul.u32.u64.compose %v3901, %v3900
    %v3903 = vextract.low.u32 %v3902
    %v3904 = vextract.high.u32 %v3902
    %v3905 = vmul.u32.u64.compose %v3901, %v3896
    %v3906 = vextract.low.u32 %v3905
    %v3907 = vextract.high.u32 %v3905
    %v3908 = vmul.u32 %v3901, %v3892
    %v3909 = vadd.s32 %v3904, %v3906
    %vm3910 = vc.u32 %v3904, %v3906
    %v3911 = vadd.s32 %v3907, 1
    %v3912 = vsel %vm3910, %v3911, %v3907
    %v3913 = vadd.s32 %v3908, %v3912
    %v3914 = vadd.s32 %v3913, 536870912
    %v3915 = vshrl.u32 %v3914, 30
    %v3916 = vshll.u32 %v3915, 30
    %v3917 = vsub.s32 %v3913, %v3916
    %vm3918 = vcmp.lt.s32.totalorder %v3917, 0
    %v3919 = vsub.s32 0, %v3917
    %v3920 = vsel %vm3918, %v3919, %v3917
    %v3921 = vclz %v3920
    %v3922 = vsub.s32 %v3921, 2
    %vm3923 = vcmp.gt.s32.totalorder 0, %v3922
    %v3924 = vsel %vm3923, 0, %v3922
    %v3925 = vsub.s32 32, %v3924
    %v3926 = vshll.u32 %v3917, %v3924
    %v3927 = vshrl.u32 %v3909, %v3925
    %v3928 = vor.u32 %v3926, %v3927
    %v3929 = vsub.s32 4294967266, %v3924
    %v3930 = vadd.s32 %v3929, 127
    %v3931 = vshll.u32 %v3930, 23
    %v3932 = vor.u32 4788187, %v3931
    %v3933 = vand.u32 2147483647, %v3932
    %v3935 = vcvt.s32.f32 %v3928
    %v3936 = vmul.f32 %v3935, %v3933
    %v3937 = vxor.u32 %v3936, 2147483648
    %v3938 = vsel %vm3855, %v3937, %v3936
    %v3939 = vsub.s32 4, %v3915
    %v3940 = vsel %vm3855, %v3939, %v3915
    %v3941 = vsel %vm3854, %v3455, %v3938
    %v3942 = vsel %vm3854, 0, %v3940
    %v3943 = vcosq.f32.pop %v3941
    %v3944 = vsinq.f32.pop %v3941
    %vm3945 = vweird.f32 %v3455
    %v3946 = vadd.s32 %v3942, 3
    %v3947 = vand.u32 %v3946, 3
    %vm3948 = vcmp.lt.s32.totalorder %v3947, 2
    %vm3949 = vcmp.eq.s32.totalorder %v3947, 0
    %v3950 = vxor.u32 %v3944, 2147483648
    %v3951 = vsel %vm3949, %v3943, %v3950
    %vm3952 = vcmp.eq.s32.totalorder %v3947, 2
    %v3953 = vxor.u32 %v3943, 2147483648
    %v3954 = vsel %vm3952, %v3953, %v3944
    %v3955 = vsel %vm3948, %v3951, %v3954
    %v3956 = vsel %vm3945, nan, %v3955
    %v3957 = vand.u32 2147483647, %v3459
    %vm3958 = vcmp.le.f32.partialorder %v3957, 0.7853982
    %vm3959 = vcmp.lt.s32.totalorder %v3459, 0
    %v3960 = vand.u32 %v3459, 2139095040
    %v3961 = vshrl.u32 %v3960, 23
    %v3962 = vsub.s32 %v3961, 127
    %v3963 = vand.u32 2147483647, %v3459
    %v3964 = vand.u32 %v3963, 8388607
    %v3965 = vor.u32 %v3964, 8388608
    %v3966 = vsub.s32 0, %v3965
    %v3967 = vadd.s32 %v3962, 1
    %vm3968 = vcmp.gt.s32.totalorder %v3967, 0
    %v3969 = vsel %vm3968, %v3967, 0
    %v3970 = vshrl.u32 %v3969, 5
    %v3971 = vand.u32 %v3969, 31
    %v3972 = vsub.s32 32, %v3971
    %v3973 = vshrl.u32 683565275, %v3972
    %v3974 = vshll.u32 683565275, %v3971
    %v3975 = vshrl.u32 2475754826, %v3972
    %v3976 = vor.u32 %v3974, %v3975
    %v3977 = vshll.u32 2475754826, %v3971
    %v3978 = vshrl.u32 2131351028, %v3972
    %v3979 = vor.u32 %v3977, %v3978
    %v3980 = vshll.u32 2131351028, %v3971
    %v3981 = vshrl.u32 2102212464, %v3972
    %v3982 = vor.u32 %v3980, %v3981
    %v3983 = vshll.u32 2102212464, %v3971
    %v3984 = vshrl.u32 920167782, %v3972
    %v3985 = vor.u32 %v3983, %v3984
    %v3986 = vshll.u32 920167782, %v3971
    %v3987 = vshrl.u32 1326507024, %v3972
    %v3988 = vor.u32 %v3986, %v3987
    %vm3989 = vcmp.lt.s32.totalorder %v3970, 1
    %vm3990 = vcmp.lt.s32.totalorder %v3970, 2
    %vm3991 = vcmp.lt.s32.totalorder %v3970, 3
    %vm3992 = vcmp.lt.s32.totalorder %v3970, 4
    %v3993 = vsel %vm3989, %v3973, %v3976
    %v3994 = vsel %vm3992, %v3982, 2102212464
    %v3995 = vsel %vm3991, %v3979, %v3994
    %v3996 = vsel %vm3990, %v3993, %v3995
    %v3997 = vsel %vm3989, %v3976, %v3979
    %v3998 = vsel %vm3992, %v3985, 920167782
    %v3999 = vsel %vm3991, %v3982, %v3998
    %v4000 = vsel %vm3990, %v3997, %v3999
    %v4001 = vsel %vm3989, %v3979, %v3982
    %v4002 = vsel %vm3992, %v3988, 1326507024
    %v4003 = vsel %vm3991, %v3985, %v4002
    %v4004 = vsel %vm3990, %v4001, %v4003
    %v4005 = vshll.u32 %v3965, 8
    %v4006 = vmul.u32.u64.compose %v4005, %v4004
    %v4007 = vextract.low.u32 %v4006
    %v4008 = vextract.high.u32 %v4006
    %v4009 = vmul.u32.u64.compose %v4005, %v4000
    %v4010 = vextract.low.u32 %v4009
    %v4011 = vextract.high.u32 %v4009
    %v4012 = vmul.u32 %v4005, %v3996
    %v4013 = vadd.s32 %v4008, %v4010
    %vm4014 = vc.u32 %v4008, %v4010
    %v4015 = vadd.s32 %v4011, 1
    %v4016 = vsel %vm4014, %v4015, %v4011
    %v4017 = vadd.s32 %v4012, %v4016
    %v4018 = vadd.s32 %v4017, 536870912
    %v4019 = vshrl.u32 %v4018, 30
    %v4020 = vshll.u32 %v4019, 30
    %v4021 = vsub.s32 %v4017, %v4020
    %vm4022 = vcmp.lt.s32.totalorder %v4021, 0
    %v4023 = vsub.s32 0, %v4021
    %v4024 = vsel %vm4022, %v4023, %v4021
    %v4025 = vclz %v4024
    %v4026 = vsub.s32 %v4025, 2
    %vm4027 = vcmp.gt.s32.totalorder 0, %v4026
    %v4028 = vsel %vm4027, 0, %v4026
    %v4029 = vsub.s32 32, %v4028
    %v4030 = vshll.u32 %v4021, %v4028
    %v4031 = vshrl.u32 %v4013, %v4029
    %v4032 = vor.u32 %v4030, %v4031
    %v4033 = vsub.s32 4294967266, %v4028
    %v4034 = vadd.s32 %v4033, 127
    %v4035 = vshll.u32 %v4034, 23
    %v4036 = vor.u32 4788187, %v4035
    %v4037 = vand.u32 2147483647, %v4036
    %v4039 = vcvt.s32.f32 %v4032
    %v4040 = vmul.f32 %v4039, %v4037
    %v4041 = vxor.u32 %v4040, 2147483648
    %v4042 = vsel %vm3959, %v4041, %v4040
    %v4043 = vsub.s32 4, %v4019
    %v4044 = vsel %vm3959, %v4043, %v4019
    %v4045 = vsel %vm3958, %v3459, %v4042
    %v4046 = vsel %vm3958, 0, %v4044
    %v4047 = vcosq.f32.pop %v4045
    %v4048 = vsinq.f32.pop %v4045
    %vm4049 = vweird.f32 %v3459
    %v4050 = vadd.s32 %v4046, 3
    %v4051 = vand.u32 %v4050, 3
    %vm4052 = vcmp.lt.s32.totalorder %v4051, 2
    %vm4053 = vcmp.eq.s32.totalorder %v4051, 0
    %v4054 = vxor.u32 %v4048, 2147483648
    %v4055 = vsel %vm4053, %v4047, %v4054
    %vm4056 = vcmp.eq.s32.totalorder %v4051, 2
    %v4057 = vxor.u32 %v4047, 2147483648
    %v4058 = vsel %vm4056, %v4057, %v4048
    %v4059 = vsel %vm4052, %v4055, %v4058
    %v4060 = vsel %vm4049, nan, %v4059
    %v4061 = vand.u32 2147483647, %v3461
    %vm4062 = vcmp.le.f32.partialorder %v4061, 0.7853982
    %vm4063 = vcmp.lt.s32.totalorder %v3461, 0
    %v4064 = vand.u32 %v3461, 2139095040
    %v4065 = vshrl.u32 %v4064, 23
    %v4066 = vsub.s32 %v4065, 127
    %v4067 = vand.u32 2147483647, %v3461
    %v4068 = vand.u32 %v4067, 8388607
    %v4069 = vor.u32 %v4068, 8388608
    %v4070 = vsub.s32 0, %v4069
    %v4071 = vadd.s32 %v4066, 1
    %vm4072 = vcmp.gt.s32.totalorder %v4071, 0
    %v4073 = vsel %vm4072, %v4071, 0
    %v4074 = vshrl.u32 %v4073, 5
    %v4075 = vand.u32 %v4073, 31
    %v4076 = vsub.s32 32, %v4075
    %v4077 = vshrl.u32 683565275, %v4076
    %v4078 = vshll.u32 683565275, %v4075
    %v4079 = vshrl.u32 2475754826, %v4076
    %v4080 = vor.u32 %v4078, %v4079
    %v4081 = vshll.u32 2475754826, %v4075
    %v4082 = vshrl.u32 2131351028, %v4076
    %v4083 = vor.u32 %v4081, %v4082
    %v4084 = vshll.u32 2131351028, %v4075
    %v4085 = vshrl.u32 2102212464, %v4076
    %v4086 = vor.u32 %v4084, %v4085
    %v4087 = vshll.u32 2102212464, %v4075
    %v4088 = vshrl.u32 920167782, %v4076
    %v4089 = vor.u32 %v4087, %v4088
    %v4090 = vshll.u32 920167782, %v4075
    %v4091 = vshrl.u32 1326507024, %v4076
    %v4092 = vor.u32 %v4090, %v4091
    %vm4093 = vcmp.lt.s32.totalorder %v4074, 1
    %vm4094 = vcmp.lt.s32.totalorder %v4074, 2
    %vm4095 = vcmp.lt.s32.totalorder %v4074, 3
    %vm4096 = vcmp.lt.s32.totalorder %v4074, 4
    %v4097 = vsel %vm4093, %v4077, %v4080
    %v4098 = vsel %vm4096, %v4086, 2102212464
    %v4099 = vsel %vm4095, %v4083, %v4098
    %v4100 = vsel %vm4094, %v4097, %v4099
    %v4101 = vsel %vm4093, %v4080, %v4083
    %v4102 = vsel %vm4096, %v4089, 920167782
    %v4103 = vsel %vm4095, %v4086, %v4102
    %v4104 = vsel %vm4094, %v4101, %v4103
    %v4105 = vsel %vm4093, %v4083, %v4086
    %v4106 = vsel %vm4096, %v4092, 1326507024
    %v4107 = vsel %vm4095, %v4089, %v4106
    %v4108 = vsel %vm4094, %v4105, %v4107
    %v4109 = vshll.u32 %v4069, 8
    %v4110 = vmul.u32.u64.compose %v4109, %v4108
    %v4111 = vextract.low.u32 %v4110
    %v4112 = vextract.high.u32 %v4110
    %v4113 = vmul.u32.u64.compose %v4109, %v4104
    %v4114 = vextract.low.u32 %v4113
    %v4115 = vextract.high.u32 %v4113
    %v4116 = vmul.u32 %v4109, %v4100
    %v4117 = vadd.s32 %v4112, %v4114
    %vm4118 = vc.u32 %v4112, %v4114
    %v4119 = vadd.s32 %v4115, 1
    %v4120 = vsel %vm4118, %v4119, %v4115
    %v4121 = vadd.s32 %v4116, %v4120
    %v4122 = vadd.s32 %v4121, 536870912
    %v4123 = vshrl.u32 %v4122, 30
    %v4124 = vshll.u32 %v4123, 30
    %v4125 = vsub.s32 %v4121, %v4124
    %vm4126 = vcmp.lt.s32.totalorder %v4125, 0
    %v4127 = vsub.s32 0, %v4125
    %v4128 = vsel %vm4126, %v4127, %v4125
    %v4129 = vclz %v4128
    %v4130 = vsub.s32 %v4129, 2
    %vm4131 = vcmp.gt.s32.totalorder 0, %v4130
    %v4132 = vsel %vm4131, 0, %v4130
    %v4133 = vsub.s32 32, %v4132
    %v4134 = vshll.u32 %v4125, %v4132
    %v4135 = vshrl.u32 %v4117, %v4133
    %v4136 = vor.u32 %v4134, %v4135
    %v4137 = vsub.s32 4294967266, %v4132
    %v4138 = vadd.s32 %v4137, 127
    %v4139 = vshll.u32 %v4138, 23
    %v4140 = vor.u32 4788187, %v4139
    %v4141 = vand.u32 2147483647, %v4140
    %v4143 = vcvt.s32.f32 %v4136
    %v4144 = vmul.f32 %v4143, %v4141
    %v4145 = vxor.u32 %v4144, 2147483648
    %v4146 = vsel %vm4063, %v4145, %v4144
    %v4147 = vsub.s32 4, %v4123
    %v4148 = vsel %vm4063, %v4147, %v4123
    %v4149 = vsel %vm4062, %v3461, %v4146
    %v4150 = vsel %vm4062, 0, %v4148
    %v4151 = vcosq.f32.pop %v4149
    %v4152 = vsinq.f32.pop %v4149
    %vm4153 = vweird.f32 %v3461
    %v4154 = vadd.s32 %v4150, 3
    %v4155 = vand.u32 %v4154, 3
    %vm4156 = vcmp.lt.s32.totalorder %v4155, 2
    %vm4157 = vcmp.eq.s32.totalorder %v4155, 0
    %v4158 = vxor.u32 %v4152, 2147483648
    %v4159 = vsel %vm4157, %v4151, %v4158
    %vm4160 = vcmp.eq.s32.totalorder %v4155, 2
    %v4161 = vxor.u32 %v4151, 2147483648
    %v4162 = vsel %vm4160, %v4161, %v4152
    %v4163 = vsel %vm4156, %v4159, %v4162
    %v4164 = vsel %vm4153, nan, %v4163
    %v4165 = vand.u32 2147483647, %v3465
    %vm4166 = vcmp.le.f32.partialorder %v4165, 0.7853982
    %vm4167 = vcmp.lt.s32.totalorder %v3465, 0
    %v4168 = vand.u32 %v3465, 2139095040
    %v4169 = vshrl.u32 %v4168, 23
    %v4170 = vsub.s32 %v4169, 127
    %v4171 = vand.u32 2147483647, %v3465
    %v4172 = vand.u32 %v4171, 8388607
    %v4173 = vor.u32 %v4172, 8388608
    %v4174 = vsub.s32 0, %v4173
    %v4175 = vadd.s32 %v4170, 1
    %vm4176 = vcmp.gt.s32.totalorder %v4175, 0
    %v4177 = vsel %vm4176, %v4175, 0
    %v4178 = vshrl.u32 %v4177, 5
    %v4179 = vand.u32 %v4177, 31
    %v4180 = vsub.s32 32, %v4179
    %v4181 = vshrl.u32 683565275, %v4180
    %v4182 = vshll.u32 683565275, %v4179
    %v4183 = vshrl.u32 2475754826, %v4180
    %v4184 = vor.u32 %v4182, %v4183
    %v4185 = vshll.u32 2475754826, %v4179
    %v4186 = vshrl.u32 2131351028, %v4180
    %v4187 = vor.u32 %v4185, %v4186
    %v4188 = vshll.u32 2131351028, %v4179
    %v4189 = vshrl.u32 2102212464, %v4180
    %v4190 = vor.u32 %v4188, %v4189
    %v4191 = vshll.u32 2102212464, %v4179
    %v4192 = vshrl.u32 920167782, %v4180
    %v4193 = vor.u32 %v4191, %v4192
    %v4194 = vshll.u32 920167782, %v4179
    %v4195 = vshrl.u32 1326507024, %v4180
    %v4196 = vor.u32 %v4194, %v4195
    %vm4197 = vcmp.lt.s32.totalorder %v4178, 1
    %vm4198 = vcmp.lt.s32.totalorder %v4178, 2
    %vm4199 = vcmp.lt.s32.totalorder %v4178, 3
    %vm4200 = vcmp.lt.s32.totalorder %v4178, 4
    %v4201 = vsel %vm4197, %v4181, %v4184
    %v4202 = vsel %vm4200, %v4190, 2102212464
    %v4203 = vsel %vm4199, %v4187, %v4202
    %v4204 = vsel %vm4198, %v4201, %v4203
    %v4205 = vsel %vm4197, %v4184, %v4187
    %v4206 = vsel %vm4200, %v4193, 920167782
    %v4207 = vsel %vm4199, %v4190, %v4206
    %v4208 = vsel %vm4198, %v4205, %v4207
    %v4209 = vsel %vm4197, %v4187, %v4190
    %v4210 = vsel %vm4200, %v4196, 1326507024
    %v4211 = vsel %vm4199, %v4193, %v4210
    %v4212 = vsel %vm4198, %v4209, %v4211
    %v4213 = vshll.u32 %v4173, 8
    %v4214 = vmul.u32.u64.compose %v4213, %v4212
    %v4215 = vextract.low.u32 %v4214
    %v4216 = vextract.high.u32 %v4214
    %v4217 = vmul.u32.u64.compose %v4213, %v4208
    %v4218 = vextract.low.u32 %v4217
    %v4219 = vextract.high.u32 %v4217
    %v4220 = vmul.u32 %v4213, %v4204
    %v4221 = vadd.s32 %v4216, %v4218
    %vm4222 = vc.u32 %v4216, %v4218
    %v4223 = vadd.s32 %v4219, 1
    %v4224 = vsel %vm4222, %v4223, %v4219
    %v4225 = vadd.s32 %v4220, %v4224
    %v4226 = vadd.s32 %v4225, 536870912
    %v4227 = vshrl.u32 %v4226, 30
    %v4228 = vshll.u32 %v4227, 30
    %v4229 = vsub.s32 %v4225, %v4228
    %vm4230 = vcmp.lt.s32.totalorder %v4229, 0
    %v4231 = vsub.s32 0, %v4229
    %v4232 = vsel %vm4230, %v4231, %v4229
    %v4233 = vclz %v4232
    %v4234 = vsub.s32 %v4233, 2
    %vm4235 = vcmp.gt.s32.totalorder 0, %v4234
    %v4236 = vsel %vm4235, 0, %v4234
    %v4237 = vsub.s32 32, %v4236
    %v4238 = vshll.u32 %v4229, %v4236
    %v4239 = vshrl.u32 %v4221, %v4237
    %v4240 = vor.u32 %v4238, %v4239
    %v4241 = vsub.s32 4294967266, %v4236
    %v4242 = vadd.s32 %v4241, 127
    %v4243 = vshll.u32 %v4242, 23
    %v4244 = vor.u32 4788187, %v4243
    %v4245 = vand.u32 2147483647, %v4244
    %v4247 = vcvt.s32.f32 %v4240
    %v4248 = vmul.f32 %v4247, %v4245
    %v4249 = vxor.u32 %v4248, 2147483648
    %v4250 = vsel %vm4167, %v4249, %v4248
    %v4251 = vsub.s32 4, %v4227
    %v4252 = vsel %vm4167, %v4251, %v4227
    %v4253 = vsel %vm4166, %v3465, %v4250
    %v4254 = vsel %vm4166, 0, %v4252
    %v4255 = vcosq.f32.pop %v4253
    %v4256 = vsinq.f32.pop %v4253
    %vm4257 = vweird.f32 %v3465
    %v4258 = vadd.s32 %v4254, 3
    %v4259 = vand.u32 %v4258, 3
    %vm4260 = vcmp.lt.s32.totalorder %v4259, 2
    %vm4261 = vcmp.eq.s32.totalorder %v4259, 0
    %v4262 = vxor.u32 %v4256, 2147483648
    %v4263 = vsel %vm4261, %v4255, %v4262
    %vm4264 = vcmp.eq.s32.totalorder %v4259, 2
    %v4265 = vxor.u32 %v4255, 2147483648
    %v4266 = vsel %vm4264, %v4265, %v4256
    %v4267 = vsel %vm4260, %v4263, %v4266
    %v4268 = vsel %vm4257, nan, %v4267
    %v4269 = vand.u32 2147483647, %v3467
    %vm4270 = vcmp.le.f32.partialorder %v4269, 0.7853982
    %vm4271 = vcmp.lt.s32.totalorder %v3467, 0
    %v4272 = vand.u32 %v3467, 2139095040
    %v4273 = vshrl.u32 %v4272, 23
    %v4274 = vsub.s32 %v4273, 127
    %v4275 = vand.u32 2147483647, %v3467
    %v4276 = vand.u32 %v4275, 8388607
    %v4277 = vor.u32 %v4276, 8388608
    %v4278 = vsub.s32 0, %v4277
    %v4279 = vadd.s32 %v4274, 1
    %vm4280 = vcmp.gt.s32.totalorder %v4279, 0
    %v4281 = vsel %vm4280, %v4279, 0
    %v4282 = vshrl.u32 %v4281, 5
    %v4283 = vand.u32 %v4281, 31
    %v4284 = vsub.s32 32, %v4283
    %v4285 = vshrl.u32 683565275, %v4284
    %v4286 = vshll.u32 683565275, %v4283
    %v4287 = vshrl.u32 2475754826, %v4284
    %v4288 = vor.u32 %v4286, %v4287
    %v4289 = vshll.u32 2475754826, %v4283
    %v4290 = vshrl.u32 2131351028, %v4284
    %v4291 = vor.u32 %v4289, %v4290
    %v4292 = vshll.u32 2131351028, %v4283
    %v4293 = vshrl.u32 2102212464, %v4284
    %v4294 = vor.u32 %v4292, %v4293
    %v4295 = vshll.u32 2102212464, %v4283
    %v4296 = vshrl.u32 920167782, %v4284
    %v4297 = vor.u32 %v4295, %v4296
    %v4298 = vshll.u32 920167782, %v4283
    %v4299 = vshrl.u32 1326507024, %v4284
    %v4300 = vor.u32 %v4298, %v4299
    %vm4301 = vcmp.lt.s32.totalorder %v4282, 1
    %vm4302 = vcmp.lt.s32.totalorder %v4282, 2
    %vm4303 = vcmp.lt.s32.totalorder %v4282, 3
    %vm4304 = vcmp.lt.s32.totalorder %v4282, 4
    %v4305 = vsel %vm4301, %v4285, %v4288
    %v4306 = vsel %vm4304, %v4294, 2102212464
    %v4307 = vsel %vm4303, %v4291, %v4306
    %v4308 = vsel %vm4302, %v4305, %v4307
    %v4309 = vsel %vm4301, %v4288, %v4291
    %v4310 = vsel %vm4304, %v4297, 920167782
    %v4311 = vsel %vm4303, %v4294, %v4310
    %v4312 = vsel %vm4302, %v4309, %v4311
    %v4313 = vsel %vm4301, %v4291, %v4294
    %v4314 = vsel %vm4304, %v4300, 1326507024
    %v4315 = vsel %vm4303, %v4297, %v4314
    %v4316 = vsel %vm4302, %v4313, %v4315
    %v4317 = vshll.u32 %v4277, 8
    %v4318 = vmul.u32.u64.compose %v4317, %v4316
    %v4319 = vextract.low.u32 %v4318
    %v4320 = vextract.high.u32 %v4318
    %v4321 = vmul.u32.u64.compose %v4317, %v4312
    %v4322 = vextract.low.u32 %v4321
    %v4323 = vextract.high.u32 %v4321
    %v4324 = vmul.u32 %v4317, %v4308
    %v4325 = vadd.s32 %v4320, %v4322
    %vm4326 = vc.u32 %v4320, %v4322
    %v4327 = vadd.s32 %v4323, 1
    %v4328 = vsel %vm4326, %v4327, %v4323
    %v4329 = vadd.s32 %v4324, %v4328
    %v4330 = vadd.s32 %v4329, 536870912
    %v4331 = vshrl.u32 %v4330, 30
    %v4332 = vshll.u32 %v4331, 30
    %v4333 = vsub.s32 %v4329, %v4332
    %vm4334 = vcmp.lt.s32.totalorder %v4333, 0
    %v4335 = vsub.s32 0, %v4333
    %v4336 = vsel %vm4334, %v4335, %v4333
    %v4337 = vclz %v4336
    %v4338 = vsub.s32 %v4337, 2
    %vm4339 = vcmp.gt.s32.totalorder 0, %v4338
    %v4340 = vsel %vm4339, 0, %v4338
    %v4341 = vsub.s32 32, %v4340
    %v4342 = vshll.u32 %v4333, %v4340
    %v4343 = vshrl.u32 %v4325, %v4341
    %v4344 = vor.u32 %v4342, %v4343
    %v4345 = vsub.s32 4294967266, %v4340
    %v4346 = vadd.s32 %v4345, 127
    %v4347 = vshll.u32 %v4346, 23
    %v4348 = vor.u32 4788187, %v4347
    %v4349 = vand.u32 2147483647, %v4348
    %v4351 = vcvt.s32.f32 %v4344
    %v4352 = vmul.f32 %v4351, %v4349
    %v4353 = vxor.u32 %v4352, 2147483648
    %v4354 = vsel %vm4271, %v4353, %v4352
    %v4355 = vsub.s32 4, %v4331
    %v4356 = vsel %vm4271, %v4355, %v4331
    %v4357 = vsel %vm4270, %v3467, %v4354
    %v4358 = vsel %vm4270, 0, %v4356
    %v4359 = vcosq.f32.pop %v4357
    %v4360 = vsinq.f32.pop %v4357
    %vm4361 = vweird.f32 %v3467
    %v4362 = vadd.s32 %v4358, 3
    %v4363 = vand.u32 %v4362, 3
    %vm4364 = vcmp.lt.s32.totalorder %v4363, 2
    %vm4365 = vcmp.eq.s32.totalorder %v4363, 0
    %v4366 = vxor.u32 %v4360, 2147483648
    %v4367 = vsel %vm4365, %v4359, %v4366
    %vm4368 = vcmp.eq.s32.totalorder %v4363, 2
    %v4369 = vxor.u32 %v4359, 2147483648
    %v4370 = vsel %vm4368, %v4369, %v4360
    %v4371 = vsel %vm4364, %v4367, %v4370
    %v4372 = vsel %vm4361, nan, %v4371
    %v4373 = vand.u32 2147483647, %v3471
    %vm4374 = vcmp.le.f32.partialorder %v4373, 0.7853982
    %vm4375 = vcmp.lt.s32.totalorder %v3471, 0
    %v4376 = vand.u32 %v3471, 2139095040
    %v4377 = vshrl.u32 %v4376, 23
    %v4378 = vsub.s32 %v4377, 127
    %v4379 = vand.u32 2147483647, %v3471
    %v4380 = vand.u32 %v4379, 8388607
    %v4381 = vor.u32 %v4380, 8388608
    %v4382 = vsub.s32 0, %v4381
    %v4383 = vadd.s32 %v4378, 1
    %vm4384 = vcmp.gt.s32.totalorder %v4383, 0
    %v4385 = vsel %vm4384, %v4383, 0
    %v4386 = vshrl.u32 %v4385, 5
    %v4387 = vand.u32 %v4385, 31
    %v4388 = vsub.s32 32, %v4387
    %v4389 = vshrl.u32 683565275, %v4388
    %v4390 = vshll.u32 683565275, %v4387
    %v4391 = vshrl.u32 2475754826, %v4388
    %v4392 = vor.u32 %v4390, %v4391
    %v4393 = vshll.u32 2475754826, %v4387
    %v4394 = vshrl.u32 2131351028, %v4388
    %v4395 = vor.u32 %v4393, %v4394
    %v4396 = vshll.u32 2131351028, %v4387
    %v4397 = vshrl.u32 2102212464, %v4388
    %v4398 = vor.u32 %v4396, %v4397
    %v4399 = vshll.u32 2102212464, %v4387
    %v4400 = vshrl.u32 920167782, %v4388
    %v4401 = vor.u32 %v4399, %v4400
    %v4402 = vshll.u32 920167782, %v4387
    %v4403 = vshrl.u32 1326507024, %v4388
    %v4404 = vor.u32 %v4402, %v4403
    %vm4405 = vcmp.lt.s32.totalorder %v4386, 1
    %vm4406 = vcmp.lt.s32.totalorder %v4386, 2
    %vm4407 = vcmp.lt.s32.totalorder %v4386, 3
    %vm4408 = vcmp.lt.s32.totalorder %v4386, 4
    %v4409 = vsel %vm4405, %v4389, %v4392
    %v4410 = vsel %vm4408, %v4398, 2102212464
    %v4411 = vsel %vm4407, %v4395, %v4410
    %v4412 = vsel %vm4406, %v4409, %v4411
    %v4413 = vsel %vm4405, %v4392, %v4395
    %v4414 = vsel %vm4408, %v4401, 920167782
    %v4415 = vsel %vm4407, %v4398, %v4414
    %v4416 = vsel %vm4406, %v4413, %v4415
    %v4417 = vsel %vm4405, %v4395, %v4398
    %v4418 = vsel %vm4408, %v4404, 1326507024
    %v4419 = vsel %vm4407, %v4401, %v4418
    %v4420 = vsel %vm4406, %v4417, %v4419
    %v4421 = vshll.u32 %v4381, 8
    %v4422 = vmul.u32.u64.compose %v4421, %v4420
    %v4423 = vextract.low.u32 %v4422
    %v4424 = vextract.high.u32 %v4422
    %v4425 = vmul.u32.u64.compose %v4421, %v4416
    %v4426 = vextract.low.u32 %v4425
    %v4427 = vextract.high.u32 %v4425
    %v4428 = vmul.u32 %v4421, %v4412
    %v4429 = vadd.s32 %v4424, %v4426
    %vm4430 = vc.u32 %v4424, %v4426
    %v4431 = vadd.s32 %v4427, 1
    %v4432 = vsel %vm4430, %v4431, %v4427
    %v4433 = vadd.s32 %v4428, %v4432
    %v4434 = vadd.s32 %v4433, 536870912
    %v4435 = vshrl.u32 %v4434, 30
    %v4436 = vshll.u32 %v4435, 30
    %v4437 = vsub.s32 %v4433, %v4436
    %vm4438 = vcmp.lt.s32.totalorder %v4437, 0
    %v4439 = vsub.s32 0, %v4437
    %v4440 = vsel %vm4438, %v4439, %v4437
    %v4441 = vclz %v4440
    %v4442 = vsub.s32 %v4441, 2
    %vm4443 = vcmp.gt.s32.totalorder 0, %v4442
    %v4444 = vsel %vm4443, 0, %v4442
    %v4445 = vsub.s32 32, %v4444
    %v4446 = vshll.u32 %v4437, %v4444
    %v4447 = vshrl.u32 %v4429, %v4445
    %v4448 = vor.u32 %v4446, %v4447
    %v4449 = vsub.s32 4294967266, %v4444
    %v4450 = vadd.s32 %v4449, 127
    %v4451 = vshll.u32 %v4450, 23
    %v4452 = vor.u32 4788187, %v4451
    %v4453 = vand.u32 2147483647, %v4452
    %v4455 = vcvt.s32.f32 %v4448
    %v4456 = vmul.f32 %v4455, %v4453
    %v4457 = vxor.u32 %v4456, 2147483648
    %v4458 = vsel %vm4375, %v4457, %v4456
    %v4459 = vsub.s32 4, %v4435
    %v4460 = vsel %vm4375, %v4459, %v4435
    %v4461 = vsel %vm4374, %v3471, %v4458
    %v4462 = vsel %vm4374, 0, %v4460
    %v4463 = vcosq.f32.pop %v4461
    %v4464 = vsinq.f32.pop %v4461
    %vm4465 = vweird.f32 %v3471
    %v4466 = vadd.s32 %v4462, 3
    %v4467 = vand.u32 %v4466, 3
    %vm4468 = vcmp.lt.s32.totalorder %v4467, 2
    %vm4469 = vcmp.eq.s32.totalorder %v4467, 0
    %v4470 = vxor.u32 %v4464, 2147483648
    %v4471 = vsel %vm4469, %v4463, %v4470
    %vm4472 = vcmp.eq.s32.totalorder %v4467, 2
    %v4473 = vxor.u32 %v4463, 2147483648
    %v4474 = vsel %vm4472, %v4473, %v4464
    %v4475 = vsel %vm4468, %v4471, %v4474
    %v4476 = vsel %vm4465, nan, %v4475
    %v4477 = vand.u32 2147483647, %v3473
    %vm4478 = vcmp.le.f32.partialorder %v4477, 0.7853982
    %vm4479 = vcmp.lt.s32.totalorder %v3473, 0
    %v4480 = vand.u32 %v3473, 2139095040
    %v4481 = vshrl.u32 %v4480, 23
    %v4482 = vsub.s32 %v4481, 127
    %v4483 = vand.u32 2147483647, %v3473
    %v4484 = vand.u32 %v4483, 8388607
    %v4485 = vor.u32 %v4484, 8388608
    %v4486 = vsub.s32 0, %v4485
    %v4487 = vadd.s32 %v4482, 1
    %vm4488 = vcmp.gt.s32.totalorder %v4487, 0
    %v4489 = vsel %vm4488, %v4487, 0
    %v4490 = vshrl.u32 %v4489, 5
    %v4491 = vand.u32 %v4489, 31
    %v4492 = vsub.s32 32, %v4491
    %v4493 = vshrl.u32 683565275, %v4492
    %v4494 = vshll.u32 683565275, %v4491
    %v4495 = vshrl.u32 2475754826, %v4492
    %v4496 = vor.u32 %v4494, %v4495
    %v4497 = vshll.u32 2475754826, %v4491
    %v4498 = vshrl.u32 2131351028, %v4492
    %v4499 = vor.u32 %v4497, %v4498
    %v4500 = vshll.u32 2131351028, %v4491
    %v4501 = vshrl.u32 2102212464, %v4492
    %v4502 = vor.u32 %v4500, %v4501
    %v4503 = vshll.u32 2102212464, %v4491
    %v4504 = vshrl.u32 920167782, %v4492
    %v4505 = vor.u32 %v4503, %v4504
    %v4506 = vshll.u32 920167782, %v4491
    %v4507 = vshrl.u32 1326507024, %v4492
    %v4508 = vor.u32 %v4506, %v4507
    %vm4509 = vcmp.lt.s32.totalorder %v4490, 1
    %vm4510 = vcmp.lt.s32.totalorder %v4490, 2
    %vm4511 = vcmp.lt.s32.totalorder %v4490, 3
    %vm4512 = vcmp.lt.s32.totalorder %v4490, 4
    %v4513 = vsel %vm4509, %v4493, %v4496
    %v4514 = vsel %vm4512, %v4502, 2102212464
    %v4515 = vsel %vm4511, %v4499, %v4514
    %v4516 = vsel %vm4510, %v4513, %v4515
    %v4517 = vsel %vm4509, %v4496, %v4499
    %v4518 = vsel %vm4512, %v4505, 920167782
    %v4519 = vsel %vm4511, %v4502, %v4518
    %v4520 = vsel %vm4510, %v4517, %v4519
    %v4521 = vsel %vm4509, %v4499, %v4502
    %v4522 = vsel %vm4512, %v4508, 1326507024
    %v4523 = vsel %vm4511, %v4505, %v4522
    %v4524 = vsel %vm4510, %v4521, %v4523
    %v4525 = vshll.u32 %v4485, 8
    %v4526 = vmul.u32.u64.compose %v4525, %v4524
    %v4527 = vextract.low.u32 %v4526
    %v4528 = vextract.high.u32 %v4526
    %v4529 = vmul.u32.u64.compose %v4525, %v4520
    %v4530 = vextract.low.u32 %v4529
    %v4531 = vextract.high.u32 %v4529
    %v4532 = vmul.u32 %v4525, %v4516
    %v4533 = vadd.s32 %v4528, %v4530
    %vm4534 = vc.u32 %v4528, %v4530
    %v4535 = vadd.s32 %v4531, 1
    %v4536 = vsel %vm4534, %v4535, %v4531
    %v4537 = vadd.s32 %v4532, %v4536
    %v4538 = vadd.s32 %v4537, 536870912
    %v4539 = vshrl.u32 %v4538, 30
    %v4540 = vshll.u32 %v4539, 30
    %v4541 = vsub.s32 %v4537, %v4540
    %vm4542 = vcmp.lt.s32.totalorder %v4541, 0
    %v4543 = vsub.s32 0, %v4541
    %v4544 = vsel %vm4542, %v4543, %v4541
    %v4545 = vclz %v4544
    %v4546 = vsub.s32 %v4545, 2
    %vm4547 = vcmp.gt.s32.totalorder 0, %v4546
    %v4548 = vsel %vm4547, 0, %v4546
    %v4549 = vsub.s32 32, %v4548
    %v4550 = vshll.u32 %v4541, %v4548
    %v4551 = vshrl.u32 %v4533, %v4549
    %v4552 = vor.u32 %v4550, %v4551
    %v4553 = vsub.s32 4294967266, %v4548
    %v4554 = vadd.s32 %v4553, 127
    %v4555 = vshll.u32 %v4554, 23
    %v4556 = vor.u32 4788187, %v4555
    %v4557 = vand.u32 2147483647, %v4556
    %v4559 = vcvt.s32.f32 %v4552
    %v4560 = vmul.f32 %v4559, %v4557
    %v4561 = vxor.u32 %v4560, 2147483648
    %v4562 = vsel %vm4479, %v4561, %v4560
    %v4563 = vsub.s32 4, %v4539
    %v4564 = vsel %vm4479, %v4563, %v4539
    %v4565 = vsel %vm4478, %v3473, %v4562
    %v4566 = vsel %vm4478, 0, %v4564
    %v4567 = vcosq.f32.pop %v4565
    %v4568 = vsinq.f32.pop %v4565
    %vm4569 = vweird.f32 %v3473
    %v4570 = vadd.s32 %v4566, 3
    %v4571 = vand.u32 %v4570, 3
    %vm4572 = vcmp.lt.s32.totalorder %v4571, 2
    %vm4573 = vcmp.eq.s32.totalorder %v4571, 0
    %v4574 = vxor.u32 %v4568, 2147483648
    %v4575 = vsel %vm4573, %v4567, %v4574
    %vm4576 = vcmp.eq.s32.totalorder %v4571, 2
    %v4577 = vxor.u32 %v4567, 2147483648
    %v4578 = vsel %vm4576, %v4577, %v4568
    %v4579 = vsel %vm4572, %v4575, %v4578
    %v4580 = vsel %vm4569, nan, %v4579
    %v4581 = vand.u32 2147483647, %v3477
    %vm4582 = vcmp.le.f32.partialorder %v4581, 0.7853982
    %vm4583 = vcmp.lt.s32.totalorder %v3477, 0
    %v4584 = vand.u32 %v3477, 2139095040
    %v4585 = vshrl.u32 %v4584, 23
    %v4586 = vsub.s32 %v4585, 127
    %v4587 = vand.u32 2147483647, %v3477
    %v4588 = vand.u32 %v4587, 8388607
    %v4589 = vor.u32 %v4588, 8388608
    %v4590 = vsub.s32 0, %v4589
    %v4591 = vadd.s32 %v4586, 1
    %vm4592 = vcmp.gt.s32.totalorder %v4591, 0
    %v4593 = vsel %vm4592, %v4591, 0
    %v4594 = vshrl.u32 %v4593, 5
    %v4595 = vand.u32 %v4593, 31
    %v4596 = vsub.s32 32, %v4595
    %v4597 = vshrl.u32 683565275, %v4596
    %v4598 = vshll.u32 683565275, %v4595
    %v4599 = vshrl.u32 2475754826, %v4596
    %v4600 = vor.u32 %v4598, %v4599
    %v4601 = vshll.u32 2475754826, %v4595
    %v4602 = vshrl.u32 2131351028, %v4596
    %v4603 = vor.u32 %v4601, %v4602
    %v4604 = vshll.u32 2131351028, %v4595
    %v4605 = vshrl.u32 2102212464, %v4596
    %v4606 = vor.u32 %v4604, %v4605
    %v4607 = vshll.u32 2102212464, %v4595
    %v4608 = vshrl.u32 920167782, %v4596
    %v4609 = vor.u32 %v4607, %v4608
    %v4610 = vshll.u32 920167782, %v4595
    %v4611 = vshrl.u32 1326507024, %v4596
    %v4612 = vor.u32 %v4610, %v4611
    %vm4613 = vcmp.lt.s32.totalorder %v4594, 1
    %vm4614 = vcmp.lt.s32.totalorder %v4594, 2
    %vm4615 = vcmp.lt.s32.totalorder %v4594, 3
    %vm4616 = vcmp.lt.s32.totalorder %v4594, 4
    %v4617 = vsel %vm4613, %v4597, %v4600
    %v4618 = vsel %vm4616, %v4606, 2102212464
    %v4619 = vsel %vm4615, %v4603, %v4618
    %v4620 = vsel %vm4614, %v4617, %v4619
    %v4621 = vsel %vm4613, %v4600, %v4603
    %v4622 = vsel %vm4616, %v4609, 920167782
    %v4623 = vsel %vm4615, %v4606, %v4622
    %v4624 = vsel %vm4614, %v4621, %v4623
    %v4625 = vsel %vm4613, %v4603, %v4606
    %v4626 = vsel %vm4616, %v4612, 1326507024
    %v4627 = vsel %vm4615, %v4609, %v4626
    %v4628 = vsel %vm4614, %v4625, %v4627
    %v4629 = vshll.u32 %v4589, 8
    %v4630 = vmul.u32.u64.compose %v4629, %v4628
    %v4631 = vextract.low.u32 %v4630
    %v4632 = vextract.high.u32 %v4630
    %v4633 = vmul.u32.u64.compose %v4629, %v4624
    %v4634 = vextract.low.u32 %v4633
    %v4635 = vextract.high.u32 %v4633
    %v4636 = vmul.u32 %v4629, %v4620
    %v4637 = vadd.s32 %v4632, %v4634
    %vm4638 = vc.u32 %v4632, %v4634
    %v4639 = vadd.s32 %v4635, 1
    %v4640 = vsel %vm4638, %v4639, %v4635
    %v4641 = vadd.s32 %v4636, %v4640
    %v4642 = vadd.s32 %v4641, 536870912
    %v4643 = vshrl.u32 %v4642, 30
    %v4644 = vshll.u32 %v4643, 30
    %v4645 = vsub.s32 %v4641, %v4644
    %vm4646 = vcmp.lt.s32.totalorder %v4645, 0
    %v4647 = vsub.s32 0, %v4645
    %v4648 = vsel %vm4646, %v4647, %v4645
    %v4649 = vclz %v4648
    %v4650 = vsub.s32 %v4649, 2
    %vm4651 = vcmp.gt.s32.totalorder 0, %v4650
    %v4652 = vsel %vm4651, 0, %v4650
    %v4653 = vsub.s32 32, %v4652
    %v4654 = vshll.u32 %v4645, %v4652
    %v4655 = vshrl.u32 %v4637, %v4653
    %v4656 = vor.u32 %v4654, %v4655
    %v4657 = vsub.s32 4294967266, %v4652
    %v4658 = vadd.s32 %v4657, 127
    %v4659 = vshll.u32 %v4658, 23
    %v4660 = vor.u32 4788187, %v4659
    %v4661 = vand.u32 2147483647, %v4660
    %v4663 = vcvt.s32.f32 %v4656
    %v4664 = vmul.f32 %v4663, %v4661
    %v4665 = vxor.u32 %v4664, 2147483648
    %v4666 = vsel %vm4583, %v4665, %v4664
    %v4667 = vsub.s32 4, %v4643
    %v4668 = vsel %vm4583, %v4667, %v4643
    %v4669 = vsel %vm4582, %v3477, %v4666
    %v4670 = vsel %vm4582, 0, %v4668
    %v4671 = vcosq.f32.pop %v4669
    %v4672 = vsinq.f32.pop %v4669
    %vm4673 = vweird.f32 %v3477
    %v4674 = vadd.s32 %v4670, 3
    %v4675 = vand.u32 %v4674, 3
    %vm4676 = vcmp.lt.s32.totalorder %v4675, 2
    %vm4677 = vcmp.eq.s32.totalorder %v4675, 0
    %v4678 = vxor.u32 %v4672, 2147483648
    %v4679 = vsel %vm4677, %v4671, %v4678
    %vm4680 = vcmp.eq.s32.totalorder %v4675, 2
    %v4681 = vxor.u32 %v4671, 2147483648
    %v4682 = vsel %vm4680, %v4681, %v4672
    %v4683 = vsel %vm4676, %v4679, %v4682
    %v4684 = vsel %vm4673, nan, %v4683
    %v4685 = vand.u32 2147483647, %v3479
    %vm4686 = vcmp.le.f32.partialorder %v4685, 0.7853982
    %vm4687 = vcmp.lt.s32.totalorder %v3479, 0
    %v4688 = vand.u32 %v3479, 2139095040
    %v4689 = vshrl.u32 %v4688, 23
    %v4690 = vsub.s32 %v4689, 127
    %v4691 = vand.u32 2147483647, %v3479
    %v4692 = vand.u32 %v4691, 8388607
    %v4693 = vor.u32 %v4692, 8388608
    %v4694 = vsub.s32 0, %v4693
    %v4695 = vadd.s32 %v4690, 1
    %vm4696 = vcmp.gt.s32.totalorder %v4695, 0
    %v4697 = vsel %vm4696, %v4695, 0
    %v4698 = vshrl.u32 %v4697, 5
    %v4699 = vand.u32 %v4697, 31
    %v4700 = vsub.s32 32, %v4699
    %v4701 = vshrl.u32 683565275, %v4700
    %v4702 = vshll.u32 683565275, %v4699
    %v4703 = vshrl.u32 2475754826, %v4700
    %v4704 = vor.u32 %v4702, %v4703
    %v4705 = vshll.u32 2475754826, %v4699
    %v4706 = vshrl.u32 2131351028, %v4700
    %v4707 = vor.u32 %v4705, %v4706
    %v4708 = vshll.u32 2131351028, %v4699
    %v4709 = vshrl.u32 2102212464, %v4700
    %v4710 = vor.u32 %v4708, %v4709
    %v4711 = vshll.u32 2102212464, %v4699
    %v4712 = vshrl.u32 920167782, %v4700
    %v4713 = vor.u32 %v4711, %v4712
    %v4714 = vshll.u32 920167782, %v4699
    %v4715 = vshrl.u32 1326507024, %v4700
    %v4716 = vor.u32 %v4714, %v4715
    %vm4717 = vcmp.lt.s32.totalorder %v4698, 1
    %vm4718 = vcmp.lt.s32.totalorder %v4698, 2
    %vm4719 = vcmp.lt.s32.totalorder %v4698, 3
    %vm4720 = vcmp.lt.s32.totalorder %v4698, 4
    %v4721 = vsel %vm4717, %v4701, %v4704
    %v4722 = vsel %vm4720, %v4710, 2102212464
    %v4723 = vsel %vm4719, %v4707, %v4722
    %v4724 = vsel %vm4718, %v4721, %v4723
    %v4725 = vsel %vm4717, %v4704, %v4707
    %v4726 = vsel %vm4720, %v4713, 920167782
    %v4727 = vsel %vm4719, %v4710, %v4726
    %v4728 = vsel %vm4718, %v4725, %v4727
    %v4729 = vsel %vm4717, %v4707, %v4710
    %v4730 = vsel %vm4720, %v4716, 1326507024
    %v4731 = vsel %vm4719, %v4713, %v4730
    %v4732 = vsel %vm4718, %v4729, %v4731
    %v4733 = vshll.u32 %v4693, 8
    %v4734 = vmul.u32.u64.compose %v4733, %v4732
    %v4735 = vextract.low.u32 %v4734
    %v4736 = vextract.high.u32 %v4734
    %v4737 = vmul.u32.u64.compose %v4733, %v4728
    %v4738 = vextract.low.u32 %v4737
    %v4739 = vextract.high.u32 %v4737
    %v4740 = vmul.u32 %v4733, %v4724
    %v4741 = vadd.s32 %v4736, %v4738
    %vm4742 = vc.u32 %v4736, %v4738
    %v4743 = vadd.s32 %v4739, 1
    %v4744 = vsel %vm4742, %v4743, %v4739
    %v4745 = vadd.s32 %v4740, %v4744
    %v4746 = vadd.s32 %v4745, 536870912
    %v4747 = vshrl.u32 %v4746, 30
    %v4748 = vshll.u32 %v4747, 30
    %v4749 = vsub.s32 %v4745, %v4748
    %vm4750 = vcmp.lt.s32.totalorder %v4749, 0
    %v4751 = vsub.s32 0, %v4749
    %v4752 = vsel %vm4750, %v4751, %v4749
    %v4753 = vclz %v4752
    %v4754 = vsub.s32 %v4753, 2
    %vm4755 = vcmp.gt.s32.totalorder 0, %v4754
    %v4756 = vsel %vm4755, 0, %v4754
    %v4757 = vsub.s32 32, %v4756
    %v4758 = vshll.u32 %v4749, %v4756
    %v4759 = vshrl.u32 %v4741, %v4757
    %v4760 = vor.u32 %v4758, %v4759
    %v4761 = vsub.s32 4294967266, %v4756
    %v4762 = vadd.s32 %v4761, 127
    %v4763 = vshll.u32 %v4762, 23
    %v4764 = vor.u32 4788187, %v4763
    %v4765 = vand.u32 2147483647, %v4764
    %v4767 = vcvt.s32.f32 %v4760
    %v4768 = vmul.f32 %v4767, %v4765
    %v4769 = vxor.u32 %v4768, 2147483648
    %v4770 = vsel %vm4687, %v4769, %v4768
    %v4771 = vsub.s32 4, %v4747
    %v4772 = vsel %vm4687, %v4771, %v4747
    %v4773 = vsel %vm4686, %v3479, %v4770
    %v4774 = vsel %vm4686, 0, %v4772
    %v4775 = vcosq.f32.pop %v4773
    %v4776 = vsinq.f32.pop %v4773
    %vm4777 = vweird.f32 %v3479
    %v4778 = vadd.s32 %v4774, 3
    %v4779 = vand.u32 %v4778, 3
    %vm4780 = vcmp.lt.s32.totalorder %v4779, 2
    %vm4781 = vcmp.eq.s32.totalorder %v4779, 0
    %v4782 = vxor.u32 %v4776, 2147483648
    %v4783 = vsel %vm4781, %v4775, %v4782
    %vm4784 = vcmp.eq.s32.totalorder %v4779, 2
    %v4785 = vxor.u32 %v4775, 2147483648
    %v4786 = vsel %vm4784, %v4785, %v4776
    %v4787 = vsel %vm4780, %v4783, %v4786
    %v4788 = vsel %vm4777, nan, %v4787
    %v4789 = vand.u32 2147483647, %v3483
    %vm4790 = vcmp.le.f32.partialorder %v4789, 0.7853982
    %vm4791 = vcmp.lt.s32.totalorder %v3483, 0
    %v4792 = vand.u32 %v3483, 2139095040
    %v4793 = vshrl.u32 %v4792, 23
    %v4794 = vsub.s32 %v4793, 127
    %v4795 = vand.u32 2147483647, %v3483
    %v4796 = vand.u32 %v4795, 8388607
    %v4797 = vor.u32 %v4796, 8388608
    %v4798 = vsub.s32 0, %v4797
    %v4799 = vadd.s32 %v4794, 1
    %vm4800 = vcmp.gt.s32.totalorder %v4799, 0
    %v4801 = vsel %vm4800, %v4799, 0
    %v4802 = vshrl.u32 %v4801, 5
    %v4803 = vand.u32 %v4801, 31
    %v4804 = vsub.s32 32, %v4803
    %v4805 = vshrl.u32 683565275, %v4804
    %v4806 = vshll.u32 683565275, %v4803
    %v4807 = vshrl.u32 2475754826, %v4804
    %v4808 = vor.u32 %v4806, %v4807
    %v4809 = vshll.u32 2475754826, %v4803
    %v4810 = vshrl.u32 2131351028, %v4804
    %v4811 = vor.u32 %v4809, %v4810
    %v4812 = vshll.u32 2131351028, %v4803
    %v4813 = vshrl.u32 2102212464, %v4804
    %v4814 = vor.u32 %v4812, %v4813
    %v4815 = vshll.u32 2102212464, %v4803
    %v4816 = vshrl.u32 920167782, %v4804
    %v4817 = vor.u32 %v4815, %v4816
    %v4818 = vshll.u32 920167782, %v4803
    %v4819 = vshrl.u32 1326507024, %v4804
    %v4820 = vor.u32 %v4818, %v4819
    %vm4821 = vcmp.lt.s32.totalorder %v4802, 1
    %vm4822 = vcmp.lt.s32.totalorder %v4802, 2
    %vm4823 = vcmp.lt.s32.totalorder %v4802, 3
    %vm4824 = vcmp.lt.s32.totalorder %v4802, 4
    %v4825 = vsel %vm4821, %v4805, %v4808
    %v4826 = vsel %vm4824, %v4814, 2102212464
    %v4827 = vsel %vm4823, %v4811, %v4826
    %v4828 = vsel %vm4822, %v4825, %v4827
    %v4829 = vsel %vm4821, %v4808, %v4811
    %v4830 = vsel %vm4824, %v4817, 920167782
    %v4831 = vsel %vm4823, %v4814, %v4830
    %v4832 = vsel %vm4822, %v4829, %v4831
    %v4833 = vsel %vm4821, %v4811, %v4814
    %v4834 = vsel %vm4824, %v4820, 1326507024
    %v4835 = vsel %vm4823, %v4817, %v4834
    %v4836 = vsel %vm4822, %v4833, %v4835
    %v4837 = vshll.u32 %v4797, 8
    %v4838 = vmul.u32.u64.compose %v4837, %v4836
    %v4839 = vextract.low.u32 %v4838
    %v4840 = vextract.high.u32 %v4838
    %v4841 = vmul.u32.u64.compose %v4837, %v4832
    %v4842 = vextract.low.u32 %v4841
    %v4843 = vextract.high.u32 %v4841
    %v4844 = vmul.u32 %v4837, %v4828
    %v4845 = vadd.s32 %v4840, %v4842
    %vm4846 = vc.u32 %v4840, %v4842
    %v4847 = vadd.s32 %v4843, 1
    %v4848 = vsel %vm4846, %v4847, %v4843
    %v4849 = vadd.s32 %v4844, %v4848
    %v4850 = vadd.s32 %v4849, 536870912
    %v4851 = vshrl.u32 %v4850, 30
    %v4852 = vshll.u32 %v4851, 30
    %v4853 = vsub.s32 %v4849, %v4852
    %vm4854 = vcmp.lt.s32.totalorder %v4853, 0
    %v4855 = vsub.s32 0, %v4853
    %v4856 = vsel %vm4854, %v4855, %v4853
    %v4857 = vclz %v4856
    %v4858 = vsub.s32 %v4857, 2
    %vm4859 = vcmp.gt.s32.totalorder 0, %v4858
    %v4860 = vsel %vm4859, 0, %v4858
    %v4861 = vsub.s32 32, %v4860
    %v4862 = vshll.u32 %v4853, %v4860
    %v4863 = vshrl.u32 %v4845, %v4861
    %v4864 = vor.u32 %v4862, %v4863
    %v4865 = vsub.s32 4294967266, %v4860
    %v4866 = vadd.s32 %v4865, 127
    %v4867 = vshll.u32 %v4866, 23
    %v4868 = vor.u32 4788187, %v4867
    %v4869 = vand.u32 2147483647, %v4868
    %v4871 = vcvt.s32.f32 %v4864
    %v4872 = vmul.f32 %v4871, %v4869
    %v4873 = vxor.u32 %v4872, 2147483648
    %v4874 = vsel %vm4791, %v4873, %v4872
    %v4875 = vsub.s32 4, %v4851
    %v4876 = vsel %vm4791, %v4875, %v4851
    %v4877 = vsel %vm4790, %v3483, %v4874
    %v4878 = vsel %vm4790, 0, %v4876
    %v4879 = vcosq.f32.pop %v4877
    %v4880 = vsinq.f32.pop %v4877
    %vm4881 = vweird.f32 %v3483
    %v4882 = vadd.s32 %v4878, 3
    %v4883 = vand.u32 %v4882, 3
    %vm4884 = vcmp.lt.s32.totalorder %v4883, 2
    %vm4885 = vcmp.eq.s32.totalorder %v4883, 0
    %v4886 = vxor.u32 %v4880, 2147483648
    %v4887 = vsel %vm4885, %v4879, %v4886
    %vm4888 = vcmp.eq.s32.totalorder %v4883, 2
    %v4889 = vxor.u32 %v4879, 2147483648
    %v4890 = vsel %vm4888, %v4889, %v4880
    %v4891 = vsel %vm4884, %v4887, %v4890
    %v4892 = vsel %vm4881, nan, %v4891
    %v4893 = vand.u32 2147483647, %v3485
    %vm4894 = vcmp.le.f32.partialorder %v4893, 0.7853982
    %vm4895 = vcmp.lt.s32.totalorder %v3485, 0
    %v4896 = vand.u32 %v3485, 2139095040
    %v4897 = vshrl.u32 %v4896, 23
    %v4898 = vsub.s32 %v4897, 127
    %v4899 = vand.u32 2147483647, %v3485
    %v4900 = vand.u32 %v4899, 8388607
    %v4901 = vor.u32 %v4900, 8388608
    %v4902 = vsub.s32 0, %v4901
    %v4903 = vadd.s32 %v4898, 1
    %vm4904 = vcmp.gt.s32.totalorder %v4903, 0
    %v4905 = vsel %vm4904, %v4903, 0
    %v4906 = vshrl.u32 %v4905, 5
    %v4907 = vand.u32 %v4905, 31
    %v4908 = vsub.s32 32, %v4907
    %v4909 = vshrl.u32 683565275, %v4908
    %v4910 = vshll.u32 683565275, %v4907
    %v4911 = vshrl.u32 2475754826, %v4908
    %v4912 = vor.u32 %v4910, %v4911
    %v4913 = vshll.u32 2475754826, %v4907
    %v4914 = vshrl.u32 2131351028, %v4908
    %v4915 = vor.u32 %v4913, %v4914
    %v4916 = vshll.u32 2131351028, %v4907
    %v4917 = vshrl.u32 2102212464, %v4908
    %v4918 = vor.u32 %v4916, %v4917
    %v4919 = vshll.u32 2102212464, %v4907
    %v4920 = vshrl.u32 920167782, %v4908
    %v4921 = vor.u32 %v4919, %v4920
    %v4922 = vshll.u32 920167782, %v4907
    %v4923 = vshrl.u32 1326507024, %v4908
    %v4924 = vor.u32 %v4922, %v4923
    %vm4925 = vcmp.lt.s32.totalorder %v4906, 1
    %vm4926 = vcmp.lt.s32.totalorder %v4906, 2
    %vm4927 = vcmp.lt.s32.totalorder %v4906, 3
    %vm4928 = vcmp.lt.s32.totalorder %v4906, 4
    %v4929 = vsel %vm4925, %v4909, %v4912
    %v4930 = vsel %vm4928, %v4918, 2102212464
    %v4931 = vsel %vm4927, %v4915, %v4930
    %v4932 = vsel %vm4926, %v4929, %v4931
    %v4933 = vsel %vm4925, %v4912, %v4915
    %v4934 = vsel %vm4928, %v4921, 920167782
    %v4935 = vsel %vm4927, %v4918, %v4934
    %v4936 = vsel %vm4926, %v4933, %v4935
    %v4937 = vsel %vm4925, %v4915, %v4918
    %v4938 = vsel %vm4928, %v4924, 1326507024
    %v4939 = vsel %vm4927, %v4921, %v4938
    %v4940 = vsel %vm4926, %v4937, %v4939
    %v4941 = vshll.u32 %v4901, 8
    %v4942 = vmul.u32.u64.compose %v4941, %v4940
    %v4943 = vextract.low.u32 %v4942
    %v4944 = vextract.high.u32 %v4942
    %v4945 = vmul.u32.u64.compose %v4941, %v4936
    %v4946 = vextract.low.u32 %v4945
    %v4947 = vextract.high.u32 %v4945
    %v4948 = vmul.u32 %v4941, %v4932
    %v4949 = vadd.s32 %v4944, %v4946
    %vm4950 = vc.u32 %v4944, %v4946
    %v4951 = vadd.s32 %v4947, 1
    %v4952 = vsel %vm4950, %v4951, %v4947
    %v4953 = vadd.s32 %v4948, %v4952
    %v4954 = vadd.s32 %v4953, 536870912
    %v4955 = vshrl.u32 %v4954, 30
    %v4956 = vshll.u32 %v4955, 30
    %v4957 = vsub.s32 %v4953, %v4956
    %vm4958 = vcmp.lt.s32.totalorder %v4957, 0
    %v4959 = vsub.s32 0, %v4957
    %v4960 = vsel %vm4958, %v4959, %v4957
    %v4961 = vclz %v4960
    %v4962 = vsub.s32 %v4961, 2
    %vm4963 = vcmp.gt.s32.totalorder 0, %v4962
    %v4964 = vsel %vm4963, 0, %v4962
    %v4965 = vsub.s32 32, %v4964
    %v4966 = vshll.u32 %v4957, %v4964
    %v4967 = vshrl.u32 %v4949, %v4965
    %v4968 = vor.u32 %v4966, %v4967
    %v4969 = vsub.s32 4294967266, %v4964
    %v4970 = vadd.s32 %v4969, 127
    %v4971 = vshll.u32 %v4970, 23
    %v4972 = vor.u32 4788187, %v4971
    %v4973 = vand.u32 2147483647, %v4972
    %v4975 = vcvt.s32.f32 %v4968
    %v4976 = vmul.f32 %v4975, %v4973
    %v4977 = vxor.u32 %v4976, 2147483648
    %v4978 = vsel %vm4895, %v4977, %v4976
    %v4979 = vsub.s32 4, %v4955
    %v4980 = vsel %vm4895, %v4979, %v4955
    %v4981 = vsel %vm4894, %v3485, %v4978
    %v4982 = vsel %vm4894, 0, %v4980
    %v4983 = vcosq.f32.pop %v4981
    %v4984 = vsinq.f32.pop %v4981
    %vm4985 = vweird.f32 %v3485
    %v4986 = vadd.s32 %v4982, 3
    %v4987 = vand.u32 %v4986, 3
    %vm4988 = vcmp.lt.s32.totalorder %v4987, 2
    %vm4989 = vcmp.eq.s32.totalorder %v4987, 0
    %v4990 = vxor.u32 %v4984, 2147483648
    %v4991 = vsel %vm4989, %v4983, %v4990
    %vm4992 = vcmp.eq.s32.totalorder %v4987, 2
    %v4993 = vxor.u32 %v4983, 2147483648
    %v4994 = vsel %vm4992, %v4993, %v4984
    %v4995 = vsel %vm4988, %v4991, %v4994
    %v4996 = vsel %vm4985, nan, %v4995
    %v4997 = vand.u32 2147483647, %v3489
    %vm4998 = vcmp.le.f32.partialorder %v4997, 0.7853982
    %vm4999 = vcmp.lt.s32.totalorder %v3489, 0
    %v5000 = vand.u32 %v3489, 2139095040
    %v5001 = vshrl.u32 %v5000, 23
    %v5002 = vsub.s32 %v5001, 127
    %v5003 = vand.u32 2147483647, %v3489
    %v5004 = vand.u32 %v5003, 8388607
    %v5005 = vor.u32 %v5004, 8388608
    %v5006 = vsub.s32 0, %v5005
    %v5007 = vadd.s32 %v5002, 1
    %vm5008 = vcmp.gt.s32.totalorder %v5007, 0
    %v5009 = vsel %vm5008, %v5007, 0
    %v5010 = vshrl.u32 %v5009, 5
    %v5011 = vand.u32 %v5009, 31
    %v5012 = vsub.s32 32, %v5011
    %v5013 = vshrl.u32 683565275, %v5012
    %v5014 = vshll.u32 683565275, %v5011
    %v5015 = vshrl.u32 2475754826, %v5012
    %v5016 = vor.u32 %v5014, %v5015
    %v5017 = vshll.u32 2475754826, %v5011
    %v5018 = vshrl.u32 2131351028, %v5012
    %v5019 = vor.u32 %v5017, %v5018
    %v5020 = vshll.u32 2131351028, %v5011
    %v5021 = vshrl.u32 2102212464, %v5012
    %v5022 = vor.u32 %v5020, %v5021
    %v5023 = vshll.u32 2102212464, %v5011
    %v5024 = vshrl.u32 920167782, %v5012
    %v5025 = vor.u32 %v5023, %v5024
    %v5026 = vshll.u32 920167782, %v5011
    %v5027 = vshrl.u32 1326507024, %v5012
    %v5028 = vor.u32 %v5026, %v5027
    %vm5029 = vcmp.lt.s32.totalorder %v5010, 1
    %vm5030 = vcmp.lt.s32.totalorder %v5010, 2
    %vm5031 = vcmp.lt.s32.totalorder %v5010, 3
    %vm5032 = vcmp.lt.s32.totalorder %v5010, 4
    %v5033 = vsel %vm5029, %v5013, %v5016
    %v5034 = vsel %vm5032, %v5022, 2102212464
    %v5035 = vsel %vm5031, %v5019, %v5034
    %v5036 = vsel %vm5030, %v5033, %v5035
    %v5037 = vsel %vm5029, %v5016, %v5019
    %v5038 = vsel %vm5032, %v5025, 920167782
    %v5039 = vsel %vm5031, %v5022, %v5038
    %v5040 = vsel %vm5030, %v5037, %v5039
    %v5041 = vsel %vm5029, %v5019, %v5022
    %v5042 = vsel %vm5032, %v5028, 1326507024
    %v5043 = vsel %vm5031, %v5025, %v5042
    %v5044 = vsel %vm5030, %v5041, %v5043
    %v5045 = vshll.u32 %v5005, 8
    %v5046 = vmul.u32.u64.compose %v5045, %v5044
    %v5047 = vextract.low.u32 %v5046
    %v5048 = vextract.high.u32 %v5046
    %v5049 = vmul.u32.u64.compose %v5045, %v5040
    %v5050 = vextract.low.u32 %v5049
    %v5051 = vextract.high.u32 %v5049
    %v5052 = vmul.u32 %v5045, %v5036
    %v5053 = vadd.s32 %v5048, %v5050
    %vm5054 = vc.u32 %v5048, %v5050
    %v5055 = vadd.s32 %v5051, 1
    %v5056 = vsel %vm5054, %v5055, %v5051
    %v5057 = vadd.s32 %v5052, %v5056
    %v5058 = vadd.s32 %v5057, 536870912
    %v5059 = vshrl.u32 %v5058, 30
    %v5060 = vshll.u32 %v5059, 30
    %v5061 = vsub.s32 %v5057, %v5060
    %vm5062 = vcmp.lt.s32.totalorder %v5061, 0
    %v5063 = vsub.s32 0, %v5061
    %v5064 = vsel %vm5062, %v5063, %v5061
    %v5065 = vclz %v5064
    %v5066 = vsub.s32 %v5065, 2
    %vm5067 = vcmp.gt.s32.totalorder 0, %v5066
    %v5068 = vsel %vm5067, 0, %v5066
    %v5069 = vsub.s32 32, %v5068
    %v5070 = vshll.u32 %v5061, %v5068
    %v5071 = vshrl.u32 %v5053, %v5069
    %v5072 = vor.u32 %v5070, %v5071
    %v5073 = vsub.s32 4294967266, %v5068
    %v5074 = vadd.s32 %v5073, 127
    %v5075 = vshll.u32 %v5074, 23
    %v5076 = vor.u32 4788187, %v5075
    %v5077 = vand.u32 2147483647, %v5076
    %v5079 = vcvt.s32.f32 %v5072
    %v5080 = vmul.f32 %v5079, %v5077
    %v5081 = vxor.u32 %v5080, 2147483648
    %v5082 = vsel %vm4999, %v5081, %v5080
    %v5083 = vsub.s32 4, %v5059
    %v5084 = vsel %vm4999, %v5083, %v5059
    %v5085 = vsel %vm4998, %v3489, %v5082
    %v5086 = vsel %vm4998, 0, %v5084
    %v5087 = vcosq.f32.pop %v5085
    %v5088 = vsinq.f32.pop %v5085
    %vm5089 = vweird.f32 %v3489
    %v5090 = vadd.s32 %v5086, 3
    %v5091 = vand.u32 %v5090, 3
    %vm5092 = vcmp.lt.s32.totalorder %v5091, 2
    %vm5093 = vcmp.eq.s32.totalorder %v5091, 0
    %v5094 = vxor.u32 %v5088, 2147483648
    %v5095 = vsel %vm5093, %v5087, %v5094
    %vm5096 = vcmp.eq.s32.totalorder %v5091, 2
    %v5097 = vxor.u32 %v5087, 2147483648
    %v5098 = vsel %vm5096, %v5097, %v5088
    %v5099 = vsel %vm5092, %v5095, %v5098
    %v5100 = vsel %vm5089, nan, %v5099
    %v5101 = vand.u32 2147483647, %v3491
    %vm5102 = vcmp.le.f32.partialorder %v5101, 0.7853982
    %vm5103 = vcmp.lt.s32.totalorder %v3491, 0
    %v5104 = vand.u32 %v3491, 2139095040
    %v5105 = vshrl.u32 %v5104, 23
    %v5106 = vsub.s32 %v5105, 127
    %v5107 = vand.u32 2147483647, %v3491
    %v5108 = vand.u32 %v5107, 8388607
    %v5109 = vor.u32 %v5108, 8388608
    %v5110 = vsub.s32 0, %v5109
    %v5111 = vadd.s32 %v5106, 1
    %vm5112 = vcmp.gt.s32.totalorder %v5111, 0
    %v5113 = vsel %vm5112, %v5111, 0
    %v5114 = vshrl.u32 %v5113, 5
    %v5115 = vand.u32 %v5113, 31
    %v5116 = vsub.s32 32, %v5115
    %v5117 = vshrl.u32 683565275, %v5116
    %v5118 = vshll.u32 683565275, %v5115
    %v5119 = vshrl.u32 2475754826, %v5116
    %v5120 = vor.u32 %v5118, %v5119
    %v5121 = vshll.u32 2475754826, %v5115
    %v5122 = vshrl.u32 2131351028, %v5116
    %v5123 = vor.u32 %v5121, %v5122
    %v5124 = vshll.u32 2131351028, %v5115
    %v5125 = vshrl.u32 2102212464, %v5116
    %v5126 = vor.u32 %v5124, %v5125
    %v5127 = vshll.u32 2102212464, %v5115
    %v5128 = vshrl.u32 920167782, %v5116
    %v5129 = vor.u32 %v5127, %v5128
    %v5130 = vshll.u32 920167782, %v5115
    %v5131 = vshrl.u32 1326507024, %v5116
    %v5132 = vor.u32 %v5130, %v5131
    %vm5133 = vcmp.lt.s32.totalorder %v5114, 1
    %vm5134 = vcmp.lt.s32.totalorder %v5114, 2
    %vm5135 = vcmp.lt.s32.totalorder %v5114, 3
    %vm5136 = vcmp.lt.s32.totalorder %v5114, 4
    %v5137 = vsel %vm5133, %v5117, %v5120
    %v5138 = vsel %vm5136, %v5126, 2102212464
    %v5139 = vsel %vm5135, %v5123, %v5138
    %v5140 = vsel %vm5134, %v5137, %v5139
    %v5141 = vsel %vm5133, %v5120, %v5123
    %v5142 = vsel %vm5136, %v5129, 920167782
    %v5143 = vsel %vm5135, %v5126, %v5142
    %v5144 = vsel %vm5134, %v5141, %v5143
    %v5145 = vsel %vm5133, %v5123, %v5126
    %v5146 = vsel %vm5136, %v5132, 1326507024
    %v5147 = vsel %vm5135, %v5129, %v5146
    %v5148 = vsel %vm5134, %v5145, %v5147
    %v5149 = vshll.u32 %v5109, 8
    %v5150 = vmul.u32.u64.compose %v5149, %v5148
    %v5151 = vextract.low.u32 %v5150
    %v5152 = vextract.high.u32 %v5150
    %v5153 = vmul.u32.u64.compose %v5149, %v5144
    %v5154 = vextract.low.u32 %v5153
    %v5155 = vextract.high.u32 %v5153
    %v5156 = vmul.u32 %v5149, %v5140
    %v5157 = vadd.s32 %v5152, %v5154
    %vm5158 = vc.u32 %v5152, %v5154
    %v5159 = vadd.s32 %v5155, 1
    %v5160 = vsel %vm5158, %v5159, %v5155
    %v5161 = vadd.s32 %v5156, %v5160
    %v5162 = vadd.s32 %v5161, 536870912
    %v5163 = vshrl.u32 %v5162, 30
    %v5164 = vshll.u32 %v5163, 30
    %v5165 = vsub.s32 %v5161, %v5164
    %vm5166 = vcmp.lt.s32.totalorder %v5165, 0
    %v5167 = vsub.s32 0, %v5165
    %v5168 = vsel %vm5166, %v5167, %v5165
    %v5169 = vclz %v5168
    %v5170 = vsub.s32 %v5169, 2
    %vm5171 = vcmp.gt.s32.totalorder 0, %v5170
    %v5172 = vsel %vm5171, 0, %v5170
    %v5173 = vsub.s32 32, %v5172
    %v5174 = vshll.u32 %v5165, %v5172
    %v5175 = vshrl.u32 %v5157, %v5173
    %v5176 = vor.u32 %v5174, %v5175
    %v5177 = vsub.s32 4294967266, %v5172
    %v5178 = vadd.s32 %v5177, 127
    %v5179 = vshll.u32 %v5178, 23
    %v5180 = vor.u32 4788187, %v5179
    %v5181 = vand.u32 2147483647, %v5180
    %v5183 = vcvt.s32.f32 %v5176
    %v5184 = vmul.f32 %v5183, %v5181
    %v5185 = vxor.u32 %v5184, 2147483648
    %v5186 = vsel %vm5103, %v5185, %v5184
    %v5187 = vsub.s32 4, %v5163
    %v5188 = vsel %vm5103, %v5187, %v5163
    %v5189 = vsel %vm5102, %v3491, %v5186
    %v5190 = vsel %vm5102, 0, %v5188
    %v5191 = vcosq.f32.pop %v5189
    %v5192 = vsinq.f32.pop %v5189
    %vm5193 = vweird.f32 %v3491
    %v5194 = vadd.s32 %v5190, 3
    %v5195 = vand.u32 %v5194, 3
    %vm5196 = vcmp.lt.s32.totalorder %v5195, 2
    %vm5197 = vcmp.eq.s32.totalorder %v5195, 0
    %v5198 = vxor.u32 %v5192, 2147483648
    %v5199 = vsel %vm5197, %v5191, %v5198
    %vm5200 = vcmp.eq.s32.totalorder %v5195, 2
    %v5201 = vxor.u32 %v5191, 2147483648
    %v5202 = vsel %vm5200, %v5201, %v5192
    %v5203 = vsel %vm5196, %v5199, %v5202
    %v5204 = vsel %vm5193, nan, %v5203
    %v5205 = vand.u32 2147483647, %v3495
    %vm5206 = vcmp.le.f32.partialorder %v5205, 0.7853982
    %vm5207 = vcmp.lt.s32.totalorder %v3495, 0
    %v5208 = vand.u32 %v3495, 2139095040
    %v5209 = vshrl.u32 %v5208, 23
    %v5210 = vsub.s32 %v5209, 127
    %v5211 = vand.u32 2147483647, %v3495
    %v5212 = vand.u32 %v5211, 8388607
    %v5213 = vor.u32 %v5212, 8388608
    %v5214 = vsub.s32 0, %v5213
    %v5215 = vadd.s32 %v5210, 1
    %vm5216 = vcmp.gt.s32.totalorder %v5215, 0
    %v5217 = vsel %vm5216, %v5215, 0
    %v5218 = vshrl.u32 %v5217, 5
    %v5219 = vand.u32 %v5217, 31
    %v5220 = vsub.s32 32, %v5219
    %v5221 = vshrl.u32 683565275, %v5220
    %v5222 = vshll.u32 683565275, %v5219
    %v5223 = vshrl.u32 2475754826, %v5220
    %v5224 = vor.u32 %v5222, %v5223
    %v5225 = vshll.u32 2475754826, %v5219
    %v5226 = vshrl.u32 2131351028, %v5220
    %v5227 = vor.u32 %v5225, %v5226
    %v5228 = vshll.u32 2131351028, %v5219
    %v5229 = vshrl.u32 2102212464, %v5220
    %v5230 = vor.u32 %v5228, %v5229
    %v5231 = vshll.u32 2102212464, %v5219
    %v5232 = vshrl.u32 920167782, %v5220
    %v5233 = vor.u32 %v5231, %v5232
    %v5234 = vshll.u32 920167782, %v5219
    %v5235 = vshrl.u32 1326507024, %v5220
    %v5236 = vor.u32 %v5234, %v5235
    %vm5237 = vcmp.lt.s32.totalorder %v5218, 1
    %vm5238 = vcmp.lt.s32.totalorder %v5218, 2
    %vm5239 = vcmp.lt.s32.totalorder %v5218, 3
    %vm5240 = vcmp.lt.s32.totalorder %v5218, 4
    %v5241 = vsel %vm5237, %v5221, %v5224
    %v5242 = vsel %vm5240, %v5230, 2102212464
    %v5243 = vsel %vm5239, %v5227, %v5242
    %v5244 = vsel %vm5238, %v5241, %v5243
    %v5245 = vsel %vm5237, %v5224, %v5227
    %v5246 = vsel %vm5240, %v5233, 920167782
    %v5247 = vsel %vm5239, %v5230, %v5246
    %v5248 = vsel %vm5238, %v5245, %v5247
    %v5249 = vsel %vm5237, %v5227, %v5230
    %v5250 = vsel %vm5240, %v5236, 1326507024
    %v5251 = vsel %vm5239, %v5233, %v5250
    %v5252 = vsel %vm5238, %v5249, %v5251
    %v5253 = vshll.u32 %v5213, 8
    %v5254 = vmul.u32.u64.compose %v5253, %v5252
    %v5255 = vextract.low.u32 %v5254
    %v5256 = vextract.high.u32 %v5254
    %v5257 = vmul.u32.u64.compose %v5253, %v5248
    %v5258 = vextract.low.u32 %v5257
    %v5259 = vextract.high.u32 %v5257
    %v5260 = vmul.u32 %v5253, %v5244
    %v5261 = vadd.s32 %v5256, %v5258
    %vm5262 = vc.u32 %v5256, %v5258
    %v5263 = vadd.s32 %v5259, 1
    %v5264 = vsel %vm5262, %v5263, %v5259
    %v5265 = vadd.s32 %v5260, %v5264
    %v5266 = vadd.s32 %v5265, 536870912
    %v5267 = vshrl.u32 %v5266, 30
    %v5268 = vshll.u32 %v5267, 30
    %v5269 = vsub.s32 %v5265, %v5268
    %vm5270 = vcmp.lt.s32.totalorder %v5269, 0
    %v5271 = vsub.s32 0, %v5269
    %v5272 = vsel %vm5270, %v5271, %v5269
    %v5273 = vclz %v5272
    %v5274 = vsub.s32 %v5273, 2
    %vm5275 = vcmp.gt.s32.totalorder 0, %v5274
    %v5276 = vsel %vm5275, 0, %v5274
    %v5277 = vsub.s32 32, %v5276
    %v5278 = vshll.u32 %v5269, %v5276
    %v5279 = vshrl.u32 %v5261, %v5277
    %v5280 = vor.u32 %v5278, %v5279
    %v5281 = vsub.s32 4294967266, %v5276
    %v5282 = vadd.s32 %v5281, 127
    %v5283 = vshll.u32 %v5282, 23
    %v5284 = vor.u32 4788187, %v5283
    %v5285 = vand.u32 2147483647, %v5284
    %v5287 = vcvt.s32.f32 %v5280
    %v5288 = vmul.f32 %v5287, %v5285
    %v5289 = vxor.u32 %v5288, 2147483648
    %v5290 = vsel %vm5207, %v5289, %v5288
    %v5291 = vsub.s32 4, %v5267
    %v5292 = vsel %vm5207, %v5291, %v5267
    %v5293 = vsel %vm5206, %v3495, %v5290
    %v5294 = vsel %vm5206, 0, %v5292
    %v5295 = vcosq.f32.pop %v5293
    %v5296 = vsinq.f32.pop %v5293
    %vm5297 = vweird.f32 %v3495
    %v5298 = vadd.s32 %v5294, 3
    %v5299 = vand.u32 %v5298, 3
    %vm5300 = vcmp.lt.s32.totalorder %v5299, 2
    %vm5301 = vcmp.eq.s32.totalorder %v5299, 0
    %v5302 = vxor.u32 %v5296, 2147483648
    %v5303 = vsel %vm5301, %v5295, %v5302
    %vm5304 = vcmp.eq.s32.totalorder %v5299, 2
    %v5305 = vxor.u32 %v5295, 2147483648
    %v5306 = vsel %vm5304, %v5305, %v5296
    %v5307 = vsel %vm5300, %v5303, %v5306
    %v5308 = vsel %vm5297, nan, %v5307
    %v5309 = vand.u32 2147483647, %v3497
    %vm5310 = vcmp.le.f32.partialorder %v5309, 0.7853982
    %vm5311 = vcmp.lt.s32.totalorder %v3497, 0
    %v5312 = vand.u32 %v3497, 2139095040
    %v5313 = vshrl.u32 %v5312, 23
    %v5314 = vsub.s32 %v5313, 127
    %v5315 = vand.u32 2147483647, %v3497
    %v5316 = vand.u32 %v5315, 8388607
    %v5317 = vor.u32 %v5316, 8388608
    %v5318 = vsub.s32 0, %v5317
    %v5319 = vadd.s32 %v5314, 1
    %vm5320 = vcmp.gt.s32.totalorder %v5319, 0
    %v5321 = vsel %vm5320, %v5319, 0
    %v5322 = vshrl.u32 %v5321, 5
    %v5323 = vand.u32 %v5321, 31
    %v5324 = vsub.s32 32, %v5323
    %v5325 = vshrl.u32 683565275, %v5324
    %v5326 = vshll.u32 683565275, %v5323
    %v5327 = vshrl.u32 2475754826, %v5324
    %v5328 = vor.u32 %v5326, %v5327
    %v5329 = vshll.u32 2475754826, %v5323
    %v5330 = vshrl.u32 2131351028, %v5324
    %v5331 = vor.u32 %v5329, %v5330
    %v5332 = vshll.u32 2131351028, %v5323
    %v5333 = vshrl.u32 2102212464, %v5324
    %v5334 = vor.u32 %v5332, %v5333
    %v5335 = vshll.u32 2102212464, %v5323
    %v5336 = vshrl.u32 920167782, %v5324
    %v5337 = vor.u32 %v5335, %v5336
    %v5338 = vshll.u32 920167782, %v5323
    %v5339 = vshrl.u32 1326507024, %v5324
    %v5340 = vor.u32 %v5338, %v5339
    %vm5341 = vcmp.lt.s32.totalorder %v5322, 1
    %vm5342 = vcmp.lt.s32.totalorder %v5322, 2
    %vm5343 = vcmp.lt.s32.totalorder %v5322, 3
    %vm5344 = vcmp.lt.s32.totalorder %v5322, 4
    %v5345 = vsel %vm5341, %v5325, %v5328
    %v5346 = vsel %vm5344, %v5334, 2102212464
    %v5347 = vsel %vm5343, %v5331, %v5346
    %v5348 = vsel %vm5342, %v5345, %v5347
    %v5349 = vsel %vm5341, %v5328, %v5331
    %v5350 = vsel %vm5344, %v5337, 920167782
    %v5351 = vsel %vm5343, %v5334, %v5350
    %v5352 = vsel %vm5342, %v5349, %v5351
    %v5353 = vsel %vm5341, %v5331, %v5334
    %v5354 = vsel %vm5344, %v5340, 1326507024
    %v5355 = vsel %vm5343, %v5337, %v5354
    %v5356 = vsel %vm5342, %v5353, %v5355
    %v5357 = vshll.u32 %v5317, 8
    %v5358 = vmul.u32.u64.compose %v5357, %v5356
    %v5359 = vextract.low.u32 %v5358
    %v5360 = vextract.high.u32 %v5358
    %v5361 = vmul.u32.u64.compose %v5357, %v5352
    %v5362 = vextract.low.u32 %v5361
    %v5363 = vextract.high.u32 %v5361
    %v5364 = vmul.u32 %v5357, %v5348
    %v5365 = vadd.s32 %v5360, %v5362
    %vm5366 = vc.u32 %v5360, %v5362
    %v5367 = vadd.s32 %v5363, 1
    %v5368 = vsel %vm5366, %v5367, %v5363
    %v5369 = vadd.s32 %v5364, %v5368
    %v5370 = vadd.s32 %v5369, 536870912
    %v5371 = vshrl.u32 %v5370, 30
    %v5372 = vshll.u32 %v5371, 30
    %v5373 = vsub.s32 %v5369, %v5372
    %vm5374 = vcmp.lt.s32.totalorder %v5373, 0
    %v5375 = vsub.s32 0, %v5373
    %v5376 = vsel %vm5374, %v5375, %v5373
    %v5377 = vclz %v5376
    %v5378 = vsub.s32 %v5377, 2
    %vm5379 = vcmp.gt.s32.totalorder 0, %v5378
    %v5380 = vsel %vm5379, 0, %v5378
    %v5381 = vsub.s32 32, %v5380
    %v5382 = vshll.u32 %v5373, %v5380
    %v5383 = vshrl.u32 %v5365, %v5381
    %v5384 = vor.u32 %v5382, %v5383
    %v5385 = vsub.s32 4294967266, %v5380
    %v5386 = vadd.s32 %v5385, 127
    %v5387 = vshll.u32 %v5386, 23
    %v5388 = vor.u32 4788187, %v5387
    %v5389 = vand.u32 2147483647, %v5388
    %v5391 = vcvt.s32.f32 %v5384
    %v5392 = vmul.f32 %v5391, %v5389
    %v5393 = vxor.u32 %v5392, 2147483648
    %v5394 = vsel %vm5311, %v5393, %v5392
    %v5395 = vsub.s32 4, %v5371
    %v5396 = vsel %vm5311, %v5395, %v5371
    %v5397 = vsel %vm5310, %v3497, %v5394
    %v5398 = vsel %vm5310, 0, %v5396
    %v5399 = vcosq.f32.pop %v5397
    %v5400 = vsinq.f32.pop %v5397
    %vm5401 = vweird.f32 %v3497
    %v5402 = vadd.s32 %v5398, 3
    %v5403 = vand.u32 %v5402, 3
    %vm5404 = vcmp.lt.s32.totalorder %v5403, 2
    %vm5405 = vcmp.eq.s32.totalorder %v5403, 0
    %v5406 = vxor.u32 %v5400, 2147483648
    %v5407 = vsel %vm5405, %v5399, %v5406
    %vm5408 = vcmp.eq.s32.totalorder %v5403, 2
    %v5409 = vxor.u32 %v5399, 2147483648
    %v5410 = vsel %vm5408, %v5409, %v5400
    %v5411 = vsel %vm5404, %v5407, %v5410
    %v5412 = vsel %vm5401, nan, %v5411
    %v5413 = vand.u32 2147483647, %v3501
    %vm5414 = vcmp.le.f32.partialorder %v5413, 0.7853982
    %vm5415 = vcmp.lt.s32.totalorder %v3501, 0
    %v5416 = vand.u32 %v3501, 2139095040
    %v5417 = vshrl.u32 %v5416, 23
    %v5418 = vsub.s32 %v5417, 127
    %v5419 = vand.u32 2147483647, %v3501
    %v5420 = vand.u32 %v5419, 8388607
    %v5421 = vor.u32 %v5420, 8388608
    %v5422 = vsub.s32 0, %v5421
    %v5423 = vadd.s32 %v5418, 1
    %vm5424 = vcmp.gt.s32.totalorder %v5423, 0
    %v5425 = vsel %vm5424, %v5423, 0
    %v5426 = vshrl.u32 %v5425, 5
    %v5427 = vand.u32 %v5425, 31
    %v5428 = vsub.s32 32, %v5427
    %v5429 = vshrl.u32 683565275, %v5428
    %v5430 = vshll.u32 683565275, %v5427
    %v5431 = vshrl.u32 2475754826, %v5428
    %v5432 = vor.u32 %v5430, %v5431
    %v5433 = vshll.u32 2475754826, %v5427
    %v5434 = vshrl.u32 2131351028, %v5428
    %v5435 = vor.u32 %v5433, %v5434
    %v5436 = vshll.u32 2131351028, %v5427
    %v5437 = vshrl.u32 2102212464, %v5428
    %v5438 = vor.u32 %v5436, %v5437
    %v5439 = vshll.u32 2102212464, %v5427
    %v5440 = vshrl.u32 920167782, %v5428
    %v5441 = vor.u32 %v5439, %v5440
    %v5442 = vshll.u32 920167782, %v5427
    %v5443 = vshrl.u32 1326507024, %v5428
    %v5444 = vor.u32 %v5442, %v5443
    %vm5445 = vcmp.lt.s32.totalorder %v5426, 1
    %vm5446 = vcmp.lt.s32.totalorder %v5426, 2
    %vm5447 = vcmp.lt.s32.totalorder %v5426, 3
    %vm5448 = vcmp.lt.s32.totalorder %v5426, 4
    %v5449 = vsel %vm5445, %v5429, %v5432
    %v5450 = vsel %vm5448, %v5438, 2102212464
    %v5451 = vsel %vm5447, %v5435, %v5450
    %v5452 = vsel %vm5446, %v5449, %v5451
    %v5453 = vsel %vm5445, %v5432, %v5435
    %v5454 = vsel %vm5448, %v5441, 920167782
    %v5455 = vsel %vm5447, %v5438, %v5454
    %v5456 = vsel %vm5446, %v5453, %v5455
    %v5457 = vsel %vm5445, %v5435, %v5438
    %v5458 = vsel %vm5448, %v5444, 1326507024
    %v5459 = vsel %vm5447, %v5441, %v5458
    %v5460 = vsel %vm5446, %v5457, %v5459
    %v5461 = vshll.u32 %v5421, 8
    %v5462 = vmul.u32.u64.compose %v5461, %v5460
    %v5463 = vextract.low.u32 %v5462
    %v5464 = vextract.high.u32 %v5462
    %v5465 = vmul.u32.u64.compose %v5461, %v5456
    %v5466 = vextract.low.u32 %v5465
    %v5467 = vextract.high.u32 %v5465
    %v5468 = vmul.u32 %v5461, %v5452
    %v5469 = vadd.s32 %v5464, %v5466
    %vm5470 = vc.u32 %v5464, %v5466
    %v5471 = vadd.s32 %v5467, 1
    %v5472 = vsel %vm5470, %v5471, %v5467
    %v5473 = vadd.s32 %v5468, %v5472
    %v5474 = vadd.s32 %v5473, 536870912
    %v5475 = vshrl.u32 %v5474, 30
    %v5476 = vshll.u32 %v5475, 30
    %v5477 = vsub.s32 %v5473, %v5476
    %vm5478 = vcmp.lt.s32.totalorder %v5477, 0
    %v5479 = vsub.s32 0, %v5477
    %v5480 = vsel %vm5478, %v5479, %v5477
    %v5481 = vclz %v5480
    %v5482 = vsub.s32 %v5481, 2
    %vm5483 = vcmp.gt.s32.totalorder 0, %v5482
    %v5484 = vsel %vm5483, 0, %v5482
    %v5485 = vsub.s32 32, %v5484
    %v5486 = vshll.u32 %v5477, %v5484
    %v5487 = vshrl.u32 %v5469, %v5485
    %v5488 = vor.u32 %v5486, %v5487
    %v5489 = vsub.s32 4294967266, %v5484
    %v5490 = vadd.s32 %v5489, 127
    %v5491 = vshll.u32 %v5490, 23
    %v5492 = vor.u32 4788187, %v5491
    %v5493 = vand.u32 2147483647, %v5492
    %v5495 = vcvt.s32.f32 %v5488
    %v5496 = vmul.f32 %v5495, %v5493
    %v5497 = vxor.u32 %v5496, 2147483648
    %v5498 = vsel %vm5415, %v5497, %v5496
    %v5499 = vsub.s32 4, %v5475
    %v5500 = vsel %vm5415, %v5499, %v5475
    %v5501 = vsel %vm5414, %v3501, %v5498
    %v5502 = vsel %vm5414, 0, %v5500
    %v5503 = vcosq.f32.pop %v5501
    %v5504 = vsinq.f32.pop %v5501
    %vm5505 = vweird.f32 %v3501
    %v5506 = vadd.s32 %v5502, 3
    %v5507 = vand.u32 %v5506, 3
    %vm5508 = vcmp.lt.s32.totalorder %v5507, 2
    %vm5509 = vcmp.eq.s32.totalorder %v5507, 0
    %v5510 = vxor.u32 %v5504, 2147483648
    %v5511 = vsel %vm5509, %v5503, %v5510
    %vm5512 = vcmp.eq.s32.totalorder %v5507, 2
    %v5513 = vxor.u32 %v5503, 2147483648
    %v5514 = vsel %vm5512, %v5513, %v5504
    %v5515 = vsel %vm5508, %v5511, %v5514
    %v5516 = vsel %vm5505, nan, %v5515
    %v5517 = vand.u32 2147483647, %v3503
    %vm5518 = vcmp.le.f32.partialorder %v5517, 0.7853982
    %vm5519 = vcmp.lt.s32.totalorder %v3503, 0
    %v5520 = vand.u32 %v3503, 2139095040
    %v5521 = vshrl.u32 %v5520, 23
    %v5522 = vsub.s32 %v5521, 127
    %v5523 = vand.u32 2147483647, %v3503
    %v5524 = vand.u32 %v5523, 8388607
    %v5525 = vor.u32 %v5524, 8388608
    %v5526 = vsub.s32 0, %v5525
    %v5527 = vadd.s32 %v5522, 1
    %vm5528 = vcmp.gt.s32.totalorder %v5527, 0
    %v5529 = vsel %vm5528, %v5527, 0
    %v5530 = vshrl.u32 %v5529, 5
    %v5531 = vand.u32 %v5529, 31
    %v5532 = vsub.s32 32, %v5531
    %v5533 = vshrl.u32 683565275, %v5532
    %v5534 = vshll.u32 683565275, %v5531
    %v5535 = vshrl.u32 2475754826, %v5532
    %v5536 = vor.u32 %v5534, %v5535
    %v5537 = vshll.u32 2475754826, %v5531
    %v5538 = vshrl.u32 2131351028, %v5532
    %v5539 = vor.u32 %v5537, %v5538
    %v5540 = vshll.u32 2131351028, %v5531
    %v5541 = vshrl.u32 2102212464, %v5532
    %v5542 = vor.u32 %v5540, %v5541
    %v5543 = vshll.u32 2102212464, %v5531
    %v5544 = vshrl.u32 920167782, %v5532
    %v5545 = vor.u32 %v5543, %v5544
    %v5546 = vshll.u32 920167782, %v5531
    %v5547 = vshrl.u32 1326507024, %v5532
    %v5548 = vor.u32 %v5546, %v5547
    %vm5549 = vcmp.lt.s32.totalorder %v5530, 1
    %vm5550 = vcmp.lt.s32.totalorder %v5530, 2
    %vm5551 = vcmp.lt.s32.totalorder %v5530, 3
    %vm5552 = vcmp.lt.s32.totalorder %v5530, 4
    %v5553 = vsel %vm5549, %v5533, %v5536
    %v5554 = vsel %vm5552, %v5542, 2102212464
    %v5555 = vsel %vm5551, %v5539, %v5554
    %v5556 = vsel %vm5550, %v5553, %v5555
    %v5557 = vsel %vm5549, %v5536, %v5539
    %v5558 = vsel %vm5552, %v5545, 920167782
    %v5559 = vsel %vm5551, %v5542, %v5558
    %v5560 = vsel %vm5550, %v5557, %v5559
    %v5561 = vsel %vm5549, %v5539, %v5542
    %v5562 = vsel %vm5552, %v5548, 1326507024
    %v5563 = vsel %vm5551, %v5545, %v5562
    %v5564 = vsel %vm5550, %v5561, %v5563
    %v5565 = vshll.u32 %v5525, 8
    %v5566 = vmul.u32.u64.compose %v5565, %v5564
    %v5567 = vextract.low.u32 %v5566
    %v5568 = vextract.high.u32 %v5566
    %v5569 = vmul.u32.u64.compose %v5565, %v5560
    %v5570 = vextract.low.u32 %v5569
    %v5571 = vextract.high.u32 %v5569
    %v5572 = vmul.u32 %v5565, %v5556
    %v5573 = vadd.s32 %v5568, %v5570
    %vm5574 = vc.u32 %v5568, %v5570
    %v5575 = vadd.s32 %v5571, 1
    %v5576 = vsel %vm5574, %v5575, %v5571
    %v5577 = vadd.s32 %v5572, %v5576
    %v5578 = vadd.s32 %v5577, 536870912
    %v5579 = vshrl.u32 %v5578, 30
    %v5580 = vshll.u32 %v5579, 30
    %v5581 = vsub.s32 %v5577, %v5580
    %vm5582 = vcmp.lt.s32.totalorder %v5581, 0
    %v5583 = vsub.s32 0, %v5581
    %v5584 = vsel %vm5582, %v5583, %v5581
    %v5585 = vclz %v5584
    %v5586 = vsub.s32 %v5585, 2
    %vm5587 = vcmp.gt.s32.totalorder 0, %v5586
    %v5588 = vsel %vm5587, 0, %v5586
    %v5589 = vsub.s32 32, %v5588
    %v5590 = vshll.u32 %v5581, %v5588
    %v5591 = vshrl.u32 %v5573, %v5589
    %v5592 = vor.u32 %v5590, %v5591
    %v5593 = vsub.s32 4294967266, %v5588
    %v5594 = vadd.s32 %v5593, 127
    %v5595 = vshll.u32 %v5594, 23
    %v5596 = vor.u32 4788187, %v5595
    %v5597 = vand.u32 2147483647, %v5596
    %v5599 = vcvt.s32.f32 %v5592
    %v5600 = vmul.f32 %v5599, %v5597
    %v5601 = vxor.u32 %v5600, 2147483648
    %v5602 = vsel %vm5519, %v5601, %v5600
    %v5603 = vsub.s32 4, %v5579
    %v5604 = vsel %vm5519, %v5603, %v5579
    %v5605 = vsel %vm5518, %v3503, %v5602
    %v5606 = vsel %vm5518, 0, %v5604
    %v5607 = vcosq.f32.pop %v5605
    %v5608 = vsinq.f32.pop %v5605
    %vm5609 = vweird.f32 %v3503
    %v5610 = vadd.s32 %v5606, 3
    %v5611 = vand.u32 %v5610, 3
    %vm5612 = vcmp.lt.s32.totalorder %v5611, 2
    %vm5613 = vcmp.eq.s32.totalorder %v5611, 0
    %v5614 = vxor.u32 %v5608, 2147483648
    %v5615 = vsel %vm5613, %v5607, %v5614
    %vm5616 = vcmp.eq.s32.totalorder %v5611, 2
    %v5617 = vxor.u32 %v5607, 2147483648
    %v5618 = vsel %vm5616, %v5617, %v5608
    %v5619 = vsel %vm5612, %v5615, %v5618
    %v5620 = vsel %vm5609, nan, %v5619
    %v5621 = vand.u32 2147483647, %v3507
    %vm5622 = vcmp.le.f32.partialorder %v5621, 0.7853982
    %vm5623 = vcmp.lt.s32.totalorder %v3507, 0
    %v5624 = vand.u32 %v3507, 2139095040
    %v5625 = vshrl.u32 %v5624, 23
    %v5626 = vsub.s32 %v5625, 127
    %v5627 = vand.u32 2147483647, %v3507
    %v5628 = vand.u32 %v5627, 8388607
    %v5629 = vor.u32 %v5628, 8388608
    %v5630 = vsub.s32 0, %v5629
    %v5631 = vadd.s32 %v5626, 1
    %vm5632 = vcmp.gt.s32.totalorder %v5631, 0
    %v5633 = vsel %vm5632, %v5631, 0
    %v5634 = vshrl.u32 %v5633, 5
    %v5635 = vand.u32 %v5633, 31
    %v5636 = vsub.s32 32, %v5635
    %v5637 = vshrl.u32 683565275, %v5636
    %v5638 = vshll.u32 683565275, %v5635
    %v5639 = vshrl.u32 2475754826, %v5636
    %v5640 = vor.u32 %v5638, %v5639
    %v5641 = vshll.u32 2475754826, %v5635
    %v5642 = vshrl.u32 2131351028, %v5636
    %v5643 = vor.u32 %v5641, %v5642
    %v5644 = vshll.u32 2131351028, %v5635
    %v5645 = vshrl.u32 2102212464, %v5636
    %v5646 = vor.u32 %v5644, %v5645
    %v5647 = vshll.u32 2102212464, %v5635
    %v5648 = vshrl.u32 920167782, %v5636
    %v5649 = vor.u32 %v5647, %v5648
    %v5650 = vshll.u32 920167782, %v5635
    %v5651 = vshrl.u32 1326507024, %v5636
    %v5652 = vor.u32 %v5650, %v5651
    %vm5653 = vcmp.lt.s32.totalorder %v5634, 1
    %vm5654 = vcmp.lt.s32.totalorder %v5634, 2
    %vm5655 = vcmp.lt.s32.totalorder %v5634, 3
    %vm5656 = vcmp.lt.s32.totalorder %v5634, 4
    %v5657 = vsel %vm5653, %v5637, %v5640
    %v5658 = vsel %vm5656, %v5646, 2102212464
    %v5659 = vsel %vm5655, %v5643, %v5658
    %v5660 = vsel %vm5654, %v5657, %v5659
    %v5661 = vsel %vm5653, %v5640, %v5643
    %v5662 = vsel %vm5656, %v5649, 920167782
    %v5663 = vsel %vm5655, %v5646, %v5662
    %v5664 = vsel %vm5654, %v5661, %v5663
    %v5665 = vsel %vm5653, %v5643, %v5646
    %v5666 = vsel %vm5656, %v5652, 1326507024
    %v5667 = vsel %vm5655, %v5649, %v5666
    %v5668 = vsel %vm5654, %v5665, %v5667
    %v5669 = vshll.u32 %v5629, 8
    %v5670 = vmul.u32.u64.compose %v5669, %v5668
    %v5671 = vextract.low.u32 %v5670
    %v5672 = vextract.high.u32 %v5670
    %v5673 = vmul.u32.u64.compose %v5669, %v5664
    %v5674 = vextract.low.u32 %v5673
    %v5675 = vextract.high.u32 %v5673
    %v5676 = vmul.u32 %v5669, %v5660
    %v5677 = vadd.s32 %v5672, %v5674
    %vm5678 = vc.u32 %v5672, %v5674
    %v5679 = vadd.s32 %v5675, 1
    %v5680 = vsel %vm5678, %v5679, %v5675
    %v5681 = vadd.s32 %v5676, %v5680
    %v5682 = vadd.s32 %v5681, 536870912
    %v5683 = vshrl.u32 %v5682, 30
    %v5684 = vshll.u32 %v5683, 30
    %v5685 = vsub.s32 %v5681, %v5684
    %vm5686 = vcmp.lt.s32.totalorder %v5685, 0
    %v5687 = vsub.s32 0, %v5685
    %v5688 = vsel %vm5686, %v5687, %v5685
    %v5689 = vclz %v5688
    %v5690 = vsub.s32 %v5689, 2
    %vm5691 = vcmp.gt.s32.totalorder 0, %v5690
    %v5692 = vsel %vm5691, 0, %v5690
    %v5693 = vsub.s32 32, %v5692
    %v5694 = vshll.u32 %v5685, %v5692
    %v5695 = vshrl.u32 %v5677, %v5693
    %v5696 = vor.u32 %v5694, %v5695
    %v5697 = vsub.s32 4294967266, %v5692
    %v5698 = vadd.s32 %v5697, 127
    %v5699 = vshll.u32 %v5698, 23
    %v5700 = vor.u32 4788187, %v5699
    %v5701 = vand.u32 2147483647, %v5700
    %v5703 = vcvt.s32.f32 %v5696
    %v5704 = vmul.f32 %v5703, %v5701
    %v5705 = vxor.u32 %v5704, 2147483648
    %v5706 = vsel %vm5623, %v5705, %v5704
    %v5707 = vsub.s32 4, %v5683
    %v5708 = vsel %vm5623, %v5707, %v5683
    %v5709 = vsel %vm5622, %v3507, %v5706
    %v5710 = vsel %vm5622, 0, %v5708
    %v5711 = vcosq.f32.pop %v5709
    %v5712 = vsinq.f32.pop %v5709
    %vm5713 = vweird.f32 %v3507
    %v5714 = vadd.s32 %v5710, 3
    %v5715 = vand.u32 %v5714, 3
    %vm5716 = vcmp.lt.s32.totalorder %v5715, 2
    %vm5717 = vcmp.eq.s32.totalorder %v5715, 0
    %v5718 = vxor.u32 %v5712, 2147483648
    %v5719 = vsel %vm5717, %v5711, %v5718
    %vm5720 = vcmp.eq.s32.totalorder %v5715, 2
    %v5721 = vxor.u32 %v5711, 2147483648
    %v5722 = vsel %vm5720, %v5721, %v5712
    %v5723 = vsel %vm5716, %v5719, %v5722
    %v5724 = vsel %vm5713, nan, %v5723
    %v5725 = vand.u32 2147483647, %v3509
    %vm5726 = vcmp.le.f32.partialorder %v5725, 0.7853982
    %vm5727 = vcmp.lt.s32.totalorder %v3509, 0
    %v5728 = vand.u32 %v3509, 2139095040
    %v5729 = vshrl.u32 %v5728, 23
    %v5730 = vsub.s32 %v5729, 127
    %v5731 = vand.u32 2147483647, %v3509
    %v5732 = vand.u32 %v5731, 8388607
    %v5733 = vor.u32 %v5732, 8388608
    %v5734 = vsub.s32 0, %v5733
    %v5735 = vadd.s32 %v5730, 1
    %vm5736 = vcmp.gt.s32.totalorder %v5735, 0
    %v5737 = vsel %vm5736, %v5735, 0
    %v5738 = vshrl.u32 %v5737, 5
    %v5739 = vand.u32 %v5737, 31
    %v5740 = vsub.s32 32, %v5739
    %v5741 = vshrl.u32 683565275, %v5740
    %v5742 = vshll.u32 683565275, %v5739
    %v5743 = vshrl.u32 2475754826, %v5740
    %v5744 = vor.u32 %v5742, %v5743
    %v5745 = vshll.u32 2475754826, %v5739
    %v5746 = vshrl.u32 2131351028, %v5740
    %v5747 = vor.u32 %v5745, %v5746
    %v5748 = vshll.u32 2131351028, %v5739
    %v5749 = vshrl.u32 2102212464, %v5740
    %v5750 = vor.u32 %v5748, %v5749
    %v5751 = vshll.u32 2102212464, %v5739
    %v5752 = vshrl.u32 920167782, %v5740
    %v5753 = vor.u32 %v5751, %v5752
    %v5754 = vshll.u32 920167782, %v5739
    %v5755 = vshrl.u32 1326507024, %v5740
    %v5756 = vor.u32 %v5754, %v5755
    %vm5757 = vcmp.lt.s32.totalorder %v5738, 1
    %vm5758 = vcmp.lt.s32.totalorder %v5738, 2
    %vm5759 = vcmp.lt.s32.totalorder %v5738, 3
    %vm5760 = vcmp.lt.s32.totalorder %v5738, 4
    %v5761 = vsel %vm5757, %v5741, %v5744
    %v5762 = vsel %vm5760, %v5750, 2102212464
    %v5763 = vsel %vm5759, %v5747, %v5762
    %v5764 = vsel %vm5758, %v5761, %v5763
    %v5765 = vsel %vm5757, %v5744, %v5747
    %v5766 = vsel %vm5760, %v5753, 920167782
    %v5767 = vsel %vm5759, %v5750, %v5766
    %v5768 = vsel %vm5758, %v5765, %v5767
    %v5769 = vsel %vm5757, %v5747, %v5750
    %v5770 = vsel %vm5760, %v5756, 1326507024
    %v5771 = vsel %vm5759, %v5753, %v5770
    %v5772 = vsel %vm5758, %v5769, %v5771
    %v5773 = vshll.u32 %v5733, 8
    %v5774 = vmul.u32.u64.compose %v5773, %v5772
    %v5775 = vextract.low.u32 %v5774
    %v5776 = vextract.high.u32 %v5774
    %v5777 = vmul.u32.u64.compose %v5773, %v5768
    %v5778 = vextract.low.u32 %v5777
    %v5779 = vextract.high.u32 %v5777
    %v5780 = vmul.u32 %v5773, %v5764
    %v5781 = vadd.s32 %v5776, %v5778
    %vm5782 = vc.u32 %v5776, %v5778
    %v5783 = vadd.s32 %v5779, 1
    %v5784 = vsel %vm5782, %v5783, %v5779
    %v5785 = vadd.s32 %v5780, %v5784
    %v5786 = vadd.s32 %v5785, 536870912
    %v5787 = vshrl.u32 %v5786, 30
    %v5788 = vshll.u32 %v5787, 30
    %v5789 = vsub.s32 %v5785, %v5788
    %vm5790 = vcmp.lt.s32.totalorder %v5789, 0
    %v5791 = vsub.s32 0, %v5789
    %v5792 = vsel %vm5790, %v5791, %v5789
    %v5793 = vclz %v5792
    %v5794 = vsub.s32 %v5793, 2
    %vm5795 = vcmp.gt.s32.totalorder 0, %v5794
    %v5796 = vsel %vm5795, 0, %v5794
    %v5797 = vsub.s32 32, %v5796
    %v5798 = vshll.u32 %v5789, %v5796
    %v5799 = vshrl.u32 %v5781, %v5797
    %v5800 = vor.u32 %v5798, %v5799
    %v5801 = vsub.s32 4294967266, %v5796
    %v5802 = vadd.s32 %v5801, 127
    %v5803 = vshll.u32 %v5802, 23
    %v5804 = vor.u32 4788187, %v5803
    %v5805 = vand.u32 2147483647, %v5804
    %v5807 = vcvt.s32.f32 %v5800
    %v5808 = vmul.f32 %v5807, %v5805
    %v5809 = vxor.u32 %v5808, 2147483648
    %v5810 = vsel %vm5727, %v5809, %v5808
    %v5811 = vsub.s32 4, %v5787
    %v5812 = vsel %vm5727, %v5811, %v5787
    %v5813 = vsel %vm5726, %v3509, %v5810
    %v5814 = vsel %vm5726, 0, %v5812
    %v5815 = vcosq.f32.pop %v5813
    %v5816 = vsinq.f32.pop %v5813
    %vm5817 = vweird.f32 %v3509
    %v5818 = vadd.s32 %v5814, 3
    %v5819 = vand.u32 %v5818, 3
    %vm5820 = vcmp.lt.s32.totalorder %v5819, 2
    %vm5821 = vcmp.eq.s32.totalorder %v5819, 0
    %v5822 = vxor.u32 %v5816, 2147483648
    %v5823 = vsel %vm5821, %v5815, %v5822
    %vm5824 = vcmp.eq.s32.totalorder %v5819, 2
    %v5825 = vxor.u32 %v5815, 2147483648
    %v5826 = vsel %vm5824, %v5825, %v5816
    %v5827 = vsel %vm5820, %v5823, %v5826
    %v5828 = vsel %vm5817, nan, %v5827
    %v5829 = vand.u32 2147483647, %v3513
    %vm5830 = vcmp.le.f32.partialorder %v5829, 0.7853982
    %vm5831 = vcmp.lt.s32.totalorder %v3513, 0
    %v5832 = vand.u32 %v3513, 2139095040
    %v5833 = vshrl.u32 %v5832, 23
    %v5834 = vsub.s32 %v5833, 127
    %v5835 = vand.u32 2147483647, %v3513
    %v5836 = vand.u32 %v5835, 8388607
    %v5837 = vor.u32 %v5836, 8388608
    %v5838 = vsub.s32 0, %v5837
    %v5839 = vadd.s32 %v5834, 1
    %vm5840 = vcmp.gt.s32.totalorder %v5839, 0
    %v5841 = vsel %vm5840, %v5839, 0
    %v5842 = vshrl.u32 %v5841, 5
    %v5843 = vand.u32 %v5841, 31
    %v5844 = vsub.s32 32, %v5843
    %v5845 = vshrl.u32 683565275, %v5844
    %v5846 = vshll.u32 683565275, %v5843
    %v5847 = vshrl.u32 2475754826, %v5844
    %v5848 = vor.u32 %v5846, %v5847
    %v5849 = vshll.u32 2475754826, %v5843
    %v5850 = vshrl.u32 2131351028, %v5844
    %v5851 = vor.u32 %v5849, %v5850
    %v5852 = vshll.u32 2131351028, %v5843
    %v5853 = vshrl.u32 2102212464, %v5844
    %v5854 = vor.u32 %v5852, %v5853
    %v5855 = vshll.u32 2102212464, %v5843
    %v5856 = vshrl.u32 920167782, %v5844
    %v5857 = vor.u32 %v5855, %v5856
    %v5858 = vshll.u32 920167782, %v5843
    %v5859 = vshrl.u32 1326507024, %v5844
    %v5860 = vor.u32 %v5858, %v5859
    %vm5861 = vcmp.lt.s32.totalorder %v5842, 1
    %vm5862 = vcmp.lt.s32.totalorder %v5842, 2
    %vm5863 = vcmp.lt.s32.totalorder %v5842, 3
    %vm5864 = vcmp.lt.s32.totalorder %v5842, 4
    %v5865 = vsel %vm5861, %v5845, %v5848
    %v5866 = vsel %vm5864, %v5854, 2102212464
    %v5867 = vsel %vm5863, %v5851, %v5866
    %v5868 = vsel %vm5862, %v5865, %v5867
    %v5869 = vsel %vm5861, %v5848, %v5851
    %v5870 = vsel %vm5864, %v5857, 920167782
    %v5871 = vsel %vm5863, %v5854, %v5870
    %v5872 = vsel %vm5862, %v5869, %v5871
    %v5873 = vsel %vm5861, %v5851, %v5854
    %v5874 = vsel %vm5864, %v5860, 1326507024
    %v5875 = vsel %vm5863, %v5857, %v5874
    %v5876 = vsel %vm5862, %v5873, %v5875
    %v5877 = vshll.u32 %v5837, 8
    %v5878 = vmul.u32.u64.compose %v5877, %v5876
    %v5879 = vextract.low.u32 %v5878
    %v5880 = vextract.high.u32 %v5878
    %v5881 = vmul.u32.u64.compose %v5877, %v5872
    %v5882 = vextract.low.u32 %v5881
    %v5883 = vextract.high.u32 %v5881
    %v5884 = vmul.u32 %v5877, %v5868
    %v5885 = vadd.s32 %v5880, %v5882
    %vm5886 = vc.u32 %v5880, %v5882
    %v5887 = vadd.s32 %v5883, 1
    %v5888 = vsel %vm5886, %v5887, %v5883
    %v5889 = vadd.s32 %v5884, %v5888
    %v5890 = vadd.s32 %v5889, 536870912
    %v5891 = vshrl.u32 %v5890, 30
    %v5892 = vshll.u32 %v5891, 30
    %v5893 = vsub.s32 %v5889, %v5892
    %vm5894 = vcmp.lt.s32.totalorder %v5893, 0
    %v5895 = vsub.s32 0, %v5893
    %v5896 = vsel %vm5894, %v5895, %v5893
    %v5897 = vclz %v5896
    %v5898 = vsub.s32 %v5897, 2
    %vm5899 = vcmp.gt.s32.totalorder 0, %v5898
    %v5900 = vsel %vm5899, 0, %v5898
    %v5901 = vsub.s32 32, %v5900
    %v5902 = vshll.u32 %v5893, %v5900
    %v5903 = vshrl.u32 %v5885, %v5901
    %v5904 = vor.u32 %v5902, %v5903
    %v5905 = vsub.s32 4294967266, %v5900
    %v5906 = vadd.s32 %v5905, 127
    %v5907 = vshll.u32 %v5906, 23
    %v5908 = vor.u32 4788187, %v5907
    %v5909 = vand.u32 2147483647, %v5908
    %v5911 = vcvt.s32.f32 %v5904
    %v5912 = vmul.f32 %v5911, %v5909
    %v5913 = vxor.u32 %v5912, 2147483648
    %v5914 = vsel %vm5831, %v5913, %v5912
    %v5915 = vsub.s32 4, %v5891
    %v5916 = vsel %vm5831, %v5915, %v5891
    %v5917 = vsel %vm5830, %v3513, %v5914
    %v5918 = vsel %vm5830, 0, %v5916
    %v5919 = vcosq.f32.pop %v5917
    %v5920 = vsinq.f32.pop %v5917
    %vm5921 = vweird.f32 %v3513
    %v5922 = vadd.s32 %v5918, 3
    %v5923 = vand.u32 %v5922, 3
    %vm5924 = vcmp.lt.s32.totalorder %v5923, 2
    %vm5925 = vcmp.eq.s32.totalorder %v5923, 0
    %v5926 = vxor.u32 %v5920, 2147483648
    %v5927 = vsel %vm5925, %v5919, %v5926
    %vm5928 = vcmp.eq.s32.totalorder %v5923, 2
    %v5929 = vxor.u32 %v5919, 2147483648
    %v5930 = vsel %vm5928, %v5929, %v5920
    %v5931 = vsel %vm5924, %v5927, %v5930
    %v5932 = vsel %vm5921, nan, %v5931
    %v5933 = vand.u32 2147483647, %v3515
    %vm5934 = vcmp.le.f32.partialorder %v5933, 0.7853982
    %vm5935 = vcmp.lt.s32.totalorder %v3515, 0
    %v5936 = vand.u32 %v3515, 2139095040
    %v5937 = vshrl.u32 %v5936, 23
    %v5938 = vsub.s32 %v5937, 127
    %v5939 = vand.u32 2147483647, %v3515
    %v5940 = vand.u32 %v5939, 8388607
    %v5941 = vor.u32 %v5940, 8388608
    %v5942 = vsub.s32 0, %v5941
    %v5943 = vadd.s32 %v5938, 1
    %vm5944 = vcmp.gt.s32.totalorder %v5943, 0
    %v5945 = vsel %vm5944, %v5943, 0
    %v5946 = vshrl.u32 %v5945, 5
    %v5947 = vand.u32 %v5945, 31
    %v5948 = vsub.s32 32, %v5947
    %v5949 = vshrl.u32 683565275, %v5948
    %v5950 = vshll.u32 683565275, %v5947
    %v5951 = vshrl.u32 2475754826, %v5948
    %v5952 = vor.u32 %v5950, %v5951
    %v5953 = vshll.u32 2475754826, %v5947
    %v5954 = vshrl.u32 2131351028, %v5948
    %v5955 = vor.u32 %v5953, %v5954
    %v5956 = vshll.u32 2131351028, %v5947
    %v5957 = vshrl.u32 2102212464, %v5948
    %v5958 = vor.u32 %v5956, %v5957
    %v5959 = vshll.u32 2102212464, %v5947
    %v5960 = vshrl.u32 920167782, %v5948
    %v5961 = vor.u32 %v5959, %v5960
    %v5962 = vshll.u32 920167782, %v5947
    %v5963 = vshrl.u32 1326507024, %v5948
    %v5964 = vor.u32 %v5962, %v5963
    %vm5965 = vcmp.lt.s32.totalorder %v5946, 1
    %vm5966 = vcmp.lt.s32.totalorder %v5946, 2
    %vm5967 = vcmp.lt.s32.totalorder %v5946, 3
    %vm5968 = vcmp.lt.s32.totalorder %v5946, 4
    %v5969 = vsel %vm5965, %v5949, %v5952
    %v5970 = vsel %vm5968, %v5958, 2102212464
    %v5971 = vsel %vm5967, %v5955, %v5970
    %v5972 = vsel %vm5966, %v5969, %v5971
    %v5973 = vsel %vm5965, %v5952, %v5955
    %v5974 = vsel %vm5968, %v5961, 920167782
    %v5975 = vsel %vm5967, %v5958, %v5974
    %v5976 = vsel %vm5966, %v5973, %v5975
    %v5977 = vsel %vm5965, %v5955, %v5958
    %v5978 = vsel %vm5968, %v5964, 1326507024
    %v5979 = vsel %vm5967, %v5961, %v5978
    %v5980 = vsel %vm5966, %v5977, %v5979
    %v5981 = vshll.u32 %v5941, 8
    %v5982 = vmul.u32.u64.compose %v5981, %v5980
    %v5983 = vextract.low.u32 %v5982
    %v5984 = vextract.high.u32 %v5982
    %v5985 = vmul.u32.u64.compose %v5981, %v5976
    %v5986 = vextract.low.u32 %v5985
    %v5987 = vextract.high.u32 %v5985
    %v5988 = vmul.u32 %v5981, %v5972
    %v5989 = vadd.s32 %v5984, %v5986
    %vm5990 = vc.u32 %v5984, %v5986
    %v5991 = vadd.s32 %v5987, 1
    %v5992 = vsel %vm5990, %v5991, %v5987
    %v5993 = vadd.s32 %v5988, %v5992
    %v5994 = vadd.s32 %v5993, 536870912
    %v5995 = vshrl.u32 %v5994, 30
    %v5996 = vshll.u32 %v5995, 30
    %v5997 = vsub.s32 %v5993, %v5996
    %vm5998 = vcmp.lt.s32.totalorder %v5997, 0
    %v5999 = vsub.s32 0, %v5997
    %v6000 = vsel %vm5998, %v5999, %v5997
    %v6001 = vclz %v6000
    %v6002 = vsub.s32 %v6001, 2
    %vm6003 = vcmp.gt.s32.totalorder 0, %v6002
    %v6004 = vsel %vm6003, 0, %v6002
    %v6005 = vsub.s32 32, %v6004
    %v6006 = vshll.u32 %v5997, %v6004
    %v6007 = vshrl.u32 %v5989, %v6005
    %v6008 = vor.u32 %v6006, %v6007
    %v6009 = vsub.s32 4294967266, %v6004
    %v6010 = vadd.s32 %v6009, 127
    %v6011 = vshll.u32 %v6010, 23
    %v6012 = vor.u32 4788187, %v6011
    %v6013 = vand.u32 2147483647, %v6012
    %v6015 = vcvt.s32.f32 %v6008
    %v6016 = vmul.f32 %v6015, %v6013
    %v6017 = vxor.u32 %v6016, 2147483648
    %v6018 = vsel %vm5935, %v6017, %v6016
    %v6019 = vsub.s32 4, %v5995
    %v6020 = vsel %vm5935, %v6019, %v5995
    %v6021 = vsel %vm5934, %v3515, %v6018
    %v6022 = vsel %vm5934, 0, %v6020
    %v6023 = vcosq.f32.pop %v6021
    %v6024 = vsinq.f32.pop %v6021
    %vm6025 = vweird.f32 %v3515
    %v6026 = vadd.s32 %v6022, 3
    %v6027 = vand.u32 %v6026, 3
    %vm6028 = vcmp.lt.s32.totalorder %v6027, 2
    %vm6029 = vcmp.eq.s32.totalorder %v6027, 0
    %v6030 = vxor.u32 %v6024, 2147483648
    %v6031 = vsel %vm6029, %v6023, %v6030
    %vm6032 = vcmp.eq.s32.totalorder %v6027, 2
    %v6033 = vxor.u32 %v6023, 2147483648
    %v6034 = vsel %vm6032, %v6033, %v6024
    %v6035 = vsel %vm6028, %v6031, %v6034
    %v6036 = vsel %vm6025, nan, %v6035
    %v6037 = vand.u32 2147483647, %v3519
    %vm6038 = vcmp.le.f32.partialorder %v6037, 0.7853982
    %vm6039 = vcmp.lt.s32.totalorder %v3519, 0
    %v6040 = vand.u32 %v3519, 2139095040
    %v6041 = vshrl.u32 %v6040, 23
    %v6042 = vsub.s32 %v6041, 127
    %v6043 = vand.u32 2147483647, %v3519
    %v6044 = vand.u32 %v6043, 8388607
    %v6045 = vor.u32 %v6044, 8388608
    %v6046 = vsub.s32 0, %v6045
    %v6047 = vadd.s32 %v6042, 1
    %vm6048 = vcmp.gt.s32.totalorder %v6047, 0
    %v6049 = vsel %vm6048, %v6047, 0
    %v6050 = vshrl.u32 %v6049, 5
    %v6051 = vand.u32 %v6049, 31
    %v6052 = vsub.s32 32, %v6051
    %v6053 = vshrl.u32 683565275, %v6052
    %v6054 = vshll.u32 683565275, %v6051
    %v6055 = vshrl.u32 2475754826, %v6052
    %v6056 = vor.u32 %v6054, %v6055
    %v6057 = vshll.u32 2475754826, %v6051
    %v6058 = vshrl.u32 2131351028, %v6052
    %v6059 = vor.u32 %v6057, %v6058
    %v6060 = vshll.u32 2131351028, %v6051
    %v6061 = vshrl.u32 2102212464, %v6052
    %v6062 = vor.u32 %v6060, %v6061
    %v6063 = vshll.u32 2102212464, %v6051
    %v6064 = vshrl.u32 920167782, %v6052
    %v6065 = vor.u32 %v6063, %v6064
    %v6066 = vshll.u32 920167782, %v6051
    %v6067 = vshrl.u32 1326507024, %v6052
    %v6068 = vor.u32 %v6066, %v6067
    %vm6069 = vcmp.lt.s32.totalorder %v6050, 1
    %vm6070 = vcmp.lt.s32.totalorder %v6050, 2
    %vm6071 = vcmp.lt.s32.totalorder %v6050, 3
    %vm6072 = vcmp.lt.s32.totalorder %v6050, 4
    %v6073 = vsel %vm6069, %v6053, %v6056
    %v6074 = vsel %vm6072, %v6062, 2102212464
    %v6075 = vsel %vm6071, %v6059, %v6074
    %v6076 = vsel %vm6070, %v6073, %v6075
    %v6077 = vsel %vm6069, %v6056, %v6059
    %v6078 = vsel %vm6072, %v6065, 920167782
    %v6079 = vsel %vm6071, %v6062, %v6078
    %v6080 = vsel %vm6070, %v6077, %v6079
    %v6081 = vsel %vm6069, %v6059, %v6062
    %v6082 = vsel %vm6072, %v6068, 1326507024
    %v6083 = vsel %vm6071, %v6065, %v6082
    %v6084 = vsel %vm6070, %v6081, %v6083
    %v6085 = vshll.u32 %v6045, 8
    %v6086 = vmul.u32.u64.compose %v6085, %v6084
    %v6087 = vextract.low.u32 %v6086
    %v6088 = vextract.high.u32 %v6086
    %v6089 = vmul.u32.u64.compose %v6085, %v6080
    %v6090 = vextract.low.u32 %v6089
    %v6091 = vextract.high.u32 %v6089
    %v6092 = vmul.u32 %v6085, %v6076
    %v6093 = vadd.s32 %v6088, %v6090
    %vm6094 = vc.u32 %v6088, %v6090
    %v6095 = vadd.s32 %v6091, 1
    %v6096 = vsel %vm6094, %v6095, %v6091
    %v6097 = vadd.s32 %v6092, %v6096
    %v6098 = vadd.s32 %v6097, 536870912
    %v6099 = vshrl.u32 %v6098, 30
    %v6100 = vshll.u32 %v6099, 30
    %v6101 = vsub.s32 %v6097, %v6100
    %vm6102 = vcmp.lt.s32.totalorder %v6101, 0
    %v6103 = vsub.s32 0, %v6101
    %v6104 = vsel %vm6102, %v6103, %v6101
    %v6105 = vclz %v6104
    %v6106 = vsub.s32 %v6105, 2
    %vm6107 = vcmp.gt.s32.totalorder 0, %v6106
    %v6108 = vsel %vm6107, 0, %v6106
    %v6109 = vsub.s32 32, %v6108
    %v6110 = vshll.u32 %v6101, %v6108
    %v6111 = vshrl.u32 %v6093, %v6109
    %v6112 = vor.u32 %v6110, %v6111
    %v6113 = vsub.s32 4294967266, %v6108
    %v6114 = vadd.s32 %v6113, 127
    %v6115 = vshll.u32 %v6114, 23
    %v6116 = vor.u32 4788187, %v6115
    %v6117 = vand.u32 2147483647, %v6116
    %v6119 = vcvt.s32.f32 %v6112
    %v6120 = vmul.f32 %v6119, %v6117
    %v6121 = vxor.u32 %v6120, 2147483648
    %v6122 = vsel %vm6039, %v6121, %v6120
    %v6123 = vsub.s32 4, %v6099
    %v6124 = vsel %vm6039, %v6123, %v6099
    %v6125 = vsel %vm6038, %v3519, %v6122
    %v6126 = vsel %vm6038, 0, %v6124
    %v6127 = vcosq.f32.pop %v6125
    %v6128 = vsinq.f32.pop %v6125
    %vm6129 = vweird.f32 %v3519
    %v6130 = vadd.s32 %v6126, 3
    %v6131 = vand.u32 %v6130, 3
    %vm6132 = vcmp.lt.s32.totalorder %v6131, 2
    %vm6133 = vcmp.eq.s32.totalorder %v6131, 0
    %v6134 = vxor.u32 %v6128, 2147483648
    %v6135 = vsel %vm6133, %v6127, %v6134
    %vm6136 = vcmp.eq.s32.totalorder %v6131, 2
    %v6137 = vxor.u32 %v6127, 2147483648
    %v6138 = vsel %vm6136, %v6137, %v6128
    %v6139 = vsel %vm6132, %v6135, %v6138
    %v6140 = vsel %vm6129, nan, %v6139
    %v6141 = vand.u32 2147483647, %v3521
    %vm6142 = vcmp.le.f32.partialorder %v6141, 0.7853982
    %vm6143 = vcmp.lt.s32.totalorder %v3521, 0
    %v6144 = vand.u32 %v3521, 2139095040
    %v6145 = vshrl.u32 %v6144, 23
    %v6146 = vsub.s32 %v6145, 127
    %v6147 = vand.u32 2147483647, %v3521
    %v6148 = vand.u32 %v6147, 8388607
    %v6149 = vor.u32 %v6148, 8388608
    %v6150 = vsub.s32 0, %v6149
    %v6151 = vadd.s32 %v6146, 1
    %vm6152 = vcmp.gt.s32.totalorder %v6151, 0
    %v6153 = vsel %vm6152, %v6151, 0
    %v6154 = vshrl.u32 %v6153, 5
    %v6155 = vand.u32 %v6153, 31
    %v6156 = vsub.s32 32, %v6155
    %v6157 = vshrl.u32 683565275, %v6156
    %v6158 = vshll.u32 683565275, %v6155
    %v6159 = vshrl.u32 2475754826, %v6156
    %v6160 = vor.u32 %v6158, %v6159
    %v6161 = vshll.u32 2475754826, %v6155
    %v6162 = vshrl.u32 2131351028, %v6156
    %v6163 = vor.u32 %v6161, %v6162
    %v6164 = vshll.u32 2131351028, %v6155
    %v6165 = vshrl.u32 2102212464, %v6156
    %v6166 = vor.u32 %v6164, %v6165
    %v6167 = vshll.u32 2102212464, %v6155
    %v6168 = vshrl.u32 920167782, %v6156
    %v6169 = vor.u32 %v6167, %v6168
    %v6170 = vshll.u32 920167782, %v6155
    %v6171 = vshrl.u32 1326507024, %v6156
    %v6172 = vor.u32 %v6170, %v6171
    %vm6173 = vcmp.lt.s32.totalorder %v6154, 1
    %vm6174 = vcmp.lt.s32.totalorder %v6154, 2
    %vm6175 = vcmp.lt.s32.totalorder %v6154, 3
    %vm6176 = vcmp.lt.s32.totalorder %v6154, 4
    %v6177 = vsel %vm6173, %v6157, %v6160
    %v6178 = vsel %vm6176, %v6166, 2102212464
    %v6179 = vsel %vm6175, %v6163, %v6178
    %v6180 = vsel %vm6174, %v6177, %v6179
    %v6181 = vsel %vm6173, %v6160, %v6163
    %v6182 = vsel %vm6176, %v6169, 920167782
    %v6183 = vsel %vm6175, %v6166, %v6182
    %v6184 = vsel %vm6174, %v6181, %v6183
    %v6185 = vsel %vm6173, %v6163, %v6166
    %v6186 = vsel %vm6176, %v6172, 1326507024
    %v6187 = vsel %vm6175, %v6169, %v6186
    %v6188 = vsel %vm6174, %v6185, %v6187
    %v6189 = vshll.u32 %v6149, 8
    %v6190 = vmul.u32.u64.compose %v6189, %v6188
    %v6191 = vextract.low.u32 %v6190
    %v6192 = vextract.high.u32 %v6190
    %v6193 = vmul.u32.u64.compose %v6189, %v6184
    %v6194 = vextract.low.u32 %v6193
    %v6195 = vextract.high.u32 %v6193
    %v6196 = vmul.u32 %v6189, %v6180
    %v6197 = vadd.s32 %v6192, %v6194
    %vm6198 = vc.u32 %v6192, %v6194
    %v6199 = vadd.s32 %v6195, 1
    %v6200 = vsel %vm6198, %v6199, %v6195
    %v6201 = vadd.s32 %v6196, %v6200
    %v6202 = vadd.s32 %v6201, 536870912
    %v6203 = vshrl.u32 %v6202, 30
    %v6204 = vshll.u32 %v6203, 30
    %v6205 = vsub.s32 %v6201, %v6204
    %vm6206 = vcmp.lt.s32.totalorder %v6205, 0
    %v6207 = vsub.s32 0, %v6205
    %v6208 = vsel %vm6206, %v6207, %v6205
    %v6209 = vclz %v6208
    %v6210 = vsub.s32 %v6209, 2
    %vm6211 = vcmp.gt.s32.totalorder 0, %v6210
    %v6212 = vsel %vm6211, 0, %v6210
    %v6213 = vsub.s32 32, %v6212
    %v6214 = vshll.u32 %v6205, %v6212
    %v6215 = vshrl.u32 %v6197, %v6213
    %v6216 = vor.u32 %v6214, %v6215
    %v6217 = vsub.s32 4294967266, %v6212
    %v6218 = vadd.s32 %v6217, 127
    %v6219 = vshll.u32 %v6218, 23
    %v6220 = vor.u32 4788187, %v6219
    %v6221 = vand.u32 2147483647, %v6220
    %v6223 = vcvt.s32.f32 %v6216
    %v6224 = vmul.f32 %v6223, %v6221
    %v6225 = vxor.u32 %v6224, 2147483648
    %v6226 = vsel %vm6143, %v6225, %v6224
    %v6227 = vsub.s32 4, %v6203
    %v6228 = vsel %vm6143, %v6227, %v6203
    %v6229 = vsel %vm6142, %v3521, %v6226
    %v6230 = vsel %vm6142, 0, %v6228
    %v6231 = vcosq.f32.pop %v6229
    %v6232 = vsinq.f32.pop %v6229
    %vm6233 = vweird.f32 %v3521
    %v6234 = vadd.s32 %v6230, 3
    %v6235 = vand.u32 %v6234, 3
    %vm6236 = vcmp.lt.s32.totalorder %v6235, 2
    %vm6237 = vcmp.eq.s32.totalorder %v6235, 0
    %v6238 = vxor.u32 %v6232, 2147483648
    %v6239 = vsel %vm6237, %v6231, %v6238
    %vm6240 = vcmp.eq.s32.totalorder %v6235, 2
    %v6241 = vxor.u32 %v6231, 2147483648
    %v6242 = vsel %vm6240, %v6241, %v6232
    %v6243 = vsel %vm6236, %v6239, %v6242
    %v6244 = vsel %vm6233, nan, %v6243
    %v6245 = vand.u32 2147483647, %v3525
    %vm6246 = vcmp.le.f32.partialorder %v6245, 0.7853982
    %vm6247 = vcmp.lt.s32.totalorder %v3525, 0
    %v6248 = vand.u32 %v3525, 2139095040
    %v6249 = vshrl.u32 %v6248, 23
    %v6250 = vsub.s32 %v6249, 127
    %v6251 = vand.u32 2147483647, %v3525
    %v6252 = vand.u32 %v6251, 8388607
    %v6253 = vor.u32 %v6252, 8388608
    %v6254 = vsub.s32 0, %v6253
    %v6255 = vadd.s32 %v6250, 1
    %vm6256 = vcmp.gt.s32.totalorder %v6255, 0
    %v6257 = vsel %vm6256, %v6255, 0
    %v6258 = vshrl.u32 %v6257, 5
    %v6259 = vand.u32 %v6257, 31
    %v6260 = vsub.s32 32, %v6259
    %v6261 = vshrl.u32 683565275, %v6260
    %v6262 = vshll.u32 683565275, %v6259
    %v6263 = vshrl.u32 2475754826, %v6260
    %v6264 = vor.u32 %v6262, %v6263
    %v6265 = vshll.u32 2475754826, %v6259
    %v6266 = vshrl.u32 2131351028, %v6260
    %v6267 = vor.u32 %v6265, %v6266
    %v6268 = vshll.u32 2131351028, %v6259
    %v6269 = vshrl.u32 2102212464, %v6260
    %v6270 = vor.u32 %v6268, %v6269
    %v6271 = vshll.u32 2102212464, %v6259
    %v6272 = vshrl.u32 920167782, %v6260
    %v6273 = vor.u32 %v6271, %v6272
    %v6274 = vshll.u32 920167782, %v6259
    %v6275 = vshrl.u32 1326507024, %v6260
    %v6276 = vor.u32 %v6274, %v6275
    %vm6277 = vcmp.lt.s32.totalorder %v6258, 1
    %vm6278 = vcmp.lt.s32.totalorder %v6258, 2
    %vm6279 = vcmp.lt.s32.totalorder %v6258, 3
    %vm6280 = vcmp.lt.s32.totalorder %v6258, 4
    %v6281 = vsel %vm6277, %v6261, %v6264
    %v6282 = vsel %vm6280, %v6270, 2102212464
    %v6283 = vsel %vm6279, %v6267, %v6282
    %v6284 = vsel %vm6278, %v6281, %v6283
    %v6285 = vsel %vm6277, %v6264, %v6267
    %v6286 = vsel %vm6280, %v6273, 920167782
    %v6287 = vsel %vm6279, %v6270, %v6286
    %v6288 = vsel %vm6278, %v6285, %v6287
    %v6289 = vsel %vm6277, %v6267, %v6270
    %v6290 = vsel %vm6280, %v6276, 1326507024
    %v6291 = vsel %vm6279, %v6273, %v6290
    %v6292 = vsel %vm6278, %v6289, %v6291
    %v6293 = vshll.u32 %v6253, 8
    %v6294 = vmul.u32.u64.compose %v6293, %v6292
    %v6295 = vextract.low.u32 %v6294
    %v6296 = vextract.high.u32 %v6294
    %v6297 = vmul.u32.u64.compose %v6293, %v6288
    %v6298 = vextract.low.u32 %v6297
    %v6299 = vextract.high.u32 %v6297
    %v6300 = vmul.u32 %v6293, %v6284
    %v6301 = vadd.s32 %v6296, %v6298
    %vm6302 = vc.u32 %v6296, %v6298
    %v6303 = vadd.s32 %v6299, 1
    %v6304 = vsel %vm6302, %v6303, %v6299
    %v6305 = vadd.s32 %v6300, %v6304
    %v6306 = vadd.s32 %v6305, 536870912
    %v6307 = vshrl.u32 %v6306, 30
    %v6308 = vshll.u32 %v6307, 30
    %v6309 = vsub.s32 %v6305, %v6308
    %vm6310 = vcmp.lt.s32.totalorder %v6309, 0
    %v6311 = vsub.s32 0, %v6309
    %v6312 = vsel %vm6310, %v6311, %v6309
    %v6313 = vclz %v6312
    %v6314 = vsub.s32 %v6313, 2
    %vm6315 = vcmp.gt.s32.totalorder 0, %v6314
    %v6316 = vsel %vm6315, 0, %v6314
    %v6317 = vsub.s32 32, %v6316
    %v6318 = vshll.u32 %v6309, %v6316
    %v6319 = vshrl.u32 %v6301, %v6317
    %v6320 = vor.u32 %v6318, %v6319
    %v6321 = vsub.s32 4294967266, %v6316
    %v6322 = vadd.s32 %v6321, 127
    %v6323 = vshll.u32 %v6322, 23
    %v6324 = vor.u32 4788187, %v6323
    %v6325 = vand.u32 2147483647, %v6324
    %v6327 = vcvt.s32.f32 %v6320
    %v6328 = vmul.f32 %v6327, %v6325
    %v6329 = vxor.u32 %v6328, 2147483648
    %v6330 = vsel %vm6247, %v6329, %v6328
    %v6331 = vsub.s32 4, %v6307
    %v6332 = vsel %vm6247, %v6331, %v6307
    %v6333 = vsel %vm6246, %v3525, %v6330
    %v6334 = vsel %vm6246, 0, %v6332
    %v6335 = vcosq.f32.pop %v6333
    %v6336 = vsinq.f32.pop %v6333
    %vm6337 = vweird.f32 %v3525
    %v6338 = vadd.s32 %v6334, 3
    %v6339 = vand.u32 %v6338, 3
    %vm6340 = vcmp.lt.s32.totalorder %v6339, 2
    %vm6341 = vcmp.eq.s32.totalorder %v6339, 0
    %v6342 = vxor.u32 %v6336, 2147483648
    %v6343 = vsel %vm6341, %v6335, %v6342
    %vm6344 = vcmp.eq.s32.totalorder %v6339, 2
    %v6345 = vxor.u32 %v6335, 2147483648
    %v6346 = vsel %vm6344, %v6345, %v6336
    %v6347 = vsel %vm6340, %v6343, %v6346
    %v6348 = vsel %vm6337, nan, %v6347
    %v6349 = vand.u32 2147483647, %v3527
    %vm6350 = vcmp.le.f32.partialorder %v6349, 0.7853982
    %vm6351 = vcmp.lt.s32.totalorder %v3527, 0
    %v6352 = vand.u32 %v3527, 2139095040
    %v6353 = vshrl.u32 %v6352, 23
    %v6354 = vsub.s32 %v6353, 127
    %v6355 = vand.u32 2147483647, %v3527
    %v6356 = vand.u32 %v6355, 8388607
    %v6357 = vor.u32 %v6356, 8388608
    %v6358 = vsub.s32 0, %v6357
    %v6359 = vadd.s32 %v6354, 1
    %vm6360 = vcmp.gt.s32.totalorder %v6359, 0
    %v6361 = vsel %vm6360, %v6359, 0
    %v6362 = vshrl.u32 %v6361, 5
    %v6363 = vand.u32 %v6361, 31
    %v6364 = vsub.s32 32, %v6363
    %v6365 = vshrl.u32 683565275, %v6364
    %v6366 = vshll.u32 683565275, %v6363
    %v6367 = vshrl.u32 2475754826, %v6364
    %v6368 = vor.u32 %v6366, %v6367
    %v6369 = vshll.u32 2475754826, %v6363
    %v6370 = vshrl.u32 2131351028, %v6364
    %v6371 = vor.u32 %v6369, %v6370
    %v6372 = vshll.u32 2131351028, %v6363
    %v6373 = vshrl.u32 2102212464, %v6364
    %v6374 = vor.u32 %v6372, %v6373
    %v6375 = vshll.u32 2102212464, %v6363
    %v6376 = vshrl.u32 920167782, %v6364
    %v6377 = vor.u32 %v6375, %v6376
    %v6378 = vshll.u32 920167782, %v6363
    %v6379 = vshrl.u32 1326507024, %v6364
    %v6380 = vor.u32 %v6378, %v6379
    %vm6381 = vcmp.lt.s32.totalorder %v6362, 1
    %vm6382 = vcmp.lt.s32.totalorder %v6362, 2
    %vm6383 = vcmp.lt.s32.totalorder %v6362, 3
    %vm6384 = vcmp.lt.s32.totalorder %v6362, 4
    %v6385 = vsel %vm6381, %v6365, %v6368
    %v6386 = vsel %vm6384, %v6374, 2102212464
    %v6387 = vsel %vm6383, %v6371, %v6386
    %v6388 = vsel %vm6382, %v6385, %v6387
    %v6389 = vsel %vm6381, %v6368, %v6371
    %v6390 = vsel %vm6384, %v6377, 920167782
    %v6391 = vsel %vm6383, %v6374, %v6390
    %v6392 = vsel %vm6382, %v6389, %v6391
    %v6393 = vsel %vm6381, %v6371, %v6374
    %v6394 = vsel %vm6384, %v6380, 1326507024
    %v6395 = vsel %vm6383, %v6377, %v6394
    %v6396 = vsel %vm6382, %v6393, %v6395
    %v6397 = vshll.u32 %v6357, 8
    %v6398 = vmul.u32.u64.compose %v6397, %v6396
    %v6399 = vextract.low.u32 %v6398
    %v6400 = vextract.high.u32 %v6398
    %v6401 = vmul.u32.u64.compose %v6397, %v6392
    %v6402 = vextract.low.u32 %v6401
    %v6403 = vextract.high.u32 %v6401
    %v6404 = vmul.u32 %v6397, %v6388
    %v6405 = vadd.s32 %v6400, %v6402
    %vm6406 = vc.u32 %v6400, %v6402
    %v6407 = vadd.s32 %v6403, 1
    %v6408 = vsel %vm6406, %v6407, %v6403
    %v6409 = vadd.s32 %v6404, %v6408
    %v6410 = vadd.s32 %v6409, 536870912
    %v6411 = vshrl.u32 %v6410, 30
    %v6412 = vshll.u32 %v6411, 30
    %v6413 = vsub.s32 %v6409, %v6412
    %vm6414 = vcmp.lt.s32.totalorder %v6413, 0
    %v6415 = vsub.s32 0, %v6413
    %v6416 = vsel %vm6414, %v6415, %v6413
    %v6417 = vclz %v6416
    %v6418 = vsub.s32 %v6417, 2
    %vm6419 = vcmp.gt.s32.totalorder 0, %v6418
    %v6420 = vsel %vm6419, 0, %v6418
    %v6421 = vsub.s32 32, %v6420
    %v6422 = vshll.u32 %v6413, %v6420
    %v6423 = vshrl.u32 %v6405, %v6421
    %v6424 = vor.u32 %v6422, %v6423
    %v6425 = vsub.s32 4294967266, %v6420
    %v6426 = vadd.s32 %v6425, 127
    %v6427 = vshll.u32 %v6426, 23
    %v6428 = vor.u32 4788187, %v6427
    %v6429 = vand.u32 2147483647, %v6428
    %v6431 = vcvt.s32.f32 %v6424
    %v6432 = vmul.f32 %v6431, %v6429
    %v6433 = vxor.u32 %v6432, 2147483648
    %v6434 = vsel %vm6351, %v6433, %v6432
    %v6435 = vsub.s32 4, %v6411
    %v6436 = vsel %vm6351, %v6435, %v6411
    %v6437 = vsel %vm6350, %v3527, %v6434
    %v6438 = vsel %vm6350, 0, %v6436
    %v6439 = vcosq.f32.pop %v6437
    %v6440 = vsinq.f32.pop %v6437
    %vm6441 = vweird.f32 %v3527
    %v6442 = vadd.s32 %v6438, 3
    %v6443 = vand.u32 %v6442, 3
    %vm6444 = vcmp.lt.s32.totalorder %v6443, 2
    %vm6445 = vcmp.eq.s32.totalorder %v6443, 0
    %v6446 = vxor.u32 %v6440, 2147483648
    %v6447 = vsel %vm6445, %v6439, %v6446
    %vm6448 = vcmp.eq.s32.totalorder %v6443, 2
    %v6449 = vxor.u32 %v6439, 2147483648
    %v6450 = vsel %vm6448, %v6449, %v6440
    %v6451 = vsel %vm6444, %v6447, %v6450
    %v6452 = vsel %vm6441, nan, %v6451
    %v6453 = vand.u32 2147483647, %v3531
    %vm6454 = vcmp.le.f32.partialorder %v6453, 0.7853982
    %vm6455 = vcmp.lt.s32.totalorder %v3531, 0
    %v6456 = vand.u32 %v3531, 2139095040
    %v6457 = vshrl.u32 %v6456, 23
    %v6458 = vsub.s32 %v6457, 127
    %v6459 = vand.u32 2147483647, %v3531
    %v6460 = vand.u32 %v6459, 8388607
    %v6461 = vor.u32 %v6460, 8388608
    %v6462 = vsub.s32 0, %v6461
    %v6463 = vadd.s32 %v6458, 1
    %vm6464 = vcmp.gt.s32.totalorder %v6463, 0
    %v6465 = vsel %vm6464, %v6463, 0
    %v6466 = vshrl.u32 %v6465, 5
    %v6467 = vand.u32 %v6465, 31
    %v6468 = vsub.s32 32, %v6467
    %v6469 = vshrl.u32 683565275, %v6468
    %v6470 = vshll.u32 683565275, %v6467
    %v6471 = vshrl.u32 2475754826, %v6468
    %v6472 = vor.u32 %v6470, %v6471
    %v6473 = vshll.u32 2475754826, %v6467
    %v6474 = vshrl.u32 2131351028, %v6468
    %v6475 = vor.u32 %v6473, %v6474
    %v6476 = vshll.u32 2131351028, %v6467
    %v6477 = vshrl.u32 2102212464, %v6468
    %v6478 = vor.u32 %v6476, %v6477
    %v6479 = vshll.u32 2102212464, %v6467
    %v6480 = vshrl.u32 920167782, %v6468
    %v6481 = vor.u32 %v6479, %v6480
    %v6482 = vshll.u32 920167782, %v6467
    %v6483 = vshrl.u32 1326507024, %v6468
    %v6484 = vor.u32 %v6482, %v6483
    %vm6485 = vcmp.lt.s32.totalorder %v6466, 1
    %vm6486 = vcmp.lt.s32.totalorder %v6466, 2
    %vm6487 = vcmp.lt.s32.totalorder %v6466, 3
    %vm6488 = vcmp.lt.s32.totalorder %v6466, 4
    %v6489 = vsel %vm6485, %v6469, %v6472
    %v6490 = vsel %vm6488, %v6478, 2102212464
    %v6491 = vsel %vm6487, %v6475, %v6490
    %v6492 = vsel %vm6486, %v6489, %v6491
    %v6493 = vsel %vm6485, %v6472, %v6475
    %v6494 = vsel %vm6488, %v6481, 920167782
    %v6495 = vsel %vm6487, %v6478, %v6494
    %v6496 = vsel %vm6486, %v6493, %v6495
    %v6497 = vsel %vm6485, %v6475, %v6478
    %v6498 = vsel %vm6488, %v6484, 1326507024
    %v6499 = vsel %vm6487, %v6481, %v6498
    %v6500 = vsel %vm6486, %v6497, %v6499
    %v6501 = vshll.u32 %v6461, 8
    %v6502 = vmul.u32.u64.compose %v6501, %v6500
    %v6503 = vextract.low.u32 %v6502
    %v6504 = vextract.high.u32 %v6502
    %v6505 = vmul.u32.u64.compose %v6501, %v6496
    %v6506 = vextract.low.u32 %v6505
    %v6507 = vextract.high.u32 %v6505
    %v6508 = vmul.u32 %v6501, %v6492
    %v6509 = vadd.s32 %v6504, %v6506
    %vm6510 = vc.u32 %v6504, %v6506
    %v6511 = vadd.s32 %v6507, 1
    %v6512 = vsel %vm6510, %v6511, %v6507
    %v6513 = vadd.s32 %v6508, %v6512
    %v6514 = vadd.s32 %v6513, 536870912
    %v6515 = vshrl.u32 %v6514, 30
    %v6516 = vshll.u32 %v6515, 30
    %v6517 = vsub.s32 %v6513, %v6516
    %vm6518 = vcmp.lt.s32.totalorder %v6517, 0
    %v6519 = vsub.s32 0, %v6517
    %v6520 = vsel %vm6518, %v6519, %v6517
    %v6521 = vclz %v6520
    %v6522 = vsub.s32 %v6521, 2
    %vm6523 = vcmp.gt.s32.totalorder 0, %v6522
    %v6524 = vsel %vm6523, 0, %v6522
    %v6525 = vsub.s32 32, %v6524
    %v6526 = vshll.u32 %v6517, %v6524
    %v6527 = vshrl.u32 %v6509, %v6525
    %v6528 = vor.u32 %v6526, %v6527
    %v6529 = vsub.s32 4294967266, %v6524
    %v6530 = vadd.s32 %v6529, 127
    %v6531 = vshll.u32 %v6530, 23
    %v6532 = vor.u32 4788187, %v6531
    %v6533 = vand.u32 2147483647, %v6532
    %v6535 = vcvt.s32.f32 %v6528
    %v6536 = vmul.f32 %v6535, %v6533
    %v6537 = vxor.u32 %v6536, 2147483648
    %v6538 = vsel %vm6455, %v6537, %v6536
    %v6539 = vsub.s32 4, %v6515
    %v6540 = vsel %vm6455, %v6539, %v6515
    %v6541 = vsel %vm6454, %v3531, %v6538
    %v6542 = vsel %vm6454, 0, %v6540
    %v6543 = vcosq.f32.pop %v6541
    %v6544 = vsinq.f32.pop %v6541
    %vm6545 = vweird.f32 %v3531
    %v6546 = vadd.s32 %v6542, 3
    %v6547 = vand.u32 %v6546, 3
    %vm6548 = vcmp.lt.s32.totalorder %v6547, 2
    %vm6549 = vcmp.eq.s32.totalorder %v6547, 0
    %v6550 = vxor.u32 %v6544, 2147483648
    %v6551 = vsel %vm6549, %v6543, %v6550
    %vm6552 = vcmp.eq.s32.totalorder %v6547, 2
    %v6553 = vxor.u32 %v6543, 2147483648
    %v6554 = vsel %vm6552, %v6553, %v6544
    %v6555 = vsel %vm6548, %v6551, %v6554
    %v6556 = vsel %vm6545, nan, %v6555
    %v6557 = vand.u32 2147483647, %v3533
    %vm6558 = vcmp.le.f32.partialorder %v6557, 0.7853982
    %vm6559 = vcmp.lt.s32.totalorder %v3533, 0
    %v6560 = vand.u32 %v3533, 2139095040
    %v6561 = vshrl.u32 %v6560, 23
    %v6562 = vsub.s32 %v6561, 127
    %v6563 = vand.u32 2147483647, %v3533
    %v6564 = vand.u32 %v6563, 8388607
    %v6565 = vor.u32 %v6564, 8388608
    %v6566 = vsub.s32 0, %v6565
    %v6567 = vadd.s32 %v6562, 1
    %vm6568 = vcmp.gt.s32.totalorder %v6567, 0
    %v6569 = vsel %vm6568, %v6567, 0
    %v6570 = vshrl.u32 %v6569, 5
    %v6571 = vand.u32 %v6569, 31
    %v6572 = vsub.s32 32, %v6571
    %v6573 = vshrl.u32 683565275, %v6572
    %v6574 = vshll.u32 683565275, %v6571
    %v6575 = vshrl.u32 2475754826, %v6572
    %v6576 = vor.u32 %v6574, %v6575
    %v6577 = vshll.u32 2475754826, %v6571
    %v6578 = vshrl.u32 2131351028, %v6572
    %v6579 = vor.u32 %v6577, %v6578
    %v6580 = vshll.u32 2131351028, %v6571
    %v6581 = vshrl.u32 2102212464, %v6572
    %v6582 = vor.u32 %v6580, %v6581
    %v6583 = vshll.u32 2102212464, %v6571
    %v6584 = vshrl.u32 920167782, %v6572
    %v6585 = vor.u32 %v6583, %v6584
    %v6586 = vshll.u32 920167782, %v6571
    %v6587 = vshrl.u32 1326507024, %v6572
    %v6588 = vor.u32 %v6586, %v6587
    %vm6589 = vcmp.lt.s32.totalorder %v6570, 1
    %vm6590 = vcmp.lt.s32.totalorder %v6570, 2
    %vm6591 = vcmp.lt.s32.totalorder %v6570, 3
    %vm6592 = vcmp.lt.s32.totalorder %v6570, 4
    %v6593 = vsel %vm6589, %v6573, %v6576
    %v6594 = vsel %vm6592, %v6582, 2102212464
    %v6595 = vsel %vm6591, %v6579, %v6594
    %v6596 = vsel %vm6590, %v6593, %v6595
    %v6597 = vsel %vm6589, %v6576, %v6579
    %v6598 = vsel %vm6592, %v6585, 920167782
    %v6599 = vsel %vm6591, %v6582, %v6598
    %v6600 = vsel %vm6590, %v6597, %v6599
    %v6601 = vsel %vm6589, %v6579, %v6582
    %v6602 = vsel %vm6592, %v6588, 1326507024
    %v6603 = vsel %vm6591, %v6585, %v6602
    %v6604 = vsel %vm6590, %v6601, %v6603
    %v6605 = vshll.u32 %v6565, 8
    %v6606 = vmul.u32.u64.compose %v6605, %v6604
    %v6607 = vextract.low.u32 %v6606
    %v6608 = vextract.high.u32 %v6606
    %v6609 = vmul.u32.u64.compose %v6605, %v6600
    %v6610 = vextract.low.u32 %v6609
    %v6611 = vextract.high.u32 %v6609
    %v6612 = vmul.u32 %v6605, %v6596
    %v6613 = vadd.s32 %v6608, %v6610
    %vm6614 = vc.u32 %v6608, %v6610
    %v6615 = vadd.s32 %v6611, 1
    %v6616 = vsel %vm6614, %v6615, %v6611
    %v6617 = vadd.s32 %v6612, %v6616
    %v6618 = vadd.s32 %v6617, 536870912
    %v6619 = vshrl.u32 %v6618, 30
    %v6620 = vshll.u32 %v6619, 30
    %v6621 = vsub.s32 %v6617, %v6620
    %vm6622 = vcmp.lt.s32.totalorder %v6621, 0
    %v6623 = vsub.s32 0, %v6621
    %v6624 = vsel %vm6622, %v6623, %v6621
    %v6625 = vclz %v6624
    %v6626 = vsub.s32 %v6625, 2
    %vm6627 = vcmp.gt.s32.totalorder 0, %v6626
    %v6628 = vsel %vm6627, 0, %v6626
    %v6629 = vsub.s32 32, %v6628
    %v6630 = vshll.u32 %v6621, %v6628
    %v6631 = vshrl.u32 %v6613, %v6629
    %v6632 = vor.u32 %v6630, %v6631
    %v6633 = vsub.s32 4294967266, %v6628
    %v6634 = vadd.s32 %v6633, 127
    %v6635 = vshll.u32 %v6634, 23
    %v6636 = vor.u32 4788187, %v6635
    %v6637 = vand.u32 2147483647, %v6636
    %v6639 = vcvt.s32.f32 %v6632
    %v6640 = vmul.f32 %v6639, %v6637
    %v6641 = vxor.u32 %v6640, 2147483648
    %v6642 = vsel %vm6559, %v6641, %v6640
    %v6643 = vsub.s32 4, %v6619
    %v6644 = vsel %vm6559, %v6643, %v6619
    %v6645 = vsel %vm6558, %v3533, %v6642
    %v6646 = vsel %vm6558, 0, %v6644
    %v6647 = vcosq.f32.pop %v6645
    %v6648 = vsinq.f32.pop %v6645
    %vm6649 = vweird.f32 %v3533
    %v6650 = vadd.s32 %v6646, 3
    %v6651 = vand.u32 %v6650, 3
    %vm6652 = vcmp.lt.s32.totalorder %v6651, 2
    %vm6653 = vcmp.eq.s32.totalorder %v6651, 0
    %v6654 = vxor.u32 %v6648, 2147483648
    %v6655 = vsel %vm6653, %v6647, %v6654
    %vm6656 = vcmp.eq.s32.totalorder %v6651, 2
    %v6657 = vxor.u32 %v6647, 2147483648
    %v6658 = vsel %vm6656, %v6657, %v6648
    %v6659 = vsel %vm6652, %v6655, %v6658
    %v6660 = vsel %vm6649, nan, %v6659
    %v6661 = vand.u32 2147483647, %v3537
    %vm6662 = vcmp.le.f32.partialorder %v6661, 0.7853982
    %vm6663 = vcmp.lt.s32.totalorder %v3537, 0
    %v6664 = vand.u32 %v3537, 2139095040
    %v6665 = vshrl.u32 %v6664, 23
    %v6666 = vsub.s32 %v6665, 127
    %v6667 = vand.u32 2147483647, %v3537
    %v6668 = vand.u32 %v6667, 8388607
    %v6669 = vor.u32 %v6668, 8388608
    %v6670 = vsub.s32 0, %v6669
    %v6671 = vadd.s32 %v6666, 1
    %vm6672 = vcmp.gt.s32.totalorder %v6671, 0
    %v6673 = vsel %vm6672, %v6671, 0
    %v6674 = vshrl.u32 %v6673, 5
    %v6675 = vand.u32 %v6673, 31
    %v6676 = vsub.s32 32, %v6675
    %v6677 = vshrl.u32 683565275, %v6676
    %v6678 = vshll.u32 683565275, %v6675
    %v6679 = vshrl.u32 2475754826, %v6676
    %v6680 = vor.u32 %v6678, %v6679
    %v6681 = vshll.u32 2475754826, %v6675
    %v6682 = vshrl.u32 2131351028, %v6676
    %v6683 = vor.u32 %v6681, %v6682
    %v6684 = vshll.u32 2131351028, %v6675
    %v6685 = vshrl.u32 2102212464, %v6676
    %v6686 = vor.u32 %v6684, %v6685
    %v6687 = vshll.u32 2102212464, %v6675
    %v6688 = vshrl.u32 920167782, %v6676
    %v6689 = vor.u32 %v6687, %v6688
    %v6690 = vshll.u32 920167782, %v6675
    %v6691 = vshrl.u32 1326507024, %v6676
    %v6692 = vor.u32 %v6690, %v6691
    %vm6693 = vcmp.lt.s32.totalorder %v6674, 1
    %vm6694 = vcmp.lt.s32.totalorder %v6674, 2
    %vm6695 = vcmp.lt.s32.totalorder %v6674, 3
    %vm6696 = vcmp.lt.s32.totalorder %v6674, 4
    %v6697 = vsel %vm6693, %v6677, %v6680
    %v6698 = vsel %vm6696, %v6686, 2102212464
    %v6699 = vsel %vm6695, %v6683, %v6698
    %v6700 = vsel %vm6694, %v6697, %v6699
    %v6701 = vsel %vm6693, %v6680, %v6683
    %v6702 = vsel %vm6696, %v6689, 920167782
    %v6703 = vsel %vm6695, %v6686, %v6702
    %v6704 = vsel %vm6694, %v6701, %v6703
    %v6705 = vsel %vm6693, %v6683, %v6686
    %v6706 = vsel %vm6696, %v6692, 1326507024
    %v6707 = vsel %vm6695, %v6689, %v6706
    %v6708 = vsel %vm6694, %v6705, %v6707
    %v6709 = vshll.u32 %v6669, 8
    %v6710 = vmul.u32.u64.compose %v6709, %v6708
    %v6711 = vextract.low.u32 %v6710
    %v6712 = vextract.high.u32 %v6710
    %v6713 = vmul.u32.u64.compose %v6709, %v6704
    %v6714 = vextract.low.u32 %v6713
    %v6715 = vextract.high.u32 %v6713
    %v6716 = vmul.u32 %v6709, %v6700
    %v6717 = vadd.s32 %v6712, %v6714
    %vm6718 = vc.u32 %v6712, %v6714
    %v6719 = vadd.s32 %v6715, 1
    %v6720 = vsel %vm6718, %v6719, %v6715
    %v6721 = vadd.s32 %v6716, %v6720
    %v6722 = vadd.s32 %v6721, 536870912
    %v6723 = vshrl.u32 %v6722, 30
    %v6724 = vshll.u32 %v6723, 30
    %v6725 = vsub.s32 %v6721, %v6724
    %vm6726 = vcmp.lt.s32.totalorder %v6725, 0
    %v6727 = vsub.s32 0, %v6725
    %v6728 = vsel %vm6726, %v6727, %v6725
    %v6729 = vclz %v6728
    %v6730 = vsub.s32 %v6729, 2
    %vm6731 = vcmp.gt.s32.totalorder 0, %v6730
    %v6732 = vsel %vm6731, 0, %v6730
    %v6733 = vsub.s32 32, %v6732
    %v6734 = vshll.u32 %v6725, %v6732
    %v6735 = vshrl.u32 %v6717, %v6733
    %v6736 = vor.u32 %v6734, %v6735
    %v6737 = vsub.s32 4294967266, %v6732
    %v6738 = vadd.s32 %v6737, 127
    %v6739 = vshll.u32 %v6738, 23
    %v6740 = vor.u32 4788187, %v6739
    %v6741 = vand.u32 2147483647, %v6740
    %v6743 = vcvt.s32.f32 %v6736
    %v6744 = vmul.f32 %v6743, %v6741
    %v6745 = vxor.u32 %v6744, 2147483648
    %v6746 = vsel %vm6663, %v6745, %v6744
    %v6747 = vsub.s32 4, %v6723
    %v6748 = vsel %vm6663, %v6747, %v6723
    %v6749 = vsel %vm6662, %v3537, %v6746
    %v6750 = vsel %vm6662, 0, %v6748
    %v6751 = vcosq.f32.pop %v6749
    %v6752 = vsinq.f32.pop %v6749
    %vm6753 = vweird.f32 %v3537
    %v6754 = vadd.s32 %v6750, 3
    %v6755 = vand.u32 %v6754, 3
    %vm6756 = vcmp.lt.s32.totalorder %v6755, 2
    %vm6757 = vcmp.eq.s32.totalorder %v6755, 0
    %v6758 = vxor.u32 %v6752, 2147483648
    %v6759 = vsel %vm6757, %v6751, %v6758
    %vm6760 = vcmp.eq.s32.totalorder %v6755, 2
    %v6761 = vxor.u32 %v6751, 2147483648
    %v6762 = vsel %vm6760, %v6761, %v6752
    %v6763 = vsel %vm6756, %v6759, %v6762
    %v6764 = vsel %vm6753, nan, %v6763
    %v6765 = vand.u32 2147483647, %v3539
    %vm6766 = vcmp.le.f32.partialorder %v6765, 0.7853982
    %vm6767 = vcmp.lt.s32.totalorder %v3539, 0
    %v6768 = vand.u32 %v3539, 2139095040
    %v6769 = vshrl.u32 %v6768, 23
    %v6770 = vsub.s32 %v6769, 127
    %v6771 = vand.u32 2147483647, %v3539
    %v6772 = vand.u32 %v6771, 8388607
    %v6773 = vor.u32 %v6772, 8388608
    %v6774 = vsub.s32 0, %v6773
    %v6775 = vadd.s32 %v6770, 1
    %vm6776 = vcmp.gt.s32.totalorder %v6775, 0
    %v6777 = vsel %vm6776, %v6775, 0
    %v6778 = vshrl.u32 %v6777, 5
    %v6779 = vand.u32 %v6777, 31
    %v6780 = vsub.s32 32, %v6779
    %v6781 = vshrl.u32 683565275, %v6780
    %v6782 = vshll.u32 683565275, %v6779
    %v6783 = vshrl.u32 2475754826, %v6780
    %v6784 = vor.u32 %v6782, %v6783
    %v6785 = vshll.u32 2475754826, %v6779
    %v6786 = vshrl.u32 2131351028, %v6780
    %v6787 = vor.u32 %v6785, %v6786
    %v6788 = vshll.u32 2131351028, %v6779
    %v6789 = vshrl.u32 2102212464, %v6780
    %v6790 = vor.u32 %v6788, %v6789
    %v6791 = vshll.u32 2102212464, %v6779
    %v6792 = vshrl.u32 920167782, %v6780
    %v6793 = vor.u32 %v6791, %v6792
    %v6794 = vshll.u32 920167782, %v6779
    %v6795 = vshrl.u32 1326507024, %v6780
    %v6796 = vor.u32 %v6794, %v6795
    %vm6797 = vcmp.lt.s32.totalorder %v6778, 1
    %vm6798 = vcmp.lt.s32.totalorder %v6778, 2
    %vm6799 = vcmp.lt.s32.totalorder %v6778, 3
    %vm6800 = vcmp.lt.s32.totalorder %v6778, 4
    %v6801 = vsel %vm6797, %v6781, %v6784
    %v6802 = vsel %vm6800, %v6790, 2102212464
    %v6803 = vsel %vm6799, %v6787, %v6802
    %v6804 = vsel %vm6798, %v6801, %v6803
    %v6805 = vsel %vm6797, %v6784, %v6787
    %v6806 = vsel %vm6800, %v6793, 920167782
    %v6807 = vsel %vm6799, %v6790, %v6806
    %v6808 = vsel %vm6798, %v6805, %v6807
    %v6809 = vsel %vm6797, %v6787, %v6790
    %v6810 = vsel %vm6800, %v6796, 1326507024
    %v6811 = vsel %vm6799, %v6793, %v6810
    %v6812 = vsel %vm6798, %v6809, %v6811
    %v6813 = vshll.u32 %v6773, 8
    %v6814 = vmul.u32.u64.compose %v6813, %v6812
    %v6815 = vextract.low.u32 %v6814
    %v6816 = vextract.high.u32 %v6814
    %v6817 = vmul.u32.u64.compose %v6813, %v6808
    %v6818 = vextract.low.u32 %v6817
    %v6819 = vextract.high.u32 %v6817
    %v6820 = vmul.u32 %v6813, %v6804
    %v6821 = vadd.s32 %v6816, %v6818
    %vm6822 = vc.u32 %v6816, %v6818
    %v6823 = vadd.s32 %v6819, 1
    %v6824 = vsel %vm6822, %v6823, %v6819
    %v6825 = vadd.s32 %v6820, %v6824
    %v6826 = vadd.s32 %v6825, 536870912
    %v6827 = vshrl.u32 %v6826, 30
    %v6828 = vshll.u32 %v6827, 30
    %v6829 = vsub.s32 %v6825, %v6828
    %vm6830 = vcmp.lt.s32.totalorder %v6829, 0
    %v6831 = vsub.s32 0, %v6829
    %v6832 = vsel %vm6830, %v6831, %v6829
    %v6833 = vclz %v6832
    %v6834 = vsub.s32 %v6833, 2
    %vm6835 = vcmp.gt.s32.totalorder 0, %v6834
    %v6836 = vsel %vm6835, 0, %v6834
    %v6837 = vsub.s32 32, %v6836
    %v6838 = vshll.u32 %v6829, %v6836
    %v6839 = vshrl.u32 %v6821, %v6837
    %v6840 = vor.u32 %v6838, %v6839
    %v6841 = vsub.s32 4294967266, %v6836
    %v6842 = vadd.s32 %v6841, 127
    %v6843 = vshll.u32 %v6842, 23
    %v6844 = vor.u32 4788187, %v6843
    %v6845 = vand.u32 2147483647, %v6844
    %v6847 = vcvt.s32.f32 %v6840
    %v6848 = vmul.f32 %v6847, %v6845
    %v6849 = vxor.u32 %v6848, 2147483648
    %v6850 = vsel %vm6767, %v6849, %v6848
    %v6851 = vsub.s32 4, %v6827
    %v6852 = vsel %vm6767, %v6851, %v6827
    %v6853 = vsel %vm6766, %v3539, %v6850
    %v6854 = vsel %vm6766, 0, %v6852
    %v6855 = vcosq.f32.pop %v6853
    %v6856 = vsinq.f32.pop %v6853
    %vm6857 = vweird.f32 %v3539
    %v6858 = vadd.s32 %v6854, 3
    %v6859 = vand.u32 %v6858, 3
    %vm6860 = vcmp.lt.s32.totalorder %v6859, 2
    %vm6861 = vcmp.eq.s32.totalorder %v6859, 0
    %v6862 = vxor.u32 %v6856, 2147483648
    %v6863 = vsel %vm6861, %v6855, %v6862
    %vm6864 = vcmp.eq.s32.totalorder %v6859, 2
    %v6865 = vxor.u32 %v6855, 2147483648
    %v6866 = vsel %vm6864, %v6865, %v6856
    %v6867 = vsel %vm6860, %v6863, %v6866
    %v6868 = vsel %vm6857, nan, %v6867
    %6869 = vst [vmem:[#allocation2] sm:$0xff] %v3644
    %6870 = vst [vmem:[#allocation2 + $0x8] sm:$0xff] %v3748
    %6871 = vst [vmem:[#allocation2 + $0x10] sm:$0xff] %v3852
    %6872 = vst [vmem:[#allocation2 + $0x18] sm:$0xff] %v3956
    %6873 = vst [vmem:[#allocation2 + $0x20] sm:$0xff] %v4060
    %6874 = vst [vmem:[#allocation2 + $0x28] sm:$0xff] %v4164
    %6875 = vst [vmem:[#allocation2 + $0x30] sm:$0xff] %v4268
    %6876 = vst [vmem:[#allocation2 + $0x38] sm:$0xff] %v4372
    %6877 = vst [vmem:[#allocation2 + $0x40] sm:$0xff] %v4476
    %6878 = vst [vmem:[#allocation2 + $0x48] sm:$0xff] %v4580
    %6879 = vst [vmem:[#allocation2 + $0x50] sm:$0xff] %v4684
    %6880 = vst [vmem:[#allocation2 + $0x58] sm:$0xff] %v4788
    %6881 = vst [vmem:[#allocation2 + $0x60] sm:$0xff] %v4892
    %6882 = vst [vmem:[#allocation2 + $0x68] sm:$0xff] %v4996
    %6883 = vst [vmem:[#allocation2 + $0x70] sm:$0xff] %v5100
    %6884 = vst [vmem:[#allocation2 + $0x78] sm:$0xff] %v5204
    %6885 = vst [vmem:[#allocation2 + $0x80] sm:$0xff] %v5308
    %6886 = vst [vmem:[#allocation2 + $0x88] sm:$0xff] %v5412
    %6887 = vst [vmem:[#allocation2 + $0x90] sm:$0xff] %v5516
    %6888 = vst [vmem:[#allocation2 + $0x98] sm:$0xff] %v5620
    %6889 = vst [vmem:[#allocation2 + $0xa0] sm:$0xff] %v5724
    %6890 = vst [vmem:[#allocation2 + $0xa8] sm:$0xff] %v5828
    %6891 = vst [vmem:[#allocation2 + $0xb0] sm:$0xff] %v5932
    %6892 = vst [vmem:[#allocation2 + $0xb8] sm:$0xff] %v6036
    %6893 = vst [vmem:[#allocation2 + $0xc0] sm:$0xff] %v6140
    %6894 = vst [vmem:[#allocation2 + $0xc8] sm:$0xff] %v6244
    %6895 = vst [vmem:[#allocation2 + $0xd0] sm:$0xff] %v6348
    %6896 = vst [vmem:[#allocation2 + $0xd8] sm:$0xff] %v6452
    %6897 = vst [vmem:[#allocation2 + $0xe0] sm:$0xff] %v6556
    %6898 = vst [vmem:[#allocation2 + $0xe8] sm:$0xff] %v6660
    %6899 = vst [vmem:[#allocation2 + $0xf0] sm:$0xff] %v6764
    %6900 = vst [vmem:[#allocation2 + $0xf8] sm:$0xff] %v6868
    %v6901 = vld [vmem:[#allocation11] sm:$0xff]
    %v6902 = vld [vmem:[#allocation11 + $0x8] sm:$0xff]
    %v6903 = vld [vmem:[#allocation11 + $0x10] sm:$0xff]
    %v6904 = vld [vmem:[#allocation11 + $0x18] sm:$0xff]
    %6905 = vst [vmem:[#allocation6] sm:$0xff] %v6901
    %6906 = vst [vmem:[#allocation6 + $0x8] sm:$0xff] %v6902
    %6907 = vst [vmem:[#allocation6 + $0x10] sm:$0xff] %v6903
    %6908 = vst [vmem:[#allocation6 + $0x18] sm:$0xff] %v6904
    %6909 = vrot.lane.b32.xlu0 %v6901, 1
    %v6910 = vpop.permute.xlu0 %6909
    %6911 = vrot.lane.b32.xlu0 %v6903, 1
    %v6912 = vpop.permute.xlu0 %6911
    %6913 = vrot.lane.b32.xlu0 %v6902, 1
    %v6914 = vpop.permute.xlu0 %6913
    %6915 = vrot.lane.b32.xlu0 %v6904, 1
    %v6916 = vpop.permute.xlu0 %6915
    %vm6917 = vcmp.lt.s32.totalorder %v982, 1
    %v6918 = vsel %vm6917, %v6910, %v6914
    %v6919 = vsel %vm6917, %v6912, %v6916
    %v6920 = vsel %vm6917, %v6914, %v6910
    %v6921 = vsel %vm6917, %v6916, %v6912
    %6922 = vst [vmem:[#allocation6 + $0x20] sm:$0xff] %v6920
    %6923 = vst [vmem:[#allocation6 + $0x28] sm:$0xff] %v6918
    %6924 = vst [vmem:[#allocation6 + $0x30] sm:$0xff] %v6921
    %6925 = vst [vmem:[#allocation6 + $0x38] sm:$0xff] %v6919
    %6926 = vrot.lane.b32.xlu0 %v6901, 2
    %v6927 = vpop.permute.xlu0 %6926
    %6928 = vrot.lane.b32.xlu0 %v6903, 2
    %v6929 = vpop.permute.xlu0 %6928
    %6930 = vrot.lane.b32.xlu0 %v6902, 2
    %v6931 = vpop.permute.xlu0 %6930
    %6932 = vrot.lane.b32.xlu0 %v6904, 2
    %v6933 = vpop.permute.xlu0 %6932
    %vm6934 = vcmp.lt.s32.totalorder %v982, 2
    %v6935 = vsel %vm6934, %v6927, %v6931
    %v6936 = vsel %vm6934, %v6929, %v6933
    %v6937 = vsel %vm6934, %v6931, %v6927
    %v6938 = vsel %vm6934, %v6933, %v6929
    %6939 = vst [vmem:[#allocation6 + $0x40] sm:$0xff] %v6937
    %6940 = vst [vmem:[#allocation6 + $0x48] sm:$0xff] %v6935
    %6941 = vst [vmem:[#allocation6 + $0x50] sm:$0xff] %v6938
    %6942 = vst [vmem:[#allocation6 + $0x58] sm:$0xff] %v6936
    %6943 = vrot.lane.b32.xlu0 %v6901, 3
    %v6944 = vpop.permute.xlu0 %6943
    %6945 = vrot.lane.b32.xlu0 %v6903, 3
    %v6946 = vpop.permute.xlu0 %6945
    %6947 = vrot.lane.b32.xlu0 %v6902, 3
    %v6948 = vpop.permute.xlu0 %6947
    %6949 = vrot.lane.b32.xlu0 %v6904, 3
    %v6950 = vpop.permute.xlu0 %6949
    %vm6951 = vcmp.lt.s32.totalorder %v982, 3
    %v6952 = vsel %vm6951, %v6944, %v6948
    %v6953 = vsel %vm6951, %v6946, %v6950
    %v6954 = vsel %vm6951, %v6948, %v6944
    %v6955 = vsel %vm6951, %v6950, %v6946
    %6956 = vst [vmem:[#allocation6 + $0x60] sm:$0xff] %v6954
    %6957 = vst [vmem:[#allocation6 + $0x68] sm:$0xff] %v6952
    %6958 = vst [vmem:[#allocation6 + $0x70] sm:$0xff] %v6955
    %6959 = vst [vmem:[#allocation6 + $0x78] sm:$0xff] %v6953
    %6960 = vrot.lane.b32.xlu0 %v6901, 4
    %v6961 = vpop.permute.xlu0 %6960
    %6962 = vrot.lane.b32.xlu0 %v6903, 4
    %v6963 = vpop.permute.xlu0 %6962
    %6964 = vrot.lane.b32.xlu0 %v6902, 4
    %v6965 = vpop.permute.xlu0 %6964
    %6966 = vrot.lane.b32.xlu0 %v6904, 4
    %v6967 = vpop.permute.xlu0 %6966
    %vm6968 = vcmp.lt.s32.totalorder %v982, 4
    %v6969 = vsel %vm6968, %v6961, %v6965
    %v6970 = vsel %vm6968, %v6963, %v6967
    %v6971 = vsel %vm6968, %v6965, %v6961
    %v6972 = vsel %vm6968, %v6967, %v6963
    %6973 = vst [vmem:[#allocation6 + $0x80] sm:$0xff] %v6971
    %6974 = vst [vmem:[#allocation6 + $0x88] sm:$0xff] %v6969
    %6975 = vst [vmem:[#allocation6 + $0x90] sm:$0xff] %v6972
    %6976 = vst [vmem:[#allocation6 + $0x98] sm:$0xff] %v6970
    %6977 = vrot.lane.b32.xlu0 %v6901, 5
    %v6978 = vpop.permute.xlu0 %6977
    %6979 = vrot.lane.b32.xlu0 %v6903, 5
    %v6980 = vpop.permute.xlu0 %6979
    %6981 = vrot.lane.b32.xlu0 %v6902, 5
    %v6982 = vpop.permute.xlu0 %6981
    %6983 = vrot.lane.b32.xlu0 %v6904, 5
    %v6984 = vpop.permute.xlu0 %6983
    %vm6985 = vcmp.lt.s32.totalorder %v982, 5
    %v6986 = vsel %vm6985, %v6978, %v6982
    %v6987 = vsel %vm6985, %v6980, %v6984
    %v6988 = vsel %vm6985, %v6982, %v6978
    %v6989 = vsel %vm6985, %v6984, %v6980
    %6990 = vst [vmem:[#allocation6 + $0xa0] sm:$0xff] %v6988
    %6991 = vst [vmem:[#allocation6 + $0xa8] sm:$0xff] %v6986
    %6992 = vst [vmem:[#allocation6 + $0xb0] sm:$0xff] %v6989
    %6993 = vst [vmem:[#allocation6 + $0xb8] sm:$0xff] %v6987
    %6994 = vrot.lane.b32.xlu0 %v6901, 6
    %v6995 = vpop.permute.xlu0 %6994
    %6996 = vrot.lane.b32.xlu0 %v6903, 6
    %v6997 = vpop.permute.xlu0 %6996
    %6998 = vrot.lane.b32.xlu0 %v6902, 6
    %v6999 = vpop.permute.xlu0 %6998
    %7000 = vrot.lane.b32.xlu0 %v6904, 6
    %v7001 = vpop.permute.xlu0 %7000
    %vm7002 = vcmp.lt.s32.totalorder %v982, 6
    %v7003 = vsel %vm7002, %v6995, %v6999
    %v7004 = vsel %vm7002, %v6997, %v7001
    %v7005 = vsel %vm7002, %v6999, %v6995
    %v7006 = vsel %vm7002, %v7001, %v6997
    %7007 = vst [vmem:[#allocation6 + $0xc0] sm:$0xff] %v7005
    %7008 = vst [vmem:[#allocation6 + $0xc8] sm:$0xff] %v7003
    %7009 = vst [vmem:[#allocation6 + $0xd0] sm:$0xff] %v7006
    %7010 = vst [vmem:[#allocation6 + $0xd8] sm:$0xff] %v7004
    %7011 = vrot.lane.b32.xlu0 %v6901, 7
    %v7012 = vpop.permute.xlu0 %7011
    %7013 = vrot.lane.b32.xlu0 %v6903, 7
    %v7014 = vpop.permute.xlu0 %7013
    %7015 = vrot.lane.b32.xlu0 %v6902, 7
    %v7016 = vpop.permute.xlu0 %7015
    %7017 = vrot.lane.b32.xlu0 %v6904, 7
    %v7018 = vpop.permute.xlu0 %7017
    %vm7019 = vcmp.lt.s32.totalorder %v982, 7
    %v7020 = vsel %vm7019, %v7012, %v7016
    %v7021 = vsel %vm7019, %v7014, %v7018
    %v7022 = vsel %vm7019, %v7016, %v7012
    %v7023 = vsel %vm7019, %v7018, %v7014
    %7024 = vst [vmem:[#allocation6 + $0xe0] sm:$0xff] %v7022
    %7025 = vst [vmem:[#allocation6 + $0xe8] sm:$0xff] %v7020
    %7026 = vst [vmem:[#allocation6 + $0xf0] sm:$0xff] %v7023
    %7027 = vst [vmem:[#allocation6 + $0xf8] sm:$0xff] %v7021
    %7028 = vrot.lane.b32.xlu0 %v6901, 8
    %v7029 = vpop.permute.xlu0 %7028
    %7030 = vrot.lane.b32.xlu0 %v6903, 8
    %v7031 = vpop.permute.xlu0 %7030
    %7032 = vrot.lane.b32.xlu0 %v6902, 8
    %v7033 = vpop.permute.xlu0 %7032
    %7034 = vrot.lane.b32.xlu0 %v6904, 8
    %v7035 = vpop.permute.xlu0 %7034
    %vm7036 = vcmp.lt.s32.totalorder %v982, 8
    %v7037 = vsel %vm7036, %v7029, %v7033
    %v7038 = vsel %vm7036, %v7031, %v7035
    %v7039 = vsel %vm7036, %v7033, %v7029
    %v7040 = vsel %vm7036, %v7035, %v7031
    %7041 = vst [vmem:[#allocation6 + $0x100] sm:$0xff] %v7039
    %7042 = vst [vmem:[#allocation6 + $0x108] sm:$0xff] %v7037
    %7043 = vst [vmem:[#allocation6 + $0x110] sm:$0xff] %v7040
    %7044 = vst [vmem:[#allocation6 + $0x118] sm:$0xff] %v7038
    %7045 = vrot.lane.b32.xlu0 %v6901, 9
    %v7046 = vpop.permute.xlu0 %7045
    %7047 = vrot.lane.b32.xlu0 %v6903, 9
    %v7048 = vpop.permute.xlu0 %7047
    %7049 = vrot.lane.b32.xlu0 %v6902, 9
    %v7050 = vpop.permute.xlu0 %7049
    %7051 = vrot.lane.b32.xlu0 %v6904, 9
    %v7052 = vpop.permute.xlu0 %7051
    %vm7053 = vcmp.lt.s32.totalorder %v982, 9
    %v7054 = vsel %vm7053, %v7046, %v7050
    %v7055 = vsel %vm7053, %v7048, %v7052
    %v7056 = vsel %vm7053, %v7050, %v7046
    %v7057 = vsel %vm7053, %v7052, %v7048
    %7058 = vst [vmem:[#allocation6 + $0x120] sm:$0xff] %v7056
    %7059 = vst [vmem:[#allocation6 + $0x128] sm:$0xff] %v7054
    %7060 = vst [vmem:[#allocation6 + $0x130] sm:$0xff] %v7057
    %7061 = vst [vmem:[#allocation6 + $0x138] sm:$0xff] %v7055
    %7062 = vrot.lane.b32.xlu0 %v6901, 10
    %v7063 = vpop.permute.xlu0 %7062
    %7064 = vrot.lane.b32.xlu0 %v6903, 10
    %v7065 = vpop.permute.xlu0 %7064
    %7066 = vrot.lane.b32.xlu0 %v6902, 10
    %v7067 = vpop.permute.xlu0 %7066
    %7068 = vrot.lane.b32.xlu0 %v6904, 10
    %v7069 = vpop.permute.xlu0 %7068
    %vm7070 = vcmp.lt.s32.totalorder %v982, 10
    %v7071 = vsel %vm7070, %v7063, %v7067
    %v7072 = vsel %vm7070, %v7065, %v7069
    %v7073 = vsel %vm7070, %v7067, %v7063
    %v7074 = vsel %vm7070, %v7069, %v7065
    %7075 = vst [vmem:[#allocation6 + $0x140] sm:$0xff] %v7073
    %7076 = vst [vmem:[#allocation6 + $0x148] sm:$0xff] %v7071
    %7077 = vst [vmem:[#allocation6 + $0x150] sm:$0xff] %v7074
    %7078 = vst [vmem:[#allocation6 + $0x158] sm:$0xff] %v7072
    %7079 = vrot.lane.b32.xlu0 %v6901, 11
    %v7080 = vpop.permute.xlu0 %7079
    %7081 = vrot.lane.b32.xlu0 %v6903, 11
    %v7082 = vpop.permute.xlu0 %7081
    %7083 = vrot.lane.b32.xlu0 %v6902, 11
    %v7084 = vpop.permute.xlu0 %7083
    %7085 = vrot.lane.b32.xlu0 %v6904, 11
    %v7086 = vpop.permute.xlu0 %7085
    %vm7087 = vcmp.lt.s32.totalorder %v982, 11
    %v7088 = vsel %vm7087, %v7080, %v7084
    %v7089 = vsel %vm7087, %v7082, %v7086
    %v7090 = vsel %vm7087, %v7084, %v7080
    %v7091 = vsel %vm7087, %v7086, %v7082
    %7092 = vst [vmem:[#allocation6 + $0x160] sm:$0xff] %v7090
    %7093 = vst [vmem:[#allocation6 + $0x168] sm:$0xff] %v7088
    %7094 = vst [vmem:[#allocation6 + $0x170] sm:$0xff] %v7091
    %7095 = vst [vmem:[#allocation6 + $0x178] sm:$0xff] %v7089
    %7096 = vrot.lane.b32.xlu0 %v6901, 12
    %v7097 = vpop.permute.xlu0 %7096
    %7098 = vrot.lane.b32.xlu0 %v6903, 12
    %v7099 = vpop.permute.xlu0 %7098
    %7100 = vrot.lane.b32.xlu0 %v6902, 12
    %v7101 = vpop.permute.xlu0 %7100
    %7102 = vrot.lane.b32.xlu0 %v6904, 12
    %v7103 = vpop.permute.xlu0 %7102
    %vm7104 = vcmp.lt.s32.totalorder %v982, 12
    %v7105 = vsel %vm7104, %v7097, %v7101
    %v7106 = vsel %vm7104, %v7099, %v7103
    %v7107 = vsel %vm7104, %v7101, %v7097
    %v7108 = vsel %vm7104, %v7103, %v7099
    %7109 = vst [vmem:[#allocation6 + $0x180] sm:$0xff] %v7107
    %7110 = vst [vmem:[#allocation6 + $0x188] sm:$0xff] %v7105
    %7111 = vst [vmem:[#allocation6 + $0x190] sm:$0xff] %v7108
    %7112 = vst [vmem:[#allocation6 + $0x198] sm:$0xff] %v7106
    %7113 = vrot.lane.b32.xlu0 %v6901, 13
    %v7114 = vpop.permute.xlu0 %7113
    %7115 = vrot.lane.b32.xlu0 %v6903, 13
    %v7116 = vpop.permute.xlu0 %7115
    %7117 = vrot.lane.b32.xlu0 %v6902, 13
    %v7118 = vpop.permute.xlu0 %7117
    %7119 = vrot.lane.b32.xlu0 %v6904, 13
    %v7120 = vpop.permute.xlu0 %7119
    %vm7121 = vcmp.lt.s32.totalorder %v982, 13
    %v7122 = vsel %vm7121, %v7114, %v7118
    %v7123 = vsel %vm7121, %v7116, %v7120
    %v7124 = vsel %vm7121, %v7118, %v7114
    %v7125 = vsel %vm7121, %v7120, %v7116
    %7126 = vst [vmem:[#allocation6 + $0x1a0] sm:$0xff] %v7124
    %7127 = vst [vmem:[#allocation6 + $0x1a8] sm:$0xff] %v7122
    %7128 = vst [vmem:[#allocation6 + $0x1b0] sm:$0xff] %v7125
    %7129 = vst [vmem:[#allocation6 + $0x1b8] sm:$0xff] %v7123
    %7130 = vrot.lane.b32.xlu0 %v6901, 14
    %v7131 = vpop.permute.xlu0 %7130
    %7132 = vrot.lane.b32.xlu0 %v6903, 14
    %v7133 = vpop.permute.xlu0 %7132
    %7134 = vrot.lane.b32.xlu0 %v6902, 14
    %v7135 = vpop.permute.xlu0 %7134
    %7136 = vrot.lane.b32.xlu0 %v6904, 14
    %v7137 = vpop.permute.xlu0 %7136
    %vm7138 = vcmp.lt.s32.totalorder %v982, 14
    %v7139 = vsel %vm7138, %v7131, %v7135
    %v7140 = vsel %vm7138, %v7133, %v7137
    %v7141 = vsel %vm7138, %v7135, %v7131
    %v7142 = vsel %vm7138, %v7137, %v7133
    %7143 = vst [vmem:[#allocation6 + $0x1c0] sm:$0xff] %v7141
    %7144 = vst [vmem:[#allocation6 + $0x1c8] sm:$0xff] %v7139
    %7145 = vst [vmem:[#allocation6 + $0x1d0] sm:$0xff] %v7142
    %7146 = vst [vmem:[#allocation6 + $0x1d8] sm:$0xff] %v7140
    %7147 = vrot.lane.b32.xlu0 %v6901, 15
    %v7148 = vpop.permute.xlu0 %7147
    %7149 = vrot.lane.b32.xlu0 %v6903, 15
    %v7150 = vpop.permute.xlu0 %7149
    %7151 = vrot.lane.b32.xlu0 %v6902, 15
    %v7152 = vpop.permute.xlu0 %7151
    %7153 = vrot.lane.b32.xlu0 %v6904, 15
    %v7154 = vpop.permute.xlu0 %7153
    %vm7155 = vcmp.lt.s32.totalorder %v982, 15
    %v7156 = vsel %vm7155, %v7148, %v7152
    %v7157 = vsel %vm7155, %v7150, %v7154
    %v7158 = vsel %vm7155, %v7152, %v7148
    %v7159 = vsel %vm7155, %v7154, %v7150
    %7160 = vst [vmem:[#allocation6 + $0x1e0] sm:$0xff] %v7158
    %7161 = vst [vmem:[#allocation6 + $0x1e8] sm:$0xff] %v7156
    %7162 = vst [vmem:[#allocation6 + $0x1f0] sm:$0xff] %v7159
    %7163 = vst [vmem:[#allocation6 + $0x1f8] sm:$0xff] %v7157
    %7164 = vrot.lane.b32.xlu0 %v6901, 16
    %v7165 = vpop.permute.xlu0 %7164
    %7166 = vrot.lane.b32.xlu0 %v6903, 16
    %v7167 = vpop.permute.xlu0 %7166
    %7168 = vrot.lane.b32.xlu0 %v6902, 16
    %v7169 = vpop.permute.xlu0 %7168
    %7170 = vrot.lane.b32.xlu0 %v6904, 16
    %v7171 = vpop.permute.xlu0 %7170
    %vm7172 = vcmp.lt.s32.totalorder %v982, 16
    %v7173 = vsel %vm7172, %v7165, %v7169
    %v7174 = vsel %vm7172, %v7167, %v7171
    %v7175 = vsel %vm7172, %v7169, %v7165
    %v7176 = vsel %vm7172, %v7171, %v7167
    %7177 = vst [vmem:[#allocation6 + $0x200] sm:$0xff] %v7175
    %7178 = vst [vmem:[#allocation6 + $0x208] sm:$0xff] %v7173
    %7179 = vst [vmem:[#allocation6 + $0x210] sm:$0xff] %v7176
    %7180 = vst [vmem:[#allocation6 + $0x218] sm:$0xff] %v7174
    %7181 = vrot.lane.b32.xlu0 %v6901, 17
    %v7182 = vpop.permute.xlu0 %7181
    %7183 = vrot.lane.b32.xlu0 %v6903, 17
    %v7184 = vpop.permute.xlu0 %7183
    %7185 = vrot.lane.b32.xlu0 %v6902, 17
    %v7186 = vpop.permute.xlu0 %7185
    %7187 = vrot.lane.b32.xlu0 %v6904, 17
    %v7188 = vpop.permute.xlu0 %7187
    %vm7189 = vcmp.lt.s32.totalorder %v982, 17
    %v7190 = vsel %vm7189, %v7182, %v7186
    %v7191 = vsel %vm7189, %v7184, %v7188
    %v7192 = vsel %vm7189, %v7186, %v7182
    %v7193 = vsel %vm7189, %v7188, %v7184
    %7194 = vst [vmem:[#allocation6 + $0x220] sm:$0xff] %v7192
    %7195 = vst [vmem:[#allocation6 + $0x228] sm:$0xff] %v7190
    %7196 = vst [vmem:[#allocation6 + $0x230] sm:$0xff] %v7193
    %7197 = vst [vmem:[#allocation6 + $0x238] sm:$0xff] %v7191
    %7198 = vrot.lane.b32.xlu0 %v6901, 18
    %v7199 = vpop.permute.xlu0 %7198
    %7200 = vrot.lane.b32.xlu0 %v6903, 18
    %v7201 = vpop.permute.xlu0 %7200
    %7202 = vrot.lane.b32.xlu0 %v6902, 18
    %v7203 = vpop.permute.xlu0 %7202
    %7204 = vrot.lane.b32.xlu0 %v6904, 18
    %v7205 = vpop.permute.xlu0 %7204
    %vm7206 = vcmp.lt.s32.totalorder %v982, 18
    %v7207 = vsel %vm7206, %v7199, %v7203
    %v7208 = vsel %vm7206, %v7201, %v7205
    %v7209 = vsel %vm7206, %v7203, %v7199
    %v7210 = vsel %vm7206, %v7205, %v7201
    %7211 = vst [vmem:[#allocation6 + $0x240] sm:$0xff] %v7209
    %7212 = vst [vmem:[#allocation6 + $0x248] sm:$0xff] %v7207
    %7213 = vst [vmem:[#allocation6 + $0x250] sm:$0xff] %v7210
    %7214 = vst [vmem:[#allocation6 + $0x258] sm:$0xff] %v7208
    %7215 = vrot.lane.b32.xlu0 %v6901, 19
    %v7216 = vpop.permute.xlu0 %7215
    %7217 = vrot.lane.b32.xlu0 %v6903, 19
    %v7218 = vpop.permute.xlu0 %7217
    %7219 = vrot.lane.b32.xlu0 %v6902, 19
    %v7220 = vpop.permute.xlu0 %7219
    %7221 = vrot.lane.b32.xlu0 %v6904, 19
    %v7222 = vpop.permute.xlu0 %7221
    %vm7223 = vcmp.lt.s32.totalorder %v982, 19
    %v7224 = vsel %vm7223, %v7216, %v7220
    %v7225 = vsel %vm7223, %v7218, %v7222
    %v7226 = vsel %vm7223, %v7220, %v7216
    %v7227 = vsel %vm7223, %v7222, %v7218
    %7228 = vst [vmem:[#allocation6 + $0x260] sm:$0xff] %v7226
    %7229 = vst [vmem:[#allocation6 + $0x268] sm:$0xff] %v7224
    %7230 = vst [vmem:[#allocation6 + $0x270] sm:$0xff] %v7227
    %7231 = vst [vmem:[#allocation6 + $0x278] sm:$0xff] %v7225
    %7232 = vrot.lane.b32.xlu0 %v6901, 20
    %v7233 = vpop.permute.xlu0 %7232
    %7234 = vrot.lane.b32.xlu0 %v6903, 20
    %v7235 = vpop.permute.xlu0 %7234
    %7236 = vrot.lane.b32.xlu0 %v6902, 20
    %v7237 = vpop.permute.xlu0 %7236
    %7238 = vrot.lane.b32.xlu0 %v6904, 20
    %v7239 = vpop.permute.xlu0 %7238
    %vm7240 = vcmp.lt.s32.totalorder %v982, 20
    %v7241 = vsel %vm7240, %v7233, %v7237
    %v7242 = vsel %vm7240, %v7235, %v7239
    %v7243 = vsel %vm7240, %v7237, %v7233
    %v7244 = vsel %vm7240, %v7239, %v7235
    %7245 = vst [vmem:[#allocation6 + $0x280] sm:$0xff] %v7243
    %7246 = vst [vmem:[#allocation6 + $0x288] sm:$0xff] %v7241
    %7247 = vst [vmem:[#allocation6 + $0x290] sm:$0xff] %v7244
    %7248 = vst [vmem:[#allocation6 + $0x298] sm:$0xff] %v7242
    %7249 = vrot.lane.b32.xlu0 %v6901, 21
    %v7250 = vpop.permute.xlu0 %7249
    %7251 = vrot.lane.b32.xlu0 %v6903, 21
    %v7252 = vpop.permute.xlu0 %7251
    %7253 = vrot.lane.b32.xlu0 %v6902, 21
    %v7254 = vpop.permute.xlu0 %7253
    %7255 = vrot.lane.b32.xlu0 %v6904, 21
    %v7256 = vpop.permute.xlu0 %7255
    %vm7257 = vcmp.lt.s32.totalorder %v982, 21
    %v7258 = vsel %vm7257, %v7250, %v7254
    %v7259 = vsel %vm7257, %v7252, %v7256
    %v7260 = vsel %vm7257, %v7254, %v7250
    %v7261 = vsel %vm7257, %v7256, %v7252
    %7262 = vst [vmem:[#allocation6 + $0x2a0] sm:$0xff] %v7260
    %7263 = vst [vmem:[#allocation6 + $0x2a8] sm:$0xff] %v7258
    %7264 = vst [vmem:[#allocation6 + $0x2b0] sm:$0xff] %v7261
    %7265 = vst [vmem:[#allocation6 + $0x2b8] sm:$0xff] %v7259
    %7266 = vrot.lane.b32.xlu0 %v6901, 22
    %v7267 = vpop.permute.xlu0 %7266
    %7268 = vrot.lane.b32.xlu0 %v6903, 22
    %v7269 = vpop.permute.xlu0 %7268
    %7270 = vrot.lane.b32.xlu0 %v6902, 22
    %v7271 = vpop.permute.xlu0 %7270
    %7272 = vrot.lane.b32.xlu0 %v6904, 22
    %v7273 = vpop.permute.xlu0 %7272
    %vm7274 = vcmp.lt.s32.totalorder %v982, 22
    %v7275 = vsel %vm7274, %v7267, %v7271
    %v7276 = vsel %vm7274, %v7269, %v7273
    %v7277 = vsel %vm7274, %v7271, %v7267
    %v7278 = vsel %vm7274, %v7273, %v7269
    %7279 = vst [vmem:[#allocation6 + $0x2c0] sm:$0xff] %v7277
    %7280 = vst [vmem:[#allocation6 + $0x2c8] sm:$0xff] %v7275
    %7281 = vst [vmem:[#allocation6 + $0x2d0] sm:$0xff] %v7278
    %7282 = vst [vmem:[#allocation6 + $0x2d8] sm:$0xff] %v7276
    %7283 = vrot.lane.b32.xlu0 %v6901, 23
    %v7284 = vpop.permute.xlu0 %7283
    %7285 = vrot.lane.b32.xlu0 %v6903, 23
    %v7286 = vpop.permute.xlu0 %7285
    %7287 = vrot.lane.b32.xlu0 %v6902, 23
    %v7288 = vpop.permute.xlu0 %7287
    %7289 = vrot.lane.b32.xlu0 %v6904, 23
    %v7290 = vpop.permute.xlu0 %7289
    %vm7291 = vcmp.lt.s32.totalorder %v982, 23
    %v7292 = vsel %vm7291, %v7284, %v7288
    %v7293 = vsel %vm7291, %v7286, %v7290
    %v7294 = vsel %vm7291, %v7288, %v7284
    %v7295 = vsel %vm7291, %v7290, %v7286
    %7296 = vst [vmem:[#allocation6 + $0x2e0] sm:$0xff] %v7294
    %7297 = vst [vmem:[#allocation6 + $0x2e8] sm:$0xff] %v7292
    %7298 = vst [vmem:[#allocation6 + $0x2f0] sm:$0xff] %v7295
    %7299 = vst [vmem:[#allocation6 + $0x2f8] sm:$0xff] %v7293
    %7300 = vrot.lane.b32.xlu0 %v6901, 24
    %v7301 = vpop.permute.xlu0 %7300
    %7302 = vrot.lane.b32.xlu0 %v6903, 24
    %v7303 = vpop.permute.xlu0 %7302
    %7304 = vrot.lane.b32.xlu0 %v6902, 24
    %v7305 = vpop.permute.xlu0 %7304
    %7306 = vrot.lane.b32.xlu0 %v6904, 24
    %v7307 = vpop.permute.xlu0 %7306
    %vm7308 = vcmp.lt.s32.totalorder %v982, 24
    %v7309 = vsel %vm7308, %v7301, %v7305
    %v7310 = vsel %vm7308, %v7303, %v7307
    %v7311 = vsel %vm7308, %v7305, %v7301
    %v7312 = vsel %vm7308, %v7307, %v7303
    %7313 = vst [vmem:[#allocation6 + $0x300] sm:$0xff] %v7311
    %7314 = vst [vmem:[#allocation6 + $0x308] sm:$0xff] %v7309
    %7315 = vst [vmem:[#allocation6 + $0x310] sm:$0xff] %v7312
    %7316 = vst [vmem:[#allocation6 + $0x318] sm:$0xff] %v7310
    %7317 = vrot.lane.b32.xlu0 %v6901, 25
    %v7318 = vpop.permute.xlu0 %7317
    %7319 = vrot.lane.b32.xlu0 %v6903, 25
    %v7320 = vpop.permute.xlu0 %7319
    %7321 = vrot.lane.b32.xlu0 %v6902, 25
    %v7322 = vpop.permute.xlu0 %7321
    %7323 = vrot.lane.b32.xlu0 %v6904, 25
    %v7324 = vpop.permute.xlu0 %7323
    %vm7325 = vcmp.lt.s32.totalorder %v982, 25
    %v7326 = vsel %vm7325, %v7318, %v7322
    %v7327 = vsel %vm7325, %v7320, %v7324
    %v7328 = vsel %vm7325, %v7322, %v7318
    %v7329 = vsel %vm7325, %v7324, %v7320
    %7330 = vst [vmem:[#allocation6 + $0x320] sm:$0xff] %v7328
    %7331 = vst [vmem:[#allocation6 + $0x328] sm:$0xff] %v7326
    %7332 = vst [vmem:[#allocation6 + $0x330] sm:$0xff] %v7329
    %7333 = vst [vmem:[#allocation6 + $0x338] sm:$0xff] %v7327
    %7334 = vrot.lane.b32.xlu0 %v6901, 26
    %v7335 = vpop.permute.xlu0 %7334
    %7336 = vrot.lane.b32.xlu0 %v6903, 26
    %v7337 = vpop.permute.xlu0 %7336
    %7338 = vrot.lane.b32.xlu0 %v6902, 26
    %v7339 = vpop.permute.xlu0 %7338
    %7340 = vrot.lane.b32.xlu0 %v6904, 26
    %v7341 = vpop.permute.xlu0 %7340
    %vm7342 = vcmp.lt.s32.totalorder %v982, 26
    %v7343 = vsel %vm7342, %v7335, %v7339
    %v7344 = vsel %vm7342, %v7337, %v7341
    %v7345 = vsel %vm7342, %v7339, %v7335
    %v7346 = vsel %vm7342, %v7341, %v7337
    %7347 = vst [vmem:[#allocation6 + $0x340] sm:$0xff] %v7345
    %7348 = vst [vmem:[#allocation6 + $0x348] sm:$0xff] %v7343
    %7349 = vst [vmem:[#allocation6 + $0x350] sm:$0xff] %v7346
    %7350 = vst [vmem:[#allocation6 + $0x358] sm:$0xff] %v7344
    %7351 = vrot.lane.b32.xlu0 %v6901, 27
    %v7352 = vpop.permute.xlu0 %7351
    %7353 = vrot.lane.b32.xlu0 %v6903, 27
    %v7354 = vpop.permute.xlu0 %7353
    %7355 = vrot.lane.b32.xlu0 %v6902, 27
    %v7356 = vpop.permute.xlu0 %7355
    %7357 = vrot.lane.b32.xlu0 %v6904, 27
    %v7358 = vpop.permute.xlu0 %7357
    %vm7359 = vcmp.lt.s32.totalorder %v982, 27
    %v7360 = vsel %vm7359, %v7352, %v7356
    %v7361 = vsel %vm7359, %v7354, %v7358
    %v7362 = vsel %vm7359, %v7356, %v7352
    %v7363 = vsel %vm7359, %v7358, %v7354
    %7364 = vst [vmem:[#allocation6 + $0x360] sm:$0xff] %v7362
    %7365 = vst [vmem:[#allocation6 + $0x368] sm:$0xff] %v7360
    %7366 = vst [vmem:[#allocation6 + $0x370] sm:$0xff] %v7363
    %7367 = vst [vmem:[#allocation6 + $0x378] sm:$0xff] %v7361
    %7368 = vrot.lane.b32.xlu0 %v6901, 28
    %v7369 = vpop.permute.xlu0 %7368
    %7370 = vrot.lane.b32.xlu0 %v6903, 28
    %v7371 = vpop.permute.xlu0 %7370
    %7372 = vrot.lane.b32.xlu0 %v6902, 28
    %v7373 = vpop.permute.xlu0 %7372
    %7374 = vrot.lane.b32.xlu0 %v6904, 28
    %v7375 = vpop.permute.xlu0 %7374
    %vm7376 = vcmp.lt.s32.totalorder %v982, 28
    %v7377 = vsel %vm7376, %v7369, %v7373
    %v7378 = vsel %vm7376, %v7371, %v7375
    %v7379 = vsel %vm7376, %v7373, %v7369
    %v7380 = vsel %vm7376, %v7375, %v7371
    %7381 = vst [vmem:[#allocation6 + $0x380] sm:$0xff] %v7379
    %7382 = vst [vmem:[#allocation6 + $0x388] sm:$0xff] %v7377
    %7383 = vst [vmem:[#allocation6 + $0x390] sm:$0xff] %v7380
    %7384 = vst [vmem:[#allocation6 + $0x398] sm:$0xff] %v7378
    %7385 = vrot.lane.b32.xlu0 %v6901, 29
    %v7386 = vpop.permute.xlu0 %7385
    %7387 = vrot.lane.b32.xlu0 %v6903, 29
    %v7388 = vpop.permute.xlu0 %7387
    %7389 = vrot.lane.b32.xlu0 %v6902, 29
    %v7390 = vpop.permute.xlu0 %7389
    %7391 = vrot.lane.b32.xlu0 %v6904, 29
    %v7392 = vpop.permute.xlu0 %7391
    %vm7393 = vcmp.lt.s32.totalorder %v982, 29
    %v7394 = vsel %vm7393, %v7386, %v7390
    %v7395 = vsel %vm7393, %v7388, %v7392
    %v7396 = vsel %vm7393, %v7390, %v7386
    %v7397 = vsel %vm7393, %v7392, %v7388
    %7398 = vst [vmem:[#allocation6 + $0x3a0] sm:$0xff] %v7396
    %7399 = vst [vmem:[#allocation6 + $0x3a8] sm:$0xff] %v7394
    %7400 = vst [vmem:[#allocation6 + $0x3b0] sm:$0xff] %v7397
    %7401 = vst [vmem:[#allocation6 + $0x3b8] sm:$0xff] %v7395
    %7402 = vrot.lane.b32.xlu0 %v6901, 30
    %v7403 = vpop.permute.xlu0 %7402
    %7404 = vrot.lane.b32.xlu0 %v6903, 30
    %v7405 = vpop.permute.xlu0 %7404
    %7406 = vrot.lane.b32.xlu0 %v6902, 30
    %v7407 = vpop.permute.xlu0 %7406
    %7408 = vrot.lane.b32.xlu0 %v6904, 30
    %v7409 = vpop.permute.xlu0 %7408
    %vm7410 = vcmp.lt.s32.totalorder %v982, 30
    %v7411 = vsel %vm7410, %v7403, %v7407
    %v7412 = vsel %vm7410, %v7405, %v7409
    %v7413 = vsel %vm7410, %v7407, %v7403
    %v7414 = vsel %vm7410, %v7409, %v7405
    %7415 = vst [vmem:[#allocation6 + $0x3c0] sm:$0xff] %v7413
    %7416 = vst [vmem:[#allocation6 + $0x3c8] sm:$0xff] %v7411
    %7417 = vst [vmem:[#allocation6 + $0x3d0] sm:$0xff] %v7414
    %7418 = vst [vmem:[#allocation6 + $0x3d8] sm:$0xff] %v7412
    %7419 = vrot.lane.b32.xlu0 %v6901, 31
    %v7420 = vpop.permute.xlu0 %7419
    %7421 = vrot.lane.b32.xlu0 %v6903, 31
    %v7422 = vpop.permute.xlu0 %7421
    %7423 = vrot.lane.b32.xlu0 %v6902, 31
    %v7424 = vpop.permute.xlu0 %7423
    %7425 = vrot.lane.b32.xlu0 %v6904, 31
    %v7426 = vpop.permute.xlu0 %7425
    %vm7427 = vcmp.lt.s32.totalorder %v982, 31
    %v7428 = vsel %vm7427, %v7420, %v7424
    %v7429 = vsel %vm7427, %v7422, %v7426
    %v7430 = vsel %vm7427, %v7424, %v7420
    %v7431 = vsel %vm7427, %v7426, %v7422
    %7432 = vst [vmem:[#allocation6 + $0x3e0] sm:$0xff] %v7430
    %7433 = vst [vmem:[#allocation6 + $0x3e8] sm:$0xff] %v7428
    %7434 = vst [vmem:[#allocation6 + $0x3f0] sm:$0xff] %v7431
    %7435 = vst [vmem:[#allocation6 + $0x3f8] sm:$0xff] %v7429
    %v7436 = vld [vmem:[#allocation2] sm:$0xff]
    %v7437 = vld [vmem:[#allocation2 + $0x10] sm:$0xff]
    %v7438 = vld [vmem:[#allocation2 + $0x20] sm:$0xff]
    %v7439 = vld [vmem:[#allocation2 + $0x30] sm:$0xff]
    %v7440 = vld [vmem:[#allocation2 + $0x40] sm:$0xff]
    %v7441 = vld [vmem:[#allocation2 + $0x50] sm:$0xff]
    %v7442 = vld [vmem:[#allocation2 + $0x60] sm:$0xff]
    %v7443 = vld [vmem:[#allocation2 + $0x70] sm:$0xff]
    %v7444 = vld [vmem:[#allocation2 + $0x80] sm:$0xff]
    %v7445 = vld [vmem:[#allocation2 + $0x90] sm:$0xff]
    %v7446 = vld [vmem:[#allocation2 + $0xa0] sm:$0xff]
    %v7447 = vld [vmem:[#allocation2 + $0xb0] sm:$0xff]
    %v7448 = vld [vmem:[#allocation2 + $0xc0] sm:$0xff]
    %v7449 = vld [vmem:[#allocation2 + $0xd0] sm:$0xff]
    %v7450 = vld [vmem:[#allocation2 + $0xe0] sm:$0xff]
    %v7451 = vld [vmem:[#allocation2 + $0xf0] sm:$0xff]
    %v7452 = vld [vmem:[%s18] sm:$0xff]
    %v7453 = vld [vmem:[%s18 + $0x8] sm:$0xff]
    %v7454 = vld [vmem:[%s18 + $0x10] sm:$0xff]
    %v7455 = vld [vmem:[%s18 + $0x18] sm:$0xff]
    %v7456 = vld [vmem:[%s18 + $0x20] sm:$0xff]
    %v7457 = vld [vmem:[%s18 + $0x28] sm:$0xff]
    %v7458 = vld [vmem:[%s18 + $0x30] sm:$0xff]
    %v7459 = vld [vmem:[%s18 + $0x38] sm:$0xff]
    %v7460 = vld [vmem:[%s18 + $0x40] sm:$0xff]
    %v7461 = vld [vmem:[%s18 + $0x48] sm:$0xff]
    %v7462 = vld [vmem:[%s18 + $0x50] sm:$0xff]
    %v7463 = vld [vmem:[%s18 + $0x58] sm:$0xff]
    %v7464 = vld [vmem:[%s18 + $0x60] sm:$0xff]
    %v7465 = vld [vmem:[%s18 + $0x68] sm:$0xff]
    %v7466 = vld [vmem:[%s18 + $0x70] sm:$0xff]
    %v7467 = vld [vmem:[%s18 + $0x78] sm:$0xff]
    %v7469 = vsel %vm307, %v7436, 0
    %v7472 = vsel %vm307, %v7437, 0
    %v7475 = vsel %vm307, %v7438, 0
    %v7478 = vsel %vm307, %v7439, 0
    %v7481 = vsel %vm307, %v7440, 0
    %v7484 = vsel %vm307, %v7441, 0
    %v7487 = vsel %vm307, %v7442, 0
    %v7490 = vsel %vm307, %v7443, 0
    %v7493 = vsel %vm307, %v7444, 0
    %v7496 = vsel %vm307, %v7445, 0
    %v7499 = vsel %vm307, %v7446, 0
    %v7502 = vsel %vm307, %v7447, 0
    %v7505 = vsel %vm307, %v7448, 0
    %v7508 = vsel %vm307, %v7449, 0
    %v7511 = vsel %vm307, %v7450, 0
    %v7514 = vsel %vm307, %v7451, 0
    %7516 = vmatprep.subr.mxu0 %v7453
    %7517 = vmatpush1.msra.mxu0 %v7452
    %7518 = vmatprep.subr.mxu0 %v7457
    %7519 = vmatpush1.msra.mxu0 %v7456
    %7520 = vmatprep.subr.mxu0 %v7461
    %7521 = vmatpush1.msra.mxu0 %v7460
    %7522 = vmatprep.subr.mxu0 %v7465
    %7523 = vmatpush1.msra.mxu0 %v7464
    %7524 = vmatprep.subr.mxu0 0.0
    %7525 = vmatpush1.msra.mxu0 0.0
    %7526 = vmatprep.subr.mxu0 0.0
    %7527 = vmatpush1.msra.mxu0 0.0
    %7528 = vmatprep.subr.mxu0 0.0
    %7529 = vmatpush1.msra.mxu0 0.0
    %7530 = vmatprep.subr.mxu0 0.0
    %7531 = vmatpush1.msra.mxu0 0.0
    %7532 = vmatprep.subr.mxu0 0.0
    %7533 = vmatpush1.msra.mxu0 0.0
    %7534 = vmatprep.subr.mxu0 0.0
    %7535 = vmatpush1.msra.mxu0 0.0
    %7536 = vmatprep.subr.mxu0 0.0
    %7537 = vmatpush1.msra.mxu0 0.0
    %7538 = vmatprep.subr.mxu0 0.0
    %7539 = vmatpush1.msra.mxu0 0.0
    %7540 = vmatprep.subr.mxu0 0.0
    %7541 = vmatpush1.msra.mxu0 0.0
    %7542 = vmatprep.subr.mxu0 0.0
    %7543 = vmatpush1.msra.mxu0 0.0
    %7544 = vmatprep.subr.mxu0 0.0
    %7545 = vmatpush1.msra.mxu0 0.0
    %7546 = vmatprep.subr.mxu0 0.0
    %7547 = vmatpush1.msra.mxu0 0.0
    %7548 = vmatprep.subr.mxu0 0.0
    %7549 = vmatpush1.msra.mxu0 0.0
    %7550 = vmatprep.subr.mxu0 0.0
    %7551 = vmatpush1.msra.mxu0 0.0
    %7552 = vmatprep.subr.mxu0 0.0
    %7553 = vmatpush1.msra.mxu0 0.0
    %7554 = vmatprep.subr.mxu0 0.0
    %7555 = vmatpush1.msra.mxu0 0.0
    %7556 = vmatprep.subr.mxu0 0.0
    %7557 = vmatpush1.msra.mxu0 0.0
    %7558 = vmatprep.subr.mxu0 0.0
    %7559 = vmatpush1.msra.mxu0 0.0
    %7560 = vmatprep.subr.mxu0 0.0
    %7561 = vmatpush1.msra.mxu0 0.0
    %7562 = vmatprep.subr.mxu0 0.0
    %7563 = vmatpush1.msra.mxu0 0.0
    %7564 = vmatprep.subr.mxu0 0.0
    %7565 = vmatpush1.msra.mxu0 0.0
    %7566 = vmatprep.subr.mxu0 0.0
    %7567 = vmatpush1.msra.mxu0 0.0
    %7568 = vmatprep.subr.mxu0 0.0
    %7569 = vmatpush1.msra.mxu0 0.0
    %7570 = vmatprep.subr.mxu0 0.0
    %7571 = vmatpush1.msra.mxu0 0.0
    %7572 = vmatprep.subr.mxu0 0.0
    %7573 = vmatpush1.msra.mxu0 0.0
    %7574 = vmatprep.subr.mxu0 0.0
    %7575 = vmatpush1.msra.mxu0 0.0
    %7576 = vmatprep.subr.mxu0 0.0
    %7577 = vmatpush1.msra.mxu0 0.0
    %7578 = vmatprep.subr.mxu0 0.0
    %7579 = vmatpush1.msra.mxu0 0.0
    %7580 = vmatprep.mubr.f32.mxu0 0.0
    %7581 = vmatmul.mubr.f32.gmra.mrb[0].mxu0 %v7469
    %v7582 = vpop.f32.mrb[0].mxu0
    %v7583 = vadd.f32 0.0, %v7582
    %v7584 = vpop.f32.mrb[0].mxu0
    %v7585 = vadd.f32 0.0, %v7584
    %7586 = vmatprep.mubr.f32.mxu0 0.0
    %7587 = vmatmul.mubr.f32.gmra.mrb[0].mxu0 %v7472
    %v7588 = vpop.f32.mrb[0].mxu0
    %v7589 = vadd.f32 0.0, %v7588
    %v7590 = vpop.f32.mrb[0].mxu0
    %v7591 = vadd.f32 0.0, %v7590
    %7592 = vmatprep.mubr.f32.mxu0 0.0
    %7593 = vmatmul.mubr.f32.gmra.mrb[0].mxu0 %v7475
    %v7594 = vpop.f32.mrb[0].mxu0
    %v7595 = vadd.f32 0.0, %v7594
    %v7596 = vpop.f32.mrb[0].mxu0
    %v7597 = vadd.f32 0.0, %v7596
    %7598 = vmatprep.mubr.f32.mxu0 0.0
    %7599 = vmatmul.mubr.f32.gmra.mrb[0].mxu0 %v7478
    %v7600 = vpop.f32.mrb[0].mxu0
    %v7601 = vadd.f32 0.0, %v7600
    %v7602 = vpop.f32.mrb[0].mxu0
    %v7603 = vadd.f32 0.0, %v7602
    %7604 = vmatprep.mubr.f32.mxu0 0.0
    %7605 = vmatmul.mubr.f32.gmra.mrb[0].mxu0 %v7481
    %v7606 = vpop.f32.mrb[0].mxu0
    %v7607 = vadd.f32 0.0, %v7606
    %v7608 = vpop.f32.mrb[0].mxu0
    %v7609 = vadd.f32 0.0, %v7608
    %7610 = vmatprep.mubr.f32.mxu0 0.0
    %7611 = vmatmul.mubr.f32.gmra.mrb[0].mxu0 %v7484
    %v7612 = vpop.f32.mrb[0].mxu0
    %v7613 = vadd.f32 0.0, %v7612
    %v7614 = vpop.f32.mrb[0].mxu0
    %v7615 = vadd.f32 0.0, %v7614
    %7616 = vmatprep.mubr.f32.mxu0 0.0
    %7617 = vmatmul.mubr.f32.gmra.mrb[0].mxu0 %v7487
    %v7618 = vpop.f32.mrb[0].mxu0
    %v7619 = vadd.f32 0.0, %v7618
    %v7620 = vpop.f32.mrb[0].mxu0
    %v7621 = vadd.f32 0.0, %v7620
    %7622 = vmatprep.mubr.f32.mxu0 0.0
    %7623 = vmatmul.mubr.f32.gmra.mrb[0].mxu0 %v7490
    %v7624 = vpop.f32.mrb[0].mxu0
    %v7625 = vadd.f32 0.0, %v7624
    %v7626 = vpop.f32.mrb[0].mxu0
    %v7627 = vadd.f32 0.0, %v7626
    %7628 = vmatprep.mubr.f32.mxu0 0.0
    %7629 = vmatmul.mubr.f32.gmra.mrb[0].mxu0 %v7493
    %v7630 = vpop.f32.mrb[0].mxu0
    %v7631 = vadd.f32 0.0, %v7630
    %v7632 = vpop.f32.mrb[0].mxu0
    %v7633 = vadd.f32 0.0, %v7632
    %7634 = vmatprep.mubr.f32.mxu0 0.0
    %7635 = vmatmul.mubr.f32.gmra.mrb[0].mxu0 %v7496
    %v7636 = vpop.f32.mrb[0].mxu0
    %v7637 = vadd.f32 0.0, %v7636
    %v7638 = vpop.f32.mrb[0].mxu0
    %v7639 = vadd.f32 0.0, %v7638
    %7640 = vmatprep.mubr.f32.mxu0 0.0
    %7641 = vmatmul.mubr.f32.gmra.mrb[0].mxu0 %v7499
    %v7642 = vpop.f32.mrb[0].mxu0
    %v7643 = vadd.f32 0.0, %v7642
    %v7644 = vpop.f32.mrb[0].mxu0
    %v7645 = vadd.f32 0.0, %v7644
    %7646 = vmatprep.mubr.f32.mxu0 0.0
    %7647 = vmatmul.mubr.f32.gmra.mrb[0].mxu0 %v7502
    %v7648 = vpop.f32.mrb[0].mxu0
    %v7649 = vadd.f32 0.0, %v7648
    %v7650 = vpop.f32.mrb[0].mxu0
    %v7651 = vadd.f32 0.0, %v7650
    %7652 = vmatprep.mubr.f32.mxu0 0.0
    %7653 = vmatmul.mubr.f32.gmra.mrb[0].mxu0 %v7505
    %v7654 = vpop.f32.mrb[0].mxu0
    %v7655 = vadd.f32 0.0, %v7654
    %v7656 = vpop.f32.mrb[0].mxu0
    %v7657 = vadd.f32 0.0, %v7656
    %7658 = vmatprep.mubr.f32.mxu0 0.0
    %7659 = vmatmul.mubr.f32.gmra.mrb[0].mxu0 %v7508
    %v7660 = vpop.f32.mrb[0].mxu0
    %v7661 = vadd.f32 0.0, %v7660
    %v7662 = vpop.f32.mrb[0].mxu0
    %v7663 = vadd.f32 0.0, %v7662
    %7664 = vmatprep.mubr.f32.mxu0 0.0
    %7665 = vmatmul.mubr.f32.gmra.mrb[0].mxu0 %v7511
    %v7666 = vpop.f32.mrb[0].mxu0
    %v7667 = vadd.f32 0.0, %v7666
    %v7668 = vpop.f32.mrb[0].mxu0
    %v7669 = vadd.f32 0.0, %v7668
    %7670 = vmatprep.mubr.f32.mxu0 0.0
    %7671 = vmatmul.mubr.f32.gmra.mrb[0].mxu0 %v7514
    %v7672 = vpop.f32.mrb[0].mxu0
    %v7673 = vadd.f32 0.0, %v7672
    %v7674 = vpop.f32.mrb[0].mxu0
    %v7675 = vadd.f32 0.0, %v7674
    %7676 = vdwg.mxu0
    %7677 = vmatprep.subr.mxu0 %v7455
    %7678 = vmatpush1.msra.mxu0 %v7454
    %7679 = vmatprep.subr.mxu0 %v7459
    %7680 = vmatpush1.msra.mxu0 %v7458
    %7681 = vmatprep.subr.mxu0 %v7463
    %7682 = vmatpush1.msra.mxu0 %v7462
    %7683 = vmatprep.subr.mxu0 %v7467
    %7684 = vmatpush1.msra.mxu0 %v7466
    %7685 = vmatprep.subr.mxu0 0.0
    %7686 = vmatpush1.msra.mxu0 0.0
    %7687 = vmatprep.subr.mxu0 0.0
    %7688 = vmatpush1.msra.mxu0 0.0
    %7689 = vmatprep.subr.mxu0 0.0
    %7690 = vmatpush1.msra.mxu0 0.0
    %7691 = vmatprep.subr.mxu0 0.0
    %7692 = vmatpush1.msra.mxu0 0.0
    %7693 = vmatprep.subr.mxu0 0.0
    %7694 = vmatpush1.msra.mxu0 0.0
    %7695 = vmatprep.subr.mxu0 0.0
    %7696 = vmatpush1.msra.mxu0 0.0
    %7697 = vmatprep.subr.mxu0 0.0
    %7698 = vmatpush1.msra.mxu0 0.0
    %7699 = vmatprep.subr.mxu0 0.0
    %7700 = vmatpush1.msra.mxu0 0.0
    %7701 = vmatprep.subr.mxu0 0.0
    %7702 = vmatpush1.msra.mxu0 0.0
    %7703 = vmatprep.subr.mxu0 0.0
    %7704 = vmatpush1.msra.mxu0 0.0
    %7705 = vmatprep.subr.mxu0 0.0
    %7706 = vmatpush1.msra.mxu0 0.0
    %7707 = vmatprep.subr.mxu0 0.0
    %7708 = vmatpush1.msra.mxu0 0.0
    %7709 = vmatprep.subr.mxu0 0.0
    %7710 = vmatpush1.msra.mxu0 0.0
    %7711 = vmatprep.subr.mxu0 0.0
    %7712 = vmatpush1.msra.mxu0 0.0
    %7713 = vmatprep.subr.mxu0 0.0
    %7714 = vmatpush1.msra.mxu0 0.0
    %7715 = vmatprep.subr.mxu0 0.0
    %7716 = vmatpush1.msra.mxu0 0.0
    %7717 = vmatprep.subr.mxu0 0.0
    %7718 = vmatpush1.msra.mxu0 0.0
    %7719 = vmatprep.subr.mxu0 0.0
    %7720 = vmatpush1.msra.mxu0 0.0
    %7721 = vmatprep.subr.mxu0 0.0
    %7722 = vmatpush1.msra.mxu0 0.0
    %7723 = vmatprep.subr.mxu0 0.0
    %7724 = vmatpush1.msra.mxu0 0.0
    %7725 = vmatprep.subr.mxu0 0.0
    %7726 = vmatpush1.msra.mxu0 0.0
    %7727 = vmatprep.subr.mxu0 0.0
    %7728 = vmatpush1.msra.mxu0 0.0
    %7729 = vmatprep.subr.mxu0 0.0
    %7730 = vmatpush1.msra.mxu0 0.0
    %7731 = vmatprep.subr.mxu0 0.0
    %7732 = vmatpush1.msra.mxu0 0.0
    %7733 = vmatprep.subr.mxu0 0.0
    %7734 = vmatpush1.msra.mxu0 0.0
    %7735 = vmatprep.subr.mxu0 0.0
    %7736 = vmatpush1.msra.mxu0 0.0
    %7737 = vmatprep.subr.mxu0 0.0
    %7738 = vmatpush1.msra.mxu0 0.0
    %7739 = vmatprep.subr.mxu0 0.0
    %7740 = vmatpush1.msra.mxu0 0.0
    %7741 = vmatprep.mubr.f32.mxu0 0.0
    %7742 = vmatmul.mubr.f32.gmra.mrb[0].mxu0 %v7469
    %v7743 = vpop.f32.mrb[0].mxu0
    %v7744 = vadd.f32 0.0, %v7743
    %v7745 = vpop.f32.mrb[0].mxu0
    %v7746 = vadd.f32 0.0, %v7745
    %7747 = vmatprep.mubr.f32.mxu0 0.0
    %7748 = vmatmul.mubr.f32.gmra.mrb[0].mxu0 %v7472
    %v7749 = vpop.f32.mrb[0].mxu0
    %v7750 = vadd.f32 0.0, %v7749
    %v7751 = vpop.f32.mrb[0].mxu0
    %v7752 = vadd.f32 0.0, %v7751
    %7753 = vmatprep.mubr.f32.mxu0 0.0
    %7754 = vmatmul.mubr.f32.gmra.mrb[0].mxu0 %v7475
    %v7755 = vpop.f32.mrb[0].mxu0
    %v7756 = vadd.f32 0.0, %v7755
    %v7757 = vpop.f32.mrb[0].mxu0
    %v7758 = vadd.f32 0.0, %v7757
    %7759 = vmatprep.mubr.f32.mxu0 0.0
    %7760 = vmatmul.mubr.f32.gmra.mrb[0].mxu0 %v7478
    %v7761 = vpop.f32.mrb[0].mxu0
    %v7762 = vadd.f32 0.0, %v7761
    %v7763 = vpop.f32.mrb[0].mxu0
    %v7764 = vadd.f32 0.0, %v7763
    %7765 = vmatprep.mubr.f32.mxu0 0.0
    %7766 = vmatmul.mubr.f32.gmra.mrb[0].mxu0 %v7481
    %v7767 = vpop.f32.mrb[0].mxu0
    %v7768 = vadd.f32 0.0, %v7767
    %v7769 = vpop.f32.mrb[0].mxu0
    %v7770 = vadd.f32 0.0, %v7769
    %7771 = vmatprep.mubr.f32.mxu0 0.0
    %7772 = vmatmul.mubr.f32.gmra.mrb[0].mxu0 %v7484
    %v7773 = vpop.f32.mrb[0].mxu0
    %v7774 = vadd.f32 0.0, %v7773
    %v7775 = vpop.f32.mrb[0].mxu0
    %v7776 = vadd.f32 0.0, %v7775
    %7777 = vmatprep.mubr.f32.mxu0 0.0
    %7778 = vmatmul.mubr.f32.gmra.mrb[0].mxu0 %v7487
    %v7779 = vpop.f32.mrb[0].mxu0
    %v7780 = vadd.f32 0.0, %v7779
    %v7781 = vpop.f32.mrb[0].mxu0
    %v7782 = vadd.f32 0.0, %v7781
    %7783 = vmatprep.mubr.f32.mxu0 0.0
    %7784 = vmatmul.mubr.f32.gmra.mrb[0].mxu0 %v7490
    %v7785 = vpop.f32.mrb[0].mxu0
    %v7786 = vadd.f32 0.0, %v7785
    %v7787 = vpop.f32.mrb[0].mxu0
    %v7788 = vadd.f32 0.0, %v7787
    %7789 = vmatprep.mubr.f32.mxu0 0.0
    %7790 = vmatmul.mubr.f32.gmra.mrb[0].mxu0 %v7493
    %v7791 = vpop.f32.mrb[0].mxu0
    %v7792 = vadd.f32 0.0, %v7791
    %v7793 = vpop.f32.mrb[0].mxu0
    %v7794 = vadd.f32 0.0, %v7793
    %7795 = vmatprep.mubr.f32.mxu0 0.0
    %7796 = vmatmul.mubr.f32.gmra.mrb[0].mxu0 %v7496
    %v7797 = vpop.f32.mrb[0].mxu0
    %v7798 = vadd.f32 0.0, %v7797
    %v7799 = vpop.f32.mrb[0].mxu0
    %v7800 = vadd.f32 0.0, %v7799
    %7801 = vmatprep.mubr.f32.mxu0 0.0
    %7802 = vmatmul.mubr.f32.gmra.mrb[0].mxu0 %v7499
    %v7803 = vpop.f32.mrb[0].mxu0
    %v7804 = vadd.f32 0.0, %v7803
    %v7805 = vpop.f32.mrb[0].mxu0
    %v7806 = vadd.f32 0.0, %v7805
    %7807 = vmatprep.mubr.f32.mxu0 0.0
    %7808 = vmatmul.mubr.f32.gmra.mrb[0].mxu0 %v7502
    %v7809 = vpop.f32.mrb[0].mxu0
    %v7810 = vadd.f32 0.0, %v7809
    %v7811 = vpop.f32.mrb[0].mxu0
    %v7812 = vadd.f32 0.0, %v7811
    %7813 = vmatprep.mubr.f32.mxu0 0.0
    %7814 = vmatmul.mubr.f32.gmra.mrb[0].mxu0 %v7505
    %v7815 = vpop.f32.mrb[0].mxu0
    %v7816 = vadd.f32 0.0, %v7815
    %v7817 = vpop.f32.mrb[0].mxu0
    %v7818 = vadd.f32 0.0, %v7817
    %7819 = vmatprep.mubr.f32.mxu0 0.0
    %7820 = vmatmul.mubr.f32.gmra.mrb[0].mxu0 %v7508
    %v7821 = vpop.f32.mrb[0].mxu0
    %v7822 = vadd.f32 0.0, %v7821
    %v7823 = vpop.f32.mrb[0].mxu0
    %v7824 = vadd.f32 0.0, %v7823
    %7825 = vmatprep.mubr.f32.mxu0 0.0
    %7826 = vmatmul.mubr.f32.gmra.mrb[0].mxu0 %v7511
    %v7827 = vpop.f32.mrb[0].mxu0
    %v7828 = vadd.f32 0.0, %v7827
    %v7829 = vpop.f32.mrb[0].mxu0
    %v7830 = vadd.f32 0.0, %v7829
    %7831 = vmatprep.mubr.f32.mxu0 0.0
    %7832 = vmatmul.mubr.f32.gmra.mrb[0].mxu0 %v7514
    %v7833 = vpop.f32.mrb[0].mxu0
    %v7834 = vadd.f32 0.0, %v7833
    %v7835 = vpop.f32.mrb[0].mxu0
    %v7836 = vadd.f32 0.0, %v7835
    %7837 = vdwg.mxu0
    %v7838 = vld [vmem:[#allocation25] sm:$0xff]
    %v7839 = vld [vmem:[#allocation25 + $0x8] sm:$0xff]
    %v7840 = vld [vmem:[#allocation25 + $0x10] sm:$0xff]
    %v7841 = vld [vmem:[#allocation25 + $0x18] sm:$0xff]
    %v7842 = vld [vmem:[#allocation25 + $0x20] sm:$0xff]
    %v7843 = vld [vmem:[#allocation25 + $0x28] sm:$0xff]
    %v7844 = vld [vmem:[#allocation25 + $0x30] sm:$0xff]
    %v7845 = vld [vmem:[#allocation25 + $0x38] sm:$0xff]
    %v7846 = vld [vmem:[#allocation25 + $0x40] sm:$0xff]
    %v7847 = vld [vmem:[#allocation25 + $0x48] sm:$0xff]
    %v7848 = vld [vmem:[#allocation25 + $0x50] sm:$0xff]
    %v7849 = vld [vmem:[#allocation25 + $0x58] sm:$0xff]
    %v7850 = vld [vmem:[#allocation25 + $0x60] sm:$0xff]
    %v7851 = vld [vmem:[#allocation25 + $0x68] sm:$0xff]
    %v7852 = vld [vmem:[#allocation25 + $0x70] sm:$0xff]
    %v7853 = vld [vmem:[#allocation25 + $0x78] sm:$0xff]
    %v7854 = vld [vmem:[#allocation25 + $0x80] sm:$0xff]
    %v7855 = vld [vmem:[#allocation25 + $0x88] sm:$0xff]
    %v7856 = vld [vmem:[#allocation25 + $0x90] sm:$0xff]
    %v7857 = vld [vmem:[#allocation25 + $0x98] sm:$0xff]
    %v7858 = vld [vmem:[#allocation25 + $0xa0] sm:$0xff]
    %v7859 = vld [vmem:[#allocation25 + $0xa8] sm:$0xff]
    %v7860 = vld [vmem:[#allocation25 + $0xb0] sm:$0xff]
    %v7861 = vld [vmem:[#allocation25 + $0xb8] sm:$0xff]
    %v7862 = vld [vmem:[#allocation25 + $0xc0] sm:$0xff]
    %v7863 = vld [vmem:[#allocation25 + $0xc8] sm:$0xff]
    %v7864 = vld [vmem:[#allocation25 + $0xd0] sm:$0xff]
    %v7865 = vld [vmem:[#allocation25 + $0xd8] sm:$0xff]
    %v7866 = vld [vmem:[#allocation25 + $0xe0] sm:$0xff]
    %v7867 = vld [vmem:[#allocation25 + $0xe8] sm:$0xff]
    %v7868 = vld [vmem:[#allocation25 + $0xf0] sm:$0xff]
    %v7869 = vld [vmem:[#allocation25 + $0xf8] sm:$0xff]
    %v7870 = vld [vmem:[#allocation25 + $0x100] sm:$0xff]
    %v7871 = vld [vmem:[#allocation25 + $0x108] sm:$0xff]
    %v7872 = vld [vmem:[#allocation25 + $0x110] sm:$0xff]
    %v7873 = vld [vmem:[#allocation25 + $0x118] sm:$0xff]
    %v7874 = vld [vmem:[#allocation25 + $0x120] sm:$0xff]
    %v7875 = vld [vmem:[#allocation25 + $0x128] sm:$0xff]
    %v7876 = vld [vmem:[#allocation25 + $0x130] sm:$0xff]
    %v7877 = vld [vmem:[#allocation25 + $0x138] sm:$0xff]
    %v7878 = vld [vmem:[#allocation25 + $0x140] sm:$0xff]
    %v7879 = vld [vmem:[#allocation25 + $0x148] sm:$0xff]
    %v7880 = vld [vmem:[#allocation25 + $0x150] sm:$0xff]
    %v7881 = vld [vmem:[#allocation25 + $0x158] sm:$0xff]
    %v7882 = vld [vmem:[#allocation25 + $0x160] sm:$0xff]
    %v7883 = vld [vmem:[#allocation25 + $0x168] sm:$0xff]
    %v7884 = vld [vmem:[#allocation25 + $0x170] sm:$0xff]
    %v7885 = vld [vmem:[#allocation25 + $0x178] sm:$0xff]
    %v7886 = vld [vmem:[#allocation25 + $0x180] sm:$0xff]
    %v7887 = vld [vmem:[#allocation25 + $0x188] sm:$0xff]
    %v7888 = vld [vmem:[#allocation25 + $0x190] sm:$0xff]
    %v7889 = vld [vmem:[#allocation25 + $0x198] sm:$0xff]
    %v7890 = vld [vmem:[#allocation25 + $0x1a0] sm:$0xff]
    %v7891 = vld [vmem:[#allocation25 + $0x1a8] sm:$0xff]
    %v7892 = vld [vmem:[#allocation25 + $0x1b0] sm:$0xff]
    %v7893 = vld [vmem:[#allocation25 + $0x1b8] sm:$0xff]
    %v7894 = vld [vmem:[#allocation25 + $0x1c0] sm:$0xff]
    %v7895 = vld [vmem:[#allocation25 + $0x1c8] sm:$0xff]
    %v7896 = vld [vmem:[#allocation25 + $0x1d0] sm:$0xff]
    %v7897 = vld [vmem:[#allocation25 + $0x1d8] sm:$0xff]
    %v7898 = vld [vmem:[#allocation25 + $0x1e0] sm:$0xff]
    %v7899 = vld [vmem:[#allocation25 + $0x1e8] sm:$0xff]
    %v7900 = vld [vmem:[#allocation25 + $0x1f0] sm:$0xff]
    %v7901 = vld [vmem:[#allocation25 + $0x1f8] sm:$0xff]
    %v7902 = vmul.f32 %v7583, %v7838
    %v7903 = vmul.f32 %v7585, %v7839
    %v7904 = vmul.f32 %v7744, %v7840
    %v7905 = vmul.f32 %v7746, %v7841
    %v7906 = vmul.f32 %v7589, %v7842
    %v7907 = vmul.f32 %v7591, %v7843
    %v7908 = vmul.f32 %v7750, %v7844
    %v7909 = vmul.f32 %v7752, %v7845
    %v7910 = vmul.f32 %v7595, %v7846
    %v7911 = vmul.f32 %v7597, %v7847
    %v7912 = vmul.f32 %v7756, %v7848
    %v7913 = vmul.f32 %v7758, %v7849
    %v7914 = vmul.f32 %v7601, %v7850
    %v7915 = vmul.f32 %v7603, %v7851
    %v7916 = vmul.f32 %v7762, %v7852
    %v7917 = vmul.f32 %v7764, %v7853
    %v7918 = vmul.f32 %v7607, %v7854
    %v7919 = vmul.f32 %v7609, %v7855
    %v7920 = vmul.f32 %v7768, %v7856
    %v7921 = vmul.f32 %v7770, %v7857
    %v7922 = vmul.f32 %v7613, %v7858
    %v7923 = vmul.f32 %v7615, %v7859
    %v7924 = vmul.f32 %v7774, %v7860
    %v7925 = vmul.f32 %v7776, %v7861
    %v7926 = vmul.f32 %v7619, %v7862
    %v7927 = vmul.f32 %v7621, %v7863
    %v7928 = vmul.f32 %v7780, %v7864
    %v7929 = vmul.f32 %v7782, %v7865
    %v7930 = vmul.f32 %v7625, %v7866
    %v7931 = vmul.f32 %v7627, %v7867
    %v7932 = vmul.f32 %v7786, %v7868
    %v7933 = vmul.f32 %v7788, %v7869
    %v7934 = vmul.f32 %v7631, %v7870
    %v7935 = vmul.f32 %v7633, %v7871
    %v7936 = vmul.f32 %v7792, %v7872
    %v7937 = vmul.f32 %v7794, %v7873
    %v7938 = vmul.f32 %v7637, %v7874
    %v7939 = vmul.f32 %v7639, %v7875
    %v7940 = vmul.f32 %v7798, %v7876
    %v7941 = vmul.f32 %v7800, %v7877
    %v7942 = vmul.f32 %v7643, %v7878
    %v7943 = vmul.f32 %v7645, %v7879
    %v7944 = vmul.f32 %v7804, %v7880
    %v7945 = vmul.f32 %v7806, %v7881
    %v7946 = vmul.f32 %v7649, %v7882
    %v7947 = vmul.f32 %v7651, %v7883
    %v7948 = vmul.f32 %v7810, %v7884
    %v7949 = vmul.f32 %v7812, %v7885
    %v7950 = vmul.f32 %v7655, %v7886
    %v7951 = vmul.f32 %v7657, %v7887
    %v7952 = vmul.f32 %v7816, %v7888
    %v7953 = vmul.f32 %v7818, %v7889
    %v7954 = vmul.f32 %v7661, %v7890
    %v7955 = vmul.f32 %v7663, %v7891
    %v7956 = vmul.f32 %v7822, %v7892
    %v7957 = vmul.f32 %v7824, %v7893
    %v7958 = vmul.f32 %v7667, %v7894
    %v7959 = vmul.f32 %v7669, %v7895
    %v7960 = vmul.f32 %v7828, %v7896
    %v7961 = vmul.f32 %v7830, %v7897
    %v7962 = vmul.f32 %v7673, %v7898
    %v7963 = vmul.f32 %v7675, %v7899
    %v7964 = vmul.f32 %v7834, %v7900
    %v7965 = vmul.f32 %v7836, %v7901
    %7966 = vst [vmem:[#allocation5] sm:$0xff] %v7902
    %7967 = vst [vmem:[#allocation5 + $0x8] sm:$0xff] %v7903
    %7968 = vst [vmem:[#allocation5 + $0x10] sm:$0xff] %v7904
    %7969 = vst [vmem:[#allocation5 + $0x18] sm:$0xff] %v7905
    %7970 = vst [vmem:[#allocation5 + $0x20] sm:$0xff] %v7906
    %7971 = vst [vmem:[#allocation5 + $0x28] sm:$0xff] %v7907
    %7972 = vst [vmem:[#allocation5 + $0x30] sm:$0xff] %v7908
    %7973 = vst [vmem:[#allocation5 + $0x38] sm:$0xff] %v7909
    %7974 = vst [vmem:[#allocation5 + $0x40] sm:$0xff] %v7910
    %7975 = vst [vmem:[#allocation5 + $0x48] sm:$0xff] %v7911
    %7976 = vst [vmem:[#allocation5 + $0x50] sm:$0xff] %v7912
    %7977 = vst [vmem:[#allocation5 + $0x58] sm:$0xff] %v7913
    %7978 = vst [vmem:[#allocation5 + $0x60] sm:$0xff] %v7914
    %7979 = vst [vmem:[#allocation5 + $0x68] sm:$0xff] %v7915
    %7980 = vst [vmem:[#allocation5 + $0x70] sm:$0xff] %v7916
    %7981 = vst [vmem:[#allocation5 + $0x78] sm:$0xff] %v7917
    %7982 = vst [vmem:[#allocation5 + $0x80] sm:$0xff] %v7918
    %7983 = vst [vmem:[#allocation5 + $0x88] sm:$0xff] %v7919
    %7984 = vst [vmem:[#allocation5 + $0x90] sm:$0xff] %v7920
    %7985 = vst [vmem:[#allocation5 + $0x98] sm:$0xff] %v7921
    %7986 = vst [vmem:[#allocation5 + $0xa0] sm:$0xff] %v7922
    %7987 = vst [vmem:[#allocation5 + $0xa8] sm:$0xff] %v7923
    %7988 = vst [vmem:[#allocation5 + $0xb0] sm:$0xff] %v7924
    %7989 = vst [vmem:[#allocation5 + $0xb8] sm:$0xff] %v7925
    %7990 = vst [vmem:[#allocation5 + $0xc0] sm:$0xff] %v7926
    %7991 = vst [vmem:[#allocation5 + $0xc8] sm:$0xff] %v7927
    %7992 = vst [vmem:[#allocation5 + $0xd0] sm:$0xff] %v7928
    %7993 = vst [vmem:[#allocation5 + $0xd8] sm:$0xff] %v7929
    %7994 = vst [vmem:[#allocation5 + $0xe0] sm:$0xff] %v7930
    %7995 = vst [vmem:[#allocation5 + $0xe8] sm:$0xff] %v7931
    %7996 = vst [vmem:[#allocation5 + $0xf0] sm:$0xff] %v7932
    %7997 = vst [vmem:[#allocation5 + $0xf8] sm:$0xff] %v7933
    %7998 = vst [vmem:[#allocation5 + $0x100] sm:$0xff] %v7934
    %7999 = vst [vmem:[#allocation5 + $0x108] sm:$0xff] %v7935
    %8000 = vst [vmem:[#allocation5 + $0x110] sm:$0xff] %v7936
    %8001 = vst [vmem:[#allocation5 + $0x118] sm:$0xff] %v7937
    %8002 = vst [vmem:[#allocation5 + $0x120] sm:$0xff] %v7938
    %8003 = vst [vmem:[#allocation5 + $0x128] sm:$0xff] %v7939
    %8004 = vst [vmem:[#allocation5 + $0x130] sm:$0xff] %v7940
    %8005 = vst [vmem:[#allocation5 + $0x138] sm:$0xff] %v7941
    %8006 = vst [vmem:[#allocation5 + $0x140] sm:$0xff] %v7942
    %8007 = vst [vmem:[#allocation5 + $0x148] sm:$0xff] %v7943
    %8008 = vst [vmem:[#allocation5 + $0x150] sm:$0xff] %v7944
    %8009 = vst [vmem:[#allocation5 + $0x158] sm:$0xff] %v7945
    %8010 = vst [vmem:[#allocation5 + $0x160] sm:$0xff] %v7946
    %8011 = vst [vmem:[#allocation5 + $0x168] sm:$0xff] %v7947
    %8012 = vst [vmem:[#allocation5 + $0x170] sm:$0xff] %v7948
    %8013 = vst [vmem:[#allocation5 + $0x178] sm:$0xff] %v7949
    %8014 = vst [vmem:[#allocation5 + $0x180] sm:$0xff] %v7950
    %8015 = vst [vmem:[#allocation5 + $0x188] sm:$0xff] %v7951
    %8016 = vst [vmem:[#allocation5 + $0x190] sm:$0xff] %v7952
    %8017 = vst [vmem:[#allocation5 + $0x198] sm:$0xff] %v7953
    %8018 = vst [vmem:[#allocation5 + $0x1a0] sm:$0xff] %v7954
    %8019 = vst [vmem:[#allocation5 + $0x1a8] sm:$0xff] %v7955
    %8020 = vst [vmem:[#allocation5 + $0x1b0] sm:$0xff] %v7956
    %8021 = vst [vmem:[#allocation5 + $0x1b8] sm:$0xff] %v7957
    %8022 = vst [vmem:[#allocation5 + $0x1c0] sm:$0xff] %v7958
    %8023 = vst [vmem:[#allocation5 + $0x1c8] sm:$0xff] %v7959
    %8024 = vst [vmem:[#allocation5 + $0x1d0] sm:$0xff] %v7960
    %8025 = vst [vmem:[#allocation5 + $0x1d8] sm:$0xff] %v7961
    %8026 = vst [vmem:[#allocation5 + $0x1e0] sm:$0xff] %v7962
    %8027 = vst [vmem:[#allocation5 + $0x1e8] sm:$0xff] %v7963
    %8028 = vst [vmem:[#allocation5 + $0x1f0] sm:$0xff] %v7964
    %8029 = vst [vmem:[#allocation5 + $0x1f8] sm:$0xff] %v7965
    %v8030 = vld [vmem:[#allocation5] sm:$0xff]
    %v8031 = vld [vmem:[#allocation5 + $0x8] sm:$0xff]
    %v8032 = vld [vmem:[#allocation5 + $0x10] sm:$0xff]
    %v8033 = vld [vmem:[#allocation5 + $0x18] sm:$0xff]
    %v8034 = vld [vmem:[#allocation5 + $0x20] sm:$0xff]
    %v8035 = vld [vmem:[#allocation5 + $0x28] sm:$0xff]
    %v8036 = vld [vmem:[#allocation5 + $0x30] sm:$0xff]
    %v8037 = vld [vmem:[#allocation5 + $0x38] sm:$0xff]
    %v8038 = vld [vmem:[#allocation5 + $0x40] sm:$0xff]
    %v8039 = vld [vmem:[#allocation5 + $0x48] sm:$0xff]
    %v8040 = vld [vmem:[#allocation5 + $0x50] sm:$0xff]
    %v8041 = vld [vmem:[#allocation5 + $0x58] sm:$0xff]
    %v8042 = vld [vmem:[#allocation5 + $0x60] sm:$0xff]
    %v8043 = vld [vmem:[#allocation5 + $0x68] sm:$0xff]
    %v8044 = vld [vmem:[#allocation5 + $0x70] sm:$0xff]
    %v8045 = vld [vmem:[#allocation5 + $0x78] sm:$0xff]
    %v8046 = vld [vmem:[#allocation5 + $0x80] sm:$0xff]
    %v8047 = vld [vmem:[#allocation5 + $0x88] sm:$0xff]
    %v8048 = vld [vmem:[#allocation5 + $0x90] sm:$0xff]
    %v8049 = vld [vmem:[#allocation5 + $0x98] sm:$0xff]
    %v8050 = vld [vmem:[#allocation5 + $0xa0] sm:$0xff]
    %v8051 = vld [vmem:[#allocation5 + $0xa8] sm:$0xff]
    %v8052 = vld [vmem:[#allocation5 + $0xb0] sm:$0xff]
    %v8053 = vld [vmem:[#allocation5 + $0xb8] sm:$0xff]
    %v8054 = vld [vmem:[#allocation5 + $0xc0] sm:$0xff]
    %v8055 = vld [vmem:[#allocation5 + $0xc8] sm:$0xff]
    %v8056 = vld [vmem:[#allocation5 + $0xd0] sm:$0xff]
    %v8057 = vld [vmem:[#allocation5 + $0xd8] sm:$0xff]
    %v8058 = vld [vmem:[#allocation5 + $0xe0] sm:$0xff]
    %v8059 = vld [vmem:[#allocation5 + $0xe8] sm:$0xff]
    %v8060 = vld [vmem:[#allocation5 + $0xf0] sm:$0xff]
    %v8061 = vld [vmem:[#allocation5 + $0xf8] sm:$0xff]
    %v8062 = vld [vmem:[#allocation5 + $0x100] sm:$0xff]
    %v8063 = vld [vmem:[#allocation5 + $0x108] sm:$0xff]
    %v8064 = vld [vmem:[#allocation5 + $0x110] sm:$0xff]
    %v8065 = vld [vmem:[#allocation5 + $0x118] sm:$0xff]
    %v8066 = vld [vmem:[#allocation5 + $0x120] sm:$0xff]
    %v8067 = vld [vmem:[#allocation5 + $0x128] sm:$0xff]
    %v8068 = vld [vmem:[#allocation5 + $0x130] sm:$0xff]
    %v8069 = vld [vmem:[#allocation5 + $0x138] sm:$0xff]
    %v8070 = vld [vmem:[#allocation5 + $0x140] sm:$0xff]
    %v8071 = vld [vmem:[#allocation5 + $0x148] sm:$0xff]
    %v8072 = vld [vmem:[#allocation5 + $0x150] sm:$0xff]
    %v8073 = vld [vmem:[#allocation5 + $0x158] sm:$0xff]
    %v8074 = vld [vmem:[#allocation5 + $0x160] sm:$0xff]
    %v8075 = vld [vmem:[#allocation5 + $0x168] sm:$0xff]
    %v8076 = vld [vmem:[#allocation5 + $0x170] sm:$0xff]
    %v8077 = vld [vmem:[#allocation5 + $0x178] sm:$0xff]
    %v8078 = vld [vmem:[#allocation5 + $0x180] sm:$0xff]
    %v8079 = vld [vmem:[#allocation5 + $0x188] sm:$0xff]
    %v8080 = vld [vmem:[#allocation5 + $0x190] sm:$0xff]
    %v8081 = vld [vmem:[#allocation5 + $0x198] sm:$0xff]
    %v8082 = vld [vmem:[#allocation5 + $0x1a0] sm:$0xff]
    %v8083 = vld [vmem:[#allocation5 + $0x1a8] sm:$0xff]
    %v8084 = vld [vmem:[#allocation5 + $0x1b0] sm:$0xff]
    %v8085 = vld [vmem:[#allocation5 + $0x1b8] sm:$0xff]
    %v8086 = vld [vmem:[#allocation5 + $0x1c0] sm:$0xff]
    %v8087 = vld [vmem:[#allocation5 + $0x1c8] sm:$0xff]
    %v8088 = vld [vmem:[#allocation5 + $0x1d0] sm:$0xff]
    %v8089 = vld [vmem:[#allocation5 + $0x1d8] sm:$0xff]
    %v8090 = vld [vmem:[#allocation5 + $0x1e0] sm:$0xff]
    %v8091 = vld [vmem:[#allocation5 + $0x1e8] sm:$0xff]
    %v8092 = vld [vmem:[#allocation5 + $0x1f0] sm:$0xff]
    %v8093 = vld [vmem:[#allocation5 + $0x1f8] sm:$0xff]
    %v8094 = vld [vmem:[#allocation6] sm:$0xff]
    %v8095 = vld [vmem:[#allocation6 + $0x8] sm:$0xff]
    %v8096 = vld [vmem:[#allocation6 + $0x10] sm:$0xff]
    %v8097 = vld [vmem:[#allocation6 + $0x18] sm:$0xff]
    %v8098 = vld [vmem:[#allocation6 + $0x20] sm:$0xff]
    %v8099 = vld [vmem:[#allocation6 + $0x28] sm:$0xff]
    %v8100 = vld [vmem:[#allocation6 + $0x30] sm:$0xff]
    %v8101 = vld [vmem:[#allocation6 + $0x38] sm:$0xff]
    %v8102 = vld [vmem:[#allocation6 + $0x40] sm:$0xff]
    %v8103 = vld [vmem:[#allocation6 + $0x48] sm:$0xff]
    %v8104 = vld [vmem:[#allocation6 + $0x50] sm:$0xff]
    %v8105 = vld [vmem:[#allocation6 + $0x58] sm:$0xff]
    %v8106 = vld [vmem:[#allocation6 + $0x60] sm:$0xff]
    %v8107 = vld [vmem:[#allocation6 + $0x68] sm:$0xff]
    %v8108 = vld [vmem:[#allocation6 + $0x70] sm:$0xff]
    %v8109 = vld [vmem:[#allocation6 + $0x78] sm:$0xff]
    %v8110 = vld [vmem:[#allocation6 + $0x80] sm:$0xff]
    %v8111 = vld [vmem:[#allocation6 + $0x88] sm:$0xff]
    %v8112 = vld [vmem:[#allocation6 + $0x90] sm:$0xff]
    %v8113 = vld [vmem:[#allocation6 + $0x98] sm:$0xff]
    %v8114 = vld [vmem:[#allocation6 + $0xa0] sm:$0xff]
    %v8115 = vld [vmem:[#allocation6 + $0xa8] sm:$0xff]
    %v8116 = vld [vmem:[#allocation6 + $0xb0] sm:$0xff]
    %v8117 = vld [vmem:[#allocation6 + $0xb8] sm:$0xff]
    %v8118 = vld [vmem:[#allocation6 + $0xc0] sm:$0xff]
    %v8119 = vld [vmem:[#allocation6 + $0xc8] sm:$0xff]
    %v8120 = vld [vmem:[#allocation6 + $0xd0] sm:$0xff]
    %v8121 = vld [vmem:[#allocation6 + $0xd8] sm:$0xff]
    %v8122 = vld [vmem:[#allocation6 + $0xe0] sm:$0xff]
    %v8123 = vld [vmem:[#allocation6 + $0xe8] sm:$0xff]
    %v8124 = vld [vmem:[#allocation6 + $0xf0] sm:$0xff]
    %v8125 = vld [vmem:[#allocation6 + $0xf8] sm:$0xff]
    %v8126 = vld [vmem:[#allocation6 + $0x100] sm:$0xff]
    %v8127 = vld [vmem:[#allocation6 + $0x108] sm:$0xff]
    %v8128 = vld [vmem:[#allocation6 + $0x110] sm:$0xff]
    %v8129 = vld [vmem:[#allocation6 + $0x118] sm:$0xff]
    %v8130 = vld [vmem:[#allocation6 + $0x120] sm:$0xff]
    %v8131 = vld [vmem:[#allocation6 + $0x128] sm:$0xff]
    %v8132 = vld [vmem:[#allocation6 + $0x130] sm:$0xff]
    %v8133 = vld [vmem:[#allocation6 + $0x138] sm:$0xff]
    %v8134 = vld [vmem:[#allocation6 + $0x140] sm:$0xff]
    %v8135 = vld [vmem:[#allocation6 + $0x148] sm:$0xff]
    %v8136 = vld [vmem:[#allocation6 + $0x150] sm:$0xff]
    %v8137 = vld [vmem:[#allocation6 + $0x158] sm:$0xff]
    %v8138 = vld [vmem:[#allocation6 + $0x160] sm:$0xff]
    %v8139 = vld [vmem:[#allocation6 + $0x168] sm:$0xff]
    %v8140 = vld [vmem:[#allocation6 + $0x170] sm:$0xff]
    %v8141 = vld [vmem:[#allocation6 + $0x178] sm:$0xff]
    %v8142 = vld [vmem:[#allocation6 + $0x180] sm:$0xff]
    %v8143 = vld [vmem:[#allocation6 + $0x188] sm:$0xff]
    %v8144 = vld [vmem:[#allocation6 + $0x190] sm:$0xff]
    %v8145 = vld [vmem:[#allocation6 + $0x198] sm:$0xff]
    %v8146 = vld [vmem:[#allocation6 + $0x1a0] sm:$0xff]
    %v8147 = vld [vmem:[#allocation6 + $0x1a8] sm:$0xff]
    %v8148 = vld [vmem:[#allocation6 + $0x1b0] sm:$0xff]
    %v8149 = vld [vmem:[#allocation6 + $0x1b8] sm:$0xff]
    %v8150 = vld [vmem:[#allocation6 + $0x1c0] sm:$0xff]
    %v8151 = vld [vmem:[#allocation6 + $0x1c8] sm:$0xff]
    %v8152 = vld [vmem:[#allocation6 + $0x1d0] sm:$0xff]
    %v8153 = vld [vmem:[#allocation6 + $0x1d8] sm:$0xff]
    %v8154 = vld [vmem:[#allocation6 + $0x1e0] sm:$0xff]
    %v8155 = vld [vmem:[#allocation6 + $0x1e8] sm:$0xff]
    %v8156 = vld [vmem:[#allocation6 + $0x1f0] sm:$0xff]
    %v8157 = vld [vmem:[#allocation6 + $0x1f8] sm:$0xff]
    %v8158 = vld [vmem:[#allocation6 + $0x200] sm:$0xff]
    %v8159 = vld [vmem:[#allocation6 + $0x208] sm:$0xff]
    %v8160 = vld [vmem:[#allocation6 + $0x210] sm:$0xff]
    %v8161 = vld [vmem:[#allocation6 + $0x218] sm:$0xff]
    %v8162 = vld [vmem:[#allocation6 + $0x220] sm:$0xff]
    %v8163 = vld [vmem:[#allocation6 + $0x228] sm:$0xff]
    %v8164 = vld [vmem:[#allocation6 + $0x230] sm:$0xff]
    %v8165 = vld [vmem:[#allocation6 + $0x238] sm:$0xff]
    %v8166 = vld [vmem:[#allocation6 + $0x240] sm:$0xff]
    %v8167 = vld [vmem:[#allocation6 + $0x248] sm:$0xff]
    %v8168 = vld [vmem:[#allocation6 + $0x250] sm:$0xff]
    %v8169 = vld [vmem:[#allocation6 + $0x258] sm:$0xff]
    %v8170 = vld [vmem:[#allocation6 + $0x260] sm:$0xff]
    %v8171 = vld [vmem:[#allocation6 + $0x268] sm:$0xff]
    %v8172 = vld [vmem:[#allocation6 + $0x270] sm:$0xff]
    %v8173 = vld [vmem:[#allocation6 + $0x278] sm:$0xff]
    %v8174 = vld [vmem:[#allocation6 + $0x280] sm:$0xff]
    %v8175 = vld [vmem:[#allocation6 + $0x288] sm:$0xff]
    %v8176 = vld [vmem:[#allocation6 + $0x290] sm:$0xff]
    %v8177 = vld [vmem:[#allocation6 + $0x298] sm:$0xff]
    %v8178 = vld [vmem:[#allocation6 + $0x2a0] sm:$0xff]
    %v8179 = vld [vmem:[#allocation6 + $0x2a8] sm:$0xff]
    %v8180 = vld [vmem:[#allocation6 + $0x2b0] sm:$0xff]
    %v8181 = vld [vmem:[#allocation6 + $0x2b8] sm:$0xff]
    %v8182 = vld [vmem:[#allocation6 + $0x2c0] sm:$0xff]
    %v8183 = vld [vmem:[#allocation6 + $0x2c8] sm:$0xff]
    %v8184 = vld [vmem:[#allocation6 + $0x2d0] sm:$0xff]
    %v8185 = vld [vmem:[#allocation6 + $0x2d8] sm:$0xff]
    %v8186 = vld [vmem:[#allocation6 + $0x2e0] sm:$0xff]
    %v8187 = vld [vmem:[#allocation6 + $0x2e8] sm:$0xff]
    %v8188 = vld [vmem:[#allocation6 + $0x2f0] sm:$0xff]
    %v8189 = vld [vmem:[#allocation6 + $0x2f8] sm:$0xff]
    %v8190 = vld [vmem:[#allocation6 + $0x300] sm:$0xff]
    %v8191 = vld [vmem:[#allocation6 + $0x308] sm:$0xff]
    %v8192 = vld [vmem:[#allocation6 + $0x310] sm:$0xff]
    %v8193 = vld [vmem:[#allocation6 + $0x318] sm:$0xff]
    %v8194 = vld [vmem:[#allocation6 + $0x320] sm:$0xff]
    %v8195 = vld [vmem:[#allocation6 + $0x328] sm:$0xff]
    %v8196 = vld [vmem:[#allocation6 + $0x330] sm:$0xff]
    %v8197 = vld [vmem:[#allocation6 + $0x338] sm:$0xff]
    %v8198 = vld [vmem:[#allocation6 + $0x340] sm:$0xff]
    %v8199 = vld [vmem:[#allocation6 + $0x348] sm:$0xff]
    %v8200 = vld [vmem:[#allocation6 + $0x350] sm:$0xff]
    %v8201 = vld [vmem:[#allocation6 + $0x358] sm:$0xff]
    %v8202 = vld [vmem:[#allocation6 + $0x360] sm:$0xff]
    %v8203 = vld [vmem:[#allocation6 + $0x368] sm:$0xff]
    %v8204 = vld [vmem:[#allocation6 + $0x370] sm:$0xff]
    %v8205 = vld [vmem:[#allocation6 + $0x378] sm:$0xff]
    %v8206 = vld [vmem:[#allocation6 + $0x380] sm:$0xff]
    %v8207 = vld [vmem:[#allocation6 + $0x388] sm:$0xff]
    %v8208 = vld [vmem:[#allocation6 + $0x390] sm:$0xff]
    %v8209 = vld [vmem:[#allocation6 + $0x398] sm:$0xff]
    %v8210 = vld [vmem:[#allocation6 + $0x3a0] sm:$0xff]
    %v8211 = vld [vmem:[#allocation6 + $0x3a8] sm:$0xff]
    %v8212 = vld [vmem:[#allocation6 + $0x3b0] sm:$0xff]
    %v8213 = vld [vmem:[#allocation6 + $0x3b8] sm:$0xff]
    %v8214 = vld [vmem:[#allocation6 + $0x3c0] sm:$0xff]
    %v8215 = vld [vmem:[#allocation6 + $0x3c8] sm:$0xff]
    %v8216 = vld [vmem:[#allocation6 + $0x3d0] sm:$0xff]
    %v8217 = vld [vmem:[#allocation6 + $0x3d8] sm:$0xff]
    %v8218 = vld [vmem:[#allocation6 + $0x3e0] sm:$0xff]
    %v8219 = vld [vmem:[#allocation6 + $0x3e8] sm:$0xff]
    %v8220 = vld [vmem:[#allocation6 + $0x3f0] sm:$0xff]
    %v8221 = vld [vmem:[#allocation6 + $0x3f8] sm:$0xff]
    %8222 = vmatprep.subr.mxu0 %v8095
    %8223 = vmatpush1.msra.mxu0 %v8094
    %8224 = vmatprep.subr.mxu0 %v8097
    %8225 = vmatpush1.msra.mxu0 %v8096
    %8226 = vmatprep.subr.mxu0 %v8099
    %8227 = vmatpush1.msra.mxu0 %v8098
    %8228 = vmatprep.subr.mxu0 %v8101
    %8229 = vmatpush1.msra.mxu0 %v8100
    %8230 = vmatprep.subr.mxu0 %v8103
    %8231 = vmatpush1.msra.mxu0 %v8102
    %8232 = vmatprep.subr.mxu0 %v8105
    %8233 = vmatpush1.msra.mxu0 %v8104
    %8234 = vmatprep.subr.mxu0 %v8107
    %8235 = vmatpush1.msra.mxu0 %v8106
    %8236 = vmatprep.subr.mxu0 %v8109
    %8237 = vmatpush1.msra.mxu0 %v8108
    %8238 = vmatprep.subr.mxu0 %v8111
    %8239 = vmatpush1.msra.mxu0 %v8110
    %8240 = vmatprep.subr.mxu0 %v8113
    %8241 = vmatpush1.msra.mxu0 %v8112
    %8242 = vmatprep.subr.mxu0 %v8115
    %8243 = vmatpush1.msra.mxu0 %v8114
    %8244 = vmatprep.subr.mxu0 %v8117
    %8245 = vmatpush1.msra.mxu0 %v8116
    %8246 = vmatprep.subr.mxu0 %v8119
    %8247 = vmatpush1.msra.mxu0 %v8118
    %8248 = vmatprep.subr.mxu0 %v8121
    %8249 = vmatpush1.msra.mxu0 %v8120
    %8250 = vmatprep.subr.mxu0 %v8123
    %8251 = vmatpush1.msra.mxu0 %v8122
    %8252 = vmatprep.subr.mxu0 %v8125
    %8253 = vmatpush1.msra.mxu0 %v8124
    %8254 = vmatprep.subr.mxu0 %v8127
    %8255 = vmatpush1.msra.mxu0 %v8126
    %8256 = vmatprep.subr.mxu0 %v8129
    %8257 = vmatpush1.msra.mxu0 %v8128
    %8258 = vmatprep.subr.mxu0 %v8131
    %8259 = vmatpush1.msra.mxu0 %v8130
    %8260 = vmatprep.subr.mxu0 %v8133
    %8261 = vmatpush1.msra.mxu0 %v8132
    %8262 = vmatprep.subr.mxu0 %v8135
    %8263 = vmatpush1.msra.mxu0 %v8134
    %8264 = vmatprep.subr.mxu0 %v8137
    %8265 = vmatpush1.msra.mxu0 %v8136
    %8266 = vmatprep.subr.mxu0 %v8139
    %8267 = vmatpush1.msra.mxu0 %v8138
    %8268 = vmatprep.subr.mxu0 %v8141
    %8269 = vmatpush1.msra.mxu0 %v8140
    %8270 = vmatprep.subr.mxu0 %v8143
    %8271 = vmatpush1.msra.mxu0 %v8142
    %8272 = vmatprep.subr.mxu0 %v8145
    %8273 = vmatpush1.msra.mxu0 %v8144
    %8274 = vmatprep.subr.mxu0 %v8147
    %8275 = vmatpush1.msra.mxu0 %v8146
    %8276 = vmatprep.subr.mxu0 %v8149
    %8277 = vmatpush1.msra.mxu0 %v8148
    %8278 = vmatprep.subr.mxu0 %v8151
    %8279 = vmatpush1.msra.mxu0 %v8150
    %8280 = vmatprep.subr.mxu0 %v8153
    %8281 = vmatpush1.msra.mxu0 %v8152
    %8282 = vmatprep.subr.mxu0 %v8155
    %8283 = vmatpush1.msra.mxu0 %v8154
    %8284 = vmatprep.subr.mxu0 %v8157
    %8285 = vmatpush1.msra.mxu0 %v8156
    %8286 = vmatprep.mubr.f32.mxu0 %v8031
    %8287 = vmatmul.mubr.f32.gmra.mrb[0].mxu0 %v8030
    %v8288 = vpop.f32.mrb[0].mxu0
    %v8289 = vadd.f32 0.0, %v8288
    %v8290 = vpop.f32.mrb[0].mxu0
    %v8291 = vadd.f32 0.0, %v8290
    %8292 = vmatprep.mubr.f32.mxu0 %v8035
    %8293 = vmatmul.mubr.f32.gmra.mrb[0].mxu0 %v8034
    %v8294 = vpop.f32.mrb[0].mxu0
    %v8295 = vadd.f32 0.0, %v8294
    %v8296 = vpop.f32.mrb[0].mxu0
    %v8297 = vadd.f32 0.0, %v8296
    %8298 = vmatprep.mubr.f32.mxu0 %v8039
    %8299 = vmatmul.mubr.f32.gmra.mrb[0].mxu0 %v8038
    %v8300 = vpop.f32.mrb[0].mxu0
    %v8301 = vadd.f32 0.0, %v8300
    %v8302 = vpop.f32.mrb[0].mxu0
    %v8303 = vadd.f32 0.0, %v8302
    %8304 = vmatprep.mubr.f32.mxu0 %v8043
    %8305 = vmatmul.mubr.f32.gmra.mrb[0].mxu0 %v8042
    %v8306 = vpop.f32.mrb[0].mxu0
    %v8307 = vadd.f32 0.0, %v8306
    %v8308 = vpop.f32.mrb[0].mxu0
    %v8309 = vadd.f32 0.0, %v8308
    %8310 = vmatprep.mubr.f32.mxu0 %v8047
    %8311 = vmatmul.mubr.f32.gmra.mrb[0].mxu0 %v8046
    %v8312 = vpop.f32.mrb[0].mxu0
    %v8313 = vadd.f32 0.0, %v8312
    %v8314 = vpop.f32.mrb[0].mxu0
    %v8315 = vadd.f32 0.0, %v8314
    %8316 = vmatprep.mubr.f32.mxu0 %v8051
    %8317 = vmatmul.mubr.f32.gmra.mrb[0].mxu0 %v8050
    %v8318 = vpop.f32.mrb[0].mxu0
    %v8319 = vadd.f32 0.0, %v8318
    %v8320 = vpop.f32.mrb[0].mxu0
    %v8321 = vadd.f32 0.0, %v8320
    %8322 = vmatprep.mubr.f32.mxu0 %v8055
    %8323 = vmatmul.mubr.f32.gmra.mrb[0].mxu0 %v8054
    %v8324 = vpop.f32.mrb[0].mxu0
    %v8325 = vadd.f32 0.0, %v8324
    %v8326 = vpop.f32.mrb[0].mxu0
    %v8327 = vadd.f32 0.0, %v8326
    %8328 = vmatprep.mubr.f32.mxu0 %v8059
    %8329 = vmatmul.mubr.f32.gmra.mrb[0].mxu0 %v8058
    %v8330 = vpop.f32.mrb[0].mxu0
    %v8331 = vadd.f32 0.0, %v8330
    %v8332 = vpop.f32.mrb[0].mxu0
    %v8333 = vadd.f32 0.0, %v8332
    %8334 = vmatprep.mubr.f32.mxu0 %v8063
    %8335 = vmatmul.mubr.f32.gmra.mrb[0].mxu0 %v8062
    %v8336 = vpop.f32.mrb[0].mxu0
    %v8337 = vadd.f32 0.0, %v8336
    %v8338 = vpop.f32.mrb[0].mxu0
    %v8339 = vadd.f32 0.0, %v8338
    %8340 = vmatprep.mubr.f32.mxu0 %v8067
    %8341 = vmatmul.mubr.f32.gmra.mrb[0].mxu0 %v8066
    %v8342 = vpop.f32.mrb[0].mxu0
    %v8343 = vadd.f32 0.0, %v8342
    %v8344 = vpop.f32.mrb[0].mxu0
    %v8345 = vadd.f32 0.0, %v8344
    %8346 = vmatprep.mubr.f32.mxu0 %v8071
    %8347 = vmatmul.mubr.f32.gmra.mrb[0].mxu0 %v8070
    %v8348 = vpop.f32.mrb[0].mxu0
    %v8349 = vadd.f32 0.0, %v8348
    %v8350 = vpop.f32.mrb[0].mxu0
    %v8351 = vadd.f32 0.0, %v8350
    %8352 = vmatprep.mubr.f32.mxu0 %v8075
    %8353 = vmatmul.mubr.f32.gmra.mrb[0].mxu0 %v8074
    %v8354 = vpop.f32.mrb[0].mxu0
    %v8355 = vadd.f32 0.0, %v8354
    %v8356 = vpop.f32.mrb[0].mxu0
    %v8357 = vadd.f32 0.0, %v8356
    %8358 = vmatprep.mubr.f32.mxu0 %v8079
    %8359 = vmatmul.mubr.f32.gmra.mrb[0].mxu0 %v8078
    %v8360 = vpop.f32.mrb[0].mxu0
    %v8361 = vadd.f32 0.0, %v8360
    %v8362 = vpop.f32.mrb[0].mxu0
    %v8363 = vadd.f32 0.0, %v8362
    %8364 = vmatprep.mubr.f32.mxu0 %v8083
    %8365 = vmatmul.mubr.f32.gmra.mrb[0].mxu0 %v8082
    %v8366 = vpop.f32.mrb[0].mxu0
    %v8367 = vadd.f32 0.0, %v8366
    %v8368 = vpop.f32.mrb[0].mxu0
    %v8369 = vadd.f32 0.0, %v8368
    %8370 = vmatprep.mubr.f32.mxu0 %v8087
    %8371 = vmatmul.mubr.f32.gmra.mrb[0].mxu0 %v8086
    %v8372 = vpop.f32.mrb[0].mxu0
    %v8373 = vadd.f32 0.0, %v8372
    %v8374 = vpop.f32.mrb[0].mxu0
    %v8375 = vadd.f32 0.0, %v8374
    %8376 = vmatprep.mubr.f32.mxu0 %v8091
    %8377 = vmatmul.mubr.f32.gmra.mrb[0].mxu0 %v8090
    %v8378 = vpop.f32.mrb[0].mxu0
    %v8379 = vadd.f32 0.0, %v8378
    %v8380 = vpop.f32.mrb[0].mxu0
    %v8381 = vadd.f32 0.0, %v8380
    %8382 = vdwg.mxu0
    %8383 = vmatprep.subr.mxu0 %v8159
    %8384 = vmatpush1.msra.mxu0 %v8158
    %8385 = vmatprep.subr.mxu0 %v8161
    %8386 = vmatpush1.msra.mxu0 %v8160
    %8387 = vmatprep.subr.mxu0 %v8163
    %8388 = vmatpush1.msra.mxu0 %v8162
    %8389 = vmatprep.subr.mxu0 %v8165
    %8390 = vmatpush1.msra.mxu0 %v8164
    %8391 = vmatprep.subr.mxu0 %v8167
    %8392 = vmatpush1.msra.mxu0 %v8166
    %8393 = vmatprep.subr.mxu0 %v8169
    %8394 = vmatpush1.msra.mxu0 %v8168
    %8395 = vmatprep.subr.mxu0 %v8171
    %8396 = vmatpush1.msra.mxu0 %v8170
    %8397 = vmatprep.subr.mxu0 %v8173
    %8398 = vmatpush1.msra.mxu0 %v8172
    %8399 = vmatprep.subr.mxu0 %v8175
    %8400 = vmatpush1.msra.mxu0 %v8174
    %8401 = vmatprep.subr.mxu0 %v8177
    %8402 = vmatpush1.msra.mxu0 %v8176
    %8403 = vmatprep.subr.mxu0 %v8179
    %8404 = vmatpush1.msra.mxu0 %v8178
    %8405 = vmatprep.subr.mxu0 %v8181
    %8406 = vmatpush1.msra.mxu0 %v8180
    %8407 = vmatprep.subr.mxu0 %v8183
    %8408 = vmatpush1.msra.mxu0 %v8182
    %8409 = vmatprep.subr.mxu0 %v8185
    %8410 = vmatpush1.msra.mxu0 %v8184
    %8411 = vmatprep.subr.mxu0 %v8187
    %8412 = vmatpush1.msra.mxu0 %v8186
    %8413 = vmatprep.subr.mxu0 %v8189
    %8414 = vmatpush1.msra.mxu0 %v8188
    %8415 = vmatprep.subr.mxu0 %v8191
    %8416 = vmatpush1.msra.mxu0 %v8190
    %8417 = vmatprep.subr.mxu0 %v8193
    %8418 = vmatpush1.msra.mxu0 %v8192
    %8419 = vmatprep.subr.mxu0 %v8195
    %8420 = vmatpush1.msra.mxu0 %v8194
    %8421 = vmatprep.subr.mxu0 %v8197
    %8422 = vmatpush1.msra.mxu0 %v8196
    %8423 = vmatprep.subr.mxu0 %v8199
    %8424 = vmatpush1.msra.mxu0 %v8198
    %8425 = vmatprep.subr.mxu0 %v8201
    %8426 = vmatpush1.msra.mxu0 %v8200
    %8427 = vmatprep.subr.mxu0 %v8203
    %8428 = vmatpush1.msra.mxu0 %v8202
    %8429 = vmatprep.subr.mxu0 %v8205
    %8430 = vmatpush1.msra.mxu0 %v8204
    %8431 = vmatprep.subr.mxu0 %v8207
    %8432 = vmatpush1.msra.mxu0 %v8206
    %8433 = vmatprep.subr.mxu0 %v8209
    %8434 = vmatpush1.msra.mxu0 %v8208
    %8435 = vmatprep.subr.mxu0 %v8211
    %8436 = vmatpush1.msra.mxu0 %v8210
    %8437 = vmatprep.subr.mxu0 %v8213
    %8438 = vmatpush1.msra.mxu0 %v8212
    %8439 = vmatprep.subr.mxu0 %v8215
    %8440 = vmatpush1.msra.mxu0 %v8214
    %8441 = vmatprep.subr.mxu0 %v8217
    %8442 = vmatpush1.msra.mxu0 %v8216
    %8443 = vmatprep.subr.mxu0 %v8219
    %8444 = vmatpush1.msra.mxu0 %v8218
    %8445 = vmatprep.subr.mxu0 %v8221
    %8446 = vmatpush1.msra.mxu0 %v8220
    %8447 = vmatprep.mubr.f32.mxu0 %v8033
    %8448 = vmatmul.mubr.f32.gmra.mrb[0].mxu0 %v8032
    %v8449 = vpop.f32.mrb[0].mxu0
    %v8450 = vadd.f32 %v8289, %v8449
    %v8451 = vpop.f32.mrb[0].mxu0
    %v8452 = vadd.f32 %v8291, %v8451
    %8453 = vmatprep.mubr.f32.mxu0 %v8037
    %8454 = vmatmul.mubr.f32.gmra.mrb[0].mxu0 %v8036
    %v8455 = vpop.f32.mrb[0].mxu0
    %v8456 = vadd.f32 %v8295, %v8455
    %v8457 = vpop.f32.mrb[0].mxu0
    %v8458 = vadd.f32 %v8297, %v8457
    %8459 = vmatprep.mubr.f32.mxu0 %v8041
    %8460 = vmatmul.mubr.f32.gmra.mrb[0].mxu0 %v8040
    %v8461 = vpop.f32.mrb[0].mxu0
    %v8462 = vadd.f32 %v8301, %v8461
    %v8463 = vpop.f32.mrb[0].mxu0
    %v8464 = vadd.f32 %v8303, %v8463
    %8465 = vmatprep.mubr.f32.mxu0 %v8045
    %8466 = vmatmul.mubr.f32.gmra.mrb[0].mxu0 %v8044
    %v8467 = vpop.f32.mrb[0].mxu0
    %v8468 = vadd.f32 %v8307, %v8467
    %v8469 = vpop.f32.mrb[0].mxu0
    %v8470 = vadd.f32 %v8309, %v8469
    %8471 = vmatprep.mubr.f32.mxu0 %v8049
    %8472 = vmatmul.mubr.f32.gmra.mrb[0].mxu0 %v8048
    %v8473 = vpop.f32.mrb[0].mxu0
    %v8474 = vadd.f32 %v8313, %v8473
    %v8475 = vpop.f32.mrb[0].mxu0
    %v8476 = vadd.f32 %v8315, %v8475
    %8477 = vmatprep.mubr.f32.mxu0 %v8053
    %8478 = vmatmul.mubr.f32.gmra.mrb[0].mxu0 %v8052
    %v8479 = vpop.f32.mrb[0].mxu0
    %v8480 = vadd.f32 %v8319, %v8479
    %v8481 = vpop.f32.mrb[0].mxu0
    %v8482 = vadd.f32 %v8321, %v8481
    %8483 = vmatprep.mubr.f32.mxu0 %v8057
    %8484 = vmatmul.mubr.f32.gmra.mrb[0].mxu0 %v8056
    %v8485 = vpop.f32.mrb[0].mxu0
    %v8486 = vadd.f32 %v8325, %v8485
    %v8487 = vpop.f32.mrb[0].mxu0
    %v8488 = vadd.f32 %v8327, %v8487
    %8489 = vmatprep.mubr.f32.mxu0 %v8061
    %8490 = vmatmul.mubr.f32.gmra.mrb[0].mxu0 %v8060
    %v8491 = vpop.f32.mrb[0].mxu0
    %v8492 = vadd.f32 %v8331, %v8491
    %v8493 = vpop.f32.mrb[0].mxu0
    %v8494 = vadd.f32 %v8333, %v8493
    %8495 = vmatprep.mubr.f32.mxu0 %v8065
    %8496 = vmatmul.mubr.f32.gmra.mrb[0].mxu0 %v8064
    %v8497 = vpop.f32.mrb[0].mxu0
    %v8498 = vadd.f32 %v8337, %v8497
    %v8499 = vpop.f32.mrb[0].mxu0
    %v8500 = vadd.f32 %v8339, %v8499
    %8501 = vmatprep.mubr.f32.mxu0 %v8069
    %8502 = vmatmul.mubr.f32.gmra.mrb[0].mxu0 %v8068
    %v8503 = vpop.f32.mrb[0].mxu0
    %v8504 = vadd.f32 %v8343, %v8503
    %v8505 = vpop.f32.mrb[0].mxu0
    %v8506 = vadd.f32 %v8345, %v8505
    %8507 = vmatprep.mubr.f32.mxu0 %v8073
    %8508 = vmatmul.mubr.f32.gmra.mrb[0].mxu0 %v8072
    %v8509 = vpop.f32.mrb[0].mxu0
    %v8510 = vadd.f32 %v8349, %v8509
    %v8511 = vpop.f32.mrb[0].mxu0
    %v8512 = vadd.f32 %v8351, %v8511
    %8513 = vmatprep.mubr.f32.mxu0 %v8077
    %8514 = vmatmul.mubr.f32.gmra.mrb[0].mxu0 %v8076
    %v8515 = vpop.f32.mrb[0].mxu0
    %v8516 = vadd.f32 %v8355, %v8515
    %v8517 = vpop.f32.mrb[0].mxu0
    %v8518 = vadd.f32 %v8357, %v8517
    %8519 = vmatprep.mubr.f32.mxu0 %v8081
    %8520 = vmatmul.mubr.f32.gmra.mrb[0].mxu0 %v8080
    %v8521 = vpop.f32.mrb[0].mxu0
    %v8522 = vadd.f32 %v8361, %v8521
    %v8523 = vpop.f32.mrb[0].mxu0
    %v8524 = vadd.f32 %v8363, %v8523
    %8525 = vmatprep.mubr.f32.mxu0 %v8085
    %8526 = vmatmul.mubr.f32.gmra.mrb[0].mxu0 %v8084
    %v8527 = vpop.f32.mrb[0].mxu0
    %v8528 = vadd.f32 %v8367, %v8527
    %v8529 = vpop.f32.mrb[0].mxu0
    %v8530 = vadd.f32 %v8369, %v8529
    %8531 = vmatprep.mubr.f32.mxu0 %v8089
    %8532 = vmatmul.mubr.f32.gmra.mrb[0].mxu0 %v8088
    %v8533 = vpop.f32.mrb[0].mxu0
    %v8534 = vadd.f32 %v8373, %v8533
    %v8535 = vpop.f32.mrb[0].mxu0
    %v8536 = vadd.f32 %v8375, %v8535
    %8537 = vmatprep.mubr.f32.mxu0 %v8093
    %8538 = vmatmul.mubr.f32.gmra.mrb[0].mxu0 %v8092
    %v8539 = vpop.f32.mrb[0].mxu0
    %v8540 = vadd.f32 %v8379, %v8539
    %v8541 = vpop.f32.mrb[0].mxu0
    %v8542 = vadd.f32 %v8381, %v8541
    %8543 = vdwg.mxu0
    %v8544 = vand.u32 2147483647, %v8450
    %v8545 = vand.u32 2147483647, %v8452
    %v8546 = vand.u32 2147483647, %v8456
    %v8547 = vand.u32 2147483647, %v8458
    %v8548 = vand.u32 2147483647, %v8462
    %v8549 = vand.u32 2147483647, %v8464
    %v8550 = vand.u32 2147483647, %v8468
    %v8551 = vand.u32 2147483647, %v8470
    %v8552 = vand.u32 2147483647, %v8474
    %v8553 = vand.u32 2147483647, %v8476
    %v8554 = vand.u32 2147483647, %v8480
    %v8555 = vand.u32 2147483647, %v8482
    %v8556 = vand.u32 2147483647, %v8486
    %v8557 = vand.u32 2147483647, %v8488
    %v8558 = vand.u32 2147483647, %v8492
    %v8559 = vand.u32 2147483647, %v8494
    %v8560 = vand.u32 2147483647, %v8498
    %v8561 = vand.u32 2147483647, %v8500
    %v8562 = vand.u32 2147483647, %v8504
    %v8563 = vand.u32 2147483647, %v8506
    %v8564 = vand.u32 2147483647, %v8510
    %v8565 = vand.u32 2147483647, %v8512
    %v8566 = vand.u32 2147483647, %v8516
    %v8567 = vand.u32 2147483647, %v8518
    %v8568 = vand.u32 2147483647, %v8522
    %v8569 = vand.u32 2147483647, %v8524
    %v8570 = vand.u32 2147483647, %v8528
    %v8571 = vand.u32 2147483647, %v8530
    %v8572 = vand.u32 2147483647, %v8534
    %v8573 = vand.u32 2147483647, %v8536
    %v8574 = vand.u32 2147483647, %v8540
    %v8575 = vand.u32 2147483647, %v8542
    %v8576 = vmax.f32 %v8544, %v8545
    %8577 = vmax.xlane.f32.xlu0 %v8576
    %v8578 = vpop.xlane.xlu0 %8577
    %v8579 = vmax.f32 %v8546, %v8547
    %8580 = vmax.xlane.f32.xlu0 %v8579
    %v8581 = vpop.xlane.xlu0 %8580
    %v8582 = vmax.f32 %v8548, %v8549
    %8583 = vmax.xlane.f32.xlu0 %v8582
    %v8584 = vpop.xlane.xlu0 %8583
    %v8585 = vmax.f32 %v8550, %v8551
    %8586 = vmax.xlane.f32.xlu0 %v8585
    %v8587 = vpop.xlane.xlu0 %8586
    %v8588 = vmax.f32 %v8552, %v8553
    %8589 = vmax.xlane.f32.xlu0 %v8588
    %v8590 = vpop.xlane.xlu0 %8589
    %v8591 = vmax.f32 %v8554, %v8555
    %8592 = vmax.xlane.f32.xlu0 %v8591
    %v8593 = vpop.xlane.xlu0 %8592
    %v8594 = vmax.f32 %v8556, %v8557
    %8595 = vmax.xlane.f32.xlu0 %v8594
    %v8596 = vpop.xlane.xlu0 %8595
    %v8597 = vmax.f32 %v8558, %v8559
    %8598 = vmax.xlane.f32.xlu0 %v8597
    %v8599 = vpop.xlane.xlu0 %8598
    %v8600 = vmax.f32 %v8560, %v8561
    %8601 = vmax.xlane.f32.xlu0 %v8600
    %v8602 = vpop.xlane.xlu0 %8601
    %v8603 = vmax.f32 %v8562, %v8563
    %8604 = vmax.xlane.f32.xlu0 %v8603
    %v8605 = vpop.xlane.xlu0 %8604
    %v8606 = vmax.f32 %v8564, %v8565
    %8607 = vmax.xlane.f32.xlu0 %v8606
    %v8608 = vpop.xlane.xlu0 %8607
    %v8609 = vmax.f32 %v8566, %v8567
    %8610 = vmax.xlane.f32.xlu0 %v8609
    %v8611 = vpop.xlane.xlu0 %8610
    %v8612 = vmax.f32 %v8568, %v8569
    %8613 = vmax.xlane.f32.xlu0 %v8612
    %v8614 = vpop.xlane.xlu0 %8613
    %v8615 = vmax.f32 %v8570, %v8571
    %8616 = vmax.xlane.f32.xlu0 %v8615
    %v8617 = vpop.xlane.xlu0 %8616
    %v8618 = vmax.f32 %v8572, %v8573
    %8619 = vmax.xlane.f32.xlu0 %v8618
    %v8620 = vpop.xlane.xlu0 %8619
    %v8621 = vmax.f32 %v8574, %v8575
    %8622 = vmax.xlane.f32.xlu0 %v8621
    %v8623 = vpop.xlane.xlu0 %8622
    %v8624 = vadd.f32 %v8578, 1e-08
    %v8625 = vadd.f32 %v8581, 1e-08
    %v8626 = vadd.f32 %v8584, 1e-08
    %v8627 = vadd.f32 %v8587, 1e-08
    %v8628 = vadd.f32 %v8590, 1e-08
    %v8629 = vadd.f32 %v8593, 1e-08
    %v8630 = vadd.f32 %v8596, 1e-08
    %v8631 = vadd.f32 %v8599, 1e-08
    %v8632 = vadd.f32 %v8602, 1e-08
    %v8633 = vadd.f32 %v8605, 1e-08
    %v8634 = vadd.f32 %v8608, 1e-08
    %v8635 = vadd.f32 %v8611, 1e-08
    %v8636 = vadd.f32 %v8614, 1e-08
    %v8637 = vadd.f32 %v8617, 1e-08
    %v8638 = vadd.f32 %v8620, 1e-08
    %v8639 = vadd.f32 %v8623, 1e-08
    %v8640 = vrcp.pop %v8624
    %v8641 = vrcp.pop %v8625
    %v8642 = vrcp.pop %v8626
    %v8643 = vrcp.pop %v8627
    %v8644 = vrcp.pop %v8628
    %v8645 = vrcp.pop %v8629
    %v8646 = vrcp.pop %v8630
    %v8647 = vrcp.pop %v8631
    %v8648 = vrcp.pop %v8632
    %v8649 = vrcp.pop %v8633
    %v8650 = vrcp.pop %v8634
    %v8651 = vrcp.pop %v8635
    %v8652 = vrcp.pop %v8636
    %v8653 = vrcp.pop %v8637
    %v8654 = vrcp.pop %v8638
    %v8655 = vrcp.pop %v8639
    %v8656 = vmul.f32 %v8450, %v8640
    %v8657 = vmul.f32 %v8452, %v8640
    %v8658 = vmul.f32 %v8456, %v8641
    %v8659 = vmul.f32 %v8458, %v8641
    %v8660 = vmul.f32 %v8462, %v8642
    %v8661 = vmul.f32 %v8464, %v8642
    %v8662 = vmul.f32 %v8468, %v8643
    %v8663 = vmul.f32 %v8470, %v8643
    %v8664 = vmul.f32 %v8474, %v8644
    %v8665 = vmul.f32 %v8476, %v8644
    %v8666 = vmul.f32 %v8480, %v8645
    %v8667 = vmul.f32 %v8482, %v8645
    %v8668 = vmul.f32 %v8486, %v8646
    %v8669 = vmul.f32 %v8488, %v8646
    %v8670 = vmul.f32 %v8492, %v8647
    %v8671 = vmul.f32 %v8494, %v8647
    %v8672 = vmul.f32 %v8498, %v8648
    %v8673 = vmul.f32 %v8500, %v8648
    %v8674 = vmul.f32 %v8504, %v8649
    %v8675 = vmul.f32 %v8506, %v8649
    %v8676 = vmul.f32 %v8510, %v8650
    %v8677 = vmul.f32 %v8512, %v8650
    %v8678 = vmul.f32 %v8516, %v8651
    %v8679 = vmul.f32 %v8518, %v8651
    %v8680 = vmul.f32 %v8522, %v8652
    %v8681 = vmul.f32 %v8524, %v8652
    %v8682 = vmul.f32 %v8528, %v8653
    %v8683 = vmul.f32 %v8530, %v8653
    %v8684 = vmul.f32 %v8534, %v8654
    %v8685 = vmul.f32 %v8536, %v8654
    %v8686 = vmul.f32 %v8540, %v8655
    %v8687 = vmul.f32 %v8542, %v8655
    %8688 = vst [vmem:[#allocation4] sm:$0xff] %v8656
    %8689 = vst [vmem:[#allocation4 + $0x8] sm:$0xff] %v8657
    %8690 = vst [vmem:[#allocation4 + $0x10] sm:$0xff] %v8658
    %8691 = vst [vmem:[#allocation4 + $0x18] sm:$0xff] %v8659
    %8692 = vst [vmem:[#allocation4 + $0x20] sm:$0xff] %v8660
    %8693 = vst [vmem:[#allocation4 + $0x28] sm:$0xff] %v8661
    %8694 = vst [vmem:[#allocation4 + $0x30] sm:$0xff] %v8662
    %8695 = vst [vmem:[#allocation4 + $0x38] sm:$0xff] %v8663
    %8696 = vst [vmem:[#allocation4 + $0x40] sm:$0xff] %v8664
    %8697 = vst [vmem:[#allocation4 + $0x48] sm:$0xff] %v8665
    %8698 = vst [vmem:[#allocation4 + $0x50] sm:$0xff] %v8666
    %8699 = vst [vmem:[#allocation4 + $0x58] sm:$0xff] %v8667
    %8700 = vst [vmem:[#allocation4 + $0x60] sm:$0xff] %v8668
    %8701 = vst [vmem:[#allocation4 + $0x68] sm:$0xff] %v8669
    %8702 = vst [vmem:[#allocation4 + $0x70] sm:$0xff] %v8670
    %8703 = vst [vmem:[#allocation4 + $0x78] sm:$0xff] %v8671
    %8704 = vst [vmem:[#allocation4 + $0x80] sm:$0xff] %v8672
    %8705 = vst [vmem:[#allocation4 + $0x88] sm:$0xff] %v8673
    %8706 = vst [vmem:[#allocation4 + $0x90] sm:$0xff] %v8674
    %8707 = vst [vmem:[#allocation4 + $0x98] sm:$0xff] %v8675
    %8708 = vst [vmem:[#allocation4 + $0xa0] sm:$0xff] %v8676
    %8709 = vst [vmem:[#allocation4 + $0xa8] sm:$0xff] %v8677
    %8710 = vst [vmem:[#allocation4 + $0xb0] sm:$0xff] %v8678
    %8711 = vst [vmem:[#allocation4 + $0xb8] sm:$0xff] %v8679
    %8712 = vst [vmem:[#allocation4 + $0xc0] sm:$0xff] %v8680
    %8713 = vst [vmem:[#allocation4 + $0xc8] sm:$0xff] %v8681
    %8714 = vst [vmem:[#allocation4 + $0xd0] sm:$0xff] %v8682
    %8715 = vst [vmem:[#allocation4 + $0xd8] sm:$0xff] %v8683
    %8716 = vst [vmem:[#allocation4 + $0xe0] sm:$0xff] %v8684
    %8717 = vst [vmem:[#allocation4 + $0xe8] sm:$0xff] %v8685
    %8718 = vst [vmem:[#allocation4 + $0xf0] sm:$0xff] %v8686
    %8719 = vst [vmem:[#allocation4 + $0xf8] sm:$0xff] %v8687
    %v8720 = vld [vmem:[#allocation2] sm:$0xff]
    %v8721 = vld [vmem:[#allocation2 + $0x8] sm:$0xff]
    %v8722 = vld [vmem:[#allocation2 + $0x10] sm:$0xff]
    %v8723 = vld [vmem:[#allocation2 + $0x18] sm:$0xff]
    %v8724 = vld [vmem:[#allocation3] sm:$0xff]
    %v8725 = vld [vmem:[#allocation3 + $0x8] sm:$0xff]
    %v8726 = vld [vmem:[#allocation3 + $0x10] sm:$0xff]
    %v8727 = vld [vmem:[#allocation3 + $0x18] sm:$0xff]
    %v8728 = vmul.f32 %v8720, %v8724
    %v8729 = vmul.f32 %v8721, %v8725
    %v8730 = vmul.f32 %v8722, %v8726
    %v8731 = vmul.f32 %v8723, %v8727
    %v8732 = vadd.f32 %v8728, 0.0
    %v8733 = vadd.f32 %v8729, 0.0
    %v8734 = vadd.f32 %v8730, 0.0
    %v8735 = vadd.f32 %v8731, 0.0
    %v8736 = vld [vmem:[#allocation4] sm:$0xff]
    %v8737 = vld [vmem:[#allocation4 + $0x8] sm:$0xff]
    %v8738 = vld [vmem:[#allocation4 + $0x10] sm:$0xff]
    %v8739 = vld [vmem:[#allocation4 + $0x18] sm:$0xff]
    %v8740 = vld [vmem:[#allocation3 + $0x100] sm:$0xff]
    %v8741 = vld [vmem:[#allocation3 + $0x108] sm:$0xff]
    %v8742 = vld [vmem:[#allocation3 + $0x110] sm:$0xff]
    %v8743 = vld [vmem:[#allocation3 + $0x118] sm:$0xff]
    %v8744 = vmul.f32 %v8736, %v8740
    %v8745 = vmul.f32 %v8737, %v8741
    %v8746 = vmul.f32 %v8738, %v8742
    %v8747 = vmul.f32 %v8739, %v8743
    %v8748 = vadd.f32 %v8732, %v8744
    %v8749 = vadd.f32 %v8733, %v8745
    %v8750 = vadd.f32 %v8734, %v8746
    %v8751 = vadd.f32 %v8735, %v8747
    %v8752 = vld [vmem:[#allocation2 + $0x20] sm:$0xff]
    %v8753 = vld [vmem:[#allocation2 + $0x28] sm:$0xff]
    %v8754 = vld [vmem:[#allocation2 + $0x30] sm:$0xff]
    %v8755 = vld [vmem:[#allocation2 + $0x38] sm:$0xff]
    %v8756 = vld [vmem:[#allocation3 + $0x20] sm:$0xff]
    %v8757 = vld [vmem:[#allocation3 + $0x28] sm:$0xff]
    %v8758 = vld [vmem:[#allocation3 + $0x30] sm:$0xff]
    %v8759 = vld [vmem:[#allocation3 + $0x38] sm:$0xff]
    %v8760 = vmul.f32 %v8752, %v8756
    %v8761 = vmul.f32 %v8753, %v8757
    %v8762 = vmul.f32 %v8754, %v8758
    %v8763 = vmul.f32 %v8755, %v8759
    %v8764 = vadd.f32 %v8748, %v8760
    %v8765 = vadd.f32 %v8749, %v8761
    %v8766 = vadd.f32 %v8750, %v8762
    %v8767 = vadd.f32 %v8751, %v8763
    %v8768 = vld [vmem:[#allocation4 + $0x20] sm:$0xff]
    %v8769 = vld [vmem:[#allocation4 + $0x28] sm:$0xff]
    %v8770 = vld [vmem:[#allocation4 + $0x30] sm:$0xff]
    %v8771 = vld [vmem:[#allocation4 + $0x38] sm:$0xff]
    %v8772 = vld [vmem:[#allocation3 + $0x120] sm:$0xff]
    %v8773 = vld [vmem:[#allocation3 + $0x128] sm:$0xff]
    %v8774 = vld [vmem:[#allocation3 + $0x130] sm:$0xff]
    %v8775 = vld [vmem:[#allocation3 + $0x138] sm:$0xff]
    %v8776 = vmul.f32 %v8768, %v8772
    %v8777 = vmul.f32 %v8769, %v8773
    %v8778 = vmul.f32 %v8770, %v8774
    %v8779 = vmul.f32 %v8771, %v8775
    %v8780 = vadd.f32 %v8764, %v8776
    %v8781 = vadd.f32 %v8765, %v8777
    %v8782 = vadd.f32 %v8766, %v8778
    %v8783 = vadd.f32 %v8767, %v8779
    %v8784 = vld [vmem:[#allocation2 + $0x40] sm:$0xff]
    %v8785 = vld [vmem:[#allocation2 + $0x48] sm:$0xff]
    %v8786 = vld [vmem:[#allocation2 + $0x50] sm:$0xff]
    %v8787 = vld [vmem:[#allocation2 + $0x58] sm:$0xff]
    %v8788 = vld [vmem:[#allocation3 + $0x40] sm:$0xff]
    %v8789 = vld [vmem:[#allocation3 + $0x48] sm:$0xff]
    %v8790 = vld [vmem:[#allocation3 + $0x50] sm:$0xff]
    %v8791 = vld [vmem:[#allocation3 + $0x58] sm:$0xff]
    %v8792 = vmul.f32 %v8784, %v8788
    %v8793 = vmul.f32 %v8785, %v8789
    %v8794 = vmul.f32 %v8786, %v8790
    %v8795 = vmul.f32 %v8787, %v8791
    %v8796 = vadd.f32 %v8780, %v8792
    %v8797 = vadd.f32 %v8781, %v8793
    %v8798 = vadd.f32 %v8782, %v8794
    %v8799 = vadd.f32 %v8783, %v8795
    %v8800 = vld [vmem:[#allocation4 + $0x40] sm:$0xff]
    %v8801 = vld [vmem:[#allocation4 + $0x48] sm:$0xff]
    %v8802 = vld [vmem:[#allocation4 + $0x50] sm:$0xff]
    %v8803 = vld [vmem:[#allocation4 + $0x58] sm:$0xff]
    %v8804 = vld [vmem:[#allocation3 + $0x140] sm:$0xff]
    %v8805 = vld [vmem:[#allocation3 + $0x148] sm:$0xff]
    %v8806 = vld [vmem:[#allocation3 + $0x150] sm:$0xff]
    %v8807 = vld [vmem:[#allocation3 + $0x158] sm:$0xff]
    %v8808 = vmul.f32 %v8800, %v8804
    %v8809 = vmul.f32 %v8801, %v8805
    %v8810 = vmul.f32 %v8802, %v8806
    %v8811 = vmul.f32 %v8803, %v8807
    %v8812 = vadd.f32 %v8796, %v8808
    %v8813 = vadd.f32 %v8797, %v8809
    %v8814 = vadd.f32 %v8798, %v8810
    %v8815 = vadd.f32 %v8799, %v8811
    %v8816 = vld [vmem:[#allocation2 + $0x60] sm:$0xff]
    %v8817 = vld [vmem:[#allocation2 + $0x68] sm:$0xff]
    %v8818 = vld [vmem:[#allocation2 + $0x70] sm:$0xff]
    %v8819 = vld [vmem:[#allocation2 + $0x78] sm:$0xff]
    %v8820 = vld [vmem:[#allocation3 + $0x60] sm:$0xff]
    %v8821 = vld [vmem:[#allocation3 + $0x68] sm:$0xff]
    %v8822 = vld [vmem:[#allocation3 + $0x70] sm:$0xff]
    %v8823 = vld [vmem:[#allocation3 + $0x78] sm:$0xff]
    %v8824 = vmul.f32 %v8816, %v8820
    %v8825 = vmul.f32 %v8817, %v8821
    %v8826 = vmul.f32 %v8818, %v8822
    %v8827 = vmul.f32 %v8819, %v8823
    %v8828 = vadd.f32 %v8812, %v8824
    %v8829 = vadd.f32 %v8813, %v8825
    %v8830 = vadd.f32 %v8814, %v8826
    %v8831 = vadd.f32 %v8815, %v8827
    %v8832 = vld [vmem:[#allocation4 + $0x60] sm:$0xff]
    %v8833 = vld [vmem:[#allocation4 + $0x68] sm:$0xff]
    %v8834 = vld [vmem:[#allocation4 + $0x70] sm:$0xff]
    %v8835 = vld [vmem:[#allocation4 + $0x78] sm:$0xff]
    %v8836 = vld [vmem:[#allocation3 + $0x160] sm:$0xff]
    %v8837 = vld [vmem:[#allocation3 + $0x168] sm:$0xff]
    %v8838 = vld [vmem:[#allocation3 + $0x170] sm:$0xff]
    %v8839 = vld [vmem:[#allocation3 + $0x178] sm:$0xff]
    %v8840 = vmul.f32 %v8832, %v8836
    %v8841 = vmul.f32 %v8833, %v8837
    %v8842 = vmul.f32 %v8834, %v8838
    %v8843 = vmul.f32 %v8835, %v8839
    %v8844 = vadd.f32 %v8828, %v8840
    %v8845 = vadd.f32 %v8829, %v8841
    %v8846 = vadd.f32 %v8830, %v8842
    %v8847 = vadd.f32 %v8831, %v8843
    %v8848 = vld [vmem:[#allocation2 + $0x80] sm:$0xff]
    %v8849 = vld [vmem:[#allocation2 + $0x88] sm:$0xff]
    %v8850 = vld [vmem:[#allocation2 + $0x90] sm:$0xff]
    %v8851 = vld [vmem:[#allocation2 + $0x98] sm:$0xff]
    %v8852 = vld [vmem:[#allocation3 + $0x80] sm:$0xff]
    %v8853 = vld [vmem:[#allocation3 + $0x88] sm:$0xff]
    %v8854 = vld [vmem:[#allocation3 + $0x90] sm:$0xff]
    %v8855 = vld [vmem:[#allocation3 + $0x98] sm:$0xff]
    %v8856 = vmul.f32 %v8848, %v8852
    %v8857 = vmul.f32 %v8849, %v8853
    %v8858 = vmul.f32 %v8850, %v8854
    %v8859 = vmul.f32 %v8851, %v8855
    %v8860 = vadd.f32 %v8844, %v8856
    %v8861 = vadd.f32 %v8845, %v8857
    %v8862 = vadd.f32 %v8846, %v8858
    %v8863 = vadd.f32 %v8847, %v8859
    %v8864 = vld [vmem:[#allocation4 + $0x80] sm:$0xff]
    %v8865 = vld [vmem:[#allocation4 + $0x88] sm:$0xff]
    %v8866 = vld [vmem:[#allocation4 + $0x90] sm:$0xff]
    %v8867 = vld [vmem:[#allocation4 + $0x98] sm:$0xff]
    %v8868 = vld [vmem:[#allocation3 + $0x180] sm:$0xff]
    %v8869 = vld [vmem:[#allocation3 + $0x188] sm:$0xff]
    %v8870 = vld [vmem:[#allocation3 + $0x190] sm:$0xff]
    %v8871 = vld [vmem:[#allocation3 + $0x198] sm:$0xff]
    %v8872 = vmul.f32 %v8864, %v8868
    %v8873 = vmul.f32 %v8865, %v8869
    %v8874 = vmul.f32 %v8866, %v8870
    %v8875 = vmul.f32 %v8867, %v8871
    %v8876 = vadd.f32 %v8860, %v8872
    %v8877 = vadd.f32 %v8861, %v8873
    %v8878 = vadd.f32 %v8862, %v8874
    %v8879 = vadd.f32 %v8863, %v8875
    %v8880 = vld [vmem:[#allocation2 + $0xa0] sm:$0xff]
    %v8881 = vld [vmem:[#allocation2 + $0xa8] sm:$0xff]
    %v8882 = vld [vmem:[#allocation2 + $0xb0] sm:$0xff]
    %v8883 = vld [vmem:[#allocation2 + $0xb8] sm:$0xff]
    %v8884 = vld [vmem:[#allocation3 + $0xa0] sm:$0xff]
    %v8885 = vld [vmem:[#allocation3 + $0xa8] sm:$0xff]
    %v8886 = vld [vmem:[#allocation3 + $0xb0] sm:$0xff]
    %v8887 = vld [vmem:[#allocation3 + $0xb8] sm:$0xff]
    %v8888 = vmul.f32 %v8880, %v8884
    %v8889 = vmul.f32 %v8881, %v8885
    %v8890 = vmul.f32 %v8882, %v8886
    %v8891 = vmul.f32 %v8883, %v8887
    %v8892 = vadd.f32 %v8876, %v8888
    %v8893 = vadd.f32 %v8877, %v8889
    %v8894 = vadd.f32 %v8878, %v8890
    %v8895 = vadd.f32 %v8879, %v8891
    %v8896 = vld [vmem:[#allocation4 + $0xa0] sm:$0xff]
    %v8897 = vld [vmem:[#allocation4 + $0xa8] sm:$0xff]
    %v8898 = vld [vmem:[#allocation4 + $0xb0] sm:$0xff]
    %v8899 = vld [vmem:[#allocation4 + $0xb8] sm:$0xff]
    %v8900 = vld [vmem:[#allocation3 + $0x1a0] sm:$0xff]
    %v8901 = vld [vmem:[#allocation3 + $0x1a8] sm:$0xff]
    %v8902 = vld [vmem:[#allocation3 + $0x1b0] sm:$0xff]
    %v8903 = vld [vmem:[#allocation3 + $0x1b8] sm:$0xff]
    %v8904 = vmul.f32 %v8896, %v8900
    %v8905 = vmul.f32 %v8897, %v8901
    %v8906 = vmul.f32 %v8898, %v8902
    %v8907 = vmul.f32 %v8899, %v8903
    %v8908 = vadd.f32 %v8892, %v8904
    %v8909 = vadd.f32 %v8893, %v8905
    %v8910 = vadd.f32 %v8894, %v8906
    %v8911 = vadd.f32 %v8895, %v8907
    %v8912 = vld [vmem:[#allocation2 + $0xc0] sm:$0xff]
    %v8913 = vld [vmem:[#allocation2 + $0xc8] sm:$0xff]
    %v8914 = vld [vmem:[#allocation2 + $0xd0] sm:$0xff]
    %v8915 = vld [vmem:[#allocation2 + $0xd8] sm:$0xff]
    %v8916 = vld [vmem:[#allocation3 + $0xc0] sm:$0xff]
    %v8917 = vld [vmem:[#allocation3 + $0xc8] sm:$0xff]
    %v8918 = vld [vmem:[#allocation3 + $0xd0] sm:$0xff]
    %v8919 = vld [vmem:[#allocation3 + $0xd8] sm:$0xff]
    %v8920 = vmul.f32 %v8912, %v8916
    %v8921 = vmul.f32 %v8913, %v8917
    %v8922 = vmul.f32 %v8914, %v8918
    %v8923 = vmul.f32 %v8915, %v8919
    %v8924 = vadd.f32 %v8908, %v8920
    %v8925 = vadd.f32 %v8909, %v8921
    %v8926 = vadd.f32 %v8910, %v8922
    %v8927 = vadd.f32 %v8911, %v8923
    %v8928 = vld [vmem:[#allocation4 + $0xc0] sm:$0xff]
    %v8929 = vld [vmem:[#allocation4 + $0xc8] sm:$0xff]
    %v8930 = vld [vmem:[#allocation4 + $0xd0] sm:$0xff]
    %v8931 = vld [vmem:[#allocation4 + $0xd8] sm:$0xff]
    %v8932 = vld [vmem:[#allocation3 + $0x1c0] sm:$0xff]
    %v8933 = vld [vmem:[#allocation3 + $0x1c8] sm:$0xff]
    %v8934 = vld [vmem:[#allocation3 + $0x1d0] sm:$0xff]
    %v8935 = vld [vmem:[#allocation3 + $0x1d8] sm:$0xff]
    %v8936 = vmul.f32 %v8928, %v8932
    %v8937 = vmul.f32 %v8929, %v8933
    %v8938 = vmul.f32 %v8930, %v8934
    %v8939 = vmul.f32 %v8931, %v8935
    %v8940 = vadd.f32 %v8924, %v8936
    %v8941 = vadd.f32 %v8925, %v8937
    %v8942 = vadd.f32 %v8926, %v8938
    %v8943 = vadd.f32 %v8927, %v8939
    %v8944 = vld [vmem:[#allocation2 + $0xe0] sm:$0xff]
    %v8945 = vld [vmem:[#allocation2 + $0xe8] sm:$0xff]
    %v8946 = vld [vmem:[#allocation2 + $0xf0] sm:$0xff]
    %v8947 = vld [vmem:[#allocation2 + $0xf8] sm:$0xff]
    %v8948 = vld [vmem:[#allocation3 + $0xe0] sm:$0xff]
    %v8949 = vld [vmem:[#allocation3 + $0xe8] sm:$0xff]
    %v8950 = vld [vmem:[#allocation3 + $0xf0] sm:$0xff]
    %v8951 = vld [vmem:[#allocation3 + $0xf8] sm:$0xff]
    %v8952 = vmul.f32 %v8944, %v8948
    %v8953 = vmul.f32 %v8945, %v8949
    %v8954 = vmul.f32 %v8946, %v8950
    %v8955 = vmul.f32 %v8947, %v8951
    %v8956 = vadd.f32 %v8940, %v8952
    %v8957 = vadd.f32 %v8941, %v8953
    %v8958 = vadd.f32 %v8942, %v8954
    %v8959 = vadd.f32 %v8943, %v8955
    %v8960 = vld [vmem:[#allocation4 + $0xe0] sm:$0xff]
    %v8961 = vld [vmem:[#allocation4 + $0xe8] sm:$0xff]
    %v8962 = vld [vmem:[#allocation4 + $0xf0] sm:$0xff]
    %v8963 = vld [vmem:[#allocation4 + $0xf8] sm:$0xff]
    %v8964 = vld [vmem:[#allocation3 + $0x1e0] sm:$0xff]
    %v8965 = vld [vmem:[#allocation3 + $0x1e8] sm:$0xff]
    %v8966 = vld [vmem:[#allocation3 + $0x1f0] sm:$0xff]
    %v8967 = vld [vmem:[#allocation3 + $0x1f8] sm:$0xff]
    %v8968 = vmul.f32 %v8960, %v8964
    %v8969 = vmul.f32 %v8961, %v8965
    %v8970 = vmul.f32 %v8962, %v8966
    %v8971 = vmul.f32 %v8963, %v8967
    %v8972 = vadd.f32 %v8956, %v8968
    %v8973 = vadd.f32 %v8957, %v8969
    %v8974 = vadd.f32 %v8958, %v8970
    %v8975 = vadd.f32 %v8959, %v8971
    %v8976 = vadd.s32 %v982, 128
    %8977 = vst [vmem:[#allocation7] sm:$0xff] %v8972
    %8978 = vst [vmem:[#allocation7 + $0x8] sm:$0xff] %v8973
    %8979 = vst [vmem:[#allocation7 + $0x10] sm:$0xff] %v8974
    %8980 = vst [vmem:[#allocation7 + $0x18] sm:$0xff] %v8975
    %vm8981 = vcmp.ge.s32.totalorder %v982, 16
    %vm8982 = vcmp.ge.s32.totalorder %v8976, 16
    %8983 = vrot.lane.b32.xlu0 %v8972, 16
    %v8984 = vpop.permute.xlu0 %8983
    %8985 = vrot.lane.b32.xlu0 %v8974, 16
    %v8986 = vpop.permute.xlu0 %8985
    %8987 = vrot.lane.b32.xlu0 %v8973, 16
    %v8988 = vpop.permute.xlu0 %8987
    %8989 = vrot.lane.b32.xlu0 %v8975, 16
    %v8990 = vpop.permute.xlu0 %8989
    %v8991 = vsel %vm7172, %v8984, %v8988
    %v8992 = vsel %vm7172, %v8986, %v8990
    %v8993 = vsel %vm7172, %v8988, %v8984
    %v8994 = vsel %vm7172, %v8990, %v8986
    %v8995 = vsel %vm8981, 1, 0
    %v8996 = vsel %vm8982, 1, 0
    %vm8997 = vcmp.eq.s32.totalorder %v8995, 1
    %vm8998 = vcmp.eq.s32.totalorder %v8996, 1
    %v8999 = vsel %vm8997, %v8993, 0.0
    %v9000 = vsel %vm8998, %v8991, 0.0
    %v9001 = vsel %vm8997, %v8994, 0.0
    %v9002 = vsel %vm8998, %v8992, 0.0
    %9003 = vst [vmem:[#allocation7 + $0x20] sm:$0xff] %v8999
    %9004 = vst [vmem:[#allocation7 + $0x28] sm:$0xff] %v9000
    %9005 = vst [vmem:[#allocation7 + $0x30] sm:$0xff] %v9001
    %9006 = vst [vmem:[#allocation7 + $0x38] sm:$0xff] %v9002
    %vm9007 = vcmp.ge.s32.totalorder %v982, 32
    %vm9008 = vcmp.ge.s32.totalorder %v8976, 32
    %9009 = vrot.lane.b32.xlu0 %v8972, 32
    %v9010 = vpop.permute.xlu0 %9009
    %9011 = vrot.lane.b32.xlu0 %v8974, 32
    %v9012 = vpop.permute.xlu0 %9011
    %9013 = vrot.lane.b32.xlu0 %v8973, 32
    %v9014 = vpop.permute.xlu0 %9013
    %9015 = vrot.lane.b32.xlu0 %v8975, 32
    %v9016 = vpop.permute.xlu0 %9015
    %vm9017 = vcmp.lt.s32.totalorder %v982, 32
    %v9018 = vsel %vm9017, %v9010, %v9014
    %v9019 = vsel %vm9017, %v9012, %v9016
    %v9020 = vsel %vm9017, %v9014, %v9010
    %v9021 = vsel %vm9017, %v9016, %v9012
    %v9022 = vsel %vm9007, 1, 0
    %v9023 = vsel %vm9008, 1, 0
    %vm9024 = vcmp.eq.s32.totalorder %v9022, 1
    %vm9025 = vcmp.eq.s32.totalorder %v9023, 1
    %v9026 = vsel %vm9024, %v9020, 0.0
    %v9027 = vsel %vm9025, %v9018, 0.0
    %v9028 = vsel %vm9024, %v9021, 0.0
    %v9029 = vsel %vm9025, %v9019, 0.0
    %9030 = vst [vmem:[#allocation7 + $0x40] sm:$0xff] %v9026
    %9031 = vst [vmem:[#allocation7 + $0x48] sm:$0xff] %v9027
    %9032 = vst [vmem:[#allocation7 + $0x50] sm:$0xff] %v9028
    %9033 = vst [vmem:[#allocation7 + $0x58] sm:$0xff] %v9029
    %vm9034 = vcmp.ge.s32.totalorder %v982, 48
    %vm9035 = vcmp.ge.s32.totalorder %v8976, 48
    %9036 = vrot.lane.b32.xlu0 %v8972, 48
    %v9037 = vpop.permute.xlu0 %9036
    %9038 = vrot.lane.b32.xlu0 %v8974, 48
    %v9039 = vpop.permute.xlu0 %9038
    %9040 = vrot.lane.b32.xlu0 %v8973, 48
    %v9041 = vpop.permute.xlu0 %9040
    %9042 = vrot.lane.b32.xlu0 %v8975, 48
    %v9043 = vpop.permute.xlu0 %9042
    %vm9044 = vcmp.lt.s32.totalorder %v982, 48
    %v9045 = vsel %vm9044, %v9037, %v9041
    %v9046 = vsel %vm9044, %v9039, %v9043
    %v9047 = vsel %vm9044, %v9041, %v9037
    %v9048 = vsel %vm9044, %v9043, %v9039
    %v9049 = vsel %vm9034, 1, 0
    %v9050 = vsel %vm9035, 1, 0
    %vm9051 = vcmp.eq.s32.totalorder %v9049, 1
    %vm9052 = vcmp.eq.s32.totalorder %v9050, 1
    %v9053 = vsel %vm9051, %v9047, 0.0
    %v9054 = vsel %vm9052, %v9045, 0.0
    %v9055 = vsel %vm9051, %v9048, 0.0
    %v9056 = vsel %vm9052, %v9046, 0.0
    %9057 = vst [vmem:[#allocation7 + $0x60] sm:$0xff] %v9053
    %9058 = vst [vmem:[#allocation7 + $0x68] sm:$0xff] %v9054
    %9059 = vst [vmem:[#allocation7 + $0x70] sm:$0xff] %v9055
    %9060 = vst [vmem:[#allocation7 + $0x78] sm:$0xff] %v9056
    %vm9061 = vcmp.ge.s32.totalorder %v982, 64
    %vm9062 = vcmp.ge.s32.totalorder %v8976, 64
    %9063 = vrot.lane.b32.xlu0 %v8972, 64
    %v9064 = vpop.permute.xlu0 %9063
    %9065 = vrot.lane.b32.xlu0 %v8974, 64
    %v9066 = vpop.permute.xlu0 %9065
    %9067 = vrot.lane.b32.xlu0 %v8973, 64
    %v9068 = vpop.permute.xlu0 %9067
    %9069 = vrot.lane.b32.xlu0 %v8975, 64
    %v9070 = vpop.permute.xlu0 %9069
    %vm9071 = vcmp.lt.s32.totalorder %v982, 64
    %v9072 = vsel %vm9071, %v9064, %v9068
    %v9073 = vsel %vm9071, %v9066, %v9070
    %v9074 = vsel %vm9071, %v9068, %v9064
    %v9075 = vsel %vm9071, %v9070, %v9066
    %v9076 = vsel %vm9061, 1, 0
    %v9077 = vsel %vm9062, 1, 0
    %vm9078 = vcmp.eq.s32.totalorder %v9076, 1
    %vm9079 = vcmp.eq.s32.totalorder %v9077, 1
    %v9080 = vsel %vm9078, %v9074, 0.0
    %v9081 = vsel %vm9079, %v9072, 0.0
    %v9082 = vsel %vm9078, %v9075, 0.0
    %v9083 = vsel %vm9079, %v9073, 0.0
    %9084 = vst [vmem:[#allocation7 + $0x80] sm:$0xff] %v9080
    %9085 = vst [vmem:[#allocation7 + $0x88] sm:$0xff] %v9081
    %9086 = vst [vmem:[#allocation7 + $0x90] sm:$0xff] %v9082
    %9087 = vst [vmem:[#allocation7 + $0x98] sm:$0xff] %v9083
    %vm9088 = vcmp.ge.s32.totalorder %v982, 80
    %vm9089 = vcmp.ge.s32.totalorder %v8976, 80
    %9090 = vrot.lane.b32.xlu0 %v8972, 80
    %v9091 = vpop.permute.xlu0 %9090
    %9092 = vrot.lane.b32.xlu0 %v8974, 80
    %v9093 = vpop.permute.xlu0 %9092
    %9094 = vrot.lane.b32.xlu0 %v8973, 80
    %v9095 = vpop.permute.xlu0 %9094
    %9096 = vrot.lane.b32.xlu0 %v8975, 80
    %v9097 = vpop.permute.xlu0 %9096
    %vm9098 = vcmp.lt.s32.totalorder %v982, 80
    %v9099 = vsel %vm9098, %v9091, %v9095
    %v9100 = vsel %vm9098, %v9093, %v9097
    %v9101 = vsel %vm9098, %v9095, %v9091
    %v9102 = vsel %vm9098, %v9097, %v9093
    %v9103 = vsel %vm9088, 1, 0
    %v9104 = vsel %vm9089, 1, 0
    %vm9105 = vcmp.eq.s32.totalorder %v9103, 1
    %vm9106 = vcmp.eq.s32.totalorder %v9104, 1
    %v9107 = vsel %vm9105, %v9101, 0.0
    %v9108 = vsel %vm9106, %v9099, 0.0
    %v9109 = vsel %vm9105, %v9102, 0.0
    %v9110 = vsel %vm9106, %v9100, 0.0
    %9111 = vst [vmem:[#allocation7 + $0xa0] sm:$0xff] %v9107
    %9112 = vst [vmem:[#allocation7 + $0xa8] sm:$0xff] %v9108
    %9113 = vst [vmem:[#allocation7 + $0xb0] sm:$0xff] %v9109
    %9114 = vst [vmem:[#allocation7 + $0xb8] sm:$0xff] %v9110
    %vm9115 = vcmp.ge.s32.totalorder %v982, 96
    %vm9116 = vcmp.ge.s32.totalorder %v8976, 96
    %9117 = vrot.lane.b32.xlu0 %v8972, 96
    %v9118 = vpop.permute.xlu0 %9117
    %9119 = vrot.lane.b32.xlu0 %v8974, 96
    %v9120 = vpop.permute.xlu0 %9119
    %9121 = vrot.lane.b32.xlu0 %v8973, 96
    %v9122 = vpop.permute.xlu0 %9121
    %9123 = vrot.lane.b32.xlu0 %v8975, 96
    %v9124 = vpop.permute.xlu0 %9123
    %vm9125 = vcmp.lt.s32.totalorder %v982, 96
    %v9126 = vsel %vm9125, %v9118, %v9122
    %v9127 = vsel %vm9125, %v9120, %v9124
    %v9128 = vsel %vm9125, %v9122, %v9118
    %v9129 = vsel %vm9125, %v9124, %v9120
    %v9130 = vsel %vm9115, 1, 0
    %v9131 = vsel %vm9116, 1, 0
    %vm9132 = vcmp.eq.s32.totalorder %v9130, 1
    %vm9133 = vcmp.eq.s32.totalorder %v9131, 1
    %v9134 = vsel %vm9132, %v9128, 0.0
    %v9135 = vsel %vm9133, %v9126, 0.0
    %v9136 = vsel %vm9132, %v9129, 0.0
    %v9137 = vsel %vm9133, %v9127, 0.0
    %9138 = vst [vmem:[#allocation7 + $0xc0] sm:$0xff] %v9134
    %9139 = vst [vmem:[#allocation7 + $0xc8] sm:$0xff] %v9135
    %9140 = vst [vmem:[#allocation7 + $0xd0] sm:$0xff] %v9136
    %9141 = vst [vmem:[#allocation7 + $0xd8] sm:$0xff] %v9137
    %vm9142 = vcmp.ge.s32.totalorder %v982, 112
    %vm9143 = vcmp.ge.s32.totalorder %v8976, 112
    %9144 = vrot.lane.b32.xlu0 %v8972, 112
    %v9145 = vpop.permute.xlu0 %9144
    %9146 = vrot.lane.b32.xlu0 %v8974, 112
    %v9147 = vpop.permute.xlu0 %9146
    %9148 = vrot.lane.b32.xlu0 %v8973, 112
    %v9149 = vpop.permute.xlu0 %9148
    %9150 = vrot.lane.b32.xlu0 %v8975, 112
    %v9151 = vpop.permute.xlu0 %9150
    %vm9152 = vcmp.lt.s32.totalorder %v982, 112
    %v9153 = vsel %vm9152, %v9145, %v9149
    %v9154 = vsel %vm9152, %v9147, %v9151
    %v9155 = vsel %vm9152, %v9149, %v9145
    %v9156 = vsel %vm9152, %v9151, %v9147
    %v9157 = vsel %vm9142, 1, 0
    %v9158 = vsel %vm9143, 1, 0
    %vm9159 = vcmp.eq.s32.totalorder %v9157, 1
    %vm9160 = vcmp.eq.s32.totalorder %v9158, 1
    %v9161 = vsel %vm9159, %v9155, 0.0
    %v9162 = vsel %vm9160, %v9153, 0.0
    %v9163 = vsel %vm9159, %v9156, 0.0
    %v9164 = vsel %vm9160, %v9154, 0.0
    %9165 = vst [vmem:[#allocation7 + $0xe0] sm:$0xff] %v9161
    %9166 = vst [vmem:[#allocation7 + $0xe8] sm:$0xff] %v9162
    %9167 = vst [vmem:[#allocation7 + $0xf0] sm:$0xff] %v9163
    %9168 = vst [vmem:[#allocation7 + $0xf8] sm:$0xff] %v9164
    %vm9169 = vcmp.ge.s32.totalorder %v982, 128
    %vm9170 = vcmp.ge.s32.totalorder %v8976, 128
    %v9171 = vsel %vm9169, 1, 0
    %v9172 = vsel %vm9170, 1, 0
    %vm9173 = vcmp.eq.s32.totalorder %v9171, 1
    %vm9174 = vcmp.eq.s32.totalorder %v9172, 1
    %v9175 = vsel %vm9173, %v8973, 0.0
    %v9176 = vsel %vm9174, %v8972, 0.0
    %v9177 = vsel %vm9173, %v8975, 0.0
    %v9178 = vsel %vm9174, %v8974, 0.0
    %9179 = vst [vmem:[#allocation7 + $0x100] sm:$0xff] %v9175
    %9180 = vst [vmem:[#allocation7 + $0x108] sm:$0xff] %v9176
    %9181 = vst [vmem:[#allocation7 + $0x110] sm:$0xff] %v9177
    %9182 = vst [vmem:[#allocation7 + $0x118] sm:$0xff] %v9178
    %vm9183 = vcmp.ge.s32.totalorder %v982, 144
    %vm9184 = vcmp.ge.s32.totalorder %v8976, 144
    %v9185 = vsel %vm9183, 1, 0
    %v9186 = vsel %vm9184, 1, 0
    %vm9187 = vcmp.eq.s32.totalorder %v9185, 1
    %vm9188 = vcmp.eq.s32.totalorder %v9186, 1
    %v9189 = vsel %vm9187, %v8991, 0.0
    %v9190 = vsel %vm9188, %v8993, 0.0
    %v9191 = vsel %vm9187, %v8992, 0.0
    %v9192 = vsel %vm9188, %v8994, 0.0
    %9193 = vst [vmem:[#allocation7 + $0x120] sm:$0xff] %v9189
    %9194 = vst [vmem:[#allocation7 + $0x128] sm:$0xff] %v9190
    %9195 = vst [vmem:[#allocation7 + $0x130] sm:$0xff] %v9191
    %9196 = vst [vmem:[#allocation7 + $0x138] sm:$0xff] %v9192
    %vm9197 = vcmp.ge.s32.totalorder %v982, 160
    %vm9198 = vcmp.ge.s32.totalorder %v8976, 160
    %v9199 = vsel %vm9197, 1, 0
    %v9200 = vsel %vm9198, 1, 0
    %vm9201 = vcmp.eq.s32.totalorder %v9199, 1
    %vm9202 = vcmp.eq.s32.totalorder %v9200, 1
    %v9203 = vsel %vm9201, %v9018, 0.0
    %v9204 = vsel %vm9202, %v9020, 0.0
    %v9205 = vsel %vm9201, %v9019, 0.0
    %v9206 = vsel %vm9202, %v9021, 0.0
    %9207 = vst [vmem:[#allocation7 + $0x140] sm:$0xff] %v9203
    %9208 = vst [vmem:[#allocation7 + $0x148] sm:$0xff] %v9204
    %9209 = vst [vmem:[#allocation7 + $0x150] sm:$0xff] %v9205
    %9210 = vst [vmem:[#allocation7 + $0x158] sm:$0xff] %v9206
    %vm9211 = vcmp.ge.s32.totalorder %v982, 176
    %vm9212 = vcmp.ge.s32.totalorder %v8976, 176
    %v9213 = vsel %vm9211, 1, 0
    %v9214 = vsel %vm9212, 1, 0
    %vm9215 = vcmp.eq.s32.totalorder %v9213, 1
    %vm9216 = vcmp.eq.s32.totalorder %v9214, 1
    %v9217 = vsel %vm9215, %v9045, 0.0
    %v9218 = vsel %vm9216, %v9047, 0.0
    %v9219 = vsel %vm9215, %v9046, 0.0
    %v9220 = vsel %vm9216, %v9048, 0.0
    %9221 = vst [vmem:[#allocation7 + $0x160] sm:$0xff] %v9217
    %9222 = vst [vmem:[#allocation7 + $0x168] sm:$0xff] %v9218
    %9223 = vst [vmem:[#allocation7 + $0x170] sm:$0xff] %v9219
    %9224 = vst [vmem:[#allocation7 + $0x178] sm:$0xff] %v9220
    %vm9225 = vcmp.ge.s32.totalorder %v982, 192
    %vm9226 = vcmp.ge.s32.totalorder %v8976, 192
    %v9227 = vsel %vm9225, 1, 0
    %v9228 = vsel %vm9226, 1, 0
    %vm9229 = vcmp.eq.s32.totalorder %v9227, 1
    %vm9230 = vcmp.eq.s32.totalorder %v9228, 1
    %v9231 = vsel %vm9229, %v9072, 0.0
    %v9232 = vsel %vm9230, %v9074, 0.0
    %v9233 = vsel %vm9229, %v9073, 0.0
    %v9234 = vsel %vm9230, %v9075, 0.0
    %9235 = vst [vmem:[#allocation7 + $0x180] sm:$0xff] %v9231
    %9236 = vst [vmem:[#allocation7 + $0x188] sm:$0xff] %v9232
    %9237 = vst [vmem:[#allocation7 + $0x190] sm:$0xff] %v9233
    %9238 = vst [vmem:[#allocation7 + $0x198] sm:$0xff] %v9234
    %vm9239 = vcmp.ge.s32.totalorder %v982, 208
    %vm9240 = vcmp.ge.s32.totalorder %v8976, 208
    %v9241 = vsel %vm9239, 1, 0
    %v9242 = vsel %vm9240, 1, 0
    %vm9243 = vcmp.eq.s32.totalorder %v9241, 1
    %vm9244 = vcmp.eq.s32.totalorder %v9242, 1
    %v9245 = vsel %vm9243, %v9099, 0.0
    %v9246 = vsel %vm9244, %v9101, 0.0
    %v9247 = vsel %vm9243, %v9100, 0.0
    %v9248 = vsel %vm9244, %v9102, 0.0
    %9249 = vst [vmem:[#allocation7 + $0x1a0] sm:$0xff] %v9245
    %9250 = vst [vmem:[#allocation7 + $0x1a8] sm:$0xff] %v9246
    %9251 = vst [vmem:[#allocation7 + $0x1b0] sm:$0xff] %v9247
    %9252 = vst [vmem:[#allocation7 + $0x1b8] sm:$0xff] %v9248
    %vm9253 = vcmp.ge.s32.totalorder %v982, 224
    %vm9254 = vcmp.ge.s32.totalorder %v8976, 224
    %v9255 = vsel %vm9253, 1, 0
    %v9256 = vsel %vm9254, 1, 0
    %vm9257 = vcmp.eq.s32.totalorder %v9255, 1
    %vm9258 = vcmp.eq.s32.totalorder %v9256, 1
    %v9259 = vsel %vm9257, %v9126, 0.0
    %v9260 = vsel %vm9258, %v9128, 0.0
    %v9261 = vsel %vm9257, %v9127, 0.0
    %v9262 = vsel %vm9258, %v9129, 0.0
    %9263 = vst [vmem:[#allocation7 + $0x1c0] sm:$0xff] %v9259
    %9264 = vst [vmem:[#allocation7 + $0x1c8] sm:$0xff] %v9260
    %9265 = vst [vmem:[#allocation7 + $0x1d0] sm:$0xff] %v9261
    %9266 = vst [vmem:[#allocation7 + $0x1d8] sm:$0xff] %v9262
    %vm9267 = vcmp.ge.s32.totalorder %v982, 240
    %vm9268 = vcmp.ge.s32.totalorder %v8976, 240
    %v9269 = vsel %vm9267, 1, 0
    %v9270 = vsel %vm9268, 1, 0
    %vm9271 = vcmp.eq.s32.totalorder %v9269, 1
    %vm9272 = vcmp.eq.s32.totalorder %v9270, 1
    %v9273 = vsel %vm9271, %v9153, 0.0
    %v9274 = vsel %vm9272, %v9155, 0.0
    %v9275 = vsel %vm9271, %v9154, 0.0
    %v9276 = vsel %vm9272, %v9156, 0.0
    %9277 = vst [vmem:[#allocation7 + $0x1e0] sm:$0xff] %v9273
    %9278 = vst [vmem:[#allocation7 + $0x1e8] sm:$0xff] %v9274
    %9279 = vst [vmem:[#allocation7 + $0x1f0] sm:$0xff] %v9275
    %9280 = vst [vmem:[#allocation7 + $0x1f8] sm:$0xff] %v9276
    %v9281 = vld [vmem:[#allocation26] sm:$0xff]
    %v9282 = vld [vmem:[#allocation26 + $0x8] sm:$0xff]
    %v9283 = vld [vmem:[#allocation26 + $0x10] sm:$0xff]
    %v9284 = vld [vmem:[#allocation26 + $0x18] sm:$0xff]
    %v9286 = vsel %vm952, %v1179, 0
    %v9289 = vsel %vm952, %v1180, 0
    %9291 = vmatprep.subr.mxu0 %v9282
    %9292 = vmatpush1.msra.mxu0 %v9281
    %9293 = vmatprep.subr.mxu0 %v9284
    %9294 = vmatpush1.msra.mxu0 %v9283
    %9295 = vmatprep.subr.mxu0 0.0
    %9296 = vmatpush1.msra.mxu0 0.0
    %9297 = vmatprep.subr.mxu0 0.0
    %9298 = vmatpush1.msra.mxu0 0.0
    %9299 = vmatprep.subr.mxu0 0.0
    %9300 = vmatpush1.msra.mxu0 0.0
    %9301 = vmatprep.subr.mxu0 0.0
    %9302 = vmatpush1.msra.mxu0 0.0
    %9303 = vmatprep.subr.mxu0 0.0
    %9304 = vmatpush1.msra.mxu0 0.0
    %9305 = vmatprep.subr.mxu0 0.0
    %9306 = vmatpush1.msra.mxu0 0.0
    %9307 = vmatprep.subr.mxu0 0.0
    %9308 = vmatpush1.msra.mxu0 0.0
    %9309 = vmatprep.subr.mxu0 0.0
    %9310 = vmatpush1.msra.mxu0 0.0
    %9311 = vmatprep.subr.mxu0 0.0
    %9312 = vmatpush1.msra.mxu0 0.0
    %9313 = vmatprep.subr.mxu0 0.0
    %9314 = vmatpush1.msra.mxu0 0.0
    %9315 = vmatprep.subr.mxu0 0.0
    %9316 = vmatpush1.msra.mxu0 0.0
    %9317 = vmatprep.subr.mxu0 0.0
    %9318 = vmatpush1.msra.mxu0 0.0
    %9319 = vmatprep.subr.mxu0 0.0
    %9320 = vmatpush1.msra.mxu0 0.0
    %9321 = vmatprep.subr.mxu0 0.0
    %9322 = vmatpush1.msra.mxu0 0.0
    %9323 = vmatprep.subr.mxu0 0.0
    %9324 = vmatpush1.msra.mxu0 0.0
    %9325 = vmatprep.subr.mxu0 0.0
    %9326 = vmatpush1.msra.mxu0 0.0
    %9327 = vmatprep.subr.mxu0 0.0
    %9328 = vmatpush1.msra.mxu0 0.0
    %9329 = vmatprep.subr.mxu0 0.0
    %9330 = vmatpush1.msra.mxu0 0.0
    %9331 = vmatprep.subr.mxu0 0.0
    %9332 = vmatpush1.msra.mxu0 0.0
    %9333 = vmatprep.subr.mxu0 0.0
    %9334 = vmatpush1.msra.mxu0 0.0
    %9335 = vmatprep.subr.mxu0 0.0
    %9336 = vmatpush1.msra.mxu0 0.0
    %9337 = vmatprep.subr.mxu0 0.0
    %9338 = vmatpush1.msra.mxu0 0.0
    %9339 = vmatprep.subr.mxu0 0.0
    %9340 = vmatpush1.msra.mxu0 0.0
    %9341 = vmatprep.subr.mxu0 0.0
    %9342 = vmatpush1.msra.mxu0 0.0
    %9343 = vmatprep.subr.mxu0 0.0
    %9344 = vmatpush1.msra.mxu0 0.0
    %9345 = vmatprep.subr.mxu0 0.0
    %9346 = vmatpush1.msra.mxu0 0.0
    %9347 = vmatprep.subr.mxu0 0.0
    %9348 = vmatpush1.msra.mxu0 0.0
    %9349 = vmatprep.subr.mxu0 0.0
    %9350 = vmatpush1.msra.mxu0 0.0
    %9351 = vmatprep.subr.mxu0 0.0
    %9352 = vmatpush1.msra.mxu0 0.0
    %9353 = vmatprep.subr.mxu0 0.0
    %9354 = vmatpush1.msra.mxu0 0.0
    %9355 = vmatprep.mubr.f32.mxu0 0.0
    %9356 = vmatmul.mubr.f32.gmra.mrb[0].mxu0 %v9286
    %v9357 = vpop.f32.mrb[0].mxu0
    %v9358 = vadd.f32 0.0, %v9357
    %v9359 = vpop.f32.mrb[0].mxu0
    %v9360 = vadd.f32 0.0, %v9359
    %9361 = vmatprep.mubr.f32.mxu0 0.0
    %9362 = vmatmul.mubr.f32.gmra.mrb[0].mxu0 %v9289
    %v9363 = vpop.f32.mrb[0].mxu0
    %v9364 = vadd.f32 0.0, %v9363
    %v9365 = vpop.f32.mrb[0].mxu0
    %v9366 = vadd.f32 0.0, %v9365
    %9367 = vdwg.mxu0
    %v9368 = vld [vmem:[#allocation28] sm:$0xff]
    %v9369 = vld [vmem:[#allocation28 + $0x8] sm:$0xff]
    %v9370 = vld [vmem:[#allocation28 + $0x10] sm:$0xff]
    %v9371 = vld [vmem:[#allocation28 + $0x18] sm:$0xff]
    %v9372 = vmul.f32 %v9358, %v9368
    %v9373 = vmul.f32 %v9360, %v9369
    %v9374 = vmul.f32 %v9364, %v9370
    %v9375 = vmul.f32 %v9366, %v9371
    %v9376 = vld [vmem:[#allocation7] sm:$0xff]
    %v9377 = vld [vmem:[#allocation7 + $0x8] sm:$0xff]
    %v9378 = vld [vmem:[#allocation7 + $0x10] sm:$0xff]
    %v9379 = vld [vmem:[#allocation7 + $0x18] sm:$0xff]
    %v9380 = vld [vmem:[#allocation7 + $0x20] sm:$0xff]
    %v9381 = vld [vmem:[#allocation7 + $0x28] sm:$0xff]
    %v9382 = vld [vmem:[#allocation7 + $0x30] sm:$0xff]
    %v9383 = vld [vmem:[#allocation7 + $0x38] sm:$0xff]
    %v9384 = vld [vmem:[#allocation7 + $0x40] sm:$0xff]
    %v9385 = vld [vmem:[#allocation7 + $0x48] sm:$0xff]
    %v9386 = vld [vmem:[#allocation7 + $0x50] sm:$0xff]
    %v9387 = vld [vmem:[#allocation7 + $0x58] sm:$0xff]
    %v9388 = vld [vmem:[#allocation7 + $0x60] sm:$0xff]
    %v9389 = vld [vmem:[#allocation7 + $0x68] sm:$0xff]
    %v9390 = vld [vmem:[#allocation7 + $0x70] sm:$0xff]
    %v9391 = vld [vmem:[#allocation7 + $0x78] sm:$0xff]
    %v9392 = vld [vmem:[#allocation7 + $0x80] sm:$0xff]
    %v9393 = vld [vmem:[#allocation7 + $0x88] sm:$0xff]
    %v9394 = vld [vmem:[#allocation7 + $0x90] sm:$0xff]
    %v9395 = vld [vmem:[#allocation7 + $0x98] sm:$0xff]
    %v9396 = vld [vmem:[#allocation7 + $0xa0] sm:$0xff]
    %v9397 = vld [vmem:[#allocation7 + $0xa8] sm:$0xff]
    %v9398 = vld [vmem:[#allocation7 + $0xb0] sm:$0xff]
    %v9399 = vld [vmem:[#allocation7 + $0xb8] sm:$0xff]
    %v9400 = vld [vmem:[#allocation7 + $0xc0] sm:$0xff]
    %v9401 = vld [vmem:[#allocation7 + $0xc8] sm:$0xff]
    %v9402 = vld [vmem:[#allocation7 + $0xd0] sm:$0xff]
    %v9403 = vld [vmem:[#allocation7 + $0xd8] sm:$0xff]
    %v9404 = vld [vmem:[#allocation7 + $0xe0] sm:$0xff]
    %v9405 = vld [vmem:[#allocation7 + $0xe8] sm:$0xff]
    %v9406 = vld [vmem:[#allocation7 + $0xf0] sm:$0xff]
    %v9407 = vld [vmem:[#allocation7 + $0xf8] sm:$0xff]
    %v9408 = vld [vmem:[#allocation7 + $0x100] sm:$0xff]
    %v9409 = vld [vmem:[#allocation7 + $0x108] sm:$0xff]
    %v9410 = vld [vmem:[#allocation7 + $0x110] sm:$0xff]
    %v9411 = vld [vmem:[#allocation7 + $0x118] sm:$0xff]
    %v9412 = vld [vmem:[#allocation7 + $0x120] sm:$0xff]
    %v9413 = vld [vmem:[#allocation7 + $0x128] sm:$0xff]
    %v9414 = vld [vmem:[#allocation7 + $0x130] sm:$0xff]
    %v9415 = vld [vmem:[#allocation7 + $0x138] sm:$0xff]
    %v9416 = vld [vmem:[#allocation7 + $0x140] sm:$0xff]
    %v9417 = vld [vmem:[#allocation7 + $0x148] sm:$0xff]
    %v9418 = vld [vmem:[#allocation7 + $0x150] sm:$0xff]
    %v9419 = vld [vmem:[#allocation7 + $0x158] sm:$0xff]
    %v9420 = vld [vmem:[#allocation7 + $0x160] sm:$0xff]
    %v9421 = vld [vmem:[#allocation7 + $0x168] sm:$0xff]
    %v9422 = vld [vmem:[#allocation7 + $0x170] sm:$0xff]
    %v9423 = vld [vmem:[#allocation7 + $0x178] sm:$0xff]
    %v9424 = vld [vmem:[#allocation7 + $0x180] sm:$0xff]
    %v9425 = vld [vmem:[#allocation7 + $0x188] sm:$0xff]
    %v9426 = vld [vmem:[#allocation7 + $0x190] sm:$0xff]
    %v9427 = vld [vmem:[#allocation7 + $0x198] sm:$0xff]
    %v9428 = vld [vmem:[#allocation7 + $0x1a0] sm:$0xff]
    %v9429 = vld [vmem:[#allocation7 + $0x1a8] sm:$0xff]
    %v9430 = vld [vmem:[#allocation7 + $0x1b0] sm:$0xff]
    %v9431 = vld [vmem:[#allocation7 + $0x1b8] sm:$0xff]
    %v9432 = vld [vmem:[#allocation7 + $0x1c0] sm:$0xff]
    %v9433 = vld [vmem:[#allocation7 + $0x1c8] sm:$0xff]
    %v9434 = vld [vmem:[#allocation7 + $0x1d0] sm:$0xff]
    %v9435 = vld [vmem:[#allocation7 + $0x1d8] sm:$0xff]
    %v9436 = vld [vmem:[#allocation7 + $0x1e0] sm:$0xff]
    %v9437 = vld [vmem:[#allocation7 + $0x1e8] sm:$0xff]
    %v9438 = vld [vmem:[#allocation7 + $0x1f0] sm:$0xff]
    %v9439 = vld [vmem:[#allocation7 + $0x1f8] sm:$0xff]
    %9440 = vmatprep.subr.mxu0 %v9377
    %9441 = vmatpush1.msra.mxu0 %v9376
    %9442 = vmatprep.subr.mxu0 %v9379
    %9443 = vmatpush1.msra.mxu0 %v9378
    %9444 = vmatprep.subr.mxu0 %v9381
    %9445 = vmatpush1.msra.mxu0 %v9380
    %9446 = vmatprep.subr.mxu0 %v9383
    %9447 = vmatpush1.msra.mxu0 %v9382
    %9448 = vmatprep.subr.mxu0 %v9385
    %9449 = vmatpush1.msra.mxu0 %v9384
    %9450 = vmatprep.subr.mxu0 %v9387
    %9451 = vmatpush1.msra.mxu0 %v9386
    %9452 = vmatprep.subr.mxu0 %v9389
    %9453 = vmatpush1.msra.mxu0 %v9388
    %9454 = vmatprep.subr.mxu0 %v9391
    %9455 = vmatpush1.msra.mxu0 %v9390
    %9456 = vmatprep.subr.mxu0 %v9393
    %9457 = vmatpush1.msra.mxu0 %v9392
    %9458 = vmatprep.subr.mxu0 %v9395
    %9459 = vmatpush1.msra.mxu0 %v9394
    %9460 = vmatprep.subr.mxu0 %v9397
    %9461 = vmatpush1.msra.mxu0 %v9396
    %9462 = vmatprep.subr.mxu0 %v9399
    %9463 = vmatpush1.msra.mxu0 %v9398
    %9464 = vmatprep.subr.mxu0 %v9401
    %9465 = vmatpush1.msra.mxu0 %v9400
    %9466 = vmatprep.subr.mxu0 %v9403
    %9467 = vmatpush1.msra.mxu0 %v9402
    %9468 = vmatprep.subr.mxu0 %v9405
    %9469 = vmatpush1.msra.mxu0 %v9404
    %9470 = vmatprep.subr.mxu0 %v9407
    %9471 = vmatpush1.msra.mxu0 %v9406
    %9472 = vmatprep.subr.mxu0 %v9409
    %9473 = vmatpush1.msra.mxu0 %v9408
    %9474 = vmatprep.subr.mxu0 %v9411
    %9475 = vmatpush1.msra.mxu0 %v9410
    %9476 = vmatprep.subr.mxu0 %v9413
    %9477 = vmatpush1.msra.mxu0 %v9412
    %9478 = vmatprep.subr.mxu0 %v9415
    %9479 = vmatpush1.msra.mxu0 %v9414
    %9480 = vmatprep.subr.mxu0 %v9417
    %9481 = vmatpush1.msra.mxu0 %v9416
    %9482 = vmatprep.subr.mxu0 %v9419
    %9483 = vmatpush1.msra.mxu0 %v9418
    %9484 = vmatprep.subr.mxu0 %v9421
    %9485 = vmatpush1.msra.mxu0 %v9420
    %9486 = vmatprep.subr.mxu0 %v9423
    %9487 = vmatpush1.msra.mxu0 %v9422
    %9488 = vmatprep.subr.mxu0 %v9425
    %9489 = vmatpush1.msra.mxu0 %v9424
    %9490 = vmatprep.subr.mxu0 %v9427
    %9491 = vmatpush1.msra.mxu0 %v9426
    %9492 = vmatprep.subr.mxu0 %v9429
    %9493 = vmatpush1.msra.mxu0 %v9428
    %9494 = vmatprep.subr.mxu0 %v9431
    %9495 = vmatpush1.msra.mxu0 %v9430
    %9496 = vmatprep.subr.mxu0 %v9433
    %9497 = vmatpush1.msra.mxu0 %v9432
    %9498 = vmatprep.subr.mxu0 %v9435
    %9499 = vmatpush1.msra.mxu0 %v9434
    %9500 = vmatprep.subr.mxu0 %v9437
    %9501 = vmatpush1.msra.mxu0 %v9436
    %9502 = vmatprep.subr.mxu0 %v9439
    %9503 = vmatpush1.msra.mxu0 %v9438
    %9504 = vmatprep.mubr.f32.mxu0 %v9373
    %9505 = vmatmul.mubr.f32.gmra.mrb[0].mxu0 %v9372
    %v9506 = vpop.f32.mrb[0].mxu0
    %v9507 = vadd.f32 0.0, %v9506
    %v9508 = vpop.f32.mrb[0].mxu0
    %v9509 = vadd.f32 0.0, %v9508
    %9510 = vmatprep.mubr.f32.mxu0 %v9375
    %9511 = vmatmul.mubr.f32.gmra.mrb[0].mxu0 %v9374
    %v9512 = vpop.f32.mrb[0].mxu0
    %v9513 = vadd.f32 0.0, %v9512
    %v9514 = vpop.f32.mrb[0].mxu0
    %v9515 = vadd.f32 0.0, %v9514
    %9516 = vdwg.mxu0
    %9517 = vst [vmem:[#allocation29] sm:$0xff] %v9507
    %9518 = vst [vmem:[#allocation29 + $0x8] sm:$0xff] %v9509
    %9519 = vst [vmem:[#allocation29 + $0x10] sm:$0xff] %v9513
    %9520 = vst [vmem:[#allocation29 + $0x18] sm:$0xff] %v9515
    // Predicated region
    $region142: #{atoms_forward.1} parent=1 // pred_check
      _
    $region143: #{atoms_forward.1} parent=1 // pred_check_branch
      %9522 = sbr.rel (0) target = $region145
    $region144: #{atoms_forward.1} parent=1 // pred_region
      %s9524 = ssub.s32 512, 512
      %9525 = vsyncadd [#allocation10], %s9524
      %s9526 = sshll.u32 [#allocation29], 4
      %s9527 = int_to_ptr.vmem [resolvable:$true] %s9526
      %9532 = dma.vmem_to_hbm [thread:$0]  %s9527, 512, %s22, [#allocation10], 256, 256, 16
    $region145: #{atoms_forward.1} parent=1 // pred_fallthru
      _
    // Predicated region
    $region146: #{atoms_forward.1} parent=1 // pred_check
      _
    $region147: #{atoms_forward.1} parent=1 // pred_check_branch
      %9534 = sbr.rel (0) target = $region149
    $region148: #{atoms_forward.1} parent=1 // pred_region
      %9535 = dma.done [#allocation10], 512
    $region149: #{atoms_forward.1} parent=1 // pred_fallthru
      _
    %9536 = vsyncpa [#allocation9], 1
    %9537 = vsyncpa [#allocation12], 1
    %9538 = vsyncpa [#allocation15], 1
    %9539 = vsyncpa [#allocation18], 1
    %9540 = vsyncpa [#allocation21], 1
    %9541 = vsyncpa [#allocation24], 1
    %9542 = vsyncpa [#allocation27], 1
    %9543 = vsyncpa [#allocation10], 1

</llo_original>
